<compile_context>
chip_gen: v6e
topology: v6e:2x2x1
jax: 0.10.0
libtpu: 0.0.40
codegen_flags: <defaults>
</compile_context>

<pallas_src>
import functools
import numpy as np
import jax
import jax.numpy as jnp
from jax.experimental import pallas as pl
from jax.experimental.pallas import tpu as pltpu


_VMEM_LIMIT = 48 * 1024 * 1024   # conservative: fits v7x 64MiB physical VMEM w/ headroom
_LN_EPS = 1e-5


def _round_up(x, m):
    return ((x + m - 1) // m) * m


def _pad2(x, rows, cols):
    r, c = x.shape
    if (r, c) == (rows, cols):
        return x
    return jnp.pad(x, ((0, rows - r), (0, cols - c)))


# ----------------------------------------------------------------------------
# In-kernel math helpers (Mosaic-safe ops only)
# ----------------------------------------------------------------------------
def _erf_approx(x):
    # Abramowitz & Stegun 7.1.26, |err| < 1.5e-7 (exp/abs/where only).
    a1, a2, a3, a4, a5 = 0.254829592, -0.284496736, 1.421413741, -1.453152027, 1.061405429
    p = 0.3275911
    ax = jnp.abs(x)
    t = 1.0 / (1.0 + p * ax)
    poly = ((((a5 * t + a4) * t + a3) * t + a2) * t + a1) * t
    y = 1.0 - poly * jnp.exp(-ax * ax)
    return jnp.where(x >= 0, y, -y)


def _gelu(x):
    # TODO(synk): erf GELU via 7-digit rational approx (vs torch exact erf).
    return 0.5 * x * (1.0 + _erf_approx(x * 0.7071067811865476))


def _apply_act(x, act):
    if act == "relu":
        return jnp.maximum(x, 0.0)
    if act == "gelu":
        return _gelu(x)
    return x


def _ln_rows(x, g, b, eps):
    mu = jnp.mean(x, axis=-1, keepdims=True)
    xc = x - mu
    var = jnp.mean(xc * xc, axis=-1, keepdims=True)
    return xc * jax.lax.rsqrt(var + eps) * g + b


# ----------------------------------------------------------------------------
# Kernel 1: tiled matmul (+bias +act), bf16 operands, f32 accumulation
# ----------------------------------------------------------------------------
def _mm_kernel(a_ref, w_ref, b_ref, o_ref, acc_ref, *, act):
    @pl.when(pl.program_id(2) == 0)
    def _init():
        acc_ref[...] = jnp.zeros_like(acc_ref)

    acc_ref[...] += jnp.dot(a_ref[...], w_ref[...],
                            preferred_element_type=jnp.float32)

    @pl.when(pl.program_id(2) == pl.num_programs(2) - 1)
    def _fin():
        o_ref[...] = _apply_act(acc_ref[...] + b_ref[...], act)


def pallas_matmul(a, w, b=None, act="none"):
    """a:(M,K) @ w:(K,N) + b with optional fused act.  Tiled, bf16 x bf16 -> f32."""
    M, K = a.shape
    N = w.shape[1]
    TM = min(256, _round_up(M, 8))
    TN = min(256, _round_up(N, 128))
    TK = min(512, _round_up(K, 128))
    Mp, Np, Kp = _round_up(M, TM), _round_up(N, TN), _round_up(K, TK)

    a_p = _pad2(a.astype(jnp.bfloat16), Mp, Kp)
    w_p = _pad2(w.astype(jnp.bfloat16), Kp, Np)
    bias = jnp.zeros((N,), jnp.float32) if b is None else b.astype(jnp.float32)
    b_p = _pad2(bias.reshape(1, N), 1, Np)

    out = pl.pallas_call(
        functools.partial(_mm_kernel, act=act),
        grid=(Mp // TM, Np // TN, Kp // TK),
        in_specs=[
            pl.BlockSpec((TM, TK), lambda i, j, k: (i, k)),
            pl.BlockSpec((TK, TN), lambda i, j, k: (k, j)),
            pl.BlockSpec((1, TN), lambda i, j, k: (0, j)),
        ],
        out_specs=pl.BlockSpec((TM, TN), lambda i, j, k: (i, j)),
        out_shape=jax.ShapeDtypeStruct((Mp, Np), jnp.float32),
        scratch_shapes=[pltpu.VMEM((TM, TN), jnp.float32)],
        compiler_params=pltpu.CompilerParams(
            dimension_semantics=("parallel", "parallel", "arbitrary"),
            vmem_limit_bytes=_VMEM_LIMIT),
    )(a_p, w_p, b_p)
    return out[:M, :N]


# ----------------------------------------------------------------------------
# Kernel 2: LayerNorm fused into a following matmul (LN prologue, full K)
# ----------------------------------------------------------------------------
def _ln_mm_kernel(x_ref, g_ref, b_ref, w_ref, bias_ref, o_ref, *, act, eps):
    h = _ln_rows(x_ref[...], g_ref[...], b_ref[...], eps)
    acc = jnp.dot(h.astype(jnp.bfloat16), w_ref[...],
                  preferred_element_type=jnp.float32)
    o_ref[...] = _apply_act(acc + bias_ref[...], act)


def pallas_ln_matmul(x, gamma, beta, w, b=None, act="none", eps=_LN_EPS):
    M, K = x.shape
    N = w.shape[1]
    TM = min(256, _round_up(M, 8))
    TN = min(256, _round_up(N, 128))
    Mp, Np = _round_up(M, TM), _round_up(N, TN)

    x_p = _pad2(x.astype(jnp.float32), Mp, K)
    w_p = _pad2(w.astype(jnp.bfloat16), K, Np)
    bias = jnp.zeros((N,), jnp.float32) if b is None else b.astype(jnp.float32)
    b_p = _pad2(bias.reshape(1, N), 1, Np)

    out = pl.pallas_call(
        functools.partial(_ln_mm_kernel, act=act, eps=eps),
        grid=(Mp // TM, Np // TN),
        in_specs=[
            pl.BlockSpec((TM, K), lambda i, j: (i, 0)),
            pl.BlockSpec((1, K), lambda i, j: (0, 0)),
            pl.BlockSpec((1, K), lambda i, j: (0, 0)),
            pl.BlockSpec((K, TN), lambda i, j: (0, j)),
            pl.BlockSpec((1, TN), lambda i, j: (0, j)),
        ],
        out_specs=pl.BlockSpec((TM, TN), lambda i, j: (i, j)),
        out_shape=jax.ShapeDtypeStruct((Mp, Np), jnp.float32),
        compiler_params=pltpu.CompilerParams(
            dimension_semantics=("parallel", "parallel"),
            vmem_limit_bytes=_VMEM_LIMIT),
    )(x_p, gamma.reshape(1, K).astype(jnp.float32),
      beta.reshape(1, K).astype(jnp.float32), w_p, b_p)
    return out[:M, :N]


# ----------------------------------------------------------------------------
# Kernel 3: standalone tiled LayerNorm
# ----------------------------------------------------------------------------
def _ln_kernel(x_ref, g_ref, b_ref, o_ref, *, eps):
    o_ref[...] = _ln_rows(x_ref[...], g_ref[...], b_ref[...], eps)


def pallas_layernorm(x, gamma, beta, eps=_LN_EPS):
    shape = x.shape
    C = shape[-1]
    x2 = x.reshape(-1, C).astype(jnp.float32)
    M = x2.shape[0]
    TM = min(512, _round_up(M, 8))
    Mp = _round_up(M, TM)
    x_p = _pad2(x2, Mp, C)
    out = pl.pallas_call(
        functools.partial(_ln_kernel, eps=eps),
        grid=(Mp // TM,),
        in_specs=[
            pl.BlockSpec((TM, C), lambda i: (i, 0)),
            pl.BlockSpec((1, C), lambda i: (0, 0)),
            pl.BlockSpec((1, C), lambda i: (0, 0)),
        ],
        out_specs=pl.BlockSpec((TM, C), lambda i: (i, 0)),
        out_shape=jax.ShapeDtypeStruct((Mp, C), jnp.float32),
        compiler_params=pltpu.CompilerParams(
            dimension_semantics=("parallel",),
            vmem_limit_bytes=_VMEM_LIMIT),
    )(x_p, gamma.reshape(1, C).astype(jnp.float32),
      beta.reshape(1, C).astype(jnp.float32))
    return out[:M].reshape(shape)


# ----------------------------------------------------------------------------
# Kernel 4: fused Swin MLP block:  out = x + fc2(gelu(fc1(LN(x))))
# ----------------------------------------------------------------------------
def _mlp_kernel(x_ref, g_ref, b_ref, w1_ref, b1_ref, w2_ref, b2_ref, o_ref, *, eps):
    x = x_ref[...]
    h = _ln_rows(x, g_ref[...], b_ref[...], eps)
    h1 = jnp.dot(h.astype(jnp.bfloat16), w1_ref[...],
                 preferred_element_type=jnp.float32)
    h1 = _gelu(h1 + b1_ref[...])
    h2 = jnp.dot(h1.astype(jnp.bfloat16), w2_ref[...],
                 preferred_element_type=jnp.float32)
    o_ref[...] = x + h2 + b2_ref[...]


def pallas_mlp_block(x, gamma, beta, w1, b1, w2, b2, eps=_LN_EPS):
    M, C = x.shape
    H = w1.shape[1]
    TM = min(256, _round_up(M, 8))
    Mp = _round_up(M, TM)
    x_p = _pad2(x.astype(jnp.float32), Mp, C)
    out = pl.pallas_call(
        functools.partial(_mlp_kernel, eps=eps),
        grid=(Mp // TM,),
        in_specs=[
            pl.BlockSpec((TM, C), lambda i: (i, 0)),
            pl.BlockSpec((1, C), lambda i: (0, 0)),
            pl.BlockSpec((1, C), lambda i: (0, 0)),
            pl.BlockSpec((C, H), lambda i: (0, 0)),
            pl.BlockSpec((1, H), lambda i: (0, 0)),
            pl.BlockSpec((H, C), lambda i: (0, 0)),
            pl.BlockSpec((1, C), lambda i: (0, 0)),
        ],
        out_specs=pl.BlockSpec((TM, C), lambda i: (i, 0)),
        out_shape=jax.ShapeDtypeStruct((Mp, C), jnp.float32),
        compiler_params=pltpu.CompilerParams(
            dimension_semantics=("parallel",),
            vmem_limit_bytes=_VMEM_LIMIT),
    )(x_p,
      gamma.reshape(1, C).astype(jnp.float32),
      beta.reshape(1, C).astype(jnp.float32),
      w1.astype(jnp.bfloat16), b1.reshape(1, H).astype(jnp.float32),
      w2.astype(jnp.bfloat16), b2.reshape(1, C).astype(jnp.float32))
    return out[:M]


# ----------------------------------------------------------------------------
# Kernel 5: fused window attention block
#   out = xw + proj( softmax( scale*Q K^T + rpb + mask ) V ),  Q,K,V = LN(xw) Wqkv
#   grid: one step = WB windows (all heads), output lane-dense (WB, N, C).
# ----------------------------------------------------------------------------
def _swin_attn_kernel(xw_ref, g_ref, b_ref, qkvw_ref, qkvb_ref, projw_ref,
                      projb_ref, rpb_ref, mask_ref, o_ref,
                      *, num_heads, head_dim, scale, eps):
    WB, N, C = xw_ref.shape
    x = xw_ref[...]                               # (WB, N, C) f32
    xf = x.reshape(WB * N, C)
    h = _ln_rows(xf, g_ref[...], b_ref[...], eps)
    qkv = jnp.dot(h.astype(jnp.bfloat16), qkvw_ref[...],
                  preferred_element_type=jnp.float32) + qkvb_ref[...]   # (WB*N, 3C)
    mask = mask_ref[...]                          # (WB, N, N)

    acc = jnp.zeros((WB * N, C), jnp.float32)
    for hh in range(num_heads):                   # unrolled: nH is small & static
        q = qkv[:, hh * head_dim:(hh + 1) * head_dim].reshape(WB, N, head_dim)
        k = qkv[:, C + hh * head_dim:C + (hh + 1) * head_dim].reshape(WB, N, head_dim)
        v = qkv[:, 2 * C + hh * head_dim:2 * C + (hh + 1) * head_dim].reshape(WB, N, head_dim)
        s = jnp.einsum("wnd,wmd->wnm", (q * scale).astype(jnp.bfloat16),
                       k.astype(jnp.bfloat16),
                       preferred_element_type=jnp.float32)
        s = s + rpb_ref[hh][None] + mask
        s = s - jnp.max(s, axis=-1, keepdims=True)
        p = jnp.exp(s)
        p = p * pl.reciprocal(jnp.sum(p, axis=-1, keepdims=True), approx=True)
        o = jnp.einsum("wnm,wmd->wnd", p.astype(jnp.bfloat16),
                       v.astype(jnp.bfloat16),
                       preferred_element_type=jnp.float32)
        pw = projw_ref[hh * head_dim:(hh + 1) * head_dim, :]            # (hd, C)
        acc = acc + jnp.dot(o.reshape(WB * N, head_dim).astype(jnp.bfloat16),
                            pw, preferred_element_type=jnp.float32)

    o_ref[...] = x + (acc + projb_ref[...]).reshape(WB, N, C)


def _pick_window_block(nW, N, C, budget_bytes=2 * 1024 * 1024):
    for cand in range(nW, 0, -1):
        if nW % cand == 0 and cand * N * C * 4 <= budget_bytes:
            return cand
    return 1


def pallas_swin_attention_block(xw, gamma, beta, qkv_w, qkv_b, proj_w, proj_b,
                                rpb, mask, num_heads, eps=_LN_EPS):
    """xw: (B_, N, C) windowed pre-norm tokens; mask: (nW, N, N); rpb: (nH, N, N)."""
    B_, N, C = xw.shape
    nW = mask.shape[0]
    head_dim = C // num_heads
    scale = float(head_dim) ** -0.5
    WB = _pick_window_block(nW, N, C)
    n_mask_blocks = nW // WB
    grid = (B_ // WB,)

    out = pl.pallas_call(
        functools.partial(_swin_attn_kernel, num_heads=num_heads,
                          head_dim=head_dim, scale=scale, eps=eps),
        grid=grid,
        in_specs=[
            pl.BlockSpec((WB, N, C), lambda g: (g, 0, 0)),
            pl.BlockSpec((1, C), lambda g: (0, 0)),
            pl.BlockSpec((1, C), lambda g: (0, 0)),
            pl.BlockSpec((C, 3 * C), lambda g: (0, 0)),
            pl.BlockSpec((1, 3 * C), lambda g: (0, 0)),
            pl.BlockSpec((C, C), lambda g: (0, 0)),
            pl.BlockSpec((1, C), lambda g: (0, 0)),
            pl.BlockSpec((num_heads, N, N), lambda g: (0, 0, 0)),
            pl.BlockSpec((WB, N, N), lambda g: (g % n_mask_blocks, 0, 0)),
        ],
        out_specs=pl.BlockSpec((WB, N, C), lambda g: (g, 0, 0)),
        out_shape=jax.ShapeDtypeStruct((B_, N, C), jnp.float32),
        compiler_params=pltpu.CompilerParams(
            dimension_semantics=("parallel",),
            vmem_limit_bytes=_VMEM_LIMIT),
    )(xw.astype(jnp.float32),
      gamma.reshape(1, C).astype(jnp.float32),
      beta.reshape(1, C).astype(jnp.float32),
      qkv_w.astype(jnp.bfloat16), qkv_b.reshape(1, 3 * C).astype(jnp.float32),
      proj_w.astype(jnp.bfloat16), proj_b.reshape(1, C).astype(jnp.float32),
      rpb.astype(jnp.float32), mask.astype(jnp.float32))
    return out


# ----------------------------------------------------------------------------
# Layout helpers (pure permutations, XLA glue)
# ----------------------------------------------------------------------------
def window_partition(x, ws):
    B, H, W, C = x.shape
    x = x.reshape(B, H // ws, ws, W // ws, ws, C)
    return x.transpose(0, 1, 3, 2, 4, 5).reshape(-1, ws, ws, C)


def window_reverse(windows, ws, H, W):
    B = windows.shape[0] // ((H // ws) * (W // ws))
    x = windows.reshape(B, H // ws, W // ws, ws, ws, -1)
    return x.transpose(0, 1, 3, 2, 4, 5).reshape(B, H, W, -1)


def relative_position_index(ws):
    coords = np.stack(np.meshgrid(np.arange(ws), np.arange(ws), indexing="ij"))
    coords_flat = coords.reshape(2, -1)
    rel = coords_flat[:, :, None] - coords_flat[:, None, :]
    rel = rel.transpose(1, 2, 0).astype(np.int64)
    rel[:, :, 0] += ws - 1
    rel[:, :, 1] += ws - 1
    rel[:, :, 0] *= 2 * ws - 1
    return rel.sum(-1)  # (ws*ws, ws*ws)


def compute_attn_mask(H, W, ws, shift):
    img_mask = np.zeros((1, H, W, 1), dtype=np.float32)
    slices = (slice(0, -ws), slice(-ws, -shift), slice(-shift, None))
    cnt = 0
    for h in slices:
        for w in slices:
            img_mask[:, h, w, :] = cnt
            cnt += 1
    mw = img_mask.reshape(1, H // ws, ws, W // ws, ws, 1)
    mw = mw.transpose(0, 1, 3, 2, 4, 5).reshape(-1, ws * ws)
    am = mw[:, None, :] - mw[:, :, None]
    am = np.where(am != 0, -100.0, 0.0).astype(np.float32)
    return jnp.asarray(am)  # (nW, N, N)


# ----------------------------------------------------------------------------
# Swin-Unet building blocks
# ----------------------------------------------------------------------------
def swin_block(p, x, H, W, num_heads, ws, shift, rel_idx, mask):
    B, L, C = x.shape
    N = ws * ws
    h = x.reshape(B, H, W, C)
    if shift > 0:
        h = jnp.roll(h, shift=(-shift, -shift), axis=(1, 2))
    xw = window_partition(h, ws).reshape(-1, N, C)

    # relative position bias, un-broadcast: (nH, N, N)
    rpb = p["attn"]["rpb_table"][rel_idx].reshape(N, N, num_heads)
    rpb = jnp.transpose(rpb, (2, 0, 1))

    # fused LN1 -> QKV -> attention -> proj -> +residual (residual commutes with
    # the roll / window permutations, so adding in window space is exact).
    yw = pallas_swin_attention_block(
        xw, p["norm1_g"], p["norm1_b"],
        p["attn"]["qkv_w"], p["attn"]["qkv_b"],
        p["attn"]["proj_w"], p["attn"]["proj_b"],
        rpb, mask, num_heads)

    h = window_reverse(yw.reshape(-1, ws, ws, C), ws, H, W)
    if shift > 0:
        h = jnp.roll(h, shift=(shift, shift), axis=(1, 2))
    x = h.reshape(B, L, C)

    # fused LN2 -> fc1 -> GELU -> fc2 -> +residual
    y = pallas_mlp_block(x.reshape(B * L, C), p["norm2_g"], p["norm2_b"],
                         p["fc1_w"], p["fc1_b"], p["fc2_w"], p["fc2_b"])
    return y.reshape(B, L, C)


def run_basic_layer(block_params, x, Hc, Wc, num_heads, window_size):
    if min(Hc, Wc) <= window_size:
        eff_ws, base_shift = min(Hc, Wc), 0
    else:
        eff_ws, base_shift = window_size, window_size // 2
    N = eff_ws * eff_ws
    nW = (Hc // eff_ws) * (Wc // eff_ws)
    rel_idx = jnp.asarray(relative_position_index(eff_ws).reshape(-1), dtype=jnp.int32)
    mask_zero = jnp.zeros((nW, N, N), jnp.float32)
    mask_shift = compute_attn_mask(Hc, Wc, eff_ws, base_shift) if base_shift > 0 else None
    for bi, bp in enumerate(block_params):
        shift = 0 if bi % 2 == 0 else base_shift
        mask = mask_shift if shift > 0 else mask_zero
        x = swin_block(bp, x, Hc, Wc, num_heads, eff_ws, shift, rel_idx, mask)
    return x


def patch_merging(p, x, H, W):
    B, L, C = x.shape
    x = x.reshape(B, H, W, C)
    x0 = x[:, 0::2, 0::2, :]
    x1 = x[:, 1::2, 0::2, :]
    x2 = x[:, 0::2, 1::2, :]
    x3 = x[:, 1::2, 1::2, :]
    x = jnp.concatenate([x0, x1, x2, x3], axis=-1).reshape(-1, 4 * C)
    # LayerNorm fused into the 4C -> 2C reduction matmul
    y = pallas_ln_matmul(x, p["norm_g"], p["norm_b"], p["red_w"], None)
    return y.reshape(B, (H // 2) * (W // 2), 2 * C)


def patch_expand(p, x, H, W, pre_ln=None):
    B, L, C = x.shape
    xf = x.reshape(-1, C)
    if pre_ln is not None:   # fuse a preceding LayerNorm into the expand matmul
        y = pallas_ln_matmul(xf, pre_ln[0], pre_ln[1], p["expand_w"], None)
    else:
        y = pallas_matmul(xf, p["expand_w"], None)
    y = y.reshape(B, H, W, 2 * C)
    c = C // 2
    y = y.reshape(B, H, W, 2, 2, c).transpose(0, 1, 3, 2, 4, 5).reshape(B, 4 * H * W, c)
    return pallas_layernorm(y, p["norm_g"], p["norm_b"])


def final_patch_expand_x4(p, x, H, W, pre_ln):
    B, L, C = x.shape
    y = pallas_ln_matmul(x.reshape(-1, C), pre_ln[0], pre_ln[1], p["expand_w"], None)
    y = y.reshape(B, H, W, 16 * C)
    y = y.reshape(B, H, W, 4, 4, C).transpose(0, 1, 3, 2, 4, 5).reshape(B, 16 * H * W, C)
    return pallas_layernorm(y, p["norm_g"], p["norm_b"])


# ----------------------------------------------------------------------------
# UNet (docking network producing dock_channels feature map)
# ----------------------------------------------------------------------------
def conv3x3_relu(x, w, b):
    # TODO(synk): tiny-channel 3x3 convs stay on XLA conv per perf review (avoids
    # the 9x im2col HBM materialization); 1x1 / linear layers use Pallas matmul.
    y = jax.lax.conv_general_dilated(
        x, w, window_strides=(1, 1), padding=((1, 1), (1, 1)),
        dimension_numbers=("NHWC", "HWIO", "NHWC"))
    return jnp.maximum(y + b, 0.0)


def unet_forward(p, x):
    x1 = conv3x3_relu(x, p["c1a_w"], p["c1a_b"])
    x1 = conv3x3_relu(x1, p["c1b_w"], p["c1b_b"])
    B, H, W, C = x1.shape
    xp = x1.reshape(B, H // 2, 2, W // 2, 2, C).max(axis=(2, 4))       # maxpool 2x2
    x2 = conv3x3_relu(xp, p["c2a_w"], p["c2a_b"])
    x2 = conv3x3_relu(x2, p["c2b_w"], p["c2b_b"])
    xu = jnp.repeat(jnp.repeat(x2, 2, axis=1), 2, axis=2)              # nearest up x2
    xc = jnp.concatenate([xu, x1], axis=-1)
    x3 = conv3x3_relu(xc, p["c3a_w"], p["c3a_b"])
    x3 = conv3x3_relu(x3, p["c3b_w"], p["c3b_b"])
    Bo, Ho, Wo, Co = x3.shape
    dock = p["outc_w"].shape[-1]
    out = pallas_matmul(x3.reshape(Bo * Ho * Wo, Co),
                        p["outc_w"].reshape(Co, dock), p["outc_b"])    # 1x1 conv
    return out.reshape(Bo, Ho, Wo, dock)


# ----------------------------------------------------------------------------
# SwinTransformerSys forward
# ----------------------------------------------------------------------------
def swin_forward(params, cfg, x_nhwc):
    B, H, W, Cin = x_nhwc.shape
    ps, ed, ws = cfg["patch_size"], cfg["embed_dim"], cfg["window_size"]
    depths, heads = cfg["depths"], cfg["num_heads"]
    nc = cfg["num_classes"]
    num_layers = len(depths)
    Hp, Wp = H // ps, W // ps

    # patch embed: Conv2d(k=ps, stride=ps) as matmul + LayerNorm
    patches = x_nhwc.reshape(B, Hp, ps, Wp, ps, Cin).transpose(0, 1, 3, 2, 4, 5)
    patches = patches.reshape(B * Hp * Wp, ps * ps * Cin)
    pe = params["patch_embed"]
    x = pallas_matmul(patches, pe["w"], pe["b"])
    x = pallas_layernorm(x, pe["norm_g"], pe["norm_b"]).reshape(B, Hp * Wp, ed)

    ress = [(Hp // (2 ** i), Wp // (2 ** i)) for i in range(num_layers)]

    # ---- encoder ----
    x_downsample = []
    for il in range(num_layers):
        x_downsample.append(x)
        Hc, Wc = ress[il]
        x = run_basic_layer(params["layers"][il]["blocks"], x, Hc, Wc, heads[il], ws)
        if "downsample" in params["layers"][il]:
            x = patch_merging(params["layers"][il]["downsample"], x, Hc, Wc)

    # ---- decoder ----
    for inx in range(num_layers):
        if inx == 0:
            Hc, Wc = ress[num_layers - 1]
            # encoder-final norm fused as prologue of the expand matmul
            x = patch_expand(params["layers_up"][0], x, Hc, Wc,
                             pre_ln=(params["norm_g"], params["norm_b"]))
        else:
            skip = x_downsample[num_layers - 1 - inx]
            x = jnp.concatenate([x, skip], axis=-1)
            Bc, Lc, Cc = x.shape
            cbd = params["concat_back_dim"][inx]
            x = pallas_matmul(x.reshape(Bc * Lc, Cc), cbd["w"], cbd["b"]).reshape(Bc, Lc, -1)
            Hc, Wc = ress[num_layers - 1 - inx]
            x = run_basic_layer(params["layers_up"][inx]["blocks"], x, Hc, Wc,
                                heads[num_layers - 1 - inx], ws)
            if "upsample" in params["layers_up"][inx]:
                x = patch_expand(params["layers_up"][inx]["upsample"], x, Hc, Wc)

    # ---- norm_up (fused) + final x4 expand + 1x1 output conv (bias=False) ----
    x = final_patch_expand_x4(params["up"], x, Hp, Wp,
                              pre_ln=(params["norm_up_g"], params["norm_up_b"]))
    x = x.reshape(B, H, W, ed)
    # output conv: matmul wrapper pads N (=num_classes) to 128 lanes internally
    logits = pallas_matmul(x.reshape(B * H * W, ed), params["output_w"], None)
    logits = logits.reshape(B, H, W, nc)
    return jnp.transpose(logits, (0, 3, 1, 2))   # back to NCHW


def unet_swinunet_forward(unet_params, swin_params, cfg, x_nchw):
    x = jnp.transpose(x_nchw, (0, 2, 3, 1)).astype(jnp.float32)   # NCHW -> NHWC
    x = unet_forward(unet_params, x)
    if x.shape[-1] == 1:                                          # x.repeat(1,3,1,1)
        x = jnp.tile(x, (1, 1, 1, 3))
    return swin_forward(swin_params, cfg, x)


# ----------------------------------------------------------------------------
# Deterministic parameter construction
# ----------------------------------------------------------------------------
class ParamFactory:
    def __init__(self, seed=0):
        self.key = jax.random.PRNGKey(seed)
        self.count = 0

    def normal(self, shape, std=0.02):
        self.count += 1
        k = jax.random.fold_in(self.key, self.count)
        return jax.random.normal(k, shape, dtype=jnp.float32) * std

    def zeros(self, shape):
        return jnp.zeros(shape, jnp.float32)

    def ones(self, shape):
        return jnp.ones(shape, jnp.float32)


def make_block_params(pf, dim, num_heads, mlp_ratio, window_size):
    hidden = int(dim * mlp_ratio)
    return dict(
        norm1_g=pf.ones((dim,)), norm1_b=pf.zeros((dim,)),
        attn=dict(
            qkv_w=pf.normal((dim, 3 * dim)), qkv_b=pf.zeros((3 * dim,)),
            proj_w=pf.normal((dim, dim)), proj_b=pf.zeros((dim,)),
            rpb_table=pf.normal(((2 * window_size - 1) ** 2, num_heads)),
        ),
        norm2_g=pf.ones((dim,)), norm2_b=pf.zeros((dim,)),
        fc1_w=pf.normal((dim, hidden)), fc1_b=pf.zeros((hidden,)),
        fc2_w=pf.normal((hidden, dim)), fc2_b=pf.zeros((dim,)),
    )


def build_unet_params(pf, in_channels, dock_channels):
    c1, c2 = 8, 16
    return dict(
        c1a_w=pf.normal((3, 3, in_channels, c1)), c1a_b=pf.zeros((c1,)),
        c1b_w=pf.normal((3, 3, c1, c1)), c1b_b=pf.zeros((c1,)),
        c2a_w=pf.normal((3, 3, c1, c2)), c2a_b=pf.zeros((c2,)),
        c2b_w=pf.normal((3, 3, c2, c2)), c2b_b=pf.zeros((c2,)),
        c3a_w=pf.normal((3, 3, c2 + c1, c1)), c3a_b=pf.zeros((c1,)),
        c3b_w=pf.normal((3, 3, c1, c1)), c3b_b=pf.zeros((c1,)),
        outc_w=pf.normal((1, 1, c1, dock_channels)), outc_b=pf.zeros((dock_channels,)),
    )


def build_swin_params(pf, cfg):
    ps, ed, ws = cfg["patch_size"], cfg["embed_dim"], cfg["window_size"]
    in_chans, nc = cfg["in_chans"], cfg["num_classes"]
    depths, heads, mlp_ratio = cfg["depths"], cfg["num_heads"], cfg["mlp_ratio"]
    num_layers = len(depths)
    Hp = cfg["img_size"] // ps
    dims = [ed * (2 ** i) for i in range(num_layers)]
    ress = [Hp // (2 ** i) for i in range(num_layers)]

    params = dict(
        patch_embed=dict(w=pf.normal((ps * ps * in_chans, ed)), b=pf.zeros((ed,)),
                         norm_g=pf.ones((ed,)), norm_b=pf.zeros((ed,))))

    layers = []
    for i, d in enumerate(depths):
        eff_ws = ws if ress[i] > ws else ress[i]
        layer = dict(blocks=[make_block_params(pf, dims[i], heads[i], mlp_ratio, eff_ws)
                             for _ in range(d)])
        if i < num_layers - 1:
            layer["downsample"] = dict(norm_g=pf.ones((4 * dims[i],)),
                                       norm_b=pf.zeros((4 * dims[i],)),
                                       red_w=pf.normal((4 * dims[i], 2 * dims[i])))
        layers.append(layer)
    params["layers"] = layers
    params["norm_g"] = pf.ones((dims[-1],))
    params["norm_b"] = pf.zeros((dims[-1],))

    # decoder
    layers_up = [dict(expand_w=pf.normal((dims[-1], 2 * dims[-1])),
                      norm_g=pf.ones((dims[-1] // 2,)), norm_b=pf.zeros((dims[-1] // 2,)))]
    concat_back_dim = [None]
    for inx in range(1, num_layers):
        di = num_layers - 1 - inx
        eff_ws = ws if ress[di] > ws else ress[di]
        lu = dict(blocks=[make_block_params(pf, dims[di], heads[di], mlp_ratio, eff_ws)
                          for _ in range(depths[di])])
        if inx < num_layers - 1:
            lu["upsample"] = dict(expand_w=pf.normal((dims[di], 2 * dims[di])),
                                  norm_g=pf.ones((dims[di] // 2,)),
                                  norm_b=pf.zeros((dims[di] // 2,)))
        layers_up.append(lu)
        concat_back_dim.append(dict(w=pf.normal((2 * dims[di], dims[di])),
                                    b=pf.zeros((dims[di],))))
    params["layers_up"] = layers_up
    params["concat_back_dim"] = concat_back_dim
    params["norm_up_g"] = pf.ones((ed,))
    params["norm_up_b"] = pf.zeros((ed,))
    params["up"] = dict(expand_w=pf.normal((ed, 16 * ed)),
                        norm_g=pf.ones((ed,)), norm_b=pf.zeros((ed,)))
    params["output_w"] = pf.normal((ed, nc))
    return params


# ----------------------------------------------------------------------------
# Main
# ----------------------------------------------------------------------------
if __name__ == "__main__":
    B, IN_CH, IMG = 2, 1, 16
    DOCK = 8
    cfg = dict(img_size=IMG, patch_size=4, in_chans=DOCK, embed_dim=32,
               depths=[2, 2], num_heads=[2, 4], window_size=2, mlp_ratio=4.0,
               num_classes=3)

    key = jax.random.PRNGKey(0)
    x = jax.random.normal(key, (B, IN_CH, IMG, IMG), dtype=jnp.float32)  # NCHW input

    pf = ParamFactory(seed=0)
    unet_params = build_unet_params(pf, in_channels=IN_CH, dock_channels=DOCK)
    swin_params = build_swin_params(pf, cfg)

    fwd = jax.jit(lambda up, sp, xx: unet_swinunet_forward(up, sp, cfg, xx))
    logits = jax.block_until_ready(fwd(unet_params, swin_params, x))

    assert logits.shape == (B, cfg["num_classes"], IMG, IMG), logits.shape
    assert bool(jnp.all(jnp.isfinite(logits)))
    print("KERNEL_OK")
</pallas_src>

<mosaic_0001>
module attributes {stable_mosaic.version = 11 : i64} {
  func.func @_mm_kernel(%arg0: i32, %arg1: i32, %arg2: i32, %arg3: memref<256x128xbf16, #tpu.memory_space<vmem>>, %arg4: memref<128x128xbf16, #tpu.memory_space<vmem>>, %arg5: memref<1x128xf32, #tpu.memory_space<vmem>>, %arg6: memref<256x128xf32, #tpu.memory_space<vmem>>, %arg7: memref<256x128xf32, #tpu.memory_space<vmem>>) attributes {dimension_semantics = [#tpu.dimension_semantics<parallel>, #tpu.dimension_semantics<parallel>, #tpu.dimension_semantics<arbitrary>], iteration_bounds = array<i64: 2, 1, 1>, scalar_prefetch = 0 : i64, scratch_operands = 1 : i64, tpu.core_type = #tpu.core_type<tc>, window_params = [{transform_indices = @transform_0, window_bounds = array<i64: 256, 128>}, {transform_indices = @transform_1, window_bounds = array<i64: 128, 128>}, {transform_indices = @transform_2, window_bounds = array<i64: 1, 128>}, {transform_indices = @transform_3, window_bounds = array<i64: 256, 128>}]} {
    %c0_i32 = arith.constant 0 : i32
    %0 = arith.cmpi eq, %arg2, %c0_i32 : i32
    %1 = arith.extui %0 : i1 to i32
    %c0_i32_0 = arith.constant 0 : i32
    %2 = arith.cmpi ne, %1, %c0_i32_0 : i32
    scf.if %2 {
      %cst_10 = arith.constant 0.000000e+00 : f32
      %12 = vector.broadcast %cst_10 : f32 to vector<256x128xf32>
      %c0_11 = arith.constant 0 : index
      %c0_12 = arith.constant 0 : index
      %13 = vector.load %arg7[%c0_11, %c0_12] : memref<256x128xf32, #tpu.memory_space<vmem>>, vector<256x128xf32>
      tpu.vector_store %arg7[%c0_11, %c0_12], %12 {strides = array<i32>} : memref<256x128xf32, #tpu.memory_space<vmem>>, vector<256x128xf32>,
    } else {
    }
    %c0 = arith.constant 0 : index
    %c0_1 = arith.constant 0 : index
    %3 = vector.load %arg7[%c0, %c0_1] : memref<256x128xf32, #tpu.memory_space<vmem>>, vector<256x128xf32>
    %c0_2 = arith.constant 0 : index
    %c0_3 = arith.constant 0 : index
    %4 = vector.load %arg3[%c0_2, %c0_3] : memref<256x128xbf16, #tpu.memory_space<vmem>>, vector<256x128xbf16>
    %c0_4 = arith.constant 0 : index
    %c0_5 = arith.constant 0 : index
    %5 = vector.load %arg4[%c0_4, %c0_5] : memref<128x128xbf16, #tpu.memory_space<vmem>>, vector<128x128xbf16>
    %cst = arith.constant dense<0.000000e+00> : vector<256x128xf32>
    %6 = tpu.matmul %4, %5, %cst {dimension_numbers = #tpu.dot_dimension_numbers<[1], [0], [0], [1], [0, 0, 1, 1], [], []>} : vector<256x128xbf16>, vector<128x128xbf16>, vector<256x128xf32> -> vector<256x128xf32>
    %7 = arith.addf %3, %6 : vector<256x128xf32>
    %c0_6 = arith.constant 0 : index
    %c0_7 = arith.constant 0 : index
    %8 = vector.load %arg7[%c0_6, %c0_7] : memref<256x128xf32, #tpu.memory_space<vmem>>, vector<256x128xf32>
    tpu.vector_store %arg7[%c0_6, %c0_7], %7 {strides = array<i32>} : memref<256x128xf32, #tpu.memory_space<vmem>>, vector<256x128xf32>,
    %c0_i32_8 = arith.constant 0 : i32
    %9 = arith.cmpi eq, %arg2, %c0_i32_8 : i32
    %10 = arith.extui %9 : i1 to i32
    %c0_i32_9 = arith.constant 0 : i32
    %11 = arith.cmpi ne, %10, %c0_i32_9 : i32
    scf.if %11 {
      %c0_10 = arith.constant 0 : index
      %c0_11 = arith.constant 0 : index
      %12 = vector.load %arg7[%c0_10, %c0_11] : memref<256x128xf32, #tpu.memory_space<vmem>>, vector<256x128xf32>
      %c0_12 = arith.constant 0 : index
      %c0_13 = arith.constant 0 : index
      %13 = vector.load %arg5[%c0_12, %c0_13] : memref<1x128xf32, #tpu.memory_space<vmem>>, vector<1x128xf32>
      %14 = vector.broadcast %13 : vector<1x128xf32> to vector<256x128xf32>
      %15 = arith.addf %12, %14 : vector<256x128xf32>
      %c0_14 = arith.constant 0 : index
      %c0_15 = arith.constant 0 : index
      %16 = vector.load %arg6[%c0_14, %c0_15] : memref<256x128xf32, #tpu.memory_space<vmem>>, vector<256x128xf32>
      tpu.vector_store %arg6[%c0_14, %c0_15], %15 {strides = array<i32>} : memref<256x128xf32, #tpu.memory_space<vmem>>, vector<256x128xf32>,
    } else {
    }
    return
  }
  func.func @transform_0(%arg0: i32, %arg1: i32, %arg2: i32) -> (i32, i32) {
    %c0_i32 = arith.constant 0 : i32
    return %arg0, %arg2 : i32, i32
  }
  func.func @transform_1(%arg0: i32, %arg1: i32, %arg2: i32) -> (i32, i32) {
    %c0_i32 = arith.constant 0 : i32
    return %arg2, %arg1 : i32, i32
  }
  func.func @transform_2(%arg0: i32, %arg1: i32, %arg2: i32) -> (i32, i32) {
    %c0_i32 = arith.constant 0 : i32
    %c0_i32_0 = arith.constant 0 : i32
    return %c0_i32, %arg1 : i32, i32
  }
  func.func @transform_3(%arg0: i32, %arg1: i32, %arg2: i32) -> (i32, i32) {
    %c0_i32 = arith.constant 0 : i32
    return %arg0, %arg1 : i32, i32
  }
}

module attributes {stable_mosaic.version = 11 : i64} {
  func.func @_mm_kernel(%arg0: i32, %arg1: i32, %arg2: i32, %arg3: memref<32x128xbf16, #tpu.memory_space<vmem>>, %arg4: memref<128x128xbf16, #tpu.memory_space<vmem>>, %arg5: memref<1x128xf32, #tpu.memory_space<vmem>>, %arg6: memref<32x128xf32, #tpu.memory_space<vmem>>, %arg7: memref<32x128xf32, #tpu.memory_space<vmem>>) attributes {dimension_semantics = [#tpu.dimension_semantics<parallel>, #tpu.dimension_semantics<parallel>, #tpu.dimension_semantics<arbitrary>], iteration_bounds = array<i64: 1, 1, 1>, scalar_prefetch = 0 : i64, scratch_operands = 1 : i64, tpu.core_type = #tpu.core_type<tc>, window_params = [{transform_indices = @transform_0, window_bounds = array<i64: 32, 128>}, {transform_indices = @transform_1, window_bounds = array<i64: 128, 128>}, {transform_indices = @transform_2, window_bounds = array<i64: 1, 128>}, {transform_indices = @transform_3, window_bounds = array<i64: 32, 128>}]} {
    %c0_i32 = arith.constant 0 : i32
    %0 = arith.cmpi eq, %arg2, %c0_i32 : i32
    %1 = arith.extui %0 : i1 to i32
    %c0_i32_0 = arith.constant 0 : i32
    %2 = arith.cmpi ne, %1, %c0_i32_0 : i32
    scf.if %2 {
      %cst_10 = arith.constant 0.000000e+00 : f32
      %12 = vector.broadcast %cst_10 : f32 to vector<32x128xf32>
      %c0_11 = arith.constant 0 : index
      %c0_12 = arith.constant 0 : index
      %13 = vector.load %arg7[%c0_11, %c0_12] : memref<32x128xf32, #tpu.memory_space<vmem>>, vector<32x128xf32>
      tpu.vector_store %arg7[%c0_11, %c0_12], %12 {strides = array<i32>} : memref<32x128xf32, #tpu.memory_space<vmem>>, vector<32x128xf32>,
    } else {
    }
    %c0 = arith.constant 0 : index
    %c0_1 = arith.constant 0 : index
    %3 = vector.load %arg7[%c0, %c0_1] : memref<32x128xf32, #tpu.memory_space<vmem>>, vector<32x128xf32>
    %c0_2 = arith.constant 0 : index
    %c0_3 = arith.constant 0 : index
    %4 = vector.load %arg3[%c0_2, %c0_3] : memref<32x128xbf16, #tpu.memory_space<vmem>>, vector<32x128xbf16>
    %c0_4 = arith.constant 0 : index
    %c0_5 = arith.constant 0 : index
    %5 = vector.load %arg4[%c0_4, %c0_5] : memref<128x128xbf16, #tpu.memory_space<vmem>>, vector<128x128xbf16>
    %cst = arith.constant dense<0.000000e+00> : vector<32x128xf32>
    %6 = tpu.matmul %4, %5, %cst {dimension_numbers = #tpu.dot_dimension_numbers<[1], [0], [0], [1], [0, 0, 1, 1], [], []>} : vector<32x128xbf16>, vector<128x128xbf16>, vector<32x128xf32> -> vector<32x128xf32>
    %7 = arith.addf %3, %6 : vector<32x128xf32>
    %c0_6 = arith.constant 0 : index
    %c0_7 = arith.constant 0 : index
    %8 = vector.load %arg7[%c0_6, %c0_7] : memref<32x128xf32, #tpu.memory_space<vmem>>, vector<32x128xf32>
    tpu.vector_store %arg7[%c0_6, %c0_7], %7 {strides = array<i32>} : memref<32x128xf32, #tpu.memory_space<vmem>>, vector<32x128xf32>,
    %c0_i32_8 = arith.constant 0 : i32
    %9 = arith.cmpi eq, %arg2, %c0_i32_8 : i32
    %10 = arith.extui %9 : i1 to i32
    %c0_i32_9 = arith.constant 0 : i32
    %11 = arith.cmpi ne, %10, %c0_i32_9 : i32
    scf.if %11 {
      %c0_10 = arith.constant 0 : index
      %c0_11 = arith.constant 0 : index
      %12 = vector.load %arg7[%c0_10, %c0_11] : memref<32x128xf32, #tpu.memory_space<vmem>>, vector<32x128xf32>
      %c0_12 = arith.constant 0 : index
      %c0_13 = arith.constant 0 : index
      %13 = vector.load %arg5[%c0_12, %c0_13] : memref<1x128xf32, #tpu.memory_space<vmem>>, vector<1x128xf32>
      %14 = vector.broadcast %13 : vector<1x128xf32> to vector<32x128xf32>
      %15 = arith.addf %12, %14 : vector<32x128xf32>
      %c0_14 = arith.constant 0 : index
      %c0_15 = arith.constant 0 : index
      %16 = vector.load %arg6[%c0_14, %c0_15] : memref<32x128xf32, #tpu.memory_space<vmem>>, vector<32x128xf32>
      tpu.vector_store %arg6[%c0_14, %c0_15], %15 {strides = array<i32>} : memref<32x128xf32, #tpu.memory_space<vmem>>, vector<32x128xf32>,
    } else {
    }
    return
  }
  func.func @transform_0(%arg0: i32, %arg1: i32, %arg2: i32) -> (i32, i32) {
    %c0_i32 = arith.constant 0 : i32
    return %arg0, %arg2 : i32, i32
  }
  func.func @transform_1(%arg0: i32, %arg1: i32, %arg2: i32) -> (i32, i32) {
    %c0_i32 = arith.constant 0 : i32
    return %arg2, %arg1 : i32, i32
  }
  func.func @transform_2(%arg0: i32, %arg1: i32, %arg2: i32) -> (i32, i32) {
    %c0_i32 = arith.constant 0 : i32
    %c0_i32_0 = arith.constant 0 : i32
    return %c0_i32, %arg1 : i32, i32
  }
  func.func @transform_3(%arg0: i32, %arg1: i32, %arg2: i32) -> (i32, i32) {
    %c0_i32 = arith.constant 0 : i32
    return %arg0, %arg1 : i32, i32
  }
}

module attributes {stable_mosaic.version = 11 : i64} {
  func.func @_ln_kernel(%arg0: i32, %arg1: memref<32x32xf32, #tpu.memory_space<vmem>>, %arg2: memref<1x32xf32, #tpu.memory_space<vmem>>, %arg3: memref<1x32xf32, #tpu.memory_space<vmem>>, %arg4: memref<32x32xf32, #tpu.memory_space<vmem>>) attributes {dimension_semantics = [#tpu.dimension_semantics<parallel>], iteration_bounds = array<i64: 1>, scalar_prefetch = 0 : i64, scratch_operands = 0 : i64, tpu.core_type = #tpu.core_type<tc>, window_params = [{transform_indices = @transform_0, window_bounds = array<i64: 32, 32>}, {pipeline_mode = #tpu.pipeline_mode<synchronous>, transform_indices = @transform_1, window_bounds = array<i64: 1, 32>}, {pipeline_mode = #tpu.pipeline_mode<synchronous>, transform_indices = @transform_2, window_bounds = array<i64: 1, 32>}, {transform_indices = @transform_3, window_bounds = array<i64: 32, 32>}]} {
    %c0 = arith.constant 0 : index
    %c0_0 = arith.constant 0 : index
    %0 = vector.load %arg1[%c0, %c0_0] : memref<32x32xf32, #tpu.memory_space<vmem>>, vector<32x32xf32>
    %c0_1 = arith.constant 0 : index
    %c0_2 = arith.constant 0 : index
    %1 = vector.load %arg2[%c0_1, %c0_2] : memref<1x32xf32, #tpu.memory_space<vmem>>, vector<1x32xf32>
    %c0_3 = arith.constant 0 : index
    %c0_4 = arith.constant 0 : index
    %2 = vector.load %arg3[%c0_3, %c0_4] : memref<1x32xf32, #tpu.memory_space<vmem>>, vector<1x32xf32>
    %cst = arith.constant dense<0.000000e+00> : vector<32xf32>
    %3 = vector.multi_reduction <add>, %0, %cst [1] : vector<32x32xf32> to vector<32xf32>
    %4 = vector.shape_cast %3 : vector<32xf32> to vector<32x1xf32>
    %cst_5 = arith.constant 3.200000e+01 : f32
    %5 = vector.broadcast %cst_5 : f32 to vector<32x1xf32>
    %6 = arith.divf %4, %5 : vector<32x1xf32>
    %7 = vector.broadcast %6 : vector<32x1xf32> to vector<32x32xf32>
    %8 = arith.subf %0, %7 : vector<32x32xf32>
    %9 = arith.mulf %8, %8 : vector<32x32xf32>
    %cst_6 = arith.constant dense<0.000000e+00> : vector<32xf32>
    %10 = vector.multi_reduction <add>, %9, %cst_6 [1] : vector<32x32xf32> to vector<32xf32>
    %11 = vector.shape_cast %10 : vector<32xf32> to vector<32x1xf32>
    %cst_7 = arith.constant 3.200000e+01 : f32
    %12 = vector.broadcast %cst_7 : f32 to vector<32x1xf32>
    %13 = arith.divf %11, %12 : vector<32x1xf32>
    %cst_8 = arith.constant 9.99999974E-6 : f32
    %14 = vector.broadcast %cst_8 : f32 to vector<32x1xf32>
    %15 = arith.addf %13, %14 : vector<32x1xf32>
    %16 = math.rsqrt %15 : vector<32x1xf32>
    %17 = vector.broadcast %16 : vector<32x1xf32> to vector<32x32xf32>
    %18 = arith.mulf %8, %17 : vector<32x32xf32>
    %19 = vector.broadcast %1 : vector<1x32xf32> to vector<32x32xf32>
    %20 = arith.mulf %18, %19 : vector<32x32xf32>
    %21 = vector.broadcast %2 : vector<1x32xf32> to vector<32x32xf32>
    %22 = arith.addf %20, %21 : vector<32x32xf32>
    %c0_9 = arith.constant 0 : index
    %c0_10 = arith.constant 0 : index
    %23 = vector.load %arg4[%c0_9, %c0_10] : memref<32x32xf32, #tpu.memory_space<vmem>>, vector<32x32xf32>
    tpu.vector_store %arg4[%c0_9, %c0_10], %22 {strides = array<i32>} : memref<32x32xf32, #tpu.memory_space<vmem>>, vector<32x32xf32>,
    return
  }
  func.func @transform_0(%arg0: i32) -> (i32, i32) {
    %c0_i32 = arith.constant 0 : i32
    %c0_i32_0 = arith.constant 0 : i32
    return %arg0, %c0_i32 : i32, i32
  }
  func.func @transform_1(%arg0: i32) -> (i32, i32) {
    %c0_i32 = arith.constant 0 : i32
    %c0_i32_0 = arith.constant 0 : i32
    %c0_i32_1 = arith.constant 0 : i32
    return %c0_i32, %c0_i32_0 : i32, i32
  }
  func.func @transform_2(%arg0: i32) -> (i32, i32) {
    %c0_i32 = arith.constant 0 : i32
    %c0_i32_0 = arith.constant 0 : i32
    %c0_i32_1 = arith.constant 0 : i32
    return %c0_i32, %c0_i32_0 : i32, i32
  }
  func.func @transform_3(%arg0: i32) -> (i32, i32) {
    %c0_i32 = arith.constant 0 : i32
    %c0_i32_0 = arith.constant 0 : i32
    return %arg0, %c0_i32 : i32, i32
  }
}

module attributes {stable_mosaic.version = 11 : i64} {
  func.func @_mlp_kernel(%arg0: i32, %arg1: memref<32x32xf32, #tpu.memory_space<vmem>>, %arg2: memref<1x32xf32, #tpu.memory_space<vmem>>, %arg3: memref<1x32xf32, #tpu.memory_space<vmem>>, %arg4: memref<32x128xbf16, #tpu.memory_space<vmem>>, %arg5: memref<1x128xf32, #tpu.memory_space<vmem>>, %arg6: memref<128x32xbf16, #tpu.memory_space<vmem>>, %arg7: memref<1x32xf32, #tpu.memory_space<vmem>>, %arg8: memref<32x32xf32, #tpu.memory_space<vmem>>) attributes {dimension_semantics = [#tpu.dimension_semantics<parallel>], iteration_bounds = array<i64: 1>, scalar_prefetch = 0 : i64, scratch_operands = 0 : i64, tpu.core_type = #tpu.core_type<tc>, window_params = [{transform_indices = @transform_0, window_bounds = array<i64: 32, 32>}, {pipeline_mode = #tpu.pipeline_mode<synchronous>, transform_indices = @transform_1, window_bounds = array<i64: 1, 32>}, {pipeline_mode = #tpu.pipeline_mode<synchronous>, transform_indices = @transform_2, window_bounds = array<i64: 1, 32>}, {pipeline_mode = #tpu.pipeline_mode<synchronous>, transform_indices = @transform_3, window_bounds = array<i64: 32, 128>}, {pipeline_mode = #tpu.pipeline_mode<synchronous>, transform_indices = @transform_4, window_bounds = array<i64: 1, 128>}, {pipeline_mode = #tpu.pipeline_mode<synchronous>, transform_indices = @transform_5, window_bounds = array<i64: 128, 32>}, {pipeline_mode = #tpu.pipeline_mode<synchronous>, transform_indices = @transform_6, window_bounds = array<i64: 1, 32>}, {transform_indices = @transform_7, window_bounds = array<i64: 32, 32>}]} {
    %c0 = arith.constant 0 : index
    %c0_0 = arith.constant 0 : index
    %0 = vector.load %arg1[%c0, %c0_0] : memref<32x32xf32, #tpu.memory_space<vmem>>, vector<32x32xf32>
    %c0_1 = arith.constant 0 : index
    %c0_2 = arith.constant 0 : index
    %1 = vector.load %arg2[%c0_1, %c0_2] : memref<1x32xf32, #tpu.memory_space<vmem>>, vector<1x32xf32>
    %c0_3 = arith.constant 0 : index
    %c0_4 = arith.constant 0 : index
    %2 = vector.load %arg3[%c0_3, %c0_4] : memref<1x32xf32, #tpu.memory_space<vmem>>, vector<1x32xf32>
    %cst = arith.constant dense<0.000000e+00> : vector<32xf32>
    %3 = vector.multi_reduction <add>, %0, %cst [1] : vector<32x32xf32> to vector<32xf32>
    %4 = vector.shape_cast %3 : vector<32xf32> to vector<32x1xf32>
    %cst_5 = arith.constant 3.200000e+01 : f32
    %5 = vector.broadcast %cst_5 : f32 to vector<32x1xf32>
    %6 = arith.divf %4, %5 : vector<32x1xf32>
    %7 = vector.broadcast %6 : vector<32x1xf32> to vector<32x32xf32>
    %8 = arith.subf %0, %7 : vector<32x32xf32>
    %9 = arith.mulf %8, %8 : vector<32x32xf32>
    %cst_6 = arith.constant dense<0.000000e+00> : vector<32xf32>
    %10 = vector.multi_reduction <add>, %9, %cst_6 [1] : vector<32x32xf32> to vector<32xf32>
    %11 = vector.shape_cast %10 : vector<32xf32> to vector<32x1xf32>
    %cst_7 = arith.constant 3.200000e+01 : f32
    %12 = vector.broadcast %cst_7 : f32 to vector<32x1xf32>
    %13 = arith.divf %11, %12 : vector<32x1xf32>
    %cst_8 = arith.constant 9.99999974E-6 : f32
    %14 = vector.broadcast %cst_8 : f32 to vector<32x1xf32>
    %15 = arith.addf %13, %14 : vector<32x1xf32>
    %16 = math.rsqrt %15 : vector<32x1xf32>
    %17 = vector.broadcast %16 : vector<32x1xf32> to vector<32x32xf32>
    %18 = arith.mulf %8, %17 : vector<32x32xf32>
    %19 = vector.broadcast %1 : vector<1x32xf32> to vector<32x32xf32>
    %20 = arith.mulf %18, %19 : vector<32x32xf32>
    %21 = vector.broadcast %2 : vector<1x32xf32> to vector<32x32xf32>
    %22 = arith.addf %20, %21 : vector<32x32xf32>
    %23 = arith.truncf %22 : vector<32x32xf32> to vector<32x32xbf16>
    %c0_9 = arith.constant 0 : index
    %c0_10 = arith.constant 0 : index
    %24 = vector.load %arg4[%c0_9, %c0_10] : memref<32x128xbf16, #tpu.memory_space<vmem>>, vector<32x128xbf16>
    %cst_11 = arith.constant dense<0.000000e+00> : vector<32x128xf32>
    %25 = tpu.matmul %23, %24, %cst_11 {dimension_numbers = #tpu.dot_dimension_numbers<[1], [0], [0], [1], [0, 0, 1, 1], [], []>} : vector<32x32xbf16>, vector<32x128xbf16>, vector<32x128xf32> -> vector<32x128xf32>
    %c0_12 = arith.constant 0 : index
    %c0_13 = arith.constant 0 : index
    %26 = vector.load %arg5[%c0_12, %c0_13] : memref<1x128xf32, #tpu.memory_space<vmem>>, vector<1x128xf32>
    %27 = vector.broadcast %26 : vector<1x128xf32> to vector<32x128xf32>
    %28 = arith.addf %25, %27 : vector<32x128xf32>
    %cst_14 = arith.constant 5.000000e-01 : f32
    %29 = vector.broadcast %cst_14 : f32 to vector<32x128xf32>
    %30 = arith.mulf %29, %28 : vector<32x128xf32>
    %cst_15 = arith.constant 0.707106769 : f32
    %31 = vector.broadcast %cst_15 : f32 to vector<32x128xf32>
    %32 = arith.mulf %28, %31 : vector<32x128xf32>
    %33 = math.absf %32 : vector<32x128xf32>
    %cst_16 = arith.constant 0.327591091 : f32
    %34 = vector.broadcast %cst_16 : f32 to vector<32x128xf32>
    %35 = arith.mulf %34, %33 : vector<32x128xf32>
    %cst_17 = arith.constant 1.000000e+00 : f32
    %36 = vector.broadcast %cst_17 : f32 to vector<32x128xf32>
    %37 = arith.addf %36, %35 : vector<32x128xf32>
    %cst_18 = arith.constant 1.000000e+00 : f32
    %38 = vector.broadcast %cst_18 : f32 to vector<32x128xf32>
    %39 = arith.divf %38, %37 : vector<32x128xf32>
    %cst_19 = arith.constant 1.06140542 : f32
    %40 = vector.broadcast %cst_19 : f32 to vector<32x128xf32>
    %41 = arith.mulf %40, %39 : vector<32x128xf32>
    %cst_20 = arith.constant -1.45315206 : f32
    %42 = vector.broadcast %cst_20 : f32 to vector<32x128xf32>
    %43 = arith.addf %41, %42 : vector<32x128xf32>
    %44 = arith.mulf %43, %39 : vector<32x128xf32>
    %cst_21 = arith.constant 1.42141378 : f32
    %45 = vector.broadcast %cst_21 : f32 to vector<32x128xf32>
    %46 = arith.addf %44, %45 : vector<32x128xf32>
    %47 = arith.mulf %46, %39 : vector<32x128xf32>
    %cst_22 = arith.constant -0.284496725 : f32
    %48 = vector.broadcast %cst_22 : f32 to vector<32x128xf32>
    %49 = arith.addf %47, %48 : vector<32x128xf32>
    %50 = arith.mulf %49, %39 : vector<32x128xf32>
    %cst_23 = arith.constant 0.254829586 : f32
    %51 = vector.broadcast %cst_23 : f32 to vector<32x128xf32>
    %52 = arith.addf %50, %51 : vector<32x128xf32>
    %53 = arith.mulf %52, %39 : vector<32x128xf32>
    %cst_24 = arith.constant 0.000000e+00 : f32
    %54 = vector.broadcast %cst_24 : f32 to vector<32x128xf32>
    %55 = arith.subf %54, %33 : vector<32x128xf32>
    %56 = arith.mulf %55, %33 : vector<32x128xf32>
    %57 = math.exp %56 : vector<32x128xf32>
    %58 = arith.mulf %53, %57 : vector<32x128xf32>
    %cst_25 = arith.constant 1.000000e+00 : f32
    %59 = vector.broadcast %cst_25 : f32 to vector<32x128xf32>
    %60 = arith.subf %59, %58 : vector<32x128xf32>
    %cst_26 = arith.constant 0.000000e+00 : f32
    %61 = vector.broadcast %cst_26 : f32 to vector<32x128xf32>
    %62 = arith.cmpf oge, %32, %61 : vector<32x128xf32>
    %cst_27 = arith.constant 0.000000e+00 : f32
    %63 = vector.broadcast %cst_27 : f32 to vector<32x128xf32>
    %64 = arith.subf %63, %60 : vector<32x128xf32>
    %65 = arith.select %62, %60, %64 : vector<32x128xi1>, vector<32x128xf32>
    %cst_28 = arith.constant 1.000000e+00 : f32
    %66 = vector.broadcast %cst_28 : f32 to vector<32x128xf32>
    %67 = arith.addf %66, %65 : vector<32x128xf32>
    %68 = arith.mulf %30, %67 : vector<32x128xf32>
    %69 = arith.truncf %68 : vector<32x128xf32> to vector<32x128xbf16>
    %c0_29 = arith.constant 0 : index
    %c0_30 = arith.constant 0 : index
    %70 = vector.load %arg6[%c0_29, %c0_30] : memref<128x32xbf16, #tpu.memory_space<vmem>>, vector<128x32xbf16>
    %cst_31 = arith.constant dense<0.000000e+00> : vector<32x32xf32>
    %71 = tpu.matmul %69, %70, %cst_31 {dimension_numbers = #tpu.dot_dimension_numbers<[1], [0], [0], [1], [0, 0, 1, 1], [], []>} : vector<32x128xbf16>, vector<128x32xbf16>, vector<32x32xf32> -> vector<32x32xf32>
    %72 = arith.addf %0, %71 : vector<32x32xf32>
    %c0_32 = arith.constant 0 : index
    %c0_33 = arith.constant 0 : index
    %73 = vector.load %arg7[%c0_32, %c0_33] : memref<1x32xf32, #tpu.memory_space<vmem>>, vector<1x32xf32>
    %74 = vector.broadcast %73 : vector<1x32xf32> to vector<32x32xf32>
    %75 = arith.addf %72, %74 : vector<32x32xf32>
    %c0_34 = arith.constant 0 : index
    %c0_35 = arith.constant 0 : index
    %76 = vector.load %arg8[%c0_34, %c0_35] : memref<32x32xf32, #tpu.memory_space<vmem>>, vector<32x32xf32>
    tpu.vector_store %arg8[%c0_34, %c0_35], %75 {strides = array<i32>} : memref<32x32xf32, #tpu.memory_space<vmem>>, vector<32x32xf32>,
    return
  }
  func.func @transform_0(%arg0: i32) -> (i32, i32) {
    %c0_i32 = arith.constant 0 : i32
    %c0_i32_0 = arith.constant 0 : i32
    return %arg0, %c0_i32 : i32, i32
  }
  func.func @transform_1(%arg0: i32) -> (i32, i32) {
    %c0_i32 = arith.constant 0 : i32
    %c0_i32_0 = arith.constant 0 : i32
    %c0_i32_1 = arith.constant 0 : i32
    return %c0_i32, %c0_i32_0 : i32, i32
  }
  func.func @transform_2(%arg0: i32) -> (i32, i32) {
    %c0_i32 = arith.constant 0 : i32
    %c0_i32_0 = arith.constant 0 : i32
    %c0_i32_1 = arith.constant 0 : i32
    return %c0_i32, %c0_i32_0 : i32, i32
  }
  func.func @transform_3(%arg0: i32) -> (i32, i32) {
    %c0_i32 = arith.constant 0 : i32
    %c0_i32_0 = arith.constant 0 : i32
    %c0_i32_1 = arith.constant 0 : i32
    return %c0_i32, %c0_i32_0 : i32, i32
  }
  func.func @transform_4(%arg0: i32) -> (i32, i32) {
    %c0_i32 = arith.constant 0 : i32
    %c0_i32_0 = arith.constant 0 : i32
    %c0_i32_1 = arith.constant 0 : i32
    return %c0_i32, %c0_i32_0 : i32, i32
  }
  func.func @transform_5(%arg0: i32) -> (i32, i32) {
    %c0_i32 = arith.constant 0 : i32
    %c0_i32_0 = arith.constant 0 : i32
    %c0_i32_1 = arith.constant 0 : i32
    return %c0_i32, %c0_i32_0 : i32, i32
  }
  func.func @transform_6(%arg0: i32) -> (i32, i32) {
    %c0_i32 = arith.constant 0 : i32
    %c0_i32_0 = arith.constant 0 : i32
    %c0_i32_1 = arith.constant 0 : i32
    return %c0_i32, %c0_i32_0 : i32, i32
  }
  func.func @transform_7(%arg0: i32) -> (i32, i32) {
    %c0_i32 = arith.constant 0 : i32
    %c0_i32_0 = arith.constant 0 : i32
    return %arg0, %c0_i32 : i32, i32
  }
}

module attributes {stable_mosaic.version = 11 : i64} {
  func.func @_swin_attn_kernel(%arg0: i32, %arg1: memref<4x4x32xf32, #tpu.memory_space<vmem>>, %arg2: memref<1x32xf32, #tpu.memory_space<vmem>>, %arg3: memref<1x32xf32, #tpu.memory_space<vmem>>, %arg4: memref<32x96xbf16, #tpu.memory_space<vmem>>, %arg5: memref<1x96xf32, #tpu.memory_space<vmem>>, %arg6: memref<32x32xbf16, #tpu.memory_space<vmem>>, %arg7: memref<1x32xf32, #tpu.memory_space<vmem>>, %arg8: memref<2x4x4xf32, #tpu.memory_space<vmem>>, %arg9: memref<4x4x4xf32, #tpu.memory_space<vmem>>, %arg10: memref<4x4x32xf32, #tpu.memory_space<vmem>>) attributes {dimension_semantics = [#tpu.dimension_semantics<parallel>], iteration_bounds = array<i64: 2>, scalar_prefetch = 0 : i64, scratch_operands = 0 : i64, tpu.core_type = #tpu.core_type<tc>, window_params = [{transform_indices = @transform_0, window_bounds = array<i64: 4, 4, 32>}, {pipeline_mode = #tpu.pipeline_mode<synchronous>, transform_indices = @transform_1, window_bounds = array<i64: 1, 32>}, {pipeline_mode = #tpu.pipeline_mode<synchronous>, transform_indices = @transform_2, window_bounds = array<i64: 1, 32>}, {pipeline_mode = #tpu.pipeline_mode<synchronous>, transform_indices = @transform_3, window_bounds = array<i64: 32, 96>}, {pipeline_mode = #tpu.pipeline_mode<synchronous>, transform_indices = @transform_4, window_bounds = array<i64: 1, 96>}, {pipeline_mode = #tpu.pipeline_mode<synchronous>, transform_indices = @transform_5, window_bounds = array<i64: 32, 32>}, {pipeline_mode = #tpu.pipeline_mode<synchronous>, transform_indices = @transform_6, window_bounds = array<i64: 1, 32>}, {pipeline_mode = #tpu.pipeline_mode<synchronous>, transform_indices = @transform_7, window_bounds = array<i64: 2, 4, 4>}, {transform_indices = @transform_8, window_bounds = array<i64: 4, 4, 4>}, {transform_indices = @transform_9, window_bounds = array<i64: 4, 4, 32>}]} {
    %c0 = arith.constant 0 : index
    %c0_0 = arith.constant 0 : index
    %c0_1 = arith.constant 0 : index
    %0 = vector.load %arg1[%c0, %c0_0, %c0_1] : memref<4x4x32xf32, #tpu.memory_space<vmem>>, vector<4x4x32xf32>
    %1 = vector.shape_cast %0 : vector<4x4x32xf32> to vector<16x32xf32>
    %c0_2 = arith.constant 0 : index
    %c0_3 = arith.constant 0 : index
    %2 = vector.load %arg2[%c0_2, %c0_3] : memref<1x32xf32, #tpu.memory_space<vmem>>, vector<1x32xf32>
    %c0_4 = arith.constant 0 : index
    %c0_5 = arith.constant 0 : index
    %3 = vector.load %arg3[%c0_4, %c0_5] : memref<1x32xf32, #tpu.memory_space<vmem>>, vector<1x32xf32>
    %cst = arith.constant dense<0.000000e+00> : vector<16xf32>
    %4 = vector.multi_reduction <add>, %1, %cst [1] : vector<16x32xf32> to vector<16xf32>
    %5 = vector.shape_cast %4 : vector<16xf32> to vector<16x1xf32>
    %cst_6 = arith.constant 3.200000e+01 : f32
    %6 = vector.broadcast %cst_6 : f32 to vector<16x1xf32>
    %7 = arith.divf %5, %6 : vector<16x1xf32>
    %8 = vector.broadcast %7 : vector<16x1xf32> to vector<16x32xf32>
    %9 = arith.subf %1, %8 : vector<16x32xf32>
    %10 = arith.mulf %9, %9 : vector<16x32xf32>
    %cst_7 = arith.constant dense<0.000000e+00> : vector<16xf32>
    %11 = vector.multi_reduction <add>, %10, %cst_7 [1] : vector<16x32xf32> to vector<16xf32>
    %12 = vector.shape_cast %11 : vector<16xf32> to vector<16x1xf32>
    %cst_8 = arith.constant 3.200000e+01 : f32
    %13 = vector.broadcast %cst_8 : f32 to vector<16x1xf32>
    %14 = arith.divf %12, %13 : vector<16x1xf32>
    %cst_9 = arith.constant 9.99999974E-6 : f32
    %15 = vector.broadcast %cst_9 : f32 to vector<16x1xf32>
    %16 = arith.addf %14, %15 : vector<16x1xf32>
    %17 = math.rsqrt %16 : vector<16x1xf32>
    %18 = vector.broadcast %17 : vector<16x1xf32> to vector<16x32xf32>
    %19 = arith.mulf %9, %18 : vector<16x32xf32>
    %20 = vector.broadcast %2 : vector<1x32xf32> to vector<16x32xf32>
    %21 = arith.mulf %19, %20 : vector<16x32xf32>
    %22 = vector.broadcast %3 : vector<1x32xf32> to vector<16x32xf32>
    %23 = arith.addf %21, %22 : vector<16x32xf32>
    %24 = arith.truncf %23 : vector<16x32xf32> to vector<16x32xbf16>
    %c0_10 = arith.constant 0 : index
    %c0_11 = arith.constant 0 : index
    %25 = vector.load %arg4[%c0_10, %c0_11] : memref<32x96xbf16, #tpu.memory_space<vmem>>, vector<32x96xbf16>
    %cst_12 = arith.constant dense<0.000000e+00> : vector<16x96xf32>
    %26 = tpu.matmul %24, %25, %cst_12 {dimension_numbers = #tpu.dot_dimension_numbers<[1], [0], [0], [1], [0, 0, 1, 1], [], []>} : vector<16x32xbf16>, vector<32x96xbf16>, vector<16x96xf32> -> vector<16x96xf32>
    %c0_13 = arith.constant 0 : index
    %c0_14 = arith.constant 0 : index
    %27 = vector.load %arg5[%c0_13, %c0_14] : memref<1x96xf32, #tpu.memory_space<vmem>>, vector<1x96xf32>
    %28 = vector.broadcast %27 : vector<1x96xf32> to vector<16x96xf32>
    %29 = arith.addf %26, %28 : vector<16x96xf32>
    %c0_15 = arith.constant 0 : index
    %c0_16 = arith.constant 0 : index
    %c0_17 = arith.constant 0 : index
    %30 = vector.load %arg9[%c0_15, %c0_16, %c0_17] : memref<4x4x4xf32, #tpu.memory_space<vmem>>, vector<4x4x4xf32>
    %cst_18 = arith.constant 0.000000e+00 : f32
    %31 = vector.broadcast %cst_18 : f32 to vector<16x32xf32>
    %32 = vector.extract_strided_slice %29 {offsets = [0, 0], sizes = [16, 16], strides = [1, 1]} : vector<16x96xf32> to vector<16x16xf32>
    %33 = vector.shape_cast %32 : vector<16x16xf32> to vector<4x4x16xf32>
    %34 = vector.extract_strided_slice %29 {offsets = [0, 32], sizes = [16, 16], strides = [1, 1]} : vector<16x96xf32> to vector<16x16xf32>
    %35 = vector.shape_cast %34 : vector<16x16xf32> to vector<4x4x16xf32>
    %36 = vector.extract_strided_slice %29 {offsets = [0, 64], sizes = [16, 16], strides = [1, 1]} : vector<16x96xf32> to vector<16x16xf32>
    %37 = vector.shape_cast %36 : vector<16x16xf32> to vector<4x4x16xf32>
    %cst_19 = arith.constant 2.500000e-01 : f32
    %38 = vector.broadcast %cst_19 : f32 to vector<4x4x16xf32>
    %39 = arith.mulf %33, %38 : vector<4x4x16xf32>
    %40 = arith.truncf %39 : vector<4x4x16xf32> to vector<4x4x16xbf16>
    %41 = arith.truncf %35 : vector<4x4x16xf32> to vector<4x4x16xbf16>
    "tpu.trace_start"() <{level = 10 : i32, message = "wnd,wmd->wnm"}> : () -> ()
    %cst_20 = arith.constant dense<0.000000e+00> : vector<4x4x4xf32>
    %42 = tpu.matmul %40, %41, %cst_20 {dimension_numbers = #tpu.dot_dimension_numbers<[2], [2], [1], [1], [0, 0, 0, 1, 1, 1], [0], [0]>} : vector<4x4x16xbf16>, vector<4x4x16xbf16>, vector<4x4x4xf32> -> vector<4x4x4xf32>
    "tpu.trace_stop"() : () -> ()
    %c0_21 = arith.constant 0 : index
    %c0_22 = arith.constant 0 : index
    %c0_23 = arith.constant 0 : index
    %43 = vector.load %arg8[%c0_21, %c0_22, %c0_23] : memref<2x4x4xf32, #tpu.memory_space<vmem>>, vector<1x4x4xf32>
    %44 = vector.shape_cast %43 : vector<1x4x4xf32> to vector<4x4xf32>
    %45 = vector.shape_cast %44 : vector<4x4xf32> to vector<1x4x4xf32>
    %46 = vector.broadcast %45 : vector<1x4x4xf32> to vector<4x4x4xf32>
    %47 = arith.addf %42, %46 : vector<4x4x4xf32>
    %48 = arith.addf %47, %30 : vector<4x4x4xf32>
    %cst_24 = arith.constant dense<0xFF800000> : vector<4x4xf32>
    %49 = vector.multi_reduction <maximumf>, %48, %cst_24 [2] : vector<4x4x4xf32> to vector<4x4xf32>
    %50 = vector.shape_cast %49 : vector<4x4xf32> to vector<4x4x1xf32>
    %51 = vector.broadcast %50 : vector<4x4x1xf32> to vector<4x4x4xf32>
    %52 = arith.subf %48, %51 : vector<4x4x4xf32>
    %53 = math.exp %52 : vector<4x4x4xf32>
    %cst_25 = arith.constant dense<0.000000e+00> : vector<4x4xf32>
    %54 = vector.multi_reduction <add>, %53, %cst_25 [2] : vector<4x4x4xf32> to vector<4x4xf32>
    %55 = vector.shape_cast %54 : vector<4x4xf32> to vector<4x4x1xf32>
    %56 = tpu.reciprocal %55 {approx = true} : vector<4x4x1xf32> -> vector<4x4x1xf32>
    %57 = vector.broadcast %56 : vector<4x4x1xf32> to vector<4x4x4xf32>
    %58 = arith.mulf %53, %57 : vector<4x4x4xf32>
    %59 = arith.truncf %58 : vector<4x4x4xf32> to vector<4x4x4xbf16>
    %60 = arith.truncf %37 : vector<4x4x16xf32> to vector<4x4x16xbf16>
    "tpu.trace_start"() <{level = 10 : i32, message = "wnm,wmd->wnd"}> : () -> ()
    %cst_26 = arith.constant dense<0.000000e+00> : vector<4x4x16xf32>
    %61 = tpu.matmul %59, %60, %cst_26 {dimension_numbers = #tpu.dot_dimension_numbers<[2], [1], [1], [2], [0, 0, 0, 1, 1, 2], [0], [0]>} : vector<4x4x4xbf16>, vector<4x4x16xbf16>, vector<4x4x16xf32> -> vector<4x4x16xf32>
    "tpu.trace_stop"() : () -> ()
    %c0_27 = arith.constant 0 : index
    %c0_28 = arith.constant 0 : index
    %62 = vector.load %arg6[%c0_27, %c0_28] : memref<32x32xbf16, #tpu.memory_space<vmem>>, vector<16x32xbf16>
    %63 = vector.shape_cast %61 : vector<4x4x16xf32> to vector<16x16xf32>
    %64 = arith.truncf %63 : vector<16x16xf32> to vector<16x16xbf16>
    %cst_29 = arith.constant dense<0.000000e+00> : vector<16x32xf32>
    %65 = tpu.matmul %64, %62, %cst_29 {dimension_numbers = #tpu.dot_dimension_numbers<[1], [0], [0], [1], [0, 0, 1, 1], [], []>} : vector<16x16xbf16>, vector<16x32xbf16>, vector<16x32xf32> -> vector<16x32xf32>
    %66 = arith.addf %31, %65 : vector<16x32xf32>
    %67 = vector.extract_strided_slice %29 {offsets = [0, 16], sizes = [16, 16], strides = [1, 1]} : vector<16x96xf32> to vector<16x16xf32>
    %68 = vector.shape_cast %67 : vector<16x16xf32> to vector<4x4x16xf32>
    %69 = vector.extract_strided_slice %29 {offsets = [0, 48], sizes = [16, 16], strides = [1, 1]} : vector<16x96xf32> to vector<16x16xf32>
    %70 = vector.shape_cast %69 : vector<16x16xf32> to vector<4x4x16xf32>
    %71 = vector.extract_strided_slice %29 {offsets = [0, 80], sizes = [16, 16], strides = [1, 1]} : vector<16x96xf32> to vector<16x16xf32>
    %72 = vector.shape_cast %71 : vector<16x16xf32> to vector<4x4x16xf32>
    %cst_30 = arith.constant 2.500000e-01 : f32
    %73 = vector.broadcast %cst_30 : f32 to vector<4x4x16xf32>
    %74 = arith.mulf %68, %73 : vector<4x4x16xf32>
    %75 = arith.truncf %74 : vector<4x4x16xf32> to vector<4x4x16xbf16>
    %76 = arith.truncf %70 : vector<4x4x16xf32> to vector<4x4x16xbf16>
    "tpu.trace_start"() <{level = 10 : i32, message = "wnd,wmd->wnm"}> : () -> ()
    %cst_31 = arith.constant dense<0.000000e+00> : vector<4x4x4xf32>
    %77 = tpu.matmul %75, %76, %cst_31 {dimension_numbers = #tpu.dot_dimension_numbers<[2], [2], [1], [1], [0, 0, 0, 1, 1, 1], [0], [0]>} : vector<4x4x16xbf16>, vector<4x4x16xbf16>, vector<4x4x4xf32> -> vector<4x4x4xf32>
    "tpu.trace_stop"() : () -> ()
    %c1 = arith.constant 1 : index
    %c0_32 = arith.constant 0 : index
    %c0_33 = arith.constant 0 : index
    %78 = vector.load %arg8[%c1, %c0_32, %c0_33] : memref<2x4x4xf32, #tpu.memory_space<vmem>>, vector<1x4x4xf32>
    %79 = vector.shape_cast %78 : vector<1x4x4xf32> to vector<4x4xf32>
    %80 = vector.shape_cast %79 : vector<4x4xf32> to vector<1x4x4xf32>
    %81 = vector.broadcast %80 : vector<1x4x4xf32> to vector<4x4x4xf32>
    %82 = arith.addf %77, %81 : vector<4x4x4xf32>
    %83 = arith.addf %82, %30 : vector<4x4x4xf32>
    %cst_34 = arith.constant dense<0xFF800000> : vector<4x4xf32>
    %84 = vector.multi_reduction <maximumf>, %83, %cst_34 [2] : vector<4x4x4xf32> to vector<4x4xf32>
    %85 = vector.shape_cast %84 : vector<4x4xf32> to vector<4x4x1xf32>
    %86 = vector.broadcast %85 : vector<4x4x1xf32> to vector<4x4x4xf32>
    %87 = arith.subf %83, %86 : vector<4x4x4xf32>
    %88 = math.exp %87 : vector<4x4x4xf32>
    %cst_35 = arith.constant dense<0.000000e+00> : vector<4x4xf32>
    %89 = vector.multi_reduction <add>, %88, %cst_35 [2] : vector<4x4x4xf32> to vector<4x4xf32>
    %90 = vector.shape_cast %89 : vector<4x4xf32> to vector<4x4x1xf32>
    %91 = tpu.reciprocal %90 {approx = true} : vector<4x4x1xf32> -> vector<4x4x1xf32>
    %92 = vector.broadcast %91 : vector<4x4x1xf32> to vector<4x4x4xf32>
    %93 = arith.mulf %88, %92 : vector<4x4x4xf32>
    %94 = arith.truncf %93 : vector<4x4x4xf32> to vector<4x4x4xbf16>
    %95 = arith.truncf %72 : vector<4x4x16xf32> to vector<4x4x16xbf16>
    "tpu.trace_start"() <{level = 10 : i32, message = "wnm,wmd->wnd"}> : () -> ()
    %cst_36 = arith.constant dense<0.000000e+00> : vector<4x4x16xf32>
    %96 = tpu.matmul %94, %95, %cst_36 {dimension_numbers = #tpu.dot_dimension_numbers<[2], [1], [1], [2], [0, 0, 0, 1, 1, 2], [0], [0]>} : vector<4x4x4xbf16>, vector<4x4x16xbf16>, vector<4x4x16xf32> -> vector<4x4x16xf32>
    "tpu.trace_stop"() : () -> ()
    %c16 = arith.constant 16 : index
    %c0_37 = arith.constant 0 : index
    %97 = vector.load %arg6[%c16, %c0_37] : memref<32x32xbf16, #tpu.memory_space<vmem>>, vector<16x32xbf16>
    %98 = vector.shape_cast %96 : vector<4x4x16xf32> to vector<16x16xf32>
    %99 = arith.truncf %98 : vector<16x16xf32> to vector<16x16xbf16>
    %cst_38 = arith.constant dense<0.000000e+00> : vector<16x32xf32>
    %100 = tpu.matmul %99, %97, %cst_38 {dimension_numbers = #tpu.dot_dimension_numbers<[1], [0], [0], [1], [0, 0, 1, 1], [], []>} : vector<16x16xbf16>, vector<16x32xbf16>, vector<16x32xf32> -> vector<16x32xf32>
    %101 = arith.addf %66, %100 : vector<16x32xf32>
    %c0_39 = arith.constant 0 : index
    %c0_40 = arith.constant 0 : index
    %102 = vector.load %arg7[%c0_39, %c0_40] : memref<1x32xf32, #tpu.memory_space<vmem>>, vector<1x32xf32>
    %103 = vector.broadcast %102 : vector<1x32xf32> to vector<16x32xf32>
    %104 = arith.addf %101, %103 : vector<16x32xf32>
    %105 = vector.shape_cast %104 : vector<16x32xf32> to vector<4x4x32xf32>
    %106 = arith.addf %0, %105 : vector<4x4x32xf32>
    %c0_41 = arith.constant 0 : index
    %c0_42 = arith.constant 0 : index
    %c0_43 = arith.constant 0 : index
    %107 = vector.load %arg10[%c0_41, %c0_42, %c0_43] : memref<4x4x32xf32, #tpu.memory_space<vmem>>, vector<4x4x32xf32>
    tpu.vector_store %arg10[%c0_41, %c0_42, %c0_43], %106 {strides = array<i32>} : memref<4x4x32xf32, #tpu.memory_space<vmem>>, vector<4x4x32xf32>,
    return
  }
  func.func @transform_0(%arg0: i32) -> (i32, i32, i32) {
    %c0_i32 = arith.constant 0 : i32
    %c0_i32_0 = arith.constant 0 : i32
    %c0_i32_1 = arith.constant 0 : i32
    return %arg0, %c0_i32, %c0_i32_0 : i32, i32, i32
  }
  func.func @transform_1(%arg0: i32) -> (i32, i32) {
    %c0_i32 = arith.constant 0 : i32
    %c0_i32_0 = arith.constant 0 : i32
    %c0_i32_1 = arith.constant 0 : i32
    return %c0_i32, %c0_i32_0 : i32, i32
  }
  func.func @transform_2(%arg0: i32) -> (i32, i32) {
    %c0_i32 = arith.constant 0 : i32
    %c0_i32_0 = arith.constant 0 : i32
    %c0_i32_1 = arith.constant 0 : i32
    return %c0_i32, %c0_i32_0 : i32, i32
  }
  func.func @transform_3(%arg0: i32) -> (i32, i32) {
    %c0_i32 = arith.constant 0 : i32
    %c0_i32_0 = arith.constant 0 : i32
    %c0_i32_1 = arith.constant 0 : i32
    return %c0_i32, %c0_i32_0 : i32, i32
  }
  func.func @transform_4(%arg0: i32) -> (i32, i32) {
    %c0_i32 = arith.constant 0 : i32
    %c0_i32_0 = arith.constant 0 : i32
    %c0_i32_1 = arith.constant 0 : i32
    return %c0_i32, %c0_i32_0 : i32, i32
  }
  func.func @transform_5(%arg0: i32) -> (i32, i32) {
    %c0_i32 = arith.constant 0 : i32
    %c0_i32_0 = arith.constant 0 : i32
    %c0_i32_1 = arith.constant 0 : i32
    return %c0_i32, %c0_i32_0 : i32, i32
  }
  func.func @transform_6(%arg0: i32) -> (i32, i32) {
    %c0_i32 = arith.constant 0 : i32
    %c0_i32_0 = arith.constant 0 : i32
    %c0_i32_1 = arith.constant 0 : i32
    return %c0_i32, %c0_i32_0 : i32, i32
  }
  func.func @transform_7(%arg0: i32) -> (i32, i32, i32) {
    %c0_i32 = arith.constant 0 : i32
    %c0_i32_0 = arith.constant 0 : i32
    %c0_i32_1 = arith.constant 0 : i32
    %c0_i32_2 = arith.constant 0 : i32
    return %c0_i32, %c0_i32_0, %c0_i32_1 : i32, i32, i32
  }
  func.func @transform_8(%arg0: i32) -> (i32, i32, i32) {
    %c1_i32 = arith.constant 1 : i32
    %c0_i32 = arith.constant 0 : i32
    %0 = arith.cmpi eq, %c1_i32, %c0_i32 : i32
    %c1_i32_0 = arith.constant 1 : i32
    %1 = arith.select %0, %c1_i32_0, %c1_i32 : i32
    %2 = arith.remsi %arg0, %1 : i32
    %c0_i32_1 = arith.constant 0 : i32
    %3 = arith.cmpi ne, %2, %c0_i32_1 : i32
    %c0_i32_2 = arith.constant 0 : i32
    %4 = arith.cmpi slt, %2, %c0_i32_2 : i32
    %c0_i32_3 = arith.constant 0 : i32
    %5 = arith.cmpi slt, %1, %c0_i32_3 : i32
    %6 = arith.xori %4, %5 : i1
    %7 = arith.andi %6, %3 : i1
    %8 = arith.addi %2, %1 : i32
    %9 = arith.select %7, %8, %2 : i32
    %c0_i32_4 = arith.constant 0 : i32
    %c0_i32_5 = arith.constant 0 : i32
    %c0_i32_6 = arith.constant 0 : i32
    return %9, %c0_i32_4, %c0_i32_5 : i32, i32, i32
  }
  func.func @transform_9(%arg0: i32) -> (i32, i32, i32) {
    %c0_i32 = arith.constant 0 : i32
    %c0_i32_0 = arith.constant 0 : i32
    %c0_i32_1 = arith.constant 0 : i32
    return %arg0, %c0_i32, %c0_i32_0 : i32, i32, i32
  }
}

module attributes {stable_mosaic.version = 11 : i64} {
  func.func @_ln_mm_kernel(%arg0: i32, %arg1: i32, %arg2: memref<8x128xf32, #tpu.memory_space<vmem>>, %arg3: memref<1x128xf32, #tpu.memory_space<vmem>>, %arg4: memref<1x128xf32, #tpu.memory_space<vmem>>, %arg5: memref<128x128xbf16, #tpu.memory_space<vmem>>, %arg6: memref<1x128xf32, #tpu.memory_space<vmem>>, %arg7: memref<8x128xf32, #tpu.memory_space<vmem>>) attributes {dimension_semantics = [#tpu.dimension_semantics<parallel>, #tpu.dimension_semantics<parallel>], iteration_bounds = array<i64: 1, 1>, scalar_prefetch = 0 : i64, scratch_operands = 0 : i64, tpu.core_type = #tpu.core_type<tc>, window_params = [{transform_indices = @transform_0, window_bounds = array<i64: 8, 128>}, {pipeline_mode = #tpu.pipeline_mode<synchronous>, transform_indices = @transform_1, window_bounds = array<i64: 1, 128>}, {pipeline_mode = #tpu.pipeline_mode<synchronous>, transform_indices = @transform_2, window_bounds = array<i64: 1, 128>}, {transform_indices = @transform_3, window_bounds = array<i64: 128, 128>}, {transform_indices = @transform_4, window_bounds = array<i64: 1, 128>}, {transform_indices = @transform_5, window_bounds = array<i64: 8, 128>}]} {
    %c0 = arith.constant 0 : index
    %c0_0 = arith.constant 0 : index
    %0 = vector.load %arg2[%c0, %c0_0] : memref<8x128xf32, #tpu.memory_space<vmem>>, vector<8x128xf32>
    %c0_1 = arith.constant 0 : index
    %c0_2 = arith.constant 0 : index
    %1 = vector.load %arg3[%c0_1, %c0_2] : memref<1x128xf32, #tpu.memory_space<vmem>>, vector<1x128xf32>
    %c0_3 = arith.constant 0 : index
    %c0_4 = arith.constant 0 : index
    %2 = vector.load %arg4[%c0_3, %c0_4] : memref<1x128xf32, #tpu.memory_space<vmem>>, vector<1x128xf32>
    %cst = arith.constant dense<0.000000e+00> : vector<8xf32>
    %3 = vector.multi_reduction <add>, %0, %cst [1] : vector<8x128xf32> to vector<8xf32>
    %4 = vector.shape_cast %3 : vector<8xf32> to vector<8x1xf32>
    %cst_5 = arith.constant 1.280000e+02 : f32
    %5 = vector.broadcast %cst_5 : f32 to vector<8x1xf32>
    %6 = arith.divf %4, %5 : vector<8x1xf32>
    %7 = vector.broadcast %6 : vector<8x1xf32> to vector<8x128xf32>
    %8 = arith.subf %0, %7 : vector<8x128xf32>
    %9 = arith.mulf %8, %8 : vector<8x128xf32>
    %cst_6 = arith.constant dense<0.000000e+00> : vector<8xf32>
    %10 = vector.multi_reduction <add>, %9, %cst_6 [1] : vector<8x128xf32> to vector<8xf32>
    %11 = vector.shape_cast %10 : vector<8xf32> to vector<8x1xf32>
    %cst_7 = arith.constant 1.280000e+02 : f32
    %12 = vector.broadcast %cst_7 : f32 to vector<8x1xf32>
    %13 = arith.divf %11, %12 : vector<8x1xf32>
    %cst_8 = arith.constant 9.99999974E-6 : f32
    %14 = vector.broadcast %cst_8 : f32 to vector<8x1xf32>
    %15 = arith.addf %13, %14 : vector<8x1xf32>
    %16 = math.rsqrt %15 : vector<8x1xf32>
    %17 = vector.broadcast %16 : vector<8x1xf32> to vector<8x128xf32>
    %18 = arith.mulf %8, %17 : vector<8x128xf32>
    %19 = vector.broadcast %1 : vector<1x128xf32> to vector<8x128xf32>
    %20 = arith.mulf %18, %19 : vector<8x128xf32>
    %21 = vector.broadcast %2 : vector<1x128xf32> to vector<8x128xf32>
    %22 = arith.addf %20, %21 : vector<8x128xf32>
    %23 = arith.truncf %22 : vector<8x128xf32> to vector<8x128xbf16>
    %c0_9 = arith.constant 0 : index
    %c0_10 = arith.constant 0 : index
    %24 = vector.load %arg5[%c0_9, %c0_10] : memref<128x128xbf16, #tpu.memory_space<vmem>>, vector<128x128xbf16>
    %cst_11 = arith.constant dense<0.000000e+00> : vector<8x128xf32>
    %25 = tpu.matmul %23, %24, %cst_11 {dimension_numbers = #tpu.dot_dimension_numbers<[1], [0], [0], [1], [0, 0, 1, 1], [], []>} : vector<8x128xbf16>, vector<128x128xbf16>, vector<8x128xf32> -> vector<8x128xf32>
    %c0_12 = arith.constant 0 : index
    %c0_13 = arith.constant 0 : index
    %26 = vector.load %arg6[%c0_12, %c0_13] : memref<1x128xf32, #tpu.memory_space<vmem>>, vector<1x128xf32>
    %27 = vector.broadcast %26 : vector<1x128xf32> to vector<8x128xf32>
    %28 = arith.addf %25, %27 : vector<8x128xf32>
    %c0_14 = arith.constant 0 : index
    %c0_15 = arith.constant 0 : index
    %29 = vector.load %arg7[%c0_14, %c0_15] : memref<8x128xf32, #tpu.memory_space<vmem>>, vector<8x128xf32>
    tpu.vector_store %arg7[%c0_14, %c0_15], %28 {strides = array<i32>} : memref<8x128xf32, #tpu.memory_space<vmem>>, vector<8x128xf32>,
    return
  }
  func.func @transform_0(%arg0: i32, %arg1: i32) -> (i32, i32) {
    %c0_i32 = arith.constant 0 : i32
    %c0_i32_0 = arith.constant 0 : i32
    return %arg0, %c0_i32 : i32, i32
  }
  func.func @transform_1(%arg0: i32, %arg1: i32) -> (i32, i32) {
    %c0_i32 = arith.constant 0 : i32
    %c0_i32_0 = arith.constant 0 : i32
    %c0_i32_1 = arith.constant 0 : i32
    return %c0_i32, %c0_i32_0 : i32, i32
  }
  func.func @transform_2(%arg0: i32, %arg1: i32) -> (i32, i32) {
    %c0_i32 = arith.constant 0 : i32
    %c0_i32_0 = arith.constant 0 : i32
    %c0_i32_1 = arith.constant 0 : i32
    return %c0_i32, %c0_i32_0 : i32, i32
  }
  func.func @transform_3(%arg0: i32, %arg1: i32) -> (i32, i32) {
    %c0_i32 = arith.constant 0 : i32
    %c0_i32_0 = arith.constant 0 : i32
    return %c0_i32, %arg1 : i32, i32
  }
  func.func @transform_4(%arg0: i32, %arg1: i32) -> (i32, i32) {
    %c0_i32 = arith.constant 0 : i32
    %c0_i32_0 = arith.constant 0 : i32
    return %c0_i32, %arg1 : i32, i32
  }
  func.func @transform_5(%arg0: i32, %arg1: i32) -> (i32, i32) {
    %c0_i32 = arith.constant 0 : i32
    return %arg0, %arg1 : i32, i32
  }
}

module attributes {stable_mosaic.version = 11 : i64} {
  func.func @_swin_attn_kernel(%arg0: i32, %arg1: memref<1x4x64xf32, #tpu.memory_space<vmem>>, %arg2: memref<1x64xf32, #tpu.memory_space<vmem>>, %arg3: memref<1x64xf32, #tpu.memory_space<vmem>>, %arg4: memref<64x192xbf16, #tpu.memory_space<vmem>>, %arg5: memref<1x192xf32, #tpu.memory_space<vmem>>, %arg6: memref<64x64xbf16, #tpu.memory_space<vmem>>, %arg7: memref<1x64xf32, #tpu.memory_space<vmem>>, %arg8: memref<4x4x4xf32, #tpu.memory_space<vmem>>, %arg9: memref<1x4x4xf32, #tpu.memory_space<vmem>>, %arg10: memref<1x4x64xf32, #tpu.memory_space<vmem>>) attributes {dimension_semantics = [#tpu.dimension_semantics<parallel>], iteration_bounds = array<i64: 2>, scalar_prefetch = 0 : i64, scratch_operands = 0 : i64, tpu.core_type = #tpu.core_type<tc>, window_params = [{transform_indices = @transform_0, window_bounds = array<i64: 1, 4, 64>}, {pipeline_mode = #tpu.pipeline_mode<synchronous>, transform_indices = @transform_1, window_bounds = array<i64: 1, 64>}, {pipeline_mode = #tpu.pipeline_mode<synchronous>, transform_indices = @transform_2, window_bounds = array<i64: 1, 64>}, {pipeline_mode = #tpu.pipeline_mode<synchronous>, transform_indices = @transform_3, window_bounds = array<i64: 64, 192>}, {pipeline_mode = #tpu.pipeline_mode<synchronous>, transform_indices = @transform_4, window_bounds = array<i64: 1, 192>}, {pipeline_mode = #tpu.pipeline_mode<synchronous>, transform_indices = @transform_5, window_bounds = array<i64: 64, 64>}, {pipeline_mode = #tpu.pipeline_mode<synchronous>, transform_indices = @transform_6, window_bounds = array<i64: 1, 64>}, {pipeline_mode = #tpu.pipeline_mode<synchronous>, transform_indices = @transform_7, window_bounds = array<i64: 4, 4, 4>}, {transform_indices = @transform_8, window_bounds = array<i64: 1, 4, 4>}, {transform_indices = @transform_9, window_bounds = array<i64: 1, 4, 64>}]} {
    %c0 = arith.constant 0 : index
    %c0_0 = arith.constant 0 : index
    %c0_1 = arith.constant 0 : index
    %0 = vector.load %arg1[%c0, %c0_0, %c0_1] : memref<1x4x64xf32, #tpu.memory_space<vmem>>, vector<1x4x64xf32>
    %1 = vector.shape_cast %0 : vector<1x4x64xf32> to vector<4x64xf32>
    %c0_2 = arith.constant 0 : index
    %c0_3 = arith.constant 0 : index
    %2 = vector.load %arg2[%c0_2, %c0_3] : memref<1x64xf32, #tpu.memory_space<vmem>>, vector<1x64xf32>
    %c0_4 = arith.constant 0 : index
    %c0_5 = arith.constant 0 : index
    %3 = vector.load %arg3[%c0_4, %c0_5] : memref<1x64xf32, #tpu.memory_space<vmem>>, vector<1x64xf32>
    %cst = arith.constant dense<0.000000e+00> : vector<4xf32>
    %4 = vector.multi_reduction <add>, %1, %cst [1] : vector<4x64xf32> to vector<4xf32>
    %5 = vector.shape_cast %4 : vector<4xf32> to vector<4x1xf32>
    %cst_6 = arith.constant 6.400000e+01 : f32
    %6 = vector.broadcast %cst_6 : f32 to vector<4x1xf32>
    %7 = arith.divf %5, %6 : vector<4x1xf32>
    %8 = vector.broadcast %7 : vector<4x1xf32> to vector<4x64xf32>
    %9 = arith.subf %1, %8 : vector<4x64xf32>
    %10 = arith.mulf %9, %9 : vector<4x64xf32>
    %cst_7 = arith.constant dense<0.000000e+00> : vector<4xf32>
    %11 = vector.multi_reduction <add>, %10, %cst_7 [1] : vector<4x64xf32> to vector<4xf32>
    %12 = vector.shape_cast %11 : vector<4xf32> to vector<4x1xf32>
    %cst_8 = arith.constant 6.400000e+01 : f32
    %13 = vector.broadcast %cst_8 : f32 to vector<4x1xf32>
    %14 = arith.divf %12, %13 : vector<4x1xf32>
    %cst_9 = arith.constant 9.99999974E-6 : f32
    %15 = vector.broadcast %cst_9 : f32 to vector<4x1xf32>
    %16 = arith.addf %14, %15 : vector<4x1xf32>
    %17 = math.rsqrt %16 : vector<4x1xf32>
    %18 = vector.broadcast %17 : vector<4x1xf32> to vector<4x64xf32>
    %19 = arith.mulf %9, %18 : vector<4x64xf32>
    %20 = vector.broadcast %2 : vector<1x64xf32> to vector<4x64xf32>
    %21 = arith.mulf %19, %20 : vector<4x64xf32>
    %22 = vector.broadcast %3 : vector<1x64xf32> to vector<4x64xf32>
    %23 = arith.addf %21, %22 : vector<4x64xf32>
    %24 = arith.truncf %23 : vector<4x64xf32> to vector<4x64xbf16>
    %c0_10 = arith.constant 0 : index
    %c0_11 = arith.constant 0 : index
    %25 = vector.load %arg4[%c0_10, %c0_11] : memref<64x192xbf16, #tpu.memory_space<vmem>>, vector<64x192xbf16>
    %cst_12 = arith.constant dense<0.000000e+00> : vector<4x192xf32>
    %26 = tpu.matmul %24, %25, %cst_12 {dimension_numbers = #tpu.dot_dimension_numbers<[1], [0], [0], [1], [0, 0, 1, 1], [], []>} : vector<4x64xbf16>, vector<64x192xbf16>, vector<4x192xf32> -> vector<4x192xf32>
    %c0_13 = arith.constant 0 : index
    %c0_14 = arith.constant 0 : index
    %27 = vector.load %arg5[%c0_13, %c0_14] : memref<1x192xf32, #tpu.memory_space<vmem>>, vector<1x192xf32>
    %28 = vector.broadcast %27 : vector<1x192xf32> to vector<4x192xf32>
    %29 = arith.addf %26, %28 : vector<4x192xf32>
    %c0_15 = arith.constant 0 : index
    %c0_16 = arith.constant 0 : index
    %c0_17 = arith.constant 0 : index
    %30 = vector.load %arg9[%c0_15, %c0_16, %c0_17] : memref<1x4x4xf32, #tpu.memory_space<vmem>>, vector<1x4x4xf32>
    %cst_18 = arith.constant 0.000000e+00 : f32
    %31 = vector.broadcast %cst_18 : f32 to vector<4x64xf32>
    %32 = vector.extract_strided_slice %29 {offsets = [0, 0], sizes = [4, 16], strides = [1, 1]} : vector<4x192xf32> to vector<4x16xf32>
    %33 = vector.shape_cast %32 : vector<4x16xf32> to vector<1x4x16xf32>
    %34 = vector.extract_strided_slice %29 {offsets = [0, 64], sizes = [4, 16], strides = [1, 1]} : vector<4x192xf32> to vector<4x16xf32>
    %35 = vector.shape_cast %34 : vector<4x16xf32> to vector<1x4x16xf32>
    %36 = vector.extract_strided_slice %29 {offsets = [0, 128], sizes = [4, 16], strides = [1, 1]} : vector<4x192xf32> to vector<4x16xf32>
    %37 = vector.shape_cast %36 : vector<4x16xf32> to vector<1x4x16xf32>
    %cst_19 = arith.constant 2.500000e-01 : f32
    %38 = vector.broadcast %cst_19 : f32 to vector<1x4x16xf32>
    %39 = arith.mulf %33, %38 : vector<1x4x16xf32>
    %40 = arith.truncf %39 : vector<1x4x16xf32> to vector<1x4x16xbf16>
    %41 = arith.truncf %35 : vector<1x4x16xf32> to vector<1x4x16xbf16>
    "tpu.trace_start"() <{level = 10 : i32, message = "wnd,wmd->wnm"}> : () -> ()
    %cst_20 = arith.constant dense<0.000000e+00> : vector<1x4x4xf32>
    %42 = tpu.matmul %40, %41, %cst_20 {dimension_numbers = #tpu.dot_dimension_numbers<[2], [2], [1], [1], [0, 0, 0, 1, 1, 1], [0], [0]>} : vector<1x4x16xbf16>, vector<1x4x16xbf16>, vector<1x4x4xf32> -> vector<1x4x4xf32>
    "tpu.trace_stop"() : () -> ()
    %c0_21 = arith.constant 0 : index
    %c0_22 = arith.constant 0 : index
    %c0_23 = arith.constant 0 : index
    %43 = vector.load %arg8[%c0_21, %c0_22, %c0_23] : memref<4x4x4xf32, #tpu.memory_space<vmem>>, vector<1x4x4xf32>
    %44 = vector.shape_cast %43 : vector<1x4x4xf32> to vector<4x4xf32>
    %45 = vector.shape_cast %44 : vector<4x4xf32> to vector<1x4x4xf32>
    %46 = arith.addf %42, %45 : vector<1x4x4xf32>
    %47 = arith.addf %46, %30 : vector<1x4x4xf32>
    %cst_24 = arith.constant dense<0xFF800000> : vector<1x4xf32>
    %48 = vector.multi_reduction <maximumf>, %47, %cst_24 [2] : vector<1x4x4xf32> to vector<1x4xf32>
    %49 = vector.shape_cast %48 : vector<1x4xf32> to vector<1x4x1xf32>
    %50 = vector.broadcast %49 : vector<1x4x1xf32> to vector<1x4x4xf32>
    %51 = arith.subf %47, %50 : vector<1x4x4xf32>
    %52 = math.exp %51 : vector<1x4x4xf32>
    %cst_25 = arith.constant dense<0.000000e+00> : vector<1x4xf32>
    %53 = vector.multi_reduction <add>, %52, %cst_25 [2] : vector<1x4x4xf32> to vector<1x4xf32>
    %54 = vector.shape_cast %53 : vector<1x4xf32> to vector<1x4x1xf32>
    %55 = tpu.reciprocal %54 {approx = true} : vector<1x4x1xf32> -> vector<1x4x1xf32>
    %56 = vector.broadcast %55 : vector<1x4x1xf32> to vector<1x4x4xf32>
    %57 = arith.mulf %52, %56 : vector<1x4x4xf32>
    %58 = arith.truncf %57 : vector<1x4x4xf32> to vector<1x4x4xbf16>
    %59 = arith.truncf %37 : vector<1x4x16xf32> to vector<1x4x16xbf16>
    "tpu.trace_start"() <{level = 10 : i32, message = "wnm,wmd->wnd"}> : () -> ()
    %cst_26 = arith.constant dense<0.000000e+00> : vector<1x4x16xf32>
    %60 = tpu.matmul %58, %59, %cst_26 {dimension_numbers = #tpu.dot_dimension_numbers<[2], [1], [1], [2], [0, 0, 0, 1, 1, 2], [0], [0]>} : vector<1x4x4xbf16>, vector<1x4x16xbf16>, vector<1x4x16xf32> -> vector<1x4x16xf32>
    "tpu.trace_stop"() : () -> ()
    %c0_27 = arith.constant 0 : index
    %c0_28 = arith.constant 0 : index
    %61 = vector.load %arg6[%c0_27, %c0_28] : memref<64x64xbf16, #tpu.memory_space<vmem>>, vector<16x64xbf16>
    %62 = vector.shape_cast %60 : vector<1x4x16xf32> to vector<4x16xf32>
    %63 = arith.truncf %62 : vector<4x16xf32> to vector<4x16xbf16>
    %cst_29 = arith.constant dense<0.000000e+00> : vector<4x64xf32>
    %64 = tpu.matmul %63, %61, %cst_29 {dimension_numbers = #tpu.dot_dimension_numbers<[1], [0], [0], [1], [0, 0, 1, 1], [], []>} : vector<4x16xbf16>, vector<16x64xbf16>, vector<4x64xf32> -> vector<4x64xf32>
    %65 = arith.addf %31, %64 : vector<4x64xf32>
    %66 = vector.extract_strided_slice %29 {offsets = [0, 16], sizes = [4, 16], strides = [1, 1]} : vector<4x192xf32> to vector<4x16xf32>
    %67 = vector.shape_cast %66 : vector<4x16xf32> to vector<1x4x16xf32>
    %68 = vector.extract_strided_slice %29 {offsets = [0, 80], sizes = [4, 16], strides = [1, 1]} : vector<4x192xf32> to vector<4x16xf32>
    %69 = vector.shape_cast %68 : vector<4x16xf32> to vector<1x4x16xf32>
    %70 = vector.extract_strided_slice %29 {offsets = [0, 144], sizes = [4, 16], strides = [1, 1]} : vector<4x192xf32> to vector<4x16xf32>
    %71 = vector.shape_cast %70 : vector<4x16xf32> to vector<1x4x16xf32>
    %cst_30 = arith.constant 2.500000e-01 : f32
    %72 = vector.broadcast %cst_30 : f32 to vector<1x4x16xf32>
    %73 = arith.mulf %67, %72 : vector<1x4x16xf32>
    %74 = arith.truncf %73 : vector<1x4x16xf32> to vector<1x4x16xbf16>
    %75 = arith.truncf %69 : vector<1x4x16xf32> to vector<1x4x16xbf16>
    "tpu.trace_start"() <{level = 10 : i32, message = "wnd,wmd->wnm"}> : () -> ()
    %cst_31 = arith.constant dense<0.000000e+00> : vector<1x4x4xf32>
    %76 = tpu.matmul %74, %75, %cst_31 {dimension_numbers = #tpu.dot_dimension_numbers<[2], [2], [1], [1], [0, 0, 0, 1, 1, 1], [0], [0]>} : vector<1x4x16xbf16>, vector<1x4x16xbf16>, vector<1x4x4xf32> -> vector<1x4x4xf32>
    "tpu.trace_stop"() : () -> ()
    %c1 = arith.constant 1 : index
    %c0_32 = arith.constant 0 : index
    %c0_33 = arith.constant 0 : index
    %77 = vector.load %arg8[%c1, %c0_32, %c0_33] : memref<4x4x4xf32, #tpu.memory_space<vmem>>, vector<1x4x4xf32>
    %78 = vector.shape_cast %77 : vector<1x4x4xf32> to vector<4x4xf32>
    %79 = vector.shape_cast %78 : vector<4x4xf32> to vector<1x4x4xf32>
    %80 = arith.addf %76, %79 : vector<1x4x4xf32>
    %81 = arith.addf %80, %30 : vector<1x4x4xf32>
    %cst_34 = arith.constant dense<0xFF800000> : vector<1x4xf32>
    %82 = vector.multi_reduction <maximumf>, %81, %cst_34 [2] : vector<1x4x4xf32> to vector<1x4xf32>
    %83 = vector.shape_cast %82 : vector<1x4xf32> to vector<1x4x1xf32>
    %84 = vector.broadcast %83 : vector<1x4x1xf32> to vector<1x4x4xf32>
    %85 = arith.subf %81, %84 : vector<1x4x4xf32>
    %86 = math.exp %85 : vector<1x4x4xf32>
    %cst_35 = arith.constant dense<0.000000e+00> : vector<1x4xf32>
    %87 = vector.multi_reduction <add>, %86, %cst_35 [2] : vector<1x4x4xf32> to vector<1x4xf32>
    %88 = vector.shape_cast %87 : vector<1x4xf32> to vector<1x4x1xf32>
    %89 = tpu.reciprocal %88 {approx = true} : vector<1x4x1xf32> -> vector<1x4x1xf32>
    %90 = vector.broadcast %89 : vector<1x4x1xf32> to vector<1x4x4xf32>
    %91 = arith.mulf %86, %90 : vector<1x4x4xf32>
    %92 = arith.truncf %91 : vector<1x4x4xf32> to vector<1x4x4xbf16>
    %93 = arith.truncf %71 : vector<1x4x16xf32> to vector<1x4x16xbf16>
    "tpu.trace_start"() <{level = 10 : i32, message = "wnm,wmd->wnd"}> : () -> ()
    %cst_36 = arith.constant dense<0.000000e+00> : vector<1x4x16xf32>
    %94 = tpu.matmul %92, %93, %cst_36 {dimension_numbers = #tpu.dot_dimension_numbers<[2], [1], [1], [2], [0, 0, 0, 1, 1, 2], [0], [0]>} : vector<1x4x4xbf16>, vector<1x4x16xbf16>, vector<1x4x16xf32> -> vector<1x4x16xf32>
    "tpu.trace_stop"() : () -> ()
    %c16 = arith.constant 16 : index
    %c0_37 = arith.constant 0 : index
    %95 = vector.load %arg6[%c16, %c0_37] : memref<64x64xbf16, #tpu.memory_space<vmem>>, vector<16x64xbf16>
    %96 = vector.shape_cast %94 : vector<1x4x16xf32> to vector<4x16xf32>
    %97 = arith.truncf %96 : vector<4x16xf32> to vector<4x16xbf16>
    %cst_38 = arith.constant dense<0.000000e+00> : vector<4x64xf32>
    %98 = tpu.matmul %97, %95, %cst_38 {dimension_numbers = #tpu.dot_dimension_numbers<[1], [0], [0], [1], [0, 0, 1, 1], [], []>} : vector<4x16xbf16>, vector<16x64xbf16>, vector<4x64xf32> -> vector<4x64xf32>
    %99 = arith.addf %65, %98 : vector<4x64xf32>
    %100 = vector.extract_strided_slice %29 {offsets = [0, 32], sizes = [4, 16], strides = [1, 1]} : vector<4x192xf32> to vector<4x16xf32>
    %101 = vector.shape_cast %100 : vector<4x16xf32> to vector<1x4x16xf32>
    %102 = vector.extract_strided_slice %29 {offsets = [0, 96], sizes = [4, 16], strides = [1, 1]} : vector<4x192xf32> to vector<4x16xf32>
    %103 = vector.shape_cast %102 : vector<4x16xf32> to vector<1x4x16xf32>
    %104 = vector.extract_strided_slice %29 {offsets = [0, 160], sizes = [4, 16], strides = [1, 1]} : vector<4x192xf32> to vector<4x16xf32>
    %105 = vector.shape_cast %104 : vector<4x16xf32> to vector<1x4x16xf32>
    %cst_39 = arith.constant 2.500000e-01 : f32
    %106 = vector.broadcast %cst_39 : f32 to vector<1x4x16xf32>
    %107 = arith.mulf %101, %106 : vector<1x4x16xf32>
    %108 = arith.truncf %107 : vector<1x4x16xf32> to vector<1x4x16xbf16>
    %109 = arith.truncf %103 : vector<1x4x16xf32> to vector<1x4x16xbf16>
    "tpu.trace_start"() <{level = 10 : i32, message = "wnd,wmd->wnm"}> : () -> ()
    %cst_40 = arith.constant dense<0.000000e+00> : vector<1x4x4xf32>
    %110 = tpu.matmul %108, %109, %cst_40 {dimension_numbers = #tpu.dot_dimension_numbers<[2], [2], [1], [1], [0, 0, 0, 1, 1, 1], [0], [0]>} : vector<1x4x16xbf16>, vector<1x4x16xbf16>, vector<1x4x4xf32> -> vector<1x4x4xf32>
    "tpu.trace_stop"() : () -> ()
    %c2 = arith.constant 2 : index
    %c0_41 = arith.constant 0 : index
    %c0_42 = arith.constant 0 : index
    %111 = vector.load %arg8[%c2, %c0_41, %c0_42] : memref<4x4x4xf32, #tpu.memory_space<vmem>>, vector<1x4x4xf32>
    %112 = vector.shape_cast %111 : vector<1x4x4xf32> to vector<4x4xf32>
    %113 = vector.shape_cast %112 : vector<4x4xf32> to vector<1x4x4xf32>
    %114 = arith.addf %110, %113 : vector<1x4x4xf32>
    %115 = arith.addf %114, %30 : vector<1x4x4xf32>
    %cst_43 = arith.constant dense<0xFF800000> : vector<1x4xf32>
    %116 = vector.multi_reduction <maximumf>, %115, %cst_43 [2] : vector<1x4x4xf32> to vector<1x4xf32>
    %117 = vector.shape_cast %116 : vector<1x4xf32> to vector<1x4x1xf32>
    %118 = vector.broadcast %117 : vector<1x4x1xf32> to vector<1x4x4xf32>
    %119 = arith.subf %115, %118 : vector<1x4x4xf32>
    %120 = math.exp %119 : vector<1x4x4xf32>
    %cst_44 = arith.constant dense<0.000000e+00> : vector<1x4xf32>
    %121 = vector.multi_reduction <add>, %120, %cst_44 [2] : vector<1x4x4xf32> to vector<1x4xf32>
    %122 = vector.shape_cast %121 : vector<1x4xf32> to vector<1x4x1xf32>
    %123 = tpu.reciprocal %122 {approx = true} : vector<1x4x1xf32> -> vector<1x4x1xf32>
    %124 = vector.broadcast %123 : vector<1x4x1xf32> to vector<1x4x4xf32>
    %125 = arith.mulf %120, %124 : vector<1x4x4xf32>
    %126 = arith.truncf %125 : vector<1x4x4xf32> to vector<1x4x4xbf16>
    %127 = arith.truncf %105 : vector<1x4x16xf32> to vector<1x4x16xbf16>
    "tpu.trace_start"() <{level = 10 : i32, message = "wnm,wmd->wnd"}> : () -> ()
    %cst_45 = arith.constant dense<0.000000e+00> : vector<1x4x16xf32>
    %128 = tpu.matmul %126, %127, %cst_45 {dimension_numbers = #tpu.dot_dimension_numbers<[2], [1], [1], [2], [0, 0, 0, 1, 1, 2], [0], [0]>} : vector<1x4x4xbf16>, vector<1x4x16xbf16>, vector<1x4x16xf32> -> vector<1x4x16xf32>
    "tpu.trace_stop"() : () -> ()
    %c32 = arith.constant 32 : index
    %c0_46 = arith.constant 0 : index
    %129 = vector.load %arg6[%c32, %c0_46] : memref<64x64xbf16, #tpu.memory_space<vmem>>, vector<16x64xbf16>
    %130 = vector.shape_cast %128 : vector<1x4x16xf32> to vector<4x16xf32>
    %131 = arith.truncf %130 : vector<4x16xf32> to vector<4x16xbf16>
    %cst_47 = arith.constant dense<0.000000e+00> : vector<4x64xf32>
    %132 = tpu.matmul %131, %129, %cst_47 {dimension_numbers = #tpu.dot_dimension_numbers<[1], [0], [0], [1], [0, 0, 1, 1], [], []>} : vector<4x16xbf16>, vector<16x64xbf16>, vector<4x64xf32> -> vector<4x64xf32>
    %133 = arith.addf %99, %132 : vector<4x64xf32>
    %134 = vector.extract_strided_slice %29 {offsets = [0, 48], sizes = [4, 16], strides = [1, 1]} : vector<4x192xf32> to vector<4x16xf32>
    %135 = vector.shape_cast %134 : vector<4x16xf32> to vector<1x4x16xf32>
    %136 = vector.extract_strided_slice %29 {offsets = [0, 112], sizes = [4, 16], strides = [1, 1]} : vector<4x192xf32> to vector<4x16xf32>
    %137 = vector.shape_cast %136 : vector<4x16xf32> to vector<1x4x16xf32>
    %138 = vector.extract_strided_slice %29 {offsets = [0, 176], sizes = [4, 16], strides = [1, 1]} : vector<4x192xf32> to vector<4x16xf32>
    %139 = vector.shape_cast %138 : vector<4x16xf32> to vector<1x4x16xf32>
    %cst_48 = arith.constant 2.500000e-01 : f32
    %140 = vector.broadcast %cst_48 : f32 to vector<1x4x16xf32>
    %141 = arith.mulf %135, %140 : vector<1x4x16xf32>
    %142 = arith.truncf %141 : vector<1x4x16xf32> to vector<1x4x16xbf16>
    %143 = arith.truncf %137 : vector<1x4x16xf32> to vector<1x4x16xbf16>
    "tpu.trace_start"() <{level = 10 : i32, message = "wnd,wmd->wnm"}> : () -> ()
    %cst_49 = arith.constant dense<0.000000e+00> : vector<1x4x4xf32>
    %144 = tpu.matmul %142, %143, %cst_49 {dimension_numbers = #tpu.dot_dimension_numbers<[2], [2], [1], [1], [0, 0, 0, 1, 1, 1], [0], [0]>} : vector<1x4x16xbf16>, vector<1x4x16xbf16>, vector<1x4x4xf32> -> vector<1x4x4xf32>
    "tpu.trace_stop"() : () -> ()
    %c3 = arith.constant 3 : index
    %c0_50 = arith.constant 0 : index
    %c0_51 = arith.constant 0 : index
    %145 = vector.load %arg8[%c3, %c0_50, %c0_51] : memref<4x4x4xf32, #tpu.memory_space<vmem>>, vector<1x4x4xf32>
    %146 = vector.shape_cast %145 : vector<1x4x4xf32> to vector<4x4xf32>
    %147 = vector.shape_cast %146 : vector<4x4xf32> to vector<1x4x4xf32>
    %148 = arith.addf %144, %147 : vector<1x4x4xf32>
    %149 = arith.addf %148, %30 : vector<1x4x4xf32>
    %cst_52 = arith.constant dense<0xFF800000> : vector<1x4xf32>
    %150 = vector.multi_reduction <maximumf>, %149, %cst_52 [2] : vector<1x4x4xf32> to vector<1x4xf32>
    %151 = vector.shape_cast %150 : vector<1x4xf32> to vector<1x4x1xf32>
    %152 = vector.broadcast %151 : vector<1x4x1xf32> to vector<1x4x4xf32>
    %153 = arith.subf %149, %152 : vector<1x4x4xf32>
    %154 = math.exp %153 : vector<1x4x4xf32>
    %cst_53 = arith.constant dense<0.000000e+00> : vector<1x4xf32>
    %155 = vector.multi_reduction <add>, %154, %cst_53 [2] : vector<1x4x4xf32> to vector<1x4xf32>
    %156 = vector.shape_cast %155 : vector<1x4xf32> to vector<1x4x1xf32>
    %157 = tpu.reciprocal %156 {approx = true} : vector<1x4x1xf32> -> vector<1x4x1xf32>
    %158 = vector.broadcast %157 : vector<1x4x1xf32> to vector<1x4x4xf32>
    %159 = arith.mulf %154, %158 : vector<1x4x4xf32>
    %160 = arith.truncf %159 : vector<1x4x4xf32> to vector<1x4x4xbf16>
    %161 = arith.truncf %139 : vector<1x4x16xf32> to vector<1x4x16xbf16>
    "tpu.trace_start"() <{level = 10 : i32, message = "wnm,wmd->wnd"}> : () -> ()
    %cst_54 = arith.constant dense<0.000000e+00> : vector<1x4x16xf32>
    %162 = tpu.matmul %160, %161, %cst_54 {dimension_numbers = #tpu.dot_dimension_numbers<[2], [1], [1], [2], [0, 0, 0, 1, 1, 2], [0], [0]>} : vector<1x4x4xbf16>, vector<1x4x16xbf16>, vector<1x4x16xf32> -> vector<1x4x16xf32>
    "tpu.trace_stop"() : () -> ()
    %c48 = arith.constant 48 : index
    %c0_55 = arith.constant 0 : index
    %163 = vector.load %arg6[%c48, %c0_55] : memref<64x64xbf16, #tpu.memory_space<vmem>>, vector<16x64xbf16>
    %164 = vector.shape_cast %162 : vector<1x4x16xf32> to vector<4x16xf32>
    %165 = arith.truncf %164 : vector<4x16xf32> to vector<4x16xbf16>
    %cst_56 = arith.constant dense<0.000000e+00> : vector<4x64xf32>
    %166 = tpu.matmul %165, %163, %cst_56 {dimension_numbers = #tpu.dot_dimension_numbers<[1], [0], [0], [1], [0, 0, 1, 1], [], []>} : vector<4x16xbf16>, vector<16x64xbf16>, vector<4x64xf32> -> vector<4x64xf32>
    %167 = arith.addf %133, %166 : vector<4x64xf32>
    %c0_57 = arith.constant 0 : index
    %c0_58 = arith.constant 0 : index
    %168 = vector.load %arg7[%c0_57, %c0_58] : memref<1x64xf32, #tpu.memory_space<vmem>>, vector<1x64xf32>
    %169 = vector.broadcast %168 : vector<1x64xf32> to vector<4x64xf32>
    %170 = arith.addf %167, %169 : vector<4x64xf32>
    %171 = vector.shape_cast %170 : vector<4x64xf32> to vector<1x4x64xf32>
    %172 = arith.addf %0, %171 : vector<1x4x64xf32>
    %c0_59 = arith.constant 0 : index
    %c0_60 = arith.constant 0 : index
    %c0_61 = arith.constant 0 : index
    %173 = vector.load %arg10[%c0_59, %c0_60, %c0_61] : memref<1x4x64xf32, #tpu.memory_space<vmem>>, vector<1x4x64xf32>
    tpu.vector_store %arg10[%c0_59, %c0_60, %c0_61], %172 {strides = array<i32>} : memref<1x4x64xf32, #tpu.memory_space<vmem>>, vector<1x4x64xf32>,
    return
  }
  func.func @transform_0(%arg0: i32) -> (i32, i32, i32) {
    %c0_i32 = arith.constant 0 : i32
    %c0_i32_0 = arith.constant 0 : i32
    %c0_i32_1 = arith.constant 0 : i32
    return %arg0, %c0_i32, %c0_i32_0 : i32, i32, i32
  }
  func.func @transform_1(%arg0: i32) -> (i32, i32) {
    %c0_i32 = arith.constant 0 : i32
    %c0_i32_0 = arith.constant 0 : i32
    %c0_i32_1 = arith.constant 0 : i32
    return %c0_i32, %c0_i32_0 : i32, i32
  }
  func.func @transform_2(%arg0: i32) -> (i32, i32) {
    %c0_i32 = arith.constant 0 : i32
    %c0_i32_0 = arith.constant 0 : i32
    %c0_i32_1 = arith.constant 0 : i32
    return %c0_i32, %c0_i32_0 : i32, i32
  }
  func.func @transform_3(%arg0: i32) -> (i32, i32) {
    %c0_i32 = arith.constant 0 : i32
    %c0_i32_0 = arith.constant 0 : i32
    %c0_i32_1 = arith.constant 0 : i32
    return %c0_i32, %c0_i32_0 : i32, i32
  }
  func.func @transform_4(%arg0: i32) -> (i32, i32) {
    %c0_i32 = arith.constant 0 : i32
    %c0_i32_0 = arith.constant 0 : i32
    %c0_i32_1 = arith.constant 0 : i32
    return %c0_i32, %c0_i32_0 : i32, i32
  }
  func.func @transform_5(%arg0: i32) -> (i32, i32) {
    %c0_i32 = arith.constant 0 : i32
    %c0_i32_0 = arith.constant 0 : i32
    %c0_i32_1 = arith.constant 0 : i32
    return %c0_i32, %c0_i32_0 : i32, i32
  }
  func.func @transform_6(%arg0: i32) -> (i32, i32) {
    %c0_i32 = arith.constant 0 : i32
    %c0_i32_0 = arith.constant 0 : i32
    %c0_i32_1 = arith.constant 0 : i32
    return %c0_i32, %c0_i32_0 : i32, i32
  }
  func.func @transform_7(%arg0: i32) -> (i32, i32, i32) {
    %c0_i32 = arith.constant 0 : i32
    %c0_i32_0 = arith.constant 0 : i32
    %c0_i32_1 = arith.constant 0 : i32
    %c0_i32_2 = arith.constant 0 : i32
    return %c0_i32, %c0_i32_0, %c0_i32_1 : i32, i32, i32
  }
  func.func @transform_8(%arg0: i32) -> (i32, i32, i32) {
    %c1_i32 = arith.constant 1 : i32
    %c0_i32 = arith.constant 0 : i32
    %0 = arith.cmpi eq, %c1_i32, %c0_i32 : i32
    %c1_i32_0 = arith.constant 1 : i32
    %1 = arith.select %0, %c1_i32_0, %c1_i32 : i32
    %2 = arith.remsi %arg0, %1 : i32
    %c0_i32_1 = arith.constant 0 : i32
    %3 = arith.cmpi ne, %2, %c0_i32_1 : i32
    %c0_i32_2 = arith.constant 0 : i32
    %4 = arith.cmpi slt, %2, %c0_i32_2 : i32
    %c0_i32_3 = arith.constant 0 : i32
    %5 = arith.cmpi slt, %1, %c0_i32_3 : i32
    %6 = arith.xori %4, %5 : i1
    %7 = arith.andi %6, %3 : i1
    %8 = arith.addi %2, %1 : i32
    %9 = arith.select %7, %8, %2 : i32
    %c0_i32_4 = arith.constant 0 : i32
    %c0_i32_5 = arith.constant 0 : i32
    %c0_i32_6 = arith.constant 0 : i32
    return %9, %c0_i32_4, %c0_i32_5 : i32, i32, i32
  }
  func.func @transform_9(%arg0: i32) -> (i32, i32, i32) {
    %c0_i32 = arith.constant 0 : i32
    %c0_i32_0 = arith.constant 0 : i32
    %c0_i32_1 = arith.constant 0 : i32
    return %arg0, %c0_i32, %c0_i32_0 : i32, i32, i32
  }
}

module attributes {stable_mosaic.version = 11 : i64} {
  func.func @_mlp_kernel(%arg0: i32, %arg1: memref<8x64xf32, #tpu.memory_space<vmem>>, %arg2: memref<1x64xf32, #tpu.memory_space<vmem>>, %arg3: memref<1x64xf32, #tpu.memory_space<vmem>>, %arg4: memref<64x256xbf16, #tpu.memory_space<vmem>>, %arg5: memref<1x256xf32, #tpu.memory_space<vmem>>, %arg6: memref<256x64xbf16, #tpu.memory_space<vmem>>, %arg7: memref<1x64xf32, #tpu.memory_space<vmem>>, %arg8: memref<8x64xf32, #tpu.memory_space<vmem>>) attributes {dimension_semantics = [#tpu.dimension_semantics<parallel>], iteration_bounds = array<i64: 1>, scalar_prefetch = 0 : i64, scratch_operands = 0 : i64, tpu.core_type = #tpu.core_type<tc>, window_params = [{transform_indices = @transform_0, window_bounds = array<i64: 8, 64>}, {pipeline_mode = #tpu.pipeline_mode<synchronous>, transform_indices = @transform_1, window_bounds = array<i64: 1, 64>}, {pipeline_mode = #tpu.pipeline_mode<synchronous>, transform_indices = @transform_2, window_bounds = array<i64: 1, 64>}, {pipeline_mode = #tpu.pipeline_mode<synchronous>, transform_indices = @transform_3, window_bounds = array<i64: 64, 256>}, {pipeline_mode = #tpu.pipeline_mode<synchronous>, transform_indices = @transform_4, window_bounds = array<i64: 1, 256>}, {pipeline_mode = #tpu.pipeline_mode<synchronous>, transform_indices = @transform_5, window_bounds = array<i64: 256, 64>}, {pipeline_mode = #tpu.pipeline_mode<synchronous>, transform_indices = @transform_6, window_bounds = array<i64: 1, 64>}, {transform_indices = @transform_7, window_bounds = array<i64: 8, 64>}]} {
    %c0 = arith.constant 0 : index
    %c0_0 = arith.constant 0 : index
    %0 = vector.load %arg1[%c0, %c0_0] : memref<8x64xf32, #tpu.memory_space<vmem>>, vector<8x64xf32>
    %c0_1 = arith.constant 0 : index
    %c0_2 = arith.constant 0 : index
    %1 = vector.load %arg2[%c0_1, %c0_2] : memref<1x64xf32, #tpu.memory_space<vmem>>, vector<1x64xf32>
    %c0_3 = arith.constant 0 : index
    %c0_4 = arith.constant 0 : index
    %2 = vector.load %arg3[%c0_3, %c0_4] : memref<1x64xf32, #tpu.memory_space<vmem>>, vector<1x64xf32>
    %cst = arith.constant dense<0.000000e+00> : vector<8xf32>
    %3 = vector.multi_reduction <add>, %0, %cst [1] : vector<8x64xf32> to vector<8xf32>
    %4 = vector.shape_cast %3 : vector<8xf32> to vector<8x1xf32>
    %cst_5 = arith.constant 6.400000e+01 : f32
    %5 = vector.broadcast %cst_5 : f32 to vector<8x1xf32>
    %6 = arith.divf %4, %5 : vector<8x1xf32>
    %7 = vector.broadcast %6 : vector<8x1xf32> to vector<8x64xf32>
    %8 = arith.subf %0, %7 : vector<8x64xf32>
    %9 = arith.mulf %8, %8 : vector<8x64xf32>
    %cst_6 = arith.constant dense<0.000000e+00> : vector<8xf32>
    %10 = vector.multi_reduction <add>, %9, %cst_6 [1] : vector<8x64xf32> to vector<8xf32>
    %11 = vector.shape_cast %10 : vector<8xf32> to vector<8x1xf32>
    %cst_7 = arith.constant 6.400000e+01 : f32
    %12 = vector.broadcast %cst_7 : f32 to vector<8x1xf32>
    %13 = arith.divf %11, %12 : vector<8x1xf32>
    %cst_8 = arith.constant 9.99999974E-6 : f32
    %14 = vector.broadcast %cst_8 : f32 to vector<8x1xf32>
    %15 = arith.addf %13, %14 : vector<8x1xf32>
    %16 = math.rsqrt %15 : vector<8x1xf32>
    %17 = vector.broadcast %16 : vector<8x1xf32> to vector<8x64xf32>
    %18 = arith.mulf %8, %17 : vector<8x64xf32>
    %19 = vector.broadcast %1 : vector<1x64xf32> to vector<8x64xf32>
    %20 = arith.mulf %18, %19 : vector<8x64xf32>
    %21 = vector.broadcast %2 : vector<1x64xf32> to vector<8x64xf32>
    %22 = arith.addf %20, %21 : vector<8x64xf32>
    %23 = arith.truncf %22 : vector<8x64xf32> to vector<8x64xbf16>
    %c0_9 = arith.constant 0 : index
    %c0_10 = arith.constant 0 : index
    %24 = vector.load %arg4[%c0_9, %c0_10] : memref<64x256xbf16, #tpu.memory_space<vmem>>, vector<64x256xbf16>
    %cst_11 = arith.constant dense<0.000000e+00> : vector<8x256xf32>
    %25 = tpu.matmul %23, %24, %cst_11 {dimension_numbers = #tpu.dot_dimension_numbers<[1], [0], [0], [1], [0, 0, 1, 1], [], []>} : vector<8x64xbf16>, vector<64x256xbf16>, vector<8x256xf32> -> vector<8x256xf32>
    %c0_12 = arith.constant 0 : index
    %c0_13 = arith.constant 0 : index
    %26 = vector.load %arg5[%c0_12, %c0_13] : memref<1x256xf32, #tpu.memory_space<vmem>>, vector<1x256xf32>
    %27 = vector.broadcast %26 : vector<1x256xf32> to vector<8x256xf32>
    %28 = arith.addf %25, %27 : vector<8x256xf32>
    %cst_14 = arith.constant 5.000000e-01 : f32
    %29 = vector.broadcast %cst_14 : f32 to vector<8x256xf32>
    %30 = arith.mulf %29, %28 : vector<8x256xf32>
    %cst_15 = arith.constant 0.707106769 : f32
    %31 = vector.broadcast %cst_15 : f32 to vector<8x256xf32>
    %32 = arith.mulf %28, %31 : vector<8x256xf32>
    %33 = math.absf %32 : vector<8x256xf32>
    %cst_16 = arith.constant 0.327591091 : f32
    %34 = vector.broadcast %cst_16 : f32 to vector<8x256xf32>
    %35 = arith.mulf %34, %33 : vector<8x256xf32>
    %cst_17 = arith.constant 1.000000e+00 : f32
    %36 = vector.broadcast %cst_17 : f32 to vector<8x256xf32>
    %37 = arith.addf %36, %35 : vector<8x256xf32>
    %cst_18 = arith.constant 1.000000e+00 : f32
    %38 = vector.broadcast %cst_18 : f32 to vector<8x256xf32>
    %39 = arith.divf %38, %37 : vector<8x256xf32>
    %cst_19 = arith.constant 1.06140542 : f32
    %40 = vector.broadcast %cst_19 : f32 to vector<8x256xf32>
    %41 = arith.mulf %40, %39 : vector<8x256xf32>
    %cst_20 = arith.constant -1.45315206 : f32
    %42 = vector.broadcast %cst_20 : f32 to vector<8x256xf32>
    %43 = arith.addf %41, %42 : vector<8x256xf32>
    %44 = arith.mulf %43, %39 : vector<8x256xf32>
    %cst_21 = arith.constant 1.42141378 : f32
    %45 = vector.broadcast %cst_21 : f32 to vector<8x256xf32>
    %46 = arith.addf %44, %45 : vector<8x256xf32>
    %47 = arith.mulf %46, %39 : vector<8x256xf32>
    %cst_22 = arith.constant -0.284496725 : f32
    %48 = vector.broadcast %cst_22 : f32 to vector<8x256xf32>
    %49 = arith.addf %47, %48 : vector<8x256xf32>
    %50 = arith.mulf %49, %39 : vector<8x256xf32>
    %cst_23 = arith.constant 0.254829586 : f32
    %51 = vector.broadcast %cst_23 : f32 to vector<8x256xf32>
    %52 = arith.addf %50, %51 : vector<8x256xf32>
    %53 = arith.mulf %52, %39 : vector<8x256xf32>
    %cst_24 = arith.constant 0.000000e+00 : f32
    %54 = vector.broadcast %cst_24 : f32 to vector<8x256xf32>
    %55 = arith.subf %54, %33 : vector<8x256xf32>
    %56 = arith.mulf %55, %33 : vector<8x256xf32>
    %57 = math.exp %56 : vector<8x256xf32>
    %58 = arith.mulf %53, %57 : vector<8x256xf32>
    %cst_25 = arith.constant 1.000000e+00 : f32
    %59 = vector.broadcast %cst_25 : f32 to vector<8x256xf32>
    %60 = arith.subf %59, %58 : vector<8x256xf32>
    %cst_26 = arith.constant 0.000000e+00 : f32
    %61 = vector.broadcast %cst_26 : f32 to vector<8x256xf32>
    %62 = arith.cmpf oge, %32, %61 : vector<8x256xf32>
    %cst_27 = arith.constant 0.000000e+00 : f32
    %63 = vector.broadcast %cst_27 : f32 to vector<8x256xf32>
    %64 = arith.subf %63, %60 : vector<8x256xf32>
    %65 = arith.select %62, %60, %64 : vector<8x256xi1>, vector<8x256xf32>
    %cst_28 = arith.constant 1.000000e+00 : f32
    %66 = vector.broadcast %cst_28 : f32 to vector<8x256xf32>
    %67 = arith.addf %66, %65 : vector<8x256xf32>
    %68 = arith.mulf %30, %67 : vector<8x256xf32>
    %69 = arith.truncf %68 : vector<8x256xf32> to vector<8x256xbf16>
    %c0_29 = arith.constant 0 : index
    %c0_30 = arith.constant 0 : index
    %70 = vector.load %arg6[%c0_29, %c0_30] : memref<256x64xbf16, #tpu.memory_space<vmem>>, vector<256x64xbf16>
    %cst_31 = arith.constant dense<0.000000e+00> : vector<8x64xf32>
    %71 = tpu.matmul %69, %70, %cst_31 {dimension_numbers = #tpu.dot_dimension_numbers<[1], [0], [0], [1], [0, 0, 1, 1], [], []>} : vector<8x256xbf16>, vector<256x64xbf16>, vector<8x64xf32> -> vector<8x64xf32>
    %72 = arith.addf %0, %71 : vector<8x64xf32>
    %c0_32 = arith.constant 0 : index
    %c0_33 = arith.constant 0 : index
    %73 = vector.load %arg7[%c0_32, %c0_33] : memref<1x64xf32, #tpu.memory_space<vmem>>, vector<1x64xf32>
    %74 = vector.broadcast %73 : vector<1x64xf32> to vector<8x64xf32>
    %75 = arith.addf %72, %74 : vector<8x64xf32>
    %c0_34 = arith.constant 0 : index
    %c0_35 = arith.constant 0 : index
    %76 = vector.load %arg8[%c0_34, %c0_35] : memref<8x64xf32, #tpu.memory_space<vmem>>, vector<8x64xf32>
    tpu.vector_store %arg8[%c0_34, %c0_35], %75 {strides = array<i32>} : memref<8x64xf32, #tpu.memory_space<vmem>>, vector<8x64xf32>,
    return
  }
  func.func @transform_0(%arg0: i32) -> (i32, i32) {
    %c0_i32 = arith.constant 0 : i32
    %c0_i32_0 = arith.constant 0 : i32
    return %arg0, %c0_i32 : i32, i32
  }
  func.func @transform_1(%arg0: i32) -> (i32, i32) {
    %c0_i32 = arith.constant 0 : i32
    %c0_i32_0 = arith.constant 0 : i32
    %c0_i32_1 = arith.constant 0 : i32
    return %c0_i32, %c0_i32_0 : i32, i32
  }
  func.func @transform_2(%arg0: i32) -> (i32, i32) {
    %c0_i32 = arith.constant 0 : i32
    %c0_i32_0 = arith.constant 0 : i32
    %c0_i32_1 = arith.constant 0 : i32
    return %c0_i32, %c0_i32_0 : i32, i32
  }
  func.func @transform_3(%arg0: i32) -> (i32, i32) {
    %c0_i32 = arith.constant 0 : i32
    %c0_i32_0 = arith.constant 0 : i32
    %c0_i32_1 = arith.constant 0 : i32
    return %c0_i32, %c0_i32_0 : i32, i32
  }
  func.func @transform_4(%arg0: i32) -> (i32, i32) {
    %c0_i32 = arith.constant 0 : i32
    %c0_i32_0 = arith.constant 0 : i32
    %c0_i32_1 = arith.constant 0 : i32
    return %c0_i32, %c0_i32_0 : i32, i32
  }
  func.func @transform_5(%arg0: i32) -> (i32, i32) {
    %c0_i32 = arith.constant 0 : i32
    %c0_i32_0 = arith.constant 0 : i32
    %c0_i32_1 = arith.constant 0 : i32
    return %c0_i32, %c0_i32_0 : i32, i32
  }
  func.func @transform_6(%arg0: i32) -> (i32, i32) {
    %c0_i32 = arith.constant 0 : i32
    %c0_i32_0 = arith.constant 0 : i32
    %c0_i32_1 = arith.constant 0 : i32
    return %c0_i32, %c0_i32_0 : i32, i32
  }
  func.func @transform_7(%arg0: i32) -> (i32, i32) {
    %c0_i32 = arith.constant 0 : i32
    %c0_i32_0 = arith.constant 0 : i32
    return %arg0, %c0_i32 : i32, i32
  }
}

module attributes {stable_mosaic.version = 11 : i64} {
  func.func @_ln_mm_kernel(%arg0: i32, %arg1: i32, %arg2: memref<8x64xf32, #tpu.memory_space<vmem>>, %arg3: memref<1x64xf32, #tpu.memory_space<vmem>>, %arg4: memref<1x64xf32, #tpu.memory_space<vmem>>, %arg5: memref<64x128xbf16, #tpu.memory_space<vmem>>, %arg6: memref<1x128xf32, #tpu.memory_space<vmem>>, %arg7: memref<8x128xf32, #tpu.memory_space<vmem>>) attributes {dimension_semantics = [#tpu.dimension_semantics<parallel>, #tpu.dimension_semantics<parallel>], iteration_bounds = array<i64: 1, 1>, scalar_prefetch = 0 : i64, scratch_operands = 0 : i64, tpu.core_type = #tpu.core_type<tc>, window_params = [{transform_indices = @transform_0, window_bounds = array<i64: 8, 64>}, {pipeline_mode = #tpu.pipeline_mode<synchronous>, transform_indices = @transform_1, window_bounds = array<i64: 1, 64>}, {pipeline_mode = #tpu.pipeline_mode<synchronous>, transform_indices = @transform_2, window_bounds = array<i64: 1, 64>}, {transform_indices = @transform_3, window_bounds = array<i64: 64, 128>}, {transform_indices = @transform_4, window_bounds = array<i64: 1, 128>}, {transform_indices = @transform_5, window_bounds = array<i64: 8, 128>}]} {
    %c0 = arith.constant 0 : index
    %c0_0 = arith.constant 0 : index
    %0 = vector.load %arg2[%c0, %c0_0] : memref<8x64xf32, #tpu.memory_space<vmem>>, vector<8x64xf32>
    %c0_1 = arith.constant 0 : index
    %c0_2 = arith.constant 0 : index
    %1 = vector.load %arg3[%c0_1, %c0_2] : memref<1x64xf32, #tpu.memory_space<vmem>>, vector<1x64xf32>
    %c0_3 = arith.constant 0 : index
    %c0_4 = arith.constant 0 : index
    %2 = vector.load %arg4[%c0_3, %c0_4] : memref<1x64xf32, #tpu.memory_space<vmem>>, vector<1x64xf32>
    %cst = arith.constant dense<0.000000e+00> : vector<8xf32>
    %3 = vector.multi_reduction <add>, %0, %cst [1] : vector<8x64xf32> to vector<8xf32>
    %4 = vector.shape_cast %3 : vector<8xf32> to vector<8x1xf32>
    %cst_5 = arith.constant 6.400000e+01 : f32
    %5 = vector.broadcast %cst_5 : f32 to vector<8x1xf32>
    %6 = arith.divf %4, %5 : vector<8x1xf32>
    %7 = vector.broadcast %6 : vector<8x1xf32> to vector<8x64xf32>
    %8 = arith.subf %0, %7 : vector<8x64xf32>
    %9 = arith.mulf %8, %8 : vector<8x64xf32>
    %cst_6 = arith.constant dense<0.000000e+00> : vector<8xf32>
    %10 = vector.multi_reduction <add>, %9, %cst_6 [1] : vector<8x64xf32> to vector<8xf32>
    %11 = vector.shape_cast %10 : vector<8xf32> to vector<8x1xf32>
    %cst_7 = arith.constant 6.400000e+01 : f32
    %12 = vector.broadcast %cst_7 : f32 to vector<8x1xf32>
    %13 = arith.divf %11, %12 : vector<8x1xf32>
    %cst_8 = arith.constant 9.99999974E-6 : f32
    %14 = vector.broadcast %cst_8 : f32 to vector<8x1xf32>
    %15 = arith.addf %13, %14 : vector<8x1xf32>
    %16 = math.rsqrt %15 : vector<8x1xf32>
    %17 = vector.broadcast %16 : vector<8x1xf32> to vector<8x64xf32>
    %18 = arith.mulf %8, %17 : vector<8x64xf32>
    %19 = vector.broadcast %1 : vector<1x64xf32> to vector<8x64xf32>
    %20 = arith.mulf %18, %19 : vector<8x64xf32>
    %21 = vector.broadcast %2 : vector<1x64xf32> to vector<8x64xf32>
    %22 = arith.addf %20, %21 : vector<8x64xf32>
    %23 = arith.truncf %22 : vector<8x64xf32> to vector<8x64xbf16>
    %c0_9 = arith.constant 0 : index
    %c0_10 = arith.constant 0 : index
    %24 = vector.load %arg5[%c0_9, %c0_10] : memref<64x128xbf16, #tpu.memory_space<vmem>>, vector<64x128xbf16>
    %cst_11 = arith.constant dense<0.000000e+00> : vector<8x128xf32>
    %25 = tpu.matmul %23, %24, %cst_11 {dimension_numbers = #tpu.dot_dimension_numbers<[1], [0], [0], [1], [0, 0, 1, 1], [], []>} : vector<8x64xbf16>, vector<64x128xbf16>, vector<8x128xf32> -> vector<8x128xf32>
    %c0_12 = arith.constant 0 : index
    %c0_13 = arith.constant 0 : index
    %26 = vector.load %arg6[%c0_12, %c0_13] : memref<1x128xf32, #tpu.memory_space<vmem>>, vector<1x128xf32>
    %27 = vector.broadcast %26 : vector<1x128xf32> to vector<8x128xf32>
    %28 = arith.addf %25, %27 : vector<8x128xf32>
    %c0_14 = arith.constant 0 : index
    %c0_15 = arith.constant 0 : index
    %29 = vector.load %arg7[%c0_14, %c0_15] : memref<8x128xf32, #tpu.memory_space<vmem>>, vector<8x128xf32>
    tpu.vector_store %arg7[%c0_14, %c0_15], %28 {strides = array<i32>} : memref<8x128xf32, #tpu.memory_space<vmem>>, vector<8x128xf32>,
    return
  }
  func.func @transform_0(%arg0: i32, %arg1: i32) -> (i32, i32) {
    %c0_i32 = arith.constant 0 : i32
    %c0_i32_0 = arith.constant 0 : i32
    return %arg0, %c0_i32 : i32, i32
  }
  func.func @transform_1(%arg0: i32, %arg1: i32) -> (i32, i32) {
    %c0_i32 = arith.constant 0 : i32
    %c0_i32_0 = arith.constant 0 : i32
    %c0_i32_1 = arith.constant 0 : i32
    return %c0_i32, %c0_i32_0 : i32, i32
  }
  func.func @transform_2(%arg0: i32, %arg1: i32) -> (i32, i32) {
    %c0_i32 = arith.constant 0 : i32
    %c0_i32_0 = arith.constant 0 : i32
    %c0_i32_1 = arith.constant 0 : i32
    return %c0_i32, %c0_i32_0 : i32, i32
  }
  func.func @transform_3(%arg0: i32, %arg1: i32) -> (i32, i32) {
    %c0_i32 = arith.constant 0 : i32
    %c0_i32_0 = arith.constant 0 : i32
    return %c0_i32, %arg1 : i32, i32
  }
  func.func @transform_4(%arg0: i32, %arg1: i32) -> (i32, i32) {
    %c0_i32 = arith.constant 0 : i32
    %c0_i32_0 = arith.constant 0 : i32
    return %c0_i32, %arg1 : i32, i32
  }
  func.func @transform_5(%arg0: i32, %arg1: i32) -> (i32, i32) {
    %c0_i32 = arith.constant 0 : i32
    return %arg0, %arg1 : i32, i32
  }
}

module attributes {stable_mosaic.version = 11 : i64} {
  func.func @_ln_mm_kernel(%arg0: i32, %arg1: i32, %arg2: memref<32x32xf32, #tpu.memory_space<vmem>>, %arg3: memref<1x32xf32, #tpu.memory_space<vmem>>, %arg4: memref<1x32xf32, #tpu.memory_space<vmem>>, %arg5: memref<32x256xbf16, #tpu.memory_space<vmem>>, %arg6: memref<1x256xf32, #tpu.memory_space<vmem>>, %arg7: memref<32x256xf32, #tpu.memory_space<vmem>>) attributes {dimension_semantics = [#tpu.dimension_semantics<parallel>, #tpu.dimension_semantics<parallel>], iteration_bounds = array<i64: 1, 2>, scalar_prefetch = 0 : i64, scratch_operands = 0 : i64, tpu.core_type = #tpu.core_type<tc>, window_params = [{transform_indices = @transform_0, window_bounds = array<i64: 32, 32>}, {pipeline_mode = #tpu.pipeline_mode<synchronous>, transform_indices = @transform_1, window_bounds = array<i64: 1, 32>}, {pipeline_mode = #tpu.pipeline_mode<synchronous>, transform_indices = @transform_2, window_bounds = array<i64: 1, 32>}, {transform_indices = @transform_3, window_bounds = array<i64: 32, 256>}, {transform_indices = @transform_4, window_bounds = array<i64: 1, 256>}, {transform_indices = @transform_5, window_bounds = array<i64: 32, 256>}]} {
    %c0 = arith.constant 0 : index
    %c0_0 = arith.constant 0 : index
    %0 = vector.load %arg2[%c0, %c0_0] : memref<32x32xf32, #tpu.memory_space<vmem>>, vector<32x32xf32>
    %c0_1 = arith.constant 0 : index
    %c0_2 = arith.constant 0 : index
    %1 = vector.load %arg3[%c0_1, %c0_2] : memref<1x32xf32, #tpu.memory_space<vmem>>, vector<1x32xf32>
    %c0_3 = arith.constant 0 : index
    %c0_4 = arith.constant 0 : index
    %2 = vector.load %arg4[%c0_3, %c0_4] : memref<1x32xf32, #tpu.memory_space<vmem>>, vector<1x32xf32>
    %cst = arith.constant dense<0.000000e+00> : vector<32xf32>
    %3 = vector.multi_reduction <add>, %0, %cst [1] : vector<32x32xf32> to vector<32xf32>
    %4 = vector.shape_cast %3 : vector<32xf32> to vector<32x1xf32>
    %cst_5 = arith.constant 3.200000e+01 : f32
    %5 = vector.broadcast %cst_5 : f32 to vector<32x1xf32>
    %6 = arith.divf %4, %5 : vector<32x1xf32>
    %7 = vector.broadcast %6 : vector<32x1xf32> to vector<32x32xf32>
    %8 = arith.subf %0, %7 : vector<32x32xf32>
    %9 = arith.mulf %8, %8 : vector<32x32xf32>
    %cst_6 = arith.constant dense<0.000000e+00> : vector<32xf32>
    %10 = vector.multi_reduction <add>, %9, %cst_6 [1] : vector<32x32xf32> to vector<32xf32>
    %11 = vector.shape_cast %10 : vector<32xf32> to vector<32x1xf32>
    %cst_7 = arith.constant 3.200000e+01 : f32
    %12 = vector.broadcast %cst_7 : f32 to vector<32x1xf32>
    %13 = arith.divf %11, %12 : vector<32x1xf32>
    %cst_8 = arith.constant 9.99999974E-6 : f32
    %14 = vector.broadcast %cst_8 : f32 to vector<32x1xf32>
    %15 = arith.addf %13, %14 : vector<32x1xf32>
    %16 = math.rsqrt %15 : vector<32x1xf32>
    %17 = vector.broadcast %16 : vector<32x1xf32> to vector<32x32xf32>
    %18 = arith.mulf %8, %17 : vector<32x32xf32>
    %19 = vector.broadcast %1 : vector<1x32xf32> to vector<32x32xf32>
    %20 = arith.mulf %18, %19 : vector<32x32xf32>
    %21 = vector.broadcast %2 : vector<1x32xf32> to vector<32x32xf32>
    %22 = arith.addf %20, %21 : vector<32x32xf32>
    %23 = arith.truncf %22 : vector<32x32xf32> to vector<32x32xbf16>
    %c0_9 = arith.constant 0 : index
    %c0_10 = arith.constant 0 : index
    %24 = vector.load %arg5[%c0_9, %c0_10] : memref<32x256xbf16, #tpu.memory_space<vmem>>, vector<32x256xbf16>
    %cst_11 = arith.constant dense<0.000000e+00> : vector<32x256xf32>
    %25 = tpu.matmul %23, %24, %cst_11 {dimension_numbers = #tpu.dot_dimension_numbers<[1], [0], [0], [1], [0, 0, 1, 1], [], []>} : vector<32x32xbf16>, vector<32x256xbf16>, vector<32x256xf32> -> vector<32x256xf32>
    %c0_12 = arith.constant 0 : index
    %c0_13 = arith.constant 0 : index
    %26 = vector.load %arg6[%c0_12, %c0_13] : memref<1x256xf32, #tpu.memory_space<vmem>>, vector<1x256xf32>
    %27 = vector.broadcast %26 : vector<1x256xf32> to vector<32x256xf32>
    %28 = arith.addf %25, %27 : vector<32x256xf32>
    %c0_14 = arith.constant 0 : index
    %c0_15 = arith.constant 0 : index
    %29 = vector.load %arg7[%c0_14, %c0_15] : memref<32x256xf32, #tpu.memory_space<vmem>>, vector<32x256xf32>
    tpu.vector_store %arg7[%c0_14, %c0_15], %28 {strides = array<i32>} : memref<32x256xf32, #tpu.memory_space<vmem>>, vector<32x256xf32>,
    return
  }
  func.func @transform_0(%arg0: i32, %arg1: i32) -> (i32, i32) {
    %c0_i32 = arith.constant 0 : i32
    %c0_i32_0 = arith.constant 0 : i32
    return %arg0, %c0_i32 : i32, i32
  }
  func.func @transform_1(%arg0: i32, %arg1: i32) -> (i32, i32) {
    %c0_i32 = arith.constant 0 : i32
    %c0_i32_0 = arith.constant 0 : i32
    %c0_i32_1 = arith.constant 0 : i32
    return %c0_i32, %c0_i32_0 : i32, i32
  }
  func.func @transform_2(%arg0: i32, %arg1: i32) -> (i32, i32) {
    %c0_i32 = arith.constant 0 : i32
    %c0_i32_0 = arith.constant 0 : i32
    %c0_i32_1 = arith.constant 0 : i32
    return %c0_i32, %c0_i32_0 : i32, i32
  }
  func.func @transform_3(%arg0: i32, %arg1: i32) -> (i32, i32) {
    %c0_i32 = arith.constant 0 : i32
    %c0_i32_0 = arith.constant 0 : i32
    return %c0_i32, %arg1 : i32, i32
  }
  func.func @transform_4(%arg0: i32, %arg1: i32) -> (i32, i32) {
    %c0_i32 = arith.constant 0 : i32
    %c0_i32_0 = arith.constant 0 : i32
    return %c0_i32, %arg1 : i32, i32
  }
  func.func @transform_5(%arg0: i32, %arg1: i32) -> (i32, i32) {
    %c0_i32 = arith.constant 0 : i32
    return %arg0, %arg1 : i32, i32
  }
}

module attributes {stable_mosaic.version = 11 : i64} {
  func.func @_ln_kernel(%arg0: i32, %arg1: memref<512x32xf32, #tpu.memory_space<vmem>>, %arg2: memref<1x32xf32, #tpu.memory_space<vmem>>, %arg3: memref<1x32xf32, #tpu.memory_space<vmem>>, %arg4: memref<512x32xf32, #tpu.memory_space<vmem>>) attributes {dimension_semantics = [#tpu.dimension_semantics<parallel>], iteration_bounds = array<i64: 1>, scalar_prefetch = 0 : i64, scratch_operands = 0 : i64, tpu.core_type = #tpu.core_type<tc>, window_params = [{transform_indices = @transform_0, window_bounds = array<i64: 512, 32>}, {pipeline_mode = #tpu.pipeline_mode<synchronous>, transform_indices = @transform_1, window_bounds = array<i64: 1, 32>}, {pipeline_mode = #tpu.pipeline_mode<synchronous>, transform_indices = @transform_2, window_bounds = array<i64: 1, 32>}, {transform_indices = @transform_3, window_bounds = array<i64: 512, 32>}]} {
    %c0 = arith.constant 0 : index
    %c0_0 = arith.constant 0 : index
    %0 = vector.load %arg1[%c0, %c0_0] : memref<512x32xf32, #tpu.memory_space<vmem>>, vector<512x32xf32>
    %c0_1 = arith.constant 0 : index
    %c0_2 = arith.constant 0 : index
    %1 = vector.load %arg2[%c0_1, %c0_2] : memref<1x32xf32, #tpu.memory_space<vmem>>, vector<1x32xf32>
    %c0_3 = arith.constant 0 : index
    %c0_4 = arith.constant 0 : index
    %2 = vector.load %arg3[%c0_3, %c0_4] : memref<1x32xf32, #tpu.memory_space<vmem>>, vector<1x32xf32>
    %cst = arith.constant dense<0.000000e+00> : vector<512xf32>
    %3 = vector.multi_reduction <add>, %0, %cst [1] : vector<512x32xf32> to vector<512xf32>
    %4 = vector.shape_cast %3 : vector<512xf32> to vector<512x1xf32>
    %cst_5 = arith.constant 3.200000e+01 : f32
    %5 = vector.broadcast %cst_5 : f32 to vector<512x1xf32>
    %6 = arith.divf %4, %5 : vector<512x1xf32>
    %7 = vector.broadcast %6 : vector<512x1xf32> to vector<512x32xf32>
    %8 = arith.subf %0, %7 : vector<512x32xf32>
    %9 = arith.mulf %8, %8 : vector<512x32xf32>
    %cst_6 = arith.constant dense<0.000000e+00> : vector<512xf32>
    %10 = vector.multi_reduction <add>, %9, %cst_6 [1] : vector<512x32xf32> to vector<512xf32>
    %11 = vector.shape_cast %10 : vector<512xf32> to vector<512x1xf32>
    %cst_7 = arith.constant 3.200000e+01 : f32
    %12 = vector.broadcast %cst_7 : f32 to vector<512x1xf32>
    %13 = arith.divf %11, %12 : vector<512x1xf32>
    %cst_8 = arith.constant 9.99999974E-6 : f32
    %14 = vector.broadcast %cst_8 : f32 to vector<512x1xf32>
    %15 = arith.addf %13, %14 : vector<512x1xf32>
    %16 = math.rsqrt %15 : vector<512x1xf32>
    %17 = vector.broadcast %16 : vector<512x1xf32> to vector<512x32xf32>
    %18 = arith.mulf %8, %17 : vector<512x32xf32>
    %19 = vector.broadcast %1 : vector<1x32xf32> to vector<512x32xf32>
    %20 = arith.mulf %18, %19 : vector<512x32xf32>
    %21 = vector.broadcast %2 : vector<1x32xf32> to vector<512x32xf32>
    %22 = arith.addf %20, %21 : vector<512x32xf32>
    %c0_9 = arith.constant 0 : index
    %c0_10 = arith.constant 0 : index
    %23 = vector.load %arg4[%c0_9, %c0_10] : memref<512x32xf32, #tpu.memory_space<vmem>>, vector<512x32xf32>
    tpu.vector_store %arg4[%c0_9, %c0_10], %22 {strides = array<i32>} : memref<512x32xf32, #tpu.memory_space<vmem>>, vector<512x32xf32>,
    return
  }
  func.func @transform_0(%arg0: i32) -> (i32, i32) {
    %c0_i32 = arith.constant 0 : i32
    %c0_i32_0 = arith.constant 0 : i32
    return %arg0, %c0_i32 : i32, i32
  }
  func.func @transform_1(%arg0: i32) -> (i32, i32) {
    %c0_i32 = arith.constant 0 : i32
    %c0_i32_0 = arith.constant 0 : i32
    %c0_i32_1 = arith.constant 0 : i32
    return %c0_i32, %c0_i32_0 : i32, i32
  }
  func.func @transform_2(%arg0: i32) -> (i32, i32) {
    %c0_i32 = arith.constant 0 : i32
    %c0_i32_0 = arith.constant 0 : i32
    %c0_i32_1 = arith.constant 0 : i32
    return %c0_i32, %c0_i32_0 : i32, i32
  }
  func.func @transform_3(%arg0: i32) -> (i32, i32) {
    %c0_i32 = arith.constant 0 : i32
    %c0_i32_0 = arith.constant 0 : i32
    return %arg0, %c0_i32 : i32, i32
  }
}

</mosaic_0001>

<llo_original>
// kernel: _lambda_.22
$region0: #{_lambda_.22}
  #allocation0 [shape = 'u32[]', space=smem, size = 0x4, offset = 0x4, fixed_abs, tag = 'smem constant byte address 0x4 - core index']
  #allocation1 [shape = 'u32[144,128]{1,0:T(1,128)}', space=vmem, size = 0x12000, scoped, tag = 'internal scratch']
  #allocation2 [shape = 'f32[256,128]{1,0:T(8,128)}', space=vmem, size = 0x20000, scoped, tag = 'scratch operand']
  %s0 = inlined_call_operand.vmem [shape: bf16[512,128], index: 0, kind: input, shape index: {}]
  %s1 = inlined_call_operand.vmem [shape: bf16[128,128], index: 1, kind: input, shape index: {}]
  %s2 = inlined_call_operand.vmem [shape: f32[1,128], index: 2, kind: input, shape index: {}]
  %s3 = inlined_call_operand.vmem [shape: f32[512,128], index: 3, kind: output, shape index: {}]
  %s4 = sld [smem:[#allocation0]]
  $region53: #{_lambda_.22} parent=0
    _
  %s6 = ssub.s32 1, %s4
  %s7 = scalar_select 0, %s6, %s4
  loop: start=0, step=1, limit=4
  $region2: #{_lambda_.22} parent=0 // loop_pre_header
    _
  $region3: #{_lambda_.22} parent=0 // loop_header
    %s9 = sphi 0, %s13
    %p10 = scmp.ge.s32.totalorder %s9, 4
    %s16 = sphi 0, %s35
    %s17 = sphi 0, %s31
    %s18 = sphi 0, %s27
    %s19 = sphi 0, %s16
    %s20 = sphi 0, %s17
    %s21 = sphi 0, %s18
    %s22 = sphi 0, %s19
    %s23 = sphi 0, %s20
    %s24 = sphi 0, %s21
    %s40 = sphi 0, %s42
    %s43 = sphi 0, %s40
    %s44 = sphi 0, %s43
    %s60 = sphi 0, %s44
    %s68 = sphi 0, %s70
    %s71 = sphi 0, %s68
    %s72 = sphi 0, %s71
    %s88 = sphi 0, %s72
    %s94 = sphi 0, %s96
    %s97 = sphi 0, %s94
    %s98 = sphi 0, %s97
    %s114 = sphi 0, %s98
    %s122 = sphi 0, %s124
    %s125 = sphi 0, %s122
    %s126 = sphi 0, %s125
    %s142 = sphi 0, %s126
  $region4: #{_lambda_.22} parent=0 // loop_header_branch
    %12 = sbr.rel (%p10) target = $region8
  $region5: #{_lambda_.22} parent=0 // loop_body
    %s14 = ssub.s32 %s9, 1
    %s15 = ssub.s32 %s9, 2
    %s25 = sadd.s32 1, %s18
    %p26 = scmp.ge.s32.totalorder %s25, 1
    %s27 = scalar_select %p26, 0, %s25
    %s28 = sadd.s32 1, %s17
    %s29 = scalar_select %p26, %s28, %s17
    %p30 = scmp.ge.s32.totalorder %s29, 1
    %s31 = scalar_select %p30, 0, %s29
    %s32 = sadd.s32 1, %s16
    %s33 = scalar_select %p30, %s32, %s16
    %p34 = scmp.ge.s32.totalorder %s33, 2
    %s35 = scalar_select %p34, 0, %s33
    %s36 = ssub.s32 %s16, %s35
    %s37 = ssub.s32 %s18, %s27
    %s38 = sor.u32 %s36, %s37
    %p39 = scmp.eq.s32.totalorder %s38, 0
    %s41 = sadd.s32 %s40, 1
    %s42 = scalar_select %p39, %s40, %s41
    %p45 = pneg %p39
    %p46 = scmp.eq.s32.totalorder %s9, 1
    %p47 = por %p45, %p46
    %p48 = scmp.ne.s32.totalorder %s40, %s43
    %p49 = scmp.eq.s32.totalorder %s9, 0
    %p50 = por %p48, %p49
    %p51 = scmp.ne.s32.totalorder %s40, %s43
    %p52 = scmp.eq.s32.totalorder %s14, 1
    %p53 = por %p51, %p52
    %p54 = scmp.ne.s32.totalorder %s43, %s44
    %p55 = scmp.eq.s32.totalorder %s14, 0
    %p56 = por %p54, %p55
    %p57 = scmp.ne.s32.totalorder %s43, %s44
    %p58 = scmp.eq.s32.totalorder %s15, 1
    %p59 = por %p57, %p58
    %p61 = scmp.ne.s32.totalorder %s44, %s60
    %p62 = scmp.eq.s32.totalorder %s15, 0
    %p63 = por %p61, %p62
    %s64 = ssub.s32 %s18, %s27
    %s65 = ssub.s32 %s17, %s31
    %s66 = sor.u32 %s64, %s65
    %p67 = scmp.eq.s32.totalorder %s66, 0
    %s69 = sadd.s32 %s68, 1
    %s70 = scalar_select %p67, %s68, %s69
    %p73 = pneg %p67
    %p74 = scmp.eq.s32.totalorder %s9, 1
    %p75 = por %p73, %p74
    %p76 = scmp.ne.s32.totalorder %s68, %s71
    %p77 = scmp.eq.s32.totalorder %s9, 0
    %p78 = por %p76, %p77
    %p79 = scmp.ne.s32.totalorder %s68, %s71
    %p80 = scmp.eq.s32.totalorder %s14, 1
    %p81 = por %p79, %p80
    %p82 = scmp.ne.s32.totalorder %s71, %s72
    %p83 = scmp.eq.s32.totalorder %s14, 0
    %p84 = por %p82, %p83
    %p85 = scmp.ne.s32.totalorder %s71, %s72
    %p86 = scmp.eq.s32.totalorder %s15, 1
    %p87 = por %p85, %p86
    %p89 = scmp.ne.s32.totalorder %s72, %s88
    %p90 = scmp.eq.s32.totalorder %s15, 0
    %p91 = por %p89, %p90
    %s92 = ssub.s32 %s17, %s31
    %p93 = scmp.eq.s32.totalorder %s92, 0
    %s95 = sadd.s32 %s94, 1
    %s96 = scalar_select %p93, %s94, %s95
    %p99 = pneg %p93
    %p100 = scmp.eq.s32.totalorder %s9, 1
    %p101 = por %p99, %p100
    %p102 = scmp.ne.s32.totalorder %s94, %s97
    %p103 = scmp.eq.s32.totalorder %s9, 0
    %p104 = por %p102, %p103
    %p105 = scmp.ne.s32.totalorder %s94, %s97
    %p106 = scmp.eq.s32.totalorder %s14, 1
    %p107 = por %p105, %p106
    %p108 = scmp.ne.s32.totalorder %s97, %s98
    %p109 = scmp.eq.s32.totalorder %s14, 0
    %p110 = por %p108, %p109
    %p111 = scmp.ne.s32.totalorder %s97, %s98
    %p112 = scmp.eq.s32.totalorder %s15, 1
    %p113 = por %p111, %p112
    %p115 = scmp.ne.s32.totalorder %s98, %s114
    %p116 = scmp.eq.s32.totalorder %s15, 0
    %p117 = por %p115, %p116
    %s118 = ssub.s32 %s16, %s35
    %s119 = ssub.s32 %s17, %s31
    %s120 = sor.u32 %s118, %s119
    %p121 = scmp.eq.s32.totalorder %s120, 0
    %s123 = sadd.s32 %s122, 1
    %s124 = scalar_select %p121, %s122, %s123
    %p127 = pneg %p121
    %p128 = scmp.eq.s32.totalorder %s9, 1
    %p129 = por %p127, %p128
    %p130 = scmp.ne.s32.totalorder %s122, %s125
    %p131 = scmp.eq.s32.totalorder %s9, 0
    %p132 = por %p130, %p131
    %p133 = scmp.ne.s32.totalorder %s122, %s125
    %p134 = scmp.eq.s32.totalorder %s14, 1
    %p135 = por %p133, %p134
    %p136 = scmp.ne.s32.totalorder %s125, %s126
    %p137 = scmp.eq.s32.totalorder %s14, 0
    %p138 = por %p136, %p137
    %p139 = scmp.ne.s32.totalorder %s125, %s126
    %p140 = scmp.eq.s32.totalorder %s15, 1
    %p141 = por %p139, %p140
    %p143 = scmp.ne.s32.totalorder %s126, %s142
    %p144 = scmp.eq.s32.totalorder %s15, 0
    %p145 = por %p143, %p144
    %p146 = scmp.le.s32.totalorder 1, %s9
    %p147 = scmp.lt.s32.totalorder %s9, 3
    %p148 = pnand %p146, %p147
    %p149 = pneg %p148
    // Predicated region
    $region9: #{_lambda_.22} parent=5 // pred_check
      _
    $region10: #{_lambda_.22} parent=5 // pred_check_branch
      %151 = sbr.rel (%p148) target = $region12
    $region11: #{_lambda_.22} parent=5 // pred_region
      %s152 = ssub.s32 %s9, 1
      // Predicated region
      $region13: #{_lambda_.22} parent=11 // pred_check
        %p153 = pneg %p84
      $region14: #{_lambda_.22} parent=11 // pred_check_branch
        %155 = sbr.rel (%p153) target = $region16
      $region15: #{_lambda_.22} parent=11 // pred_region
        %s156 = smul.u32 16, %s21
        %p157 = scmp.lt.s32.totalorder %s156, 15
        %s158 = scalar_select %p157, %s156, 15
        %p159 = scmp.lt.s32.totalorder %s20, 0
        %s160 = scalar_select %p159, %s20, 0
        %s161 = sadd.s32 %s160, %s158
        %s162 = smul.addr %s161, 4
        %s163 = scalar_lea.vmem %s1, %s162
        %s164 = smul.u32 16, %s21
      $region16: #{_lambda_.22} parent=11 // pred_fallthru
        _
      // Predicated region
      $region17: #{_lambda_.22} parent=11 // pred_check
        %p165 = pneg %p110
      $region18: #{_lambda_.22} parent=11 // pred_check_branch
        %167 = sbr.rel (%p165) target = $region20
      $region19: #{_lambda_.22} parent=11 // pred_region
        %p168 = scmp.lt.s32.totalorder %s20, 0
        %s169 = scalar_select %p168, %s20, 0
        %s170 = scalar_lea.vmem %s2, %s169
      $region20: #{_lambda_.22} parent=11 // pred_fallthru
        _
    $region12: #{_lambda_.22} parent=5 // pred_fallthru
      _
    %p171 = scmp.lt.s32.totalorder %s9, 2
    // Predicated region
    $region21: #{_lambda_.22} parent=5 // pred_check
      %p172 = pneg %p171
    $region22: #{_lambda_.22} parent=5 // pred_check_branch
      %174 = sbr.rel (%p172) target = $region24
    $region23: #{_lambda_.22} parent=5 // pred_region
      // Predicated region
      $region25: #{_lambda_.22} parent=23 // pred_check
        %p175 = pneg %p50
      $region26: #{_lambda_.22} parent=23 // pred_check_branch
        %177 = sbr.rel (%p175) target = $region28
      $region27: #{_lambda_.22} parent=23 // pred_region
        %s178 = smul.u32 32, %s16
        %p179 = scmp.lt.s32.totalorder %s178, 63
        %s180 = scalar_select %p179, %s178, 63
        %p181 = scmp.lt.s32.totalorder %s18, 0
        %s182 = scalar_select %p181, %s18, 0
        %s183 = sadd.s32 %s182, %s180
        %s184 = smul.addr %s183, 4
        %s185 = scalar_lea.vmem %s0, %s184
        %s186 = smul.u32 32, %s16
      $region28: #{_lambda_.22} parent=23 // pred_fallthru
        _
    $region24: #{_lambda_.22} parent=5 // pred_fallthru
      _
    %p187 = scmp.le.s32.totalorder 1, %s9
    %p188 = scmp.lt.s32.totalorder %s9, 3
    %p189 = pnand %p187, %p188
    %p190 = pneg %p189
    // Predicated region
    $region29: #{_lambda_.22} parent=5 // pred_check
      _
    $region30: #{_lambda_.22} parent=5 // pred_check_branch
      %192 = sbr.rel (%p189) target = $region32
    $region31: #{_lambda_.22} parent=5 // pred_region
      %s193 = ssub.s32 %s9, 1
      %s194 = smul.u32 32, %s19
      %p195 = scmp.lt.s32.totalorder %s194, 63
      %s196 = scalar_select %p195, %s194, 63
      %p197 = scmp.lt.s32.totalorder %s21, 0
      %s198 = scalar_select %p197, %s21, 0
      %s199 = sadd.s32 %s198, %s196
      %s200 = smul.addr %s199, 4
      %s201 = scalar_lea.vmem %s0, %s200
      %p202 = pneg %p56
      %p203 = pneg %p53
      %s204 = smul.u32 16, %s21
      %p205 = scmp.lt.s32.totalorder %s204, 15
      %s206 = scalar_select %p205, %s204, 15
      %p207 = scmp.lt.s32.totalorder %s20, 0
      %s208 = scalar_select %p207, %s20, 0
      %s209 = sadd.s32 %s208, %s206
      %s210 = smul.addr %s209, 4
      %s211 = scalar_lea.vmem %s1, %s210
      %p212 = pneg %p84
      %p213 = pneg %p81
      %p214 = scmp.lt.s32.totalorder %s20, 0
      %s215 = scalar_select %p214, %s20, 0
      %s216 = scalar_lea.vmem %s2, %s215
      %p217 = pneg %p110
      %p218 = pneg %p107
      %p219 = pneg %p138
      %p220 = pneg %p135
      %s221 = smul.u32 32, %s19
      %p222 = scmp.lt.s32.totalorder %s221, 63
      %s223 = scalar_select %p222, %s221, 63
      %p224 = scmp.lt.s32.totalorder %s20, 0
      %s225 = scalar_select %p224, %s20, 0
      %s226 = sadd.s32 %s225, %s223
      %s227 = smul.addr %s226, 8
      %s228 = scalar_lea.vmem %s3, %s227
      %s229 = smul.u32 32, %s19
      %p230 = scmp.lt.s32.totalorder %s229, 63
      %s231 = scalar_select %p230, %s229, 63
      %p232 = scmp.lt.s32.totalorder %s21, 0
      %s233 = scalar_select %p232, %s21, 0
      %s234 = sadd.s32 %s233, %s231
      %s235 = smul.addr %s234, 4
      %s236 = scalar_lea.vmem %s0, %s235
      %s237 = smul.u32 32, %s19
      %s238 = smul.u32 16, %s21
      %p239 = scmp.lt.s32.totalorder %s238, 15
      %s240 = scalar_select %p239, %s238, 15
      %p241 = scmp.lt.s32.totalorder %s20, 0
      %s242 = scalar_select %p241, %s20, 0
      %s243 = sadd.s32 %s242, %s240
      %s244 = smul.addr %s243, 4
      %s245 = scalar_lea.vmem %s1, %s244
      %s246 = smul.u32 16, %s21
      %p247 = scmp.lt.s32.totalorder %s20, 0
      %s248 = scalar_select %p247, %s20, 0
      %s249 = scalar_lea.vmem %s2, %s248
      %s250 = smul.u32 32, %s19
      %p251 = scmp.lt.s32.totalorder %s250, 63
      %s252 = scalar_select %p251, %s250, 63
      %p253 = scmp.lt.s32.totalorder %s20, 0
      %s254 = scalar_select %p253, %s20, 0
      %s255 = sadd.s32 %s254, %s252
      %s256 = smul.addr %s255, 8
      %s257 = scalar_lea.vmem %s3, %s256
      %s258 = smul.u32 32, %s19
      %p260 = scmp.eq.s32.totalorder %s21, 0
      // Predicated region
      $region33: #{_lambda_.22} parent=31 // pred_check
        %p261 = pneg %p260
      $region34: #{_lambda_.22} parent=31 // pred_check_branch
        %263 = sbr.rel (%p261) target = $region36
      $region35: #{_lambda_.22} parent=31 // pred_region
        %264 = vst [vmem:[#allocation2] sm:$0xff] 0.0
        %265 = vst [vmem:[#allocation2 + $0x8] sm:$0xff] 0.0
        %266 = vst [vmem:[#allocation2 + $0x10] sm:$0xff] 0.0
        %267 = vst [vmem:[#allocation2 + $0x18] sm:$0xff] 0.0
        %268 = vst [vmem:[#allocation2 + $0x20] sm:$0xff] 0.0
        %269 = vst [vmem:[#allocation2 + $0x28] sm:$0xff] 0.0
        %270 = vst [vmem:[#allocation2 + $0x30] sm:$0xff] 0.0
        %271 = vst [vmem:[#allocation2 + $0x38] sm:$0xff] 0.0
        %272 = vst [vmem:[#allocation2 + $0x40] sm:$0xff] 0.0
        %273 = vst [vmem:[#allocation2 + $0x48] sm:$0xff] 0.0
        %274 = vst [vmem:[#allocation2 + $0x50] sm:$0xff] 0.0
        %275 = vst [vmem:[#allocation2 + $0x58] sm:$0xff] 0.0
        %276 = vst [vmem:[#allocation2 + $0x60] sm:$0xff] 0.0
        %277 = vst [vmem:[#allocation2 + $0x68] sm:$0xff] 0.0
        %278 = vst [vmem:[#allocation2 + $0x70] sm:$0xff] 0.0
        %279 = vst [vmem:[#allocation2 + $0x78] sm:$0xff] 0.0
        %280 = vst [vmem:[#allocation2 + $0x80] sm:$0xff] 0.0
        %281 = vst [vmem:[#allocation2 + $0x88] sm:$0xff] 0.0
        %282 = vst [vmem:[#allocation2 + $0x90] sm:$0xff] 0.0
        %283 = vst [vmem:[#allocation2 + $0x98] sm:$0xff] 0.0
        %284 = vst [vmem:[#allocation2 + $0xa0] sm:$0xff] 0.0
        %285 = vst [vmem:[#allocation2 + $0xa8] sm:$0xff] 0.0
        %286 = vst [vmem:[#allocation2 + $0xb0] sm:$0xff] 0.0
        %287 = vst [vmem:[#allocation2 + $0xb8] sm:$0xff] 0.0
        %288 = vst [vmem:[#allocation2 + $0xc0] sm:$0xff] 0.0
        %289 = vst [vmem:[#allocation2 + $0xc8] sm:$0xff] 0.0
        %290 = vst [vmem:[#allocation2 + $0xd0] sm:$0xff] 0.0
        %291 = vst [vmem:[#allocation2 + $0xd8] sm:$0xff] 0.0
        %292 = vst [vmem:[#allocation2 + $0xe0] sm:$0xff] 0.0
        %293 = vst [vmem:[#allocation2 + $0xe8] sm:$0xff] 0.0
        %294 = vst [vmem:[#allocation2 + $0xf0] sm:$0xff] 0.0
        %295 = vst [vmem:[#allocation2 + $0xf8] sm:$0xff] 0.0
      $region36: #{_lambda_.22} parent=31 // pred_fallthru
        _
      %v296 = vld [vmem:[#allocation2] sm:$0xff]
      %v297 = vld [vmem:[#allocation2 + $0x8] sm:$0xff]
      %v298 = vld [vmem:[#allocation2 + $0x10] sm:$0xff]
      %v299 = vld [vmem:[#allocation2 + $0x18] sm:$0xff]
      %v300 = vld [vmem:[#allocation2 + $0x20] sm:$0xff]
      %v301 = vld [vmem:[#allocation2 + $0x28] sm:$0xff]
      %v302 = vld [vmem:[#allocation2 + $0x30] sm:$0xff]
      %v303 = vld [vmem:[#allocation2 + $0x38] sm:$0xff]
      %v304 = vld [vmem:[#allocation2 + $0x40] sm:$0xff]
      %v305 = vld [vmem:[#allocation2 + $0x48] sm:$0xff]
      %v306 = vld [vmem:[#allocation2 + $0x50] sm:$0xff]
      %v307 = vld [vmem:[#allocation2 + $0x58] sm:$0xff]
      %v308 = vld [vmem:[#allocation2 + $0x60] sm:$0xff]
      %v309 = vld [vmem:[#allocation2 + $0x68] sm:$0xff]
      %v310 = vld [vmem:[#allocation2 + $0x70] sm:$0xff]
      %v311 = vld [vmem:[#allocation2 + $0x78] sm:$0xff]
      %v312 = vld [vmem:[#allocation2 + $0x80] sm:$0xff]
      %v313 = vld [vmem:[#allocation2 + $0x88] sm:$0xff]
      %v314 = vld [vmem:[#allocation2 + $0x90] sm:$0xff]
      %v315 = vld [vmem:[#allocation2 + $0x98] sm:$0xff]
      %v316 = vld [vmem:[#allocation2 + $0xa0] sm:$0xff]
      %v317 = vld [vmem:[#allocation2 + $0xa8] sm:$0xff]
      %v318 = vld [vmem:[#allocation2 + $0xb0] sm:$0xff]
      %v319 = vld [vmem:[#allocation2 + $0xb8] sm:$0xff]
      %v320 = vld [vmem:[#allocation2 + $0xc0] sm:$0xff]
      %v321 = vld [vmem:[#allocation2 + $0xc8] sm:$0xff]
      %v322 = vld [vmem:[#allocation2 + $0xd0] sm:$0xff]
      %v323 = vld [vmem:[#allocation2 + $0xd8] sm:$0xff]
      %v324 = vld [vmem:[#allocation2 + $0xe0] sm:$0xff]
      %v325 = vld [vmem:[#allocation2 + $0xe8] sm:$0xff]
      %v326 = vld [vmem:[#allocation2 + $0xf0] sm:$0xff]
      %v327 = vld [vmem:[#allocation2 + $0xf8] sm:$0xff]
      %v328 = vld [vmem:[%s236] sm:$0xf]
      %v329 = vld [vmem:[%s236 + $0x4] sm:$0xf]
      %v330 = vld [vmem:[%s236 + $0x8] sm:$0xf]
      %v331 = vld [vmem:[%s236 + $0xc] sm:$0xf]
      %v332 = vld [vmem:[%s236 + $0x10] sm:$0xf]
      %v333 = vld [vmem:[%s236 + $0x14] sm:$0xf]
      %v334 = vld [vmem:[%s236 + $0x18] sm:$0xf]
      %v335 = vld [vmem:[%s236 + $0x1c] sm:$0xf]
      %v336 = vld [vmem:[%s236 + $0x20] sm:$0xf]
      %v337 = vld [vmem:[%s236 + $0x24] sm:$0xf]
      %v338 = vld [vmem:[%s236 + $0x28] sm:$0xf]
      %v339 = vld [vmem:[%s236 + $0x2c] sm:$0xf]
      %v340 = vld [vmem:[%s236 + $0x30] sm:$0xf]
      %v341 = vld [vmem:[%s236 + $0x34] sm:$0xf]
      %v342 = vld [vmem:[%s236 + $0x38] sm:$0xf]
      %v343 = vld [vmem:[%s236 + $0x3c] sm:$0xf]
      %v344 = vld [vmem:[%s236 + $0x40] sm:$0xf]
      %v345 = vld [vmem:[%s236 + $0x44] sm:$0xf]
      %v346 = vld [vmem:[%s236 + $0x48] sm:$0xf]
      %v347 = vld [vmem:[%s236 + $0x4c] sm:$0xf]
      %v348 = vld [vmem:[%s236 + $0x50] sm:$0xf]
      %v349 = vld [vmem:[%s236 + $0x54] sm:$0xf]
      %v350 = vld [vmem:[%s236 + $0x58] sm:$0xf]
      %v351 = vld [vmem:[%s236 + $0x5c] sm:$0xf]
      %v352 = vld [vmem:[%s236 + $0x60] sm:$0xf]
      %v353 = vld [vmem:[%s236 + $0x64] sm:$0xf]
      %v354 = vld [vmem:[%s236 + $0x68] sm:$0xf]
      %v355 = vld [vmem:[%s236 + $0x6c] sm:$0xf]
      %v356 = vld [vmem:[%s236 + $0x70] sm:$0xf]
      %v357 = vld [vmem:[%s236 + $0x74] sm:$0xf]
      %v358 = vld [vmem:[%s236 + $0x78] sm:$0xf]
      %v359 = vld [vmem:[%s236 + $0x7c] sm:$0xf]
      %v360 = vld [vmem:[%s245] sm:$0xf]
      %v361 = vld [vmem:[%s245 + $0x4] sm:$0xf]
      %v362 = vld [vmem:[%s245 + $0x8] sm:$0xf]
      %v363 = vld [vmem:[%s245 + $0xc] sm:$0xf]
      %v364 = vld [vmem:[%s245 + $0x10] sm:$0xf]
      %v365 = vld [vmem:[%s245 + $0x14] sm:$0xf]
      %v366 = vld [vmem:[%s245 + $0x18] sm:$0xf]
      %v367 = vld [vmem:[%s245 + $0x1c] sm:$0xf]
      %v368 = vld [vmem:[%s245 + $0x20] sm:$0xf]
      %v369 = vld [vmem:[%s245 + $0x24] sm:$0xf]
      %v370 = vld [vmem:[%s245 + $0x28] sm:$0xf]
      %v371 = vld [vmem:[%s245 + $0x2c] sm:$0xf]
      %v372 = vld [vmem:[%s245 + $0x30] sm:$0xf]
      %v373 = vld [vmem:[%s245 + $0x34] sm:$0xf]
      %v374 = vld [vmem:[%s245 + $0x38] sm:$0xf]
      %v375 = vld [vmem:[%s245 + $0x3c] sm:$0xf]
      %v408 = vunpack.c.l.b16 %v328
      %v409 = vunpack.c.l.b16 %v329
      %v410 = vunpack.c.l.b16 %v330
      %v411 = vunpack.c.l.b16 %v331
      %v412 = vunpack.c.l.b16 %v332
      %v413 = vunpack.c.l.b16 %v333
      %v414 = vunpack.c.l.b16 %v334
      %v415 = vunpack.c.l.b16 %v335
      %v416 = vunpack.c.l.b16 %v336
      %v417 = vunpack.c.l.b16 %v337
      %v418 = vunpack.c.l.b16 %v338
      %v419 = vunpack.c.l.b16 %v339
      %v420 = vunpack.c.l.b16 %v340
      %v421 = vunpack.c.l.b16 %v341
      %v422 = vunpack.c.l.b16 %v342
      %v423 = vunpack.c.l.b16 %v343
      %v424 = vunpack.c.l.b16 %v344
      %v425 = vunpack.c.l.b16 %v345
      %v426 = vunpack.c.l.b16 %v346
      %v427 = vunpack.c.l.b16 %v347
      %v428 = vunpack.c.l.b16 %v348
      %v429 = vunpack.c.l.b16 %v349
      %v430 = vunpack.c.l.b16 %v350
      %v431 = vunpack.c.l.b16 %v351
      %v432 = vunpack.c.l.b16 %v352
      %v433 = vunpack.c.l.b16 %v353
      %v434 = vunpack.c.l.b16 %v354
      %v435 = vunpack.c.l.b16 %v355
      %v436 = vunpack.c.l.b16 %v356
      %v437 = vunpack.c.l.b16 %v357
      %v438 = vunpack.c.l.b16 %v358
      %v439 = vunpack.c.l.b16 %v359
      %v440 = vpack.c.b16 %v409, %v408
      %v441 = vpack.c.b16 %v411, %v410
      %v442 = vpack.c.b16 %v413, %v412
      %v443 = vpack.c.b16 %v415, %v414
      %v444 = vpack.c.b16 %v417, %v416
      %v445 = vpack.c.b16 %v419, %v418
      %v446 = vpack.c.b16 %v421, %v420
      %v447 = vpack.c.b16 %v423, %v422
      %v448 = vpack.c.b16 %v425, %v424
      %v449 = vpack.c.b16 %v427, %v426
      %v450 = vpack.c.b16 %v429, %v428
      %v451 = vpack.c.b16 %v431, %v430
      %v452 = vpack.c.b16 %v433, %v432
      %v453 = vpack.c.b16 %v435, %v434
      %v454 = vpack.c.b16 %v437, %v436
      %v455 = vpack.c.b16 %v439, %v438
      %v488 = vunpack.c.l.b16 %v360
      %v489 = vunpack.c.l.b16 %v361
      %v490 = vunpack.c.l.b16 %v362
      %v491 = vunpack.c.l.b16 %v363
      %v492 = vunpack.c.l.b16 %v364
      %v493 = vunpack.c.l.b16 %v365
      %v494 = vunpack.c.l.b16 %v366
      %v495 = vunpack.c.l.b16 %v367
      %v496 = vunpack.c.l.b16 %v368
      %v497 = vunpack.c.l.b16 %v369
      %v498 = vunpack.c.l.b16 %v370
      %v499 = vunpack.c.l.b16 %v371
      %v500 = vunpack.c.l.b16 %v372
      %v501 = vunpack.c.l.b16 %v373
      %v502 = vunpack.c.l.b16 %v374
      %v503 = vunpack.c.l.b16 %v375
      %v504 = vpack.c.b16 %v489, %v488
      %v505 = vpack.c.b16 %v491, %v490
      %v506 = vpack.c.b16 %v493, %v492
      %v507 = vpack.c.b16 %v495, %v494
      %v508 = vpack.c.b16 %v497, %v496
      %v509 = vpack.c.b16 %v499, %v498
      %v510 = vpack.c.b16 %v501, %v500
      %v511 = vpack.c.b16 %v503, %v502
      %520 = vmatprep.subr.bf16.mxu0 0
      %521 = vmatpush1.bf16.msra.mxu0 %v511
      %522 = vmatprep.subr.bf16.mxu0 0
      %523 = vmatpush1.bf16.msra.mxu0 %v510
      %524 = vmatprep.subr.bf16.mxu0 0
      %525 = vmatpush1.bf16.msra.mxu0 %v509
      %526 = vmatprep.subr.bf16.mxu0 0
      %527 = vmatpush1.bf16.msra.mxu0 %v508
      %528 = vmatprep.subr.bf16.mxu0 0
      %529 = vmatpush1.bf16.msra.mxu0 %v507
      %530 = vmatprep.subr.bf16.mxu0 0
      %531 = vmatpush1.bf16.msra.mxu0 %v506
      %532 = vmatprep.subr.bf16.mxu0 0
      %533 = vmatpush1.bf16.msra.mxu0 %v505
      %534 = vmatprep.subr.bf16.mxu0 0
      %535 = vmatpush1.bf16.msra.mxu0 %v504
      %536 = vmatprep.subr.bf16.mxu0 0
      %537 = vmatpush2.bf16.msra.mxu0 0
      %538 = vmatprep.subr.bf16.mxu0 0
      %539 = vmatpush2.bf16.msra.mxu0 0
      %540 = vmatprep.subr.bf16.mxu0 0
      %541 = vmatpush2.bf16.msra.mxu0 0
      %542 = vmatprep.subr.bf16.mxu0 0
      %543 = vmatpush2.bf16.msra.mxu0 0
      %544 = vmatprep.subr.bf16.mxu0 0
      %545 = vmatpush2.bf16.msra.mxu0 0
      %546 = vmatprep.subr.bf16.mxu0 0
      %547 = vmatpush2.bf16.msra.mxu0 0
      %548 = vmatprep.subr.bf16.mxu0 0
      %549 = vmatpush2.bf16.msra.mxu0 0
      %550 = vmatprep.subr.bf16.mxu0 0
      %551 = vmatpush2.bf16.msra.mxu0 0
      %552 = vmatprep.mubr.bf16.mxu0 0
      %553 = vmatmul.mubr.bf16.gmra.mxu0 %v440
      %v554 = vpop.f32.mrf.mxu0
      %v555 = vadd.f32 0.0, %v554
      %v556 = vpop.f32.mrf.mxu0
      %v557 = vpop.f32.mrf.mxu0
      %v558 = vadd.f32 0.0, %v557
      %v559 = vpop.f32.mrf.mxu0
      %560 = vmatprep.mubr.bf16.mxu0 0
      %561 = vmatmul.mubr.bf16.gmra.mxu0 %v441
      %v562 = vpop.f32.mrf.mxu0
      %v563 = vadd.f32 0.0, %v562
      %v564 = vpop.f32.mrf.mxu0
      %v565 = vpop.f32.mrf.mxu0
      %v566 = vadd.f32 0.0, %v565
      %v567 = vpop.f32.mrf.mxu0
      %568 = vmatprep.mubr.bf16.mxu0 0
      %569 = vmatmul.mubr.bf16.gmra.mxu0 %v442
      %v570 = vpop.f32.mrf.mxu0
      %v571 = vadd.f32 0.0, %v570
      %v572 = vpop.f32.mrf.mxu0
      %v573 = vpop.f32.mrf.mxu0
      %v574 = vadd.f32 0.0, %v573
      %v575 = vpop.f32.mrf.mxu0
      %576 = vmatprep.mubr.bf16.mxu0 0
      %577 = vmatmul.mubr.bf16.gmra.mxu0 %v443
      %v578 = vpop.f32.mrf.mxu0
      %v579 = vadd.f32 0.0, %v578
      %v580 = vpop.f32.mrf.mxu0
      %v581 = vpop.f32.mrf.mxu0
      %v582 = vadd.f32 0.0, %v581
      %v583 = vpop.f32.mrf.mxu0
      %584 = vmatprep.mubr.bf16.mxu0 0
      %585 = vmatmul.mubr.bf16.gmra.mxu0 %v444
      %v586 = vpop.f32.mrf.mxu0
      %v587 = vadd.f32 0.0, %v586
      %v588 = vpop.f32.mrf.mxu0
      %v589 = vpop.f32.mrf.mxu0
      %v590 = vadd.f32 0.0, %v589
      %v591 = vpop.f32.mrf.mxu0
      %592 = vmatprep.mubr.bf16.mxu0 0
      %593 = vmatmul.mubr.bf16.gmra.mxu0 %v445
      %v594 = vpop.f32.mrf.mxu0
      %v595 = vadd.f32 0.0, %v594
      %v596 = vpop.f32.mrf.mxu0
      %v597 = vpop.f32.mrf.mxu0
      %v598 = vadd.f32 0.0, %v597
      %v599 = vpop.f32.mrf.mxu0
      %600 = vmatprep.mubr.bf16.mxu0 0
      %601 = vmatmul.mubr.bf16.gmra.mxu0 %v446
      %v602 = vpop.f32.mrf.mxu0
      %v603 = vadd.f32 0.0, %v602
      %v604 = vpop.f32.mrf.mxu0
      %v605 = vpop.f32.mrf.mxu0
      %v606 = vadd.f32 0.0, %v605
      %v607 = vpop.f32.mrf.mxu0
      %608 = vmatprep.mubr.bf16.mxu0 0
      %609 = vmatmul.mubr.bf16.gmra.mxu0 %v447
      %v610 = vpop.f32.mrf.mxu0
      %v611 = vadd.f32 0.0, %v610
      %v612 = vpop.f32.mrf.mxu0
      %v613 = vpop.f32.mrf.mxu0
      %v614 = vadd.f32 0.0, %v613
      %v615 = vpop.f32.mrf.mxu0
      %616 = vmatprep.mubr.bf16.mxu0 0
      %617 = vmatmul.mubr.bf16.gmra.mxu0 %v448
      %v618 = vpop.f32.mrf.mxu0
      %v619 = vadd.f32 0.0, %v618
      %v620 = vpop.f32.mrf.mxu0
      %v621 = vpop.f32.mrf.mxu0
      %v622 = vadd.f32 0.0, %v621
      %v623 = vpop.f32.mrf.mxu0
      %624 = vmatprep.mubr.bf16.mxu0 0
      %625 = vmatmul.mubr.bf16.gmra.mxu0 %v449
      %v626 = vpop.f32.mrf.mxu0
      %v627 = vadd.f32 0.0, %v626
      %v628 = vpop.f32.mrf.mxu0
      %v629 = vpop.f32.mrf.mxu0
      %v630 = vadd.f32 0.0, %v629
      %v631 = vpop.f32.mrf.mxu0
      %632 = vmatprep.mubr.bf16.mxu0 0
      %633 = vmatmul.mubr.bf16.gmra.mxu0 %v450
      %v634 = vpop.f32.mrf.mxu0
      %v635 = vadd.f32 0.0, %v634
      %v636 = vpop.f32.mrf.mxu0
      %v637 = vpop.f32.mrf.mxu0
      %v638 = vadd.f32 0.0, %v637
      %v639 = vpop.f32.mrf.mxu0
      %640 = vmatprep.mubr.bf16.mxu0 0
      %641 = vmatmul.mubr.bf16.gmra.mxu0 %v451
      %v642 = vpop.f32.mrf.mxu0
      %v643 = vadd.f32 0.0, %v642
      %v644 = vpop.f32.mrf.mxu0
      %v645 = vpop.f32.mrf.mxu0
      %v646 = vadd.f32 0.0, %v645
      %v647 = vpop.f32.mrf.mxu0
      %648 = vmatprep.mubr.bf16.mxu0 0
      %649 = vmatmul.mubr.bf16.gmra.mxu0 %v452
      %v650 = vpop.f32.mrf.mxu0
      %v651 = vadd.f32 0.0, %v650
      %v652 = vpop.f32.mrf.mxu0
      %v653 = vpop.f32.mrf.mxu0
      %v654 = vadd.f32 0.0, %v653
      %v655 = vpop.f32.mrf.mxu0
      %656 = vmatprep.mubr.bf16.mxu0 0
      %657 = vmatmul.mubr.bf16.gmra.mxu0 %v453
      %v658 = vpop.f32.mrf.mxu0
      %v659 = vadd.f32 0.0, %v658
      %v660 = vpop.f32.mrf.mxu0
      %v661 = vpop.f32.mrf.mxu0
      %v662 = vadd.f32 0.0, %v661
      %v663 = vpop.f32.mrf.mxu0
      %664 = vmatprep.mubr.bf16.mxu0 0
      %665 = vmatmul.mubr.bf16.gmra.mxu0 %v454
      %v666 = vpop.f32.mrf.mxu0
      %v667 = vadd.f32 0.0, %v666
      %v668 = vpop.f32.mrf.mxu0
      %v669 = vpop.f32.mrf.mxu0
      %v670 = vadd.f32 0.0, %v669
      %v671 = vpop.f32.mrf.mxu0
      %672 = vmatprep.mubr.bf16.mxu0 0
      %673 = vmatmul.mubr.bf16.gmra.mxu0 %v455
      %v674 = vpop.f32.mrf.mxu0
      %v675 = vadd.f32 0.0, %v674
      %v676 = vpop.f32.mrf.mxu0
      %v677 = vpop.f32.mrf.mxu0
      %v678 = vadd.f32 0.0, %v677
      %v679 = vpop.f32.mrf.mxu0
      %680 = vdwg.mxu0
      %v681 = vadd.f32 %v296, %v555
      %v682 = vadd.f32 %v297, %v558
      %v683 = vadd.f32 %v298, %v563
      %v684 = vadd.f32 %v299, %v566
      %v685 = vadd.f32 %v300, %v571
      %v686 = vadd.f32 %v301, %v574
      %v687 = vadd.f32 %v302, %v579
      %v688 = vadd.f32 %v303, %v582
      %v689 = vadd.f32 %v304, %v587
      %v690 = vadd.f32 %v305, %v590
      %v691 = vadd.f32 %v306, %v595
      %v692 = vadd.f32 %v307, %v598
      %v693 = vadd.f32 %v308, %v603
      %v694 = vadd.f32 %v309, %v606
      %v695 = vadd.f32 %v310, %v611
      %v696 = vadd.f32 %v311, %v614
      %v697 = vadd.f32 %v312, %v619
      %v698 = vadd.f32 %v313, %v622
      %v699 = vadd.f32 %v314, %v627
      %v700 = vadd.f32 %v315, %v630
      %v701 = vadd.f32 %v316, %v635
      %v702 = vadd.f32 %v317, %v638
      %v703 = vadd.f32 %v318, %v643
      %v704 = vadd.f32 %v319, %v646
      %v705 = vadd.f32 %v320, %v651
      %v706 = vadd.f32 %v321, %v654
      %v707 = vadd.f32 %v322, %v659
      %v708 = vadd.f32 %v323, %v662
      %v709 = vadd.f32 %v324, %v667
      %v710 = vadd.f32 %v325, %v670
      %v711 = vadd.f32 %v326, %v675
      %v712 = vadd.f32 %v327, %v678
      %713 = vst [vmem:[#allocation2] sm:$0xff] %v681
      %714 = vst [vmem:[#allocation2 + $0x8] sm:$0xff] %v682
      %715 = vst [vmem:[#allocation2 + $0x10] sm:$0xff] %v683
      %716 = vst [vmem:[#allocation2 + $0x18] sm:$0xff] %v684
      %717 = vst [vmem:[#allocation2 + $0x20] sm:$0xff] %v685
      %718 = vst [vmem:[#allocation2 + $0x28] sm:$0xff] %v686
      %719 = vst [vmem:[#allocation2 + $0x30] sm:$0xff] %v687
      %720 = vst [vmem:[#allocation2 + $0x38] sm:$0xff] %v688
      %721 = vst [vmem:[#allocation2 + $0x40] sm:$0xff] %v689
      %722 = vst [vmem:[#allocation2 + $0x48] sm:$0xff] %v690
      %723 = vst [vmem:[#allocation2 + $0x50] sm:$0xff] %v691
      %724 = vst [vmem:[#allocation2 + $0x58] sm:$0xff] %v692
      %725 = vst [vmem:[#allocation2 + $0x60] sm:$0xff] %v693
      %726 = vst [vmem:[#allocation2 + $0x68] sm:$0xff] %v694
      %727 = vst [vmem:[#allocation2 + $0x70] sm:$0xff] %v695
      %728 = vst [vmem:[#allocation2 + $0x78] sm:$0xff] %v696
      %729 = vst [vmem:[#allocation2 + $0x80] sm:$0xff] %v697
      %730 = vst [vmem:[#allocation2 + $0x88] sm:$0xff] %v698
      %731 = vst [vmem:[#allocation2 + $0x90] sm:$0xff] %v699
      %732 = vst [vmem:[#allocation2 + $0x98] sm:$0xff] %v700
      %733 = vst [vmem:[#allocation2 + $0xa0] sm:$0xff] %v701
      %734 = vst [vmem:[#allocation2 + $0xa8] sm:$0xff] %v702
      %735 = vst [vmem:[#allocation2 + $0xb0] sm:$0xff] %v703
      %736 = vst [vmem:[#allocation2 + $0xb8] sm:$0xff] %v704
      %737 = vst [vmem:[#allocation2 + $0xc0] sm:$0xff] %v705
      %738 = vst [vmem:[#allocation2 + $0xc8] sm:$0xff] %v706
      %739 = vst [vmem:[#allocation2 + $0xd0] sm:$0xff] %v707
      %740 = vst [vmem:[#allocation2 + $0xd8] sm:$0xff] %v708
      %741 = vst [vmem:[#allocation2 + $0xe0] sm:$0xff] %v709
      %742 = vst [vmem:[#allocation2 + $0xe8] sm:$0xff] %v710
      %743 = vst [vmem:[#allocation2 + $0xf0] sm:$0xff] %v711
      %744 = vst [vmem:[#allocation2 + $0xf8] sm:$0xff] %v712
      // Predicated region
      $region37: #{_lambda_.22} parent=31 // pred_check
        %p745 = pneg %p260
      $region38: #{_lambda_.22} parent=31 // pred_check_branch
        %747 = sbr.rel (%p745) target = $region40
      $region39: #{_lambda_.22} parent=31 // pred_region
        %v748 = vld [vmem:[#allocation2] sm:$0xff]
        %v749 = vld [vmem:[#allocation2 + $0x8] sm:$0xff]
        %v750 = vld [vmem:[#allocation2 + $0x10] sm:$0xff]
        %v751 = vld [vmem:[#allocation2 + $0x18] sm:$0xff]
        %v752 = vld [vmem:[#allocation2 + $0x20] sm:$0xff]
        %v753 = vld [vmem:[#allocation2 + $0x28] sm:$0xff]
        %v754 = vld [vmem:[#allocation2 + $0x30] sm:$0xff]
        %v755 = vld [vmem:[#allocation2 + $0x38] sm:$0xff]
        %v756 = vld [vmem:[#allocation2 + $0x40] sm:$0xff]
        %v757 = vld [vmem:[#allocation2 + $0x48] sm:$0xff]
        %v758 = vld [vmem:[#allocation2 + $0x50] sm:$0xff]
        %v759 = vld [vmem:[#allocation2 + $0x58] sm:$0xff]
        %v760 = vld [vmem:[#allocation2 + $0x60] sm:$0xff]
        %v761 = vld [vmem:[#allocation2 + $0x68] sm:$0xff]
        %v762 = vld [vmem:[#allocation2 + $0x70] sm:$0xff]
        %v763 = vld [vmem:[#allocation2 + $0x78] sm:$0xff]
        %v764 = vld [vmem:[#allocation2 + $0x80] sm:$0xff]
        %v765 = vld [vmem:[#allocation2 + $0x88] sm:$0xff]
        %v766 = vld [vmem:[#allocation2 + $0x90] sm:$0xff]
        %v767 = vld [vmem:[#allocation2 + $0x98] sm:$0xff]
        %v768 = vld [vmem:[#allocation2 + $0xa0] sm:$0xff]
        %v769 = vld [vmem:[#allocation2 + $0xa8] sm:$0xff]
        %v770 = vld [vmem:[#allocation2 + $0xb0] sm:$0xff]
        %v771 = vld [vmem:[#allocation2 + $0xb8] sm:$0xff]
        %v772 = vld [vmem:[#allocation2 + $0xc0] sm:$0xff]
        %v773 = vld [vmem:[#allocation2 + $0xc8] sm:$0xff]
        %v774 = vld [vmem:[#allocation2 + $0xd0] sm:$0xff]
        %v775 = vld [vmem:[#allocation2 + $0xd8] sm:$0xff]
        %v776 = vld [vmem:[#allocation2 + $0xe0] sm:$0xff]
        %v777 = vld [vmem:[#allocation2 + $0xe8] sm:$0xff]
        %v778 = vld [vmem:[#allocation2 + $0xf0] sm:$0xff]
        %v779 = vld [vmem:[#allocation2 + $0xf8] sm:$0xff]
        %v780 = vld [vmem:[%s249] sm:$0x1]
        %v782 = vlaneseq
        %v783 = vshrl.u32 %v782, 7
        %v784 = vsub.s32 0, %v783
        %v785 = vrot.slane %v780, %v784
        %v787 = vadd.f32 %v748, %v785
        %v788 = vadd.f32 %v749, %v785
        %v789 = vadd.f32 %v750, %v785
        %v790 = vadd.f32 %v751, %v785
        %v791 = vadd.f32 %v752, %v785
        %v792 = vadd.f32 %v753, %v785
        %v793 = vadd.f32 %v754, %v785
        %v794 = vadd.f32 %v755, %v785
        %v795 = vadd.f32 %v756, %v785
        %v796 = vadd.f32 %v757, %v785
        %v797 = vadd.f32 %v758, %v785
        %v798 = vadd.f32 %v759, %v785
        %v799 = vadd.f32 %v760, %v785
        %v800 = vadd.f32 %v761, %v785
        %v801 = vadd.f32 %v762, %v785
        %v802 = vadd.f32 %v763, %v785
        %v803 = vadd.f32 %v764, %v785
        %v804 = vadd.f32 %v765, %v785
        %v805 = vadd.f32 %v766, %v785
        %v806 = vadd.f32 %v767, %v785
        %v807 = vadd.f32 %v768, %v785
        %v808 = vadd.f32 %v769, %v785
        %v809 = vadd.f32 %v770, %v785
        %v810 = vadd.f32 %v771, %v785
        %v811 = vadd.f32 %v772, %v785
        %v812 = vadd.f32 %v773, %v785
        %v813 = vadd.f32 %v774, %v785
        %v814 = vadd.f32 %v775, %v785
        %v815 = vadd.f32 %v776, %v785
        %v816 = vadd.f32 %v777, %v785
        %v817 = vadd.f32 %v778, %v785
        %v818 = vadd.f32 %v779, %v785
        %819 = vst [vmem:[%s257] sm:$0xff] %v787
        %820 = vst [vmem:[%s257 + $0x8] sm:$0xff] %v788
        %821 = vst [vmem:[%s257 + $0x10] sm:$0xff] %v789
        %822 = vst [vmem:[%s257 + $0x18] sm:$0xff] %v790
        %823 = vst [vmem:[%s257 + $0x20] sm:$0xff] %v791
        %824 = vst [vmem:[%s257 + $0x28] sm:$0xff] %v792
        %825 = vst [vmem:[%s257 + $0x30] sm:$0xff] %v793
        %826 = vst [vmem:[%s257 + $0x38] sm:$0xff] %v794
        %827 = vst [vmem:[%s257 + $0x40] sm:$0xff] %v795
        %828 = vst [vmem:[%s257 + $0x48] sm:$0xff] %v796
        %829 = vst [vmem:[%s257 + $0x50] sm:$0xff] %v797
        %830 = vst [vmem:[%s257 + $0x58] sm:$0xff] %v798
        %831 = vst [vmem:[%s257 + $0x60] sm:$0xff] %v799
        %832 = vst [vmem:[%s257 + $0x68] sm:$0xff] %v800
        %833 = vst [vmem:[%s257 + $0x70] sm:$0xff] %v801
        %834 = vst [vmem:[%s257 + $0x78] sm:$0xff] %v802
        %835 = vst [vmem:[%s257 + $0x80] sm:$0xff] %v803
        %836 = vst [vmem:[%s257 + $0x88] sm:$0xff] %v804
        %837 = vst [vmem:[%s257 + $0x90] sm:$0xff] %v805
        %838 = vst [vmem:[%s257 + $0x98] sm:$0xff] %v806
        %839 = vst [vmem:[%s257 + $0xa0] sm:$0xff] %v807
        %840 = vst [vmem:[%s257 + $0xa8] sm:$0xff] %v808
        %841 = vst [vmem:[%s257 + $0xb0] sm:$0xff] %v809
        %842 = vst [vmem:[%s257 + $0xb8] sm:$0xff] %v810
        %843 = vst [vmem:[%s257 + $0xc0] sm:$0xff] %v811
        %844 = vst [vmem:[%s257 + $0xc8] sm:$0xff] %v812
        %845 = vst [vmem:[%s257 + $0xd0] sm:$0xff] %v813
        %846 = vst [vmem:[%s257 + $0xd8] sm:$0xff] %v814
        %847 = vst [vmem:[%s257 + $0xe0] sm:$0xff] %v815
        %848 = vst [vmem:[%s257 + $0xe8] sm:$0xff] %v816
        %849 = vst [vmem:[%s257 + $0xf0] sm:$0xff] %v817
        %850 = vst [vmem:[%s257 + $0xf8] sm:$0xff] %v818
      $region40: #{_lambda_.22} parent=31 // pred_fallthru
        _
      %s851 = smul.u32 32, %s19
      %p852 = scmp.lt.s32.totalorder %s851, 63
      %s853 = scalar_select %p852, %s851, 63
      %p854 = scmp.lt.s32.totalorder %s20, 0
      %s855 = scalar_select %p854, %s20, 0
      %s856 = sadd.s32 %s855, %s853
      %s857 = smul.addr %s856, 8
      %s858 = scalar_lea.vmem %s3, %s857
      // Predicated region
      $region41: #{_lambda_.22} parent=31 // pred_check
        %p859 = pneg %p135
      $region42: #{_lambda_.22} parent=31 // pred_check_branch
        %861 = sbr.rel (%p859) target = $region44
      $region43: #{_lambda_.22} parent=31 // pred_region
        %s862 = smul.u32 32, %s19
      $region44: #{_lambda_.22} parent=31 // pred_fallthru
        _
    $region32: #{_lambda_.22} parent=5 // pred_fallthru
      _
    %p863 = scmp.le.s32.totalorder 2, %s9
    // Predicated region
    $region45: #{_lambda_.22} parent=5 // pred_check
      %p864 = pneg %p863
    $region46: #{_lambda_.22} parent=5 // pred_check_branch
      %866 = sbr.rel (%p864) target = $region48
    $region47: #{_lambda_.22} parent=5 // pred_region
      %s867 = ssub.s32 %s9, 2
      // Predicated region
      $region49: #{_lambda_.22} parent=47 // pred_check
        %p868 = pneg %p141
      $region50: #{_lambda_.22} parent=47 // pred_check_branch
        %870 = sbr.rel (%p868) target = $region52
      $region51: #{_lambda_.22} parent=47 // pred_region
        %s871 = smul.u32 32, %s22
        %p872 = scmp.lt.s32.totalorder %s871, 63
        %s873 = scalar_select %p872, %s871, 63
        %p874 = scmp.lt.s32.totalorder %s23, 0
        %s875 = scalar_select %p874, %s23, 0
        %s876 = sadd.s32 %s875, %s873
        %s877 = smul.addr %s876, 8
        %s878 = scalar_lea.vmem %s3, %s877
      $region52: #{_lambda_.22} parent=47 // pred_fallthru
        _
    $region48: #{_lambda_.22} parent=5 // pred_fallthru
      _
  $region6: #{_lambda_.22} parent=0 // loop_footer
    %s13 = sadd.s32 1, %s9
  $region7: #{_lambda_.22} parent=0 // loop_footer_branch
    %8 = sbr.rel target = $region3
  $region8: #{_lambda_.22} parent=0 // loop_exit
    _

// kernel: _lambda_.23
$region0: #{_lambda_.23}
  #allocation0 [shape = 'u32[]', space=smem, size = 0x4, offset = 0x4, fixed_abs, tag = 'smem constant byte address 0x4 - core index']
  #allocation1 [shape = 'u32[144,128]{1,0:T(1,128)}', space=vmem, size = 0x12000, scoped, tag = 'internal scratch']
  #allocation2 [shape = 'f32[32,128]{1,0:T(8,128)}', space=vmem, size = 0x4000, scoped, tag = 'scratch operand']
  %s0 = inlined_call_operand.vmem [shape: bf16[32,128], index: 0, kind: input, shape index: {}]
  %s1 = inlined_call_operand.vmem [shape: bf16[128,128], index: 1, kind: input, shape index: {}]
  %s2 = inlined_call_operand.vmem [shape: f32[1,128], index: 2, kind: input, shape index: {}]
  %s3 = inlined_call_operand.vmem [shape: f32[32,128], index: 3, kind: output, shape index: {}]
  %s4 = sld [smem:[#allocation0]]
  $region30: #{_lambda_.23} parent=0
    _
  %s6 = ssub.s32 1, %s4
  %s7 = scalar_select 0, %s6, %s4
  // Predicated region
  $region2: #{_lambda_.23} parent=0 // pred_check
    _
  $region3: #{_lambda_.23} parent=0 // pred_check_branch
    %9 = sbr.rel (0) target = $region5
  $region4: #{_lambda_.23} parent=0 // pred_region
    _
  $region5: #{_lambda_.23} parent=0 // pred_fallthru
    _
  // Predicated region
  $region6: #{_lambda_.23} parent=0 // pred_check
    _
  $region7: #{_lambda_.23} parent=0 // pred_check_branch
    %11 = sbr.rel (0) target = $region9
  $region8: #{_lambda_.23} parent=0 // pred_region
    _
  $region9: #{_lambda_.23} parent=0 // pred_fallthru
    _
  // Predicated region
  $region10: #{_lambda_.23} parent=0 // pred_check
    _
  $region11: #{_lambda_.23} parent=0 // pred_check_branch
    %13 = sbr.rel (0) target = $region13
  $region12: #{_lambda_.23} parent=0 // pred_region
    _
  $region13: #{_lambda_.23} parent=0 // pred_fallthru
    _
  %p15 = scmp.eq.s32.totalorder 0, 0
  // Predicated region
  $region14: #{_lambda_.23} parent=0 // pred_check
    %p16 = pneg %p15
  $region15: #{_lambda_.23} parent=0 // pred_check_branch
    %18 = sbr.rel (%p16) target = $region17
  $region16: #{_lambda_.23} parent=0 // pred_region
    %19 = vst [vmem:[#allocation2] sm:$0xff] 0.0
    %20 = vst [vmem:[#allocation2 + $0x8] sm:$0xff] 0.0
    %21 = vst [vmem:[#allocation2 + $0x10] sm:$0xff] 0.0
    %22 = vst [vmem:[#allocation2 + $0x18] sm:$0xff] 0.0
  $region17: #{_lambda_.23} parent=0 // pred_fallthru
    _
  %v23 = vld [vmem:[#allocation2] sm:$0xff]
  %v24 = vld [vmem:[#allocation2 + $0x8] sm:$0xff]
  %v25 = vld [vmem:[#allocation2 + $0x10] sm:$0xff]
  %v26 = vld [vmem:[#allocation2 + $0x18] sm:$0xff]
  %v27 = vld [vmem:[%s0] sm:$0xf]
  %v28 = vld [vmem:[%s0 + $0x4] sm:$0xf]
  %v29 = vld [vmem:[%s0 + $0x8] sm:$0xf]
  %v30 = vld [vmem:[%s0 + $0xc] sm:$0xf]
  %v31 = vld [vmem:[%s1] sm:$0xf]
  %v32 = vld [vmem:[%s1 + $0x4] sm:$0xf]
  %v33 = vld [vmem:[%s1 + $0x8] sm:$0xf]
  %v34 = vld [vmem:[%s1 + $0xc] sm:$0xf]
  %v35 = vld [vmem:[%s1 + $0x10] sm:$0xf]
  %v36 = vld [vmem:[%s1 + $0x14] sm:$0xf]
  %v37 = vld [vmem:[%s1 + $0x18] sm:$0xf]
  %v38 = vld [vmem:[%s1 + $0x1c] sm:$0xf]
  %v39 = vld [vmem:[%s1 + $0x20] sm:$0xf]
  %v40 = vld [vmem:[%s1 + $0x24] sm:$0xf]
  %v41 = vld [vmem:[%s1 + $0x28] sm:$0xf]
  %v42 = vld [vmem:[%s1 + $0x2c] sm:$0xf]
  %v43 = vld [vmem:[%s1 + $0x30] sm:$0xf]
  %v44 = vld [vmem:[%s1 + $0x34] sm:$0xf]
  %v45 = vld [vmem:[%s1 + $0x38] sm:$0xf]
  %v46 = vld [vmem:[%s1 + $0x3c] sm:$0xf]
  %v51 = vunpack.c.l.b16 %v27
  %v52 = vunpack.c.l.b16 %v28
  %v53 = vunpack.c.l.b16 %v29
  %v54 = vunpack.c.l.b16 %v30
  %v55 = vpack.c.b16 %v52, %v51
  %v56 = vpack.c.b16 %v54, %v53
  %v75 = vunpack.c.l.b16 %v31
  %v76 = vunpack.c.l.b16 %v32
  %v77 = vunpack.c.l.b16 %v33
  %v78 = vunpack.c.l.b16 %v34
  %v79 = vunpack.c.l.b16 %v35
  %v80 = vunpack.c.l.b16 %v36
  %v81 = vunpack.c.l.b16 %v37
  %v82 = vunpack.c.l.b16 %v38
  %v83 = vunpack.c.l.b16 %v39
  %v84 = vunpack.c.l.b16 %v40
  %v85 = vunpack.c.l.b16 %v41
  %v86 = vunpack.c.l.b16 %v42
  %v87 = vunpack.c.l.b16 %v43
  %v88 = vunpack.c.l.b16 %v44
  %v89 = vunpack.c.l.b16 %v45
  %v90 = vunpack.c.l.b16 %v46
  %v91 = vpack.c.b16 %v76, %v75
  %v92 = vpack.c.b16 %v78, %v77
  %v93 = vpack.c.b16 %v80, %v79
  %v94 = vpack.c.b16 %v82, %v81
  %v95 = vpack.c.b16 %v84, %v83
  %v96 = vpack.c.b16 %v86, %v85
  %v97 = vpack.c.b16 %v88, %v87
  %v98 = vpack.c.b16 %v90, %v89
  %107 = vmatprep.subr.bf16.mxu0 0
  %108 = vmatpush1.bf16.msra.mxu0 %v98
  %109 = vmatprep.subr.bf16.mxu0 0
  %110 = vmatpush1.bf16.msra.mxu0 %v97
  %111 = vmatprep.subr.bf16.mxu0 0
  %112 = vmatpush1.bf16.msra.mxu0 %v96
  %113 = vmatprep.subr.bf16.mxu0 0
  %114 = vmatpush1.bf16.msra.mxu0 %v95
  %115 = vmatprep.subr.bf16.mxu0 0
  %116 = vmatpush1.bf16.msra.mxu0 %v94
  %117 = vmatprep.subr.bf16.mxu0 0
  %118 = vmatpush1.bf16.msra.mxu0 %v93
  %119 = vmatprep.subr.bf16.mxu0 0
  %120 = vmatpush1.bf16.msra.mxu0 %v92
  %121 = vmatprep.subr.bf16.mxu0 0
  %122 = vmatpush1.bf16.msra.mxu0 %v91
  %123 = vmatprep.subr.bf16.mxu0 0
  %124 = vmatpush2.bf16.msra.mxu0 0
  %125 = vmatprep.subr.bf16.mxu0 0
  %126 = vmatpush2.bf16.msra.mxu0 0
  %127 = vmatprep.subr.bf16.mxu0 0
  %128 = vmatpush2.bf16.msra.mxu0 0
  %129 = vmatprep.subr.bf16.mxu0 0
  %130 = vmatpush2.bf16.msra.mxu0 0
  %131 = vmatprep.subr.bf16.mxu0 0
  %132 = vmatpush2.bf16.msra.mxu0 0
  %133 = vmatprep.subr.bf16.mxu0 0
  %134 = vmatpush2.bf16.msra.mxu0 0
  %135 = vmatprep.subr.bf16.mxu0 0
  %136 = vmatpush2.bf16.msra.mxu0 0
  %137 = vmatprep.subr.bf16.mxu0 0
  %138 = vmatpush2.bf16.msra.mxu0 0
  %139 = vmatprep.mubr.bf16.mxu0 0
  %140 = vmatmul.mubr.bf16.gmra.mxu0 %v55
  %v141 = vpop.f32.mrf.mxu0
  %v142 = vadd.f32 0.0, %v141
  %v143 = vpop.f32.mrf.mxu0
  %v144 = vpop.f32.mrf.mxu0
  %v145 = vadd.f32 0.0, %v144
  %v146 = vpop.f32.mrf.mxu0
  %147 = vmatprep.mubr.bf16.mxu0 0
  %148 = vmatmul.mubr.bf16.gmra.mxu0 %v56
  %v149 = vpop.f32.mrf.mxu0
  %v150 = vadd.f32 0.0, %v149
  %v151 = vpop.f32.mrf.mxu0
  %v152 = vpop.f32.mrf.mxu0
  %v153 = vadd.f32 0.0, %v152
  %v154 = vpop.f32.mrf.mxu0
  %155 = vdwg.mxu0
  %v156 = vadd.f32 %v23, %v142
  %v157 = vadd.f32 %v24, %v145
  %v158 = vadd.f32 %v25, %v150
  %v159 = vadd.f32 %v26, %v153
  %160 = vst [vmem:[#allocation2] sm:$0xff] %v156
  %161 = vst [vmem:[#allocation2 + $0x8] sm:$0xff] %v157
  %162 = vst [vmem:[#allocation2 + $0x10] sm:$0xff] %v158
  %163 = vst [vmem:[#allocation2 + $0x18] sm:$0xff] %v159
  // Predicated region
  $region18: #{_lambda_.23} parent=0 // pred_check
    %p164 = pneg %p15
  $region19: #{_lambda_.23} parent=0 // pred_check_branch
    %166 = sbr.rel (%p164) target = $region21
  $region20: #{_lambda_.23} parent=0 // pred_region
    %v167 = vld [vmem:[#allocation2] sm:$0xff]
    %v168 = vld [vmem:[#allocation2 + $0x8] sm:$0xff]
    %v169 = vld [vmem:[#allocation2 + $0x10] sm:$0xff]
    %v170 = vld [vmem:[#allocation2 + $0x18] sm:$0xff]
    %v171 = vld [vmem:[%s2] sm:$0x1]
    %v173 = vlaneseq
    %v174 = vshrl.u32 %v173, 7
    %v175 = vsub.s32 0, %v174
    %v176 = vrot.slane %v171, %v175
    %v178 = vadd.f32 %v167, %v176
    %v179 = vadd.f32 %v168, %v176
    %v180 = vadd.f32 %v169, %v176
    %v181 = vadd.f32 %v170, %v176
    %182 = vst [vmem:[%s3] sm:$0xff] %v178
    %183 = vst [vmem:[%s3 + $0x8] sm:$0xff] %v179
    %184 = vst [vmem:[%s3 + $0x10] sm:$0xff] %v180
    %185 = vst [vmem:[%s3 + $0x18] sm:$0xff] %v181
  $region21: #{_lambda_.23} parent=0 // pred_fallthru
    _
  // Predicated region
  $region22: #{_lambda_.23} parent=0 // pred_check
    _
  $region23: #{_lambda_.23} parent=0 // pred_check_branch
    %187 = sbr.rel (0) target = $region25
  $region24: #{_lambda_.23} parent=0 // pred_region
    _
  $region25: #{_lambda_.23} parent=0 // pred_fallthru
    _
  // Predicated region
  $region26: #{_lambda_.23} parent=0 // pred_check
    _
  $region27: #{_lambda_.23} parent=0 // pred_check_branch
    %189 = sbr.rel (0) target = $region29
  $region28: #{_lambda_.23} parent=0 // pred_region
    _
  $region29: #{_lambda_.23} parent=0 // pred_fallthru
    _

// kernel: _lambda_.24
$region0: #{_lambda_.24}
  #allocation0 [shape = 'u32[]', space=smem, size = 0x4, offset = 0x4, fixed_abs, tag = 'smem constant byte address 0x4 - core index']
  #allocation1 [shape = 'u32[144,128]{1,0:T(1,128)}', space=vmem, size = 0x12000, scoped, tag = 'internal scratch']
  %s0 = inlined_call_operand.vmem [shape: f32[32,32], index: 0, kind: input, shape index: {}]
  %s1 = inlined_call_operand.vmem [shape: f32[1,32], index: 1, kind: input, shape index: {}]
  %s2 = inlined_call_operand.vmem [shape: f32[1,32], index: 2, kind: input, shape index: {}]
  %s3 = inlined_call_operand.vmem [shape: f32[32,32], index: 3, kind: output, shape index: {}]
  %s4 = sld [smem:[#allocation0]]
  $region22: #{_lambda_.24} parent=0
    _
  %s6 = ssub.s32 1, %s4
  %s7 = scalar_select 0, %s6, %s4
  // Predicated region
  $region2: #{_lambda_.24} parent=0 // pred_check
    _
  $region3: #{_lambda_.24} parent=0 // pred_check_branch
    %9 = sbr.rel (0) target = $region5
  $region4: #{_lambda_.24} parent=0 // pred_region
    _
  $region5: #{_lambda_.24} parent=0 // pred_fallthru
    _
  // Predicated region
  $region6: #{_lambda_.24} parent=0 // pred_check
    _
  $region7: #{_lambda_.24} parent=0 // pred_check_branch
    %11 = sbr.rel (0) target = $region9
  $region8: #{_lambda_.24} parent=0 // pred_region
    _
  $region9: #{_lambda_.24} parent=0 // pred_fallthru
    _
  // Predicated region
  $region10: #{_lambda_.24} parent=0 // pred_check
    _
  $region11: #{_lambda_.24} parent=0 // pred_check_branch
    %13 = sbr.rel (0) target = $region13
  $region12: #{_lambda_.24} parent=0 // pred_region
    _
  $region13: #{_lambda_.24} parent=0 // pred_fallthru
    _
  %v14 = vld [vmem:[%s0] sm:$0xff]
  %v15 = vld [vmem:[%s0 + $0x8] sm:$0xff]
  %v16 = vld [vmem:[%s0 + $0x10] sm:$0xff]
  %v17 = vld [vmem:[%s0 + $0x18] sm:$0xff]
  %v18 = vld [vmem:[%s1] sm:$0x1]
  %v19 = vld [vmem:[%s2] sm:$0x1]
  %vm20 = vcmask 261120
  %v21 = vsel %vm20, %v14, 0.0
  %22 = vadd.xlane.f32.xlu0 %v21
  %v23 = vpop.xlane.xlu0 %22
  %v24 = vsel %vm20, %v15, 0.0
  %25 = vadd.xlane.f32.xlu0 %v24
  %v26 = vpop.xlane.xlu0 %25
  %v27 = vsel %vm20, %v16, 0.0
  %28 = vadd.xlane.f32.xlu0 %v27
  %v29 = vpop.xlane.xlu0 %28
  %v30 = vsel %vm20, %v17, 0.0
  %31 = vadd.xlane.f32.xlu0 %v30
  %v32 = vpop.xlane.xlu0 %31
  %v33 = vrcp.pop 32.0
  %v34 = vmul.f32 %v23, %v33
  %v35 = vmul.f32 %v26, %v33
  %v36 = vmul.f32 %v29, %v33
  %v37 = vmul.f32 %v32, %v33
  %v38 = vsub.f32 %v14, %v34
  %v39 = vsub.f32 %v15, %v35
  %v40 = vsub.f32 %v16, %v36
  %v41 = vsub.f32 %v17, %v37
  %v42 = vmul.f32 %v38, %v38
  %v43 = vmul.f32 %v39, %v39
  %v44 = vmul.f32 %v40, %v40
  %v45 = vmul.f32 %v41, %v41
  %v46 = vsel %vm20, %v42, 0.0
  %47 = vadd.xlane.f32.xlu0 %v46
  %v48 = vpop.xlane.xlu0 %47
  %v49 = vsel %vm20, %v43, 0.0
  %50 = vadd.xlane.f32.xlu0 %v49
  %v51 = vpop.xlane.xlu0 %50
  %v52 = vsel %vm20, %v44, 0.0
  %53 = vadd.xlane.f32.xlu0 %v52
  %v54 = vpop.xlane.xlu0 %53
  %v55 = vsel %vm20, %v45, 0.0
  %56 = vadd.xlane.f32.xlu0 %v55
  %v57 = vpop.xlane.xlu0 %56
  %v58 = vmul.f32 %v48, %v33
  %v59 = vmul.f32 %v51, %v33
  %v60 = vmul.f32 %v54, %v33
  %v61 = vmul.f32 %v57, %v33
  %v62 = vadd.f32 %v58, 1e-05
  %v63 = vadd.f32 %v59, 1e-05
  %v64 = vadd.f32 %v60, 1e-05
  %v65 = vadd.f32 %v61, 1e-05
  %v66 = vrsqrt.pop %v62
  %v67 = vrsqrt.pop %v63
  %v68 = vrsqrt.pop %v64
  %v69 = vrsqrt.pop %v65
  %v70 = vmul.f32 %v38, %v66
  %v71 = vmul.f32 %v39, %v67
  %v72 = vmul.f32 %v40, %v68
  %v73 = vmul.f32 %v41, %v69
  %v75 = vlaneseq
  %v76 = vshrl.u32 %v75, 7
  %v77 = vsub.s32 0, %v76
  %v78 = vrot.slane %v18, %v77
  %v80 = vmul.f32 %v70, %v78
  %v81 = vmul.f32 %v71, %v78
  %v82 = vmul.f32 %v72, %v78
  %v83 = vmul.f32 %v73, %v78
  %v85 = vlaneseq
  %v86 = vshrl.u32 %v85, 7
  %v87 = vsub.s32 0, %v86
  %v88 = vrot.slane %v19, %v87
  %v90 = vadd.f32 %v80, %v88
  %v91 = vadd.f32 %v81, %v88
  %v92 = vadd.f32 %v82, %v88
  %v93 = vadd.f32 %v83, %v88
  %94 = vst.msk [vmem:[%s3] sm:$0xff] %vm20, %v90
  %95 = vst.msk [vmem:[%s3 + $0x8] sm:$0xff] %vm20, %v91
  %96 = vst.msk [vmem:[%s3 + $0x10] sm:$0xff] %vm20, %v92
  %97 = vst.msk [vmem:[%s3 + $0x18] sm:$0xff] %vm20, %v93
  // Predicated region
  $region14: #{_lambda_.24} parent=0 // pred_check
    _
  $region15: #{_lambda_.24} parent=0 // pred_check_branch
    %99 = sbr.rel (0) target = $region17
  $region16: #{_lambda_.24} parent=0 // pred_region
    _
  $region17: #{_lambda_.24} parent=0 // pred_fallthru
    _
  // Predicated region
  $region18: #{_lambda_.24} parent=0 // pred_check
    _
  $region19: #{_lambda_.24} parent=0 // pred_check_branch
    %101 = sbr.rel (0) target = $region21
  $region20: #{_lambda_.24} parent=0 // pred_region
    _
  $region21: #{_lambda_.24} parent=0 // pred_fallthru
    _

// kernel: _lambda_.26
$region0: #{_lambda_.26}
  #allocation0 [shape = 'u32[]', space=smem, size = 0x4, offset = 0x4, fixed_abs, tag = 'smem constant byte address 0x4 - core index']
  #allocation1 [shape = 'u32[144,128]{1,0:T(1,128)}', space=vmem, size = 0x12000, scoped, tag = 'internal scratch']
  %s0 = inlined_call_operand.vmem [shape: f32[32,32], index: 0, kind: input, shape index: {}]
  %s1 = inlined_call_operand.vmem [shape: f32[1,32], index: 1, kind: input, shape index: {}]
  %s2 = inlined_call_operand.vmem [shape: f32[1,32], index: 2, kind: input, shape index: {}]
  %s3 = inlined_call_operand.vmem [shape: bf16[32,128], index: 3, kind: input, shape index: {}]
  %s4 = inlined_call_operand.vmem [shape: f32[1,128], index: 4, kind: input, shape index: {}]
  %s5 = inlined_call_operand.vmem [shape: bf16[128,32], index: 5, kind: input, shape index: {}]
  %s6 = inlined_call_operand.vmem [shape: f32[1,32], index: 6, kind: input, shape index: {}]
  %s7 = inlined_call_operand.vmem [shape: f32[32,32], index: 7, kind: output, shape index: {}]
  %s8 = sld [smem:[#allocation0]]
  $region38: #{_lambda_.26} parent=0
    _
  %s10 = ssub.s32 1, %s8
  %s11 = scalar_select 0, %s10, %s8
  // Predicated region
  $region2: #{_lambda_.26} parent=0 // pred_check
    _
  $region3: #{_lambda_.26} parent=0 // pred_check_branch
    %13 = sbr.rel (0) target = $region5
  $region4: #{_lambda_.26} parent=0 // pred_region
    _
  $region5: #{_lambda_.26} parent=0 // pred_fallthru
    _
  // Predicated region
  $region6: #{_lambda_.26} parent=0 // pred_check
    _
  $region7: #{_lambda_.26} parent=0 // pred_check_branch
    %15 = sbr.rel (0) target = $region9
  $region8: #{_lambda_.26} parent=0 // pred_region
    _
  $region9: #{_lambda_.26} parent=0 // pred_fallthru
    _
  // Predicated region
  $region10: #{_lambda_.26} parent=0 // pred_check
    _
  $region11: #{_lambda_.26} parent=0 // pred_check_branch
    %17 = sbr.rel (0) target = $region13
  $region12: #{_lambda_.26} parent=0 // pred_region
    _
  $region13: #{_lambda_.26} parent=0 // pred_fallthru
    _
  // Predicated region
  $region14: #{_lambda_.26} parent=0 // pred_check
    _
  $region15: #{_lambda_.26} parent=0 // pred_check_branch
    %19 = sbr.rel (0) target = $region17
  $region16: #{_lambda_.26} parent=0 // pred_region
    _
  $region17: #{_lambda_.26} parent=0 // pred_fallthru
    _
  // Predicated region
  $region18: #{_lambda_.26} parent=0 // pred_check
    _
  $region19: #{_lambda_.26} parent=0 // pred_check_branch
    %21 = sbr.rel (0) target = $region21
  $region20: #{_lambda_.26} parent=0 // pred_region
    _
  $region21: #{_lambda_.26} parent=0 // pred_fallthru
    _
  // Predicated region
  $region22: #{_lambda_.26} parent=0 // pred_check
    _
  $region23: #{_lambda_.26} parent=0 // pred_check_branch
    %23 = sbr.rel (0) target = $region25
  $region24: #{_lambda_.26} parent=0 // pred_region
    _
  $region25: #{_lambda_.26} parent=0 // pred_fallthru
    _
  // Predicated region
  $region26: #{_lambda_.26} parent=0 // pred_check
    _
  $region27: #{_lambda_.26} parent=0 // pred_check_branch
    %25 = sbr.rel (0) target = $region29
  $region28: #{_lambda_.26} parent=0 // pred_region
    _
  $region29: #{_lambda_.26} parent=0 // pred_fallthru
    _
  %v27 = vld [vmem:[%s0] sm:$0xff]
  %v28 = vld [vmem:[%s0 + $0x8] sm:$0xff]
  %v29 = vld [vmem:[%s0 + $0x10] sm:$0xff]
  %v30 = vld [vmem:[%s0 + $0x18] sm:$0xff]
  %v31 = vld [vmem:[%s1] sm:$0x1]
  %v32 = vld [vmem:[%s2] sm:$0x1]
  %vm33 = vcmask 261120
  %v34 = vsel %vm33, %v27, 0.0
  %35 = vadd.xlane.f32.xlu0 %v34
  %v36 = vpop.xlane.xlu0 %35
  %v37 = vsel %vm33, %v28, 0.0
  %38 = vadd.xlane.f32.xlu0 %v37
  %v39 = vpop.xlane.xlu0 %38
  %v40 = vsel %vm33, %v29, 0.0
  %41 = vadd.xlane.f32.xlu0 %v40
  %v42 = vpop.xlane.xlu0 %41
  %v43 = vsel %vm33, %v30, 0.0
  %44 = vadd.xlane.f32.xlu0 %v43
  %v45 = vpop.xlane.xlu0 %44
  %v46 = vrcp.pop 32.0
  %v47 = vmul.f32 %v36, %v46
  %v48 = vmul.f32 %v39, %v46
  %v49 = vmul.f32 %v42, %v46
  %v50 = vmul.f32 %v45, %v46
  %v51 = vsub.f32 %v27, %v47
  %v52 = vsub.f32 %v28, %v48
  %v53 = vsub.f32 %v29, %v49
  %v54 = vsub.f32 %v30, %v50
  %v55 = vmul.f32 %v51, %v51
  %v56 = vmul.f32 %v52, %v52
  %v57 = vmul.f32 %v53, %v53
  %v58 = vmul.f32 %v54, %v54
  %v59 = vsel %vm33, %v55, 0.0
  %60 = vadd.xlane.f32.xlu0 %v59
  %v61 = vpop.xlane.xlu0 %60
  %v62 = vsel %vm33, %v56, 0.0
  %63 = vadd.xlane.f32.xlu0 %v62
  %v64 = vpop.xlane.xlu0 %63
  %v65 = vsel %vm33, %v57, 0.0
  %66 = vadd.xlane.f32.xlu0 %v65
  %v67 = vpop.xlane.xlu0 %66
  %v68 = vsel %vm33, %v58, 0.0
  %69 = vadd.xlane.f32.xlu0 %v68
  %v70 = vpop.xlane.xlu0 %69
  %v71 = vmul.f32 %v61, %v46
  %v72 = vmul.f32 %v64, %v46
  %v73 = vmul.f32 %v67, %v46
  %v74 = vmul.f32 %v70, %v46
  %v75 = vadd.f32 %v71, 1e-05
  %v76 = vadd.f32 %v72, 1e-05
  %v77 = vadd.f32 %v73, 1e-05
  %v78 = vadd.f32 %v74, 1e-05
  %v79 = vrsqrt.pop %v75
  %v80 = vrsqrt.pop %v76
  %v81 = vrsqrt.pop %v77
  %v82 = vrsqrt.pop %v78
  %v83 = vmul.f32 %v51, %v79
  %v84 = vmul.f32 %v52, %v80
  %v85 = vmul.f32 %v53, %v81
  %v86 = vmul.f32 %v54, %v82
  %v88 = vlaneseq
  %v89 = vshrl.u32 %v88, 7
  %v90 = vsub.s32 0, %v89
  %v91 = vrot.slane %v31, %v90
  %v93 = vmul.f32 %v83, %v91
  %v94 = vmul.f32 %v84, %v91
  %v95 = vmul.f32 %v85, %v91
  %v96 = vmul.f32 %v86, %v91
  %v98 = vlaneseq
  %v99 = vshrl.u32 %v98, 7
  %v100 = vsub.s32 0, %v99
  %v101 = vrot.slane %v32, %v100
  %v103 = vadd.f32 %v93, %v101
  %v104 = vadd.f32 %v94, %v101
  %v105 = vadd.f32 %v95, %v101
  %v106 = vadd.f32 %v96, %v101
  %v107 = vpack.c.bf16 %v104, %v103
  %v108 = vpack.c.bf16 %v106, %v105
  %v109 = vld [vmem:[%s3] sm:$0xf]
  %v110 = vld [vmem:[%s3 + $0x4] sm:$0xf]
  %v111 = vld [vmem:[%s3 + $0x8] sm:$0xf]
  %v112 = vld [vmem:[%s3 + $0xc] sm:$0xf]
  %v113 = vld [vmem:[%s4] sm:$0x1]
  %v115 = vlaneseq
  %v116 = vshrl.u32 %v115, 7
  %v117 = vsub.s32 0, %v116
  %v118 = vrot.slane %v113, %v117
  %v124 = vunpack.c.l.b16 %v109
  %v125 = vunpack.c.l.b16 %v110
  %v126 = vunpack.c.l.b16 %v111
  %v127 = vunpack.c.l.b16 %v112
  %v128 = vpack.c.b16 %v125, %v124
  %v129 = vpack.c.b16 %v127, %v126
  %v133 = vsel %vm33, %v107, 0
  %v136 = vsel %vm33, %v108, 0
  %138 = vmatprep.subr.bf16.mxu0 0
  %139 = vmatpush1.bf16.msra.mxu0 0
  %140 = vmatprep.subr.bf16.mxu0 0
  %141 = vmatpush1.bf16.msra.mxu0 0
  %142 = vmatprep.subr.bf16.mxu0 0
  %143 = vmatpush1.bf16.msra.mxu0 0
  %144 = vmatprep.subr.bf16.mxu0 0
  %145 = vmatpush1.bf16.msra.mxu0 0
  %146 = vmatprep.subr.bf16.mxu0 0
  %147 = vmatpush1.bf16.msra.mxu0 0
  %148 = vmatprep.subr.bf16.mxu0 0
  %149 = vmatpush1.bf16.msra.mxu0 0
  %150 = vmatprep.subr.bf16.mxu0 0
  %151 = vmatpush1.bf16.msra.mxu0 %v129
  %152 = vmatprep.subr.bf16.mxu0 0
  %153 = vmatpush1.bf16.msra.mxu0 %v128
  %154 = vmatprep.subr.bf16.mxu0 0
  %155 = vmatpush2.bf16.msra.mxu0 0
  %156 = vmatprep.subr.bf16.mxu0 0
  %157 = vmatpush2.bf16.msra.mxu0 0
  %158 = vmatprep.subr.bf16.mxu0 0
  %159 = vmatpush2.bf16.msra.mxu0 0
  %160 = vmatprep.subr.bf16.mxu0 0
  %161 = vmatpush2.bf16.msra.mxu0 0
  %162 = vmatprep.subr.bf16.mxu0 0
  %163 = vmatpush2.bf16.msra.mxu0 0
  %164 = vmatprep.subr.bf16.mxu0 0
  %165 = vmatpush2.bf16.msra.mxu0 0
  %166 = vmatprep.subr.bf16.mxu0 0
  %167 = vmatpush2.bf16.msra.mxu0 0
  %168 = vmatprep.subr.bf16.mxu0 0
  %169 = vmatpush2.bf16.msra.mxu0 0
  %170 = vmatprep.mubr.bf16.mxu0 0
  %171 = vmatmul.mubr.bf16.gmra.mxu0 %v133
  %v172 = vpop.f32.mrf.mxu0
  %v173 = vadd.f32 %v118, %v172
  %v174 = vpop.f32.mrf.mxu0
  %v175 = vpop.f32.mrf.mxu0
  %v176 = vadd.f32 %v118, %v175
  %v177 = vpop.f32.mrf.mxu0
  %178 = vmatprep.mubr.bf16.mxu0 0
  %179 = vmatmul.mubr.bf16.gmra.mxu0 %v136
  %v180 = vpop.f32.mrf.mxu0
  %v181 = vadd.f32 %v118, %v180
  %v182 = vpop.f32.mrf.mxu0
  %v183 = vpop.f32.mrf.mxu0
  %v184 = vadd.f32 %v118, %v183
  %v185 = vpop.f32.mrf.mxu0
  %186 = vdwg.mxu0
  %v187 = vmul.f32 %v173, 0.5
  %v188 = vmul.f32 %v176, 0.5
  %v189 = vmul.f32 %v181, 0.5
  %v190 = vmul.f32 %v184, 0.5
  %v191 = vmul.f32 %v173, 0.70710677
  %v192 = vmul.f32 %v176, 0.70710677
  %v193 = vmul.f32 %v181, 0.70710677
  %v194 = vmul.f32 %v184, 0.70710677
  %v195 = vand.u32 2147483647, %v191
  %v196 = vand.u32 2147483647, %v192
  %v197 = vand.u32 2147483647, %v193
  %v198 = vand.u32 2147483647, %v194
  %v199 = vmul.f32 %v195, 0.3275911
  %v200 = vmul.f32 %v196, 0.3275911
  %v201 = vmul.f32 %v197, 0.3275911
  %v202 = vmul.f32 %v198, 0.3275911
  %v203 = vadd.f32 %v199, 1.0
  %v204 = vadd.f32 %v200, 1.0
  %v205 = vadd.f32 %v201, 1.0
  %v206 = vadd.f32 %v202, 1.0
  %v207 = vrcp.pop %v203
  %v208 = vmul.f32 1.0, %v207
  %v209 = vrcp.pop %v204
  %v210 = vmul.f32 1.0, %v209
  %v211 = vrcp.pop %v205
  %v212 = vmul.f32 1.0, %v211
  %v213 = vrcp.pop %v206
  %v214 = vmul.f32 1.0, %v213
  %v215 = vmul.f32 %v208, 1.0614054
  %v216 = vmul.f32 %v210, 1.0614054
  %v217 = vmul.f32 %v212, 1.0614054
  %v218 = vmul.f32 %v214, 1.0614054
  %v219 = vadd.f32 %v215, -1.4531521
  %v220 = vadd.f32 %v216, -1.4531521
  %v221 = vadd.f32 %v217, -1.4531521
  %v222 = vadd.f32 %v218, -1.4531521
  %v223 = vmul.f32 %v219, %v208
  %v224 = vmul.f32 %v220, %v210
  %v225 = vmul.f32 %v221, %v212
  %v226 = vmul.f32 %v222, %v214
  %v227 = vadd.f32 %v223, 1.4214138
  %v228 = vadd.f32 %v224, 1.4214138
  %v229 = vadd.f32 %v225, 1.4214138
  %v230 = vadd.f32 %v226, 1.4214138
  %v231 = vmul.f32 %v227, %v208
  %v232 = vmul.f32 %v228, %v210
  %v233 = vmul.f32 %v229, %v212
  %v234 = vmul.f32 %v230, %v214
  %v235 = vadd.f32 %v231, -0.28449672
  %v236 = vadd.f32 %v232, -0.28449672
  %v237 = vadd.f32 %v233, -0.28449672
  %v238 = vadd.f32 %v234, -0.28449672
  %v239 = vmul.f32 %v235, %v208
  %v240 = vmul.f32 %v236, %v210
  %v241 = vmul.f32 %v237, %v212
  %v242 = vmul.f32 %v238, %v214
  %v243 = vadd.f32 %v239, 0.2548296
  %v244 = vadd.f32 %v240, 0.2548296
  %v245 = vadd.f32 %v241, 0.2548296
  %v246 = vadd.f32 %v242, 0.2548296
  %v247 = vmul.f32 %v243, %v208
  %v248 = vmul.f32 %v244, %v210
  %v249 = vmul.f32 %v245, %v212
  %v250 = vmul.f32 %v246, %v214
  %v251 = vsub.f32 0.0, %v195
  %v252 = vsub.f32 0.0, %v196
  %v253 = vsub.f32 0.0, %v197
  %v254 = vsub.f32 0.0, %v198
  %v255 = vmul.f32 %v251, %v195
  %v256 = vmul.f32 %v252, %v196
  %v257 = vmul.f32 %v253, %v197
  %v258 = vmul.f32 %v254, %v198
  %v259 = vmul.f32 %v255, 1.442695
  %v260 = vpow.pop %v259
  %v261 = vmul.f32 %v256, 1.442695
  %v262 = vpow.pop %v261
  %v263 = vmul.f32 %v257, 1.442695
  %v264 = vpow.pop %v263
  %v265 = vmul.f32 %v258, 1.442695
  %v266 = vpow.pop %v265
  %v267 = vmul.f32 %v247, %v260
  %v268 = vmul.f32 %v248, %v262
  %v269 = vmul.f32 %v249, %v264
  %v270 = vmul.f32 %v250, %v266
  %v271 = vsub.f32 1.0, %v267
  %v272 = vsub.f32 1.0, %v268
  %v273 = vsub.f32 1.0, %v269
  %v274 = vsub.f32 1.0, %v270
  %vm275 = vcmp.ge.f32.partialorder %v191, 0.0
  %vm276 = vcmp.ge.f32.partialorder %v192, 0.0
  %vm277 = vcmp.ge.f32.partialorder %v193, 0.0
  %vm278 = vcmp.ge.f32.partialorder %v194, 0.0
  %v279 = vsub.f32 0.0, %v271
  %v280 = vsub.f32 0.0, %v272
  %v281 = vsub.f32 0.0, %v273
  %v282 = vsub.f32 0.0, %v274
  %v283 = vsel %vm275, %v271, %v279
  %v284 = vsel %vm276, %v272, %v280
  %v285 = vsel %vm277, %v273, %v281
  %v286 = vsel %vm278, %v274, %v282
  %v287 = vadd.f32 %v283, 1.0
  %v288 = vadd.f32 %v284, 1.0
  %v289 = vadd.f32 %v285, 1.0
  %v290 = vadd.f32 %v286, 1.0
  %v291 = vmul.f32 %v187, %v287
  %v292 = vmul.f32 %v188, %v288
  %v293 = vmul.f32 %v189, %v289
  %v294 = vmul.f32 %v190, %v290
  %v295 = vpack.c.bf16 %v292, %v291
  %v296 = vpack.c.bf16 %v294, %v293
  %v297 = vld [vmem:[%s5] sm:$0xf]
  %v298 = vld [vmem:[%s5 + $0x4] sm:$0xf]
  %v299 = vld [vmem:[%s5 + $0x8] sm:$0xf]
  %v300 = vld [vmem:[%s5 + $0xc] sm:$0xf]
  %v301 = vld [vmem:[%s5 + $0x10] sm:$0xf]
  %v302 = vld [vmem:[%s5 + $0x14] sm:$0xf]
  %v303 = vld [vmem:[%s5 + $0x18] sm:$0xf]
  %v304 = vld [vmem:[%s5 + $0x1c] sm:$0xf]
  %v305 = vld [vmem:[%s5 + $0x20] sm:$0xf]
  %v306 = vld [vmem:[%s5 + $0x24] sm:$0xf]
  %v307 = vld [vmem:[%s5 + $0x28] sm:$0xf]
  %v308 = vld [vmem:[%s5 + $0x2c] sm:$0xf]
  %v309 = vld [vmem:[%s5 + $0x30] sm:$0xf]
  %v310 = vld [vmem:[%s5 + $0x34] sm:$0xf]
  %v311 = vld [vmem:[%s5 + $0x38] sm:$0xf]
  %v312 = vld [vmem:[%s5 + $0x3c] sm:$0xf]
  %v329 = vunpack.c.l.b16 %v297
  %v330 = vunpack.c.l.b16 %v298
  %v331 = vunpack.c.l.b16 %v299
  %v332 = vunpack.c.l.b16 %v300
  %v333 = vunpack.c.l.b16 %v301
  %v334 = vunpack.c.l.b16 %v302
  %v335 = vunpack.c.l.b16 %v303
  %v336 = vunpack.c.l.b16 %v304
  %v337 = vunpack.c.l.b16 %v305
  %v338 = vunpack.c.l.b16 %v306
  %v339 = vunpack.c.l.b16 %v307
  %v340 = vunpack.c.l.b16 %v308
  %v341 = vunpack.c.l.b16 %v309
  %v342 = vunpack.c.l.b16 %v310
  %v343 = vunpack.c.l.b16 %v311
  %v344 = vunpack.c.l.b16 %v312
  %v345 = vpack.c.b16 %v330, %v329
  %v346 = vpack.c.b16 %v332, %v331
  %v347 = vpack.c.b16 %v334, %v333
  %v348 = vpack.c.b16 %v336, %v335
  %v349 = vpack.c.b16 %v338, %v337
  %v350 = vpack.c.b16 %v340, %v339
  %v351 = vpack.c.b16 %v342, %v341
  %v352 = vpack.c.b16 %v344, %v343
  %361 = vmatprep.subr.bf16.mxu0 0
  %362 = vmatpush1.bf16.msra.mxu0 %v352
  %363 = vmatprep.subr.bf16.mxu0 0
  %364 = vmatpush1.bf16.msra.mxu0 %v351
  %365 = vmatprep.subr.bf16.mxu0 0
  %366 = vmatpush1.bf16.msra.mxu0 %v350
  %367 = vmatprep.subr.bf16.mxu0 0
  %368 = vmatpush1.bf16.msra.mxu0 %v349
  %369 = vmatprep.subr.bf16.mxu0 0
  %370 = vmatpush1.bf16.msra.mxu0 %v348
  %371 = vmatprep.subr.bf16.mxu0 0
  %372 = vmatpush1.bf16.msra.mxu0 %v347
  %373 = vmatprep.subr.bf16.mxu0 0
  %374 = vmatpush1.bf16.msra.mxu0 %v346
  %375 = vmatprep.subr.bf16.mxu0 0
  %376 = vmatpush1.bf16.msra.mxu0 %v345
  %377 = vmatprep.subr.bf16.mxu0 0
  %378 = vmatpush2.bf16.msra.mxu0 0
  %379 = vmatprep.subr.bf16.mxu0 0
  %380 = vmatpush2.bf16.msra.mxu0 0
  %381 = vmatprep.subr.bf16.mxu0 0
  %382 = vmatpush2.bf16.msra.mxu0 0
  %383 = vmatprep.subr.bf16.mxu0 0
  %384 = vmatpush2.bf16.msra.mxu0 0
  %385 = vmatprep.subr.bf16.mxu0 0
  %386 = vmatpush2.bf16.msra.mxu0 0
  %387 = vmatprep.subr.bf16.mxu0 0
  %388 = vmatpush2.bf16.msra.mxu0 0
  %389 = vmatprep.subr.bf16.mxu0 0
  %390 = vmatpush2.bf16.msra.mxu0 0
  %391 = vmatprep.subr.bf16.mxu0 0
  %392 = vmatpush2.bf16.msra.mxu0 0
  %393 = vmatprep.mubr.bf16.mxu0 0
  %394 = vmatmul.mubr.bf16.gmra.mxu0 %v295
  %v395 = vpop.f32.mrf.mxu0
  %v396 = vadd.f32 0.0, %v395
  %v397 = vpop.f32.mrf.mxu0
  %v398 = vpop.f32.mrf.mxu0
  %v399 = vadd.f32 0.0, %v398
  %v400 = vpop.f32.mrf.mxu0
  %401 = vmatprep.mubr.bf16.mxu0 0
  %402 = vmatmul.mubr.bf16.gmra.mxu0 %v296
  %v403 = vpop.f32.mrf.mxu0
  %v404 = vadd.f32 0.0, %v403
  %v405 = vpop.f32.mrf.mxu0
  %v406 = vpop.f32.mrf.mxu0
  %v407 = vadd.f32 0.0, %v406
  %v408 = vpop.f32.mrf.mxu0
  %409 = vdwg.mxu0
  %v410 = vadd.f32 %v27, %v396
  %v411 = vadd.f32 %v28, %v399
  %v412 = vadd.f32 %v29, %v404
  %v413 = vadd.f32 %v30, %v407
  %v414 = vld [vmem:[%s6] sm:$0x1]
  %v416 = vlaneseq
  %v417 = vshrl.u32 %v416, 7
  %v418 = vsub.s32 0, %v417
  %v419 = vrot.slane %v414, %v418
  %v421 = vadd.f32 %v410, %v419
  %v422 = vadd.f32 %v411, %v419
  %v423 = vadd.f32 %v412, %v419
  %v424 = vadd.f32 %v413, %v419
  %425 = vst.msk [vmem:[%s7] sm:$0xff] %vm33, %v421
  %426 = vst.msk [vmem:[%s7 + $0x8] sm:$0xff] %vm33, %v422
  %427 = vst.msk [vmem:[%s7 + $0x10] sm:$0xff] %vm33, %v423
  %428 = vst.msk [vmem:[%s7 + $0x18] sm:$0xff] %vm33, %v424
  // Predicated region
  $region30: #{_lambda_.26} parent=0 // pred_check
    _
  $region31: #{_lambda_.26} parent=0 // pred_check_branch
    %430 = sbr.rel (0) target = $region33
  $region32: #{_lambda_.26} parent=0 // pred_region
    _
  $region33: #{_lambda_.26} parent=0 // pred_fallthru
    _
  // Predicated region
  $region34: #{_lambda_.26} parent=0 // pred_check
    _
  $region35: #{_lambda_.26} parent=0 // pred_check_branch
    %432 = sbr.rel (0) target = $region37
  $region36: #{_lambda_.26} parent=0 // pred_region
    _
  $region37: #{_lambda_.26} parent=0 // pred_fallthru
    _

// kernel: _lambda_.25
$region0: #{_lambda_.25}
  #allocation0 [shape = 'u32[]', space=smem, size = 0x4, offset = 0x4, fixed_abs, tag = 'smem constant byte address 0x4 - core index']
  #allocation1 [shape = 'u32[144,128]{1,0:T(1,128)}', space=vmem, size = 0x12000, scoped, tag = 'internal scratch']
  %s0 = inlined_call_operand.vmem [shape: f32[8,4,32], index: 0, kind: input, shape index: {}]
  %s1 = inlined_call_operand.vmem [shape: f32[1,32], index: 1, kind: input, shape index: {}]
  %s2 = inlined_call_operand.vmem [shape: f32[1,32], index: 2, kind: input, shape index: {}]
  %s3 = inlined_call_operand.vmem [shape: bf16[32,96], index: 3, kind: input, shape index: {}]
  %s4 = inlined_call_operand.vmem [shape: f32[1,96], index: 4, kind: input, shape index: {}]
  %s5 = inlined_call_operand.vmem [shape: bf16[32,32], index: 5, kind: input, shape index: {}]
  %s6 = inlined_call_operand.vmem [shape: f32[1,32], index: 6, kind: input, shape index: {}]
  %s7 = inlined_call_operand.vmem [shape: f32[2,4,4], index: 7, kind: input, shape index: {}]
  %s8 = inlined_call_operand.vmem [shape: f32[4,4,4], index: 8, kind: input, shape index: {}]
  %s9 = inlined_call_operand.vmem [shape: f32[8,4,32], index: 9, kind: output, shape index: {}]
  %s10 = sld [smem:[#allocation0]]
  $region69: #{_lambda_.25} parent=0
    _
  %s12 = ssub.s32 1, %s10
  %s13 = scalar_select 0, %s12, %s10
  loop: start=0, step=1, limit=4
  $region2: #{_lambda_.25} parent=0 // loop_pre_header
    _
  $region3: #{_lambda_.25} parent=0 // loop_header
    %s15 = sphi 0, %s19
    %p16 = scmp.ge.s32.totalorder %s15, 4
    %s25 = sphi 0, %s27
    %s28 = sphi 0, %s25
    %s29 = sphi 0, %s28
    %s45 = sphi 0, %s29
    %s49 = sphi 0, %s49
    %s51 = sphi 0, %s49
    %s52 = sphi 0, %s51
    %s66 = sphi 0, %s52
    %s70 = sphi 0, %s70
    %s72 = sphi 0, %s70
    %s73 = sphi 0, %s72
    %s87 = sphi 0, %s73
    %s91 = sphi 0, %s91
    %s93 = sphi 0, %s91
    %s94 = sphi 0, %s93
    %s108 = sphi 0, %s94
    %s112 = sphi 0, %s112
    %s114 = sphi 0, %s112
    %s115 = sphi 0, %s114
    %s129 = sphi 0, %s115
    %s133 = sphi 0, %s133
    %s135 = sphi 0, %s133
    %s136 = sphi 0, %s135
    %s150 = sphi 0, %s136
    %s154 = sphi 0, %s154
    %s156 = sphi 0, %s154
    %s157 = sphi 0, %s156
    %s171 = sphi 0, %s157
    %s175 = sphi 0, %s175
    %s177 = sphi 0, %s175
    %s178 = sphi 0, %s177
    %s192 = sphi 0, %s178
    %s196 = sphi 0, %s196
    %s198 = sphi 0, %s196
    %s199 = sphi 0, %s198
    %s213 = sphi 0, %s199
    %s219 = sphi 0, %s221
    %s222 = sphi 0, %s219
    %s223 = sphi 0, %s222
    %s239 = sphi 0, %s223
  $region4: #{_lambda_.25} parent=0 // loop_header_branch
    %18 = sbr.rel (%p16) target = $region8
  $region5: #{_lambda_.25} parent=0 // loop_body
    %s20 = ssub.s32 %s15, 1
    %s21 = ssub.s32 %s15, 2
    %s22 = sadd.s32 %s15, 1
    %s23 = ssub.s32 %s15, %s22
    %p24 = scmp.eq.s32.totalorder %s23, 0
    %s26 = sadd.s32 %s25, 1
    %s27 = scalar_select %p24, %s25, %s26
    %p30 = pneg %p24
    %p31 = scmp.eq.s32.totalorder %s15, 1
    %p32 = por %p30, %p31
    %p33 = scmp.ne.s32.totalorder %s25, %s28
    %p34 = scmp.eq.s32.totalorder %s15, 0
    %p35 = por %p33, %p34
    %p36 = scmp.ne.s32.totalorder %s25, %s28
    %p37 = scmp.eq.s32.totalorder %s20, 1
    %p38 = por %p36, %p37
    %p39 = scmp.ne.s32.totalorder %s28, %s29
    %p40 = scmp.eq.s32.totalorder %s20, 0
    %p41 = por %p39, %p40
    %p42 = scmp.ne.s32.totalorder %s28, %s29
    %p43 = scmp.eq.s32.totalorder %s21, 1
    %p44 = por %p42, %p43
    %p46 = scmp.ne.s32.totalorder %s29, %s45
    %p47 = scmp.eq.s32.totalorder %s21, 0
    %p48 = por %p46, %p47
    %s50 = sadd.s32 %s49, 1
    %p53 = scmp.eq.s32.totalorder %s15, 1
    %p54 = scmp.ne.s32.totalorder %s49, %s51
    %p55 = scmp.eq.s32.totalorder %s15, 0
    %p56 = por %p54, %p55
    %p57 = scmp.ne.s32.totalorder %s49, %s51
    %p58 = scmp.eq.s32.totalorder %s20, 1
    %p59 = por %p57, %p58
    %p60 = scmp.ne.s32.totalorder %s51, %s52
    %p61 = scmp.eq.s32.totalorder %s20, 0
    %p62 = por %p60, %p61
    %p63 = scmp.ne.s32.totalorder %s51, %s52
    %p64 = scmp.eq.s32.totalorder %s21, 1
    %p65 = por %p63, %p64
    %p67 = scmp.ne.s32.totalorder %s52, %s66
    %p68 = scmp.eq.s32.totalorder %s21, 0
    %p69 = por %p67, %p68
    %s71 = sadd.s32 %s70, 1
    %p74 = scmp.eq.s32.totalorder %s15, 1
    %p75 = scmp.ne.s32.totalorder %s70, %s72
    %p76 = scmp.eq.s32.totalorder %s15, 0
    %p77 = por %p75, %p76
    %p78 = scmp.ne.s32.totalorder %s70, %s72
    %p79 = scmp.eq.s32.totalorder %s20, 1
    %p80 = por %p78, %p79
    %p81 = scmp.ne.s32.totalorder %s72, %s73
    %p82 = scmp.eq.s32.totalorder %s20, 0
    %p83 = por %p81, %p82
    %p84 = scmp.ne.s32.totalorder %s72, %s73
    %p85 = scmp.eq.s32.totalorder %s21, 1
    %p86 = por %p84, %p85
    %p88 = scmp.ne.s32.totalorder %s73, %s87
    %p89 = scmp.eq.s32.totalorder %s21, 0
    %p90 = por %p88, %p89
    %s92 = sadd.s32 %s91, 1
    %p95 = scmp.eq.s32.totalorder %s15, 1
    %p96 = scmp.ne.s32.totalorder %s91, %s93
    %p97 = scmp.eq.s32.totalorder %s15, 0
    %p98 = por %p96, %p97
    %p99 = scmp.ne.s32.totalorder %s91, %s93
    %p100 = scmp.eq.s32.totalorder %s20, 1
    %p101 = por %p99, %p100
    %p102 = scmp.ne.s32.totalorder %s93, %s94
    %p103 = scmp.eq.s32.totalorder %s20, 0
    %p104 = por %p102, %p103
    %p105 = scmp.ne.s32.totalorder %s93, %s94
    %p106 = scmp.eq.s32.totalorder %s21, 1
    %p107 = por %p105, %p106
    %p109 = scmp.ne.s32.totalorder %s94, %s108
    %p110 = scmp.eq.s32.totalorder %s21, 0
    %p111 = por %p109, %p110
    %s113 = sadd.s32 %s112, 1
    %p116 = scmp.eq.s32.totalorder %s15, 1
    %p117 = scmp.ne.s32.totalorder %s112, %s114
    %p118 = scmp.eq.s32.totalorder %s15, 0
    %p119 = por %p117, %p118
    %p120 = scmp.ne.s32.totalorder %s112, %s114
    %p121 = scmp.eq.s32.totalorder %s20, 1
    %p122 = por %p120, %p121
    %p123 = scmp.ne.s32.totalorder %s114, %s115
    %p124 = scmp.eq.s32.totalorder %s20, 0
    %p125 = por %p123, %p124
    %p126 = scmp.ne.s32.totalorder %s114, %s115
    %p127 = scmp.eq.s32.totalorder %s21, 1
    %p128 = por %p126, %p127
    %p130 = scmp.ne.s32.totalorder %s115, %s129
    %p131 = scmp.eq.s32.totalorder %s21, 0
    %p132 = por %p130, %p131
    %s134 = sadd.s32 %s133, 1
    %p137 = scmp.eq.s32.totalorder %s15, 1
    %p138 = scmp.ne.s32.totalorder %s133, %s135
    %p139 = scmp.eq.s32.totalorder %s15, 0
    %p140 = por %p138, %p139
    %p141 = scmp.ne.s32.totalorder %s133, %s135
    %p142 = scmp.eq.s32.totalorder %s20, 1
    %p143 = por %p141, %p142
    %p144 = scmp.ne.s32.totalorder %s135, %s136
    %p145 = scmp.eq.s32.totalorder %s20, 0
    %p146 = por %p144, %p145
    %p147 = scmp.ne.s32.totalorder %s135, %s136
    %p148 = scmp.eq.s32.totalorder %s21, 1
    %p149 = por %p147, %p148
    %p151 = scmp.ne.s32.totalorder %s136, %s150
    %p152 = scmp.eq.s32.totalorder %s21, 0
    %p153 = por %p151, %p152
    %s155 = sadd.s32 %s154, 1
    %p158 = scmp.eq.s32.totalorder %s15, 1
    %p159 = scmp.ne.s32.totalorder %s154, %s156
    %p160 = scmp.eq.s32.totalorder %s15, 0
    %p161 = por %p159, %p160
    %p162 = scmp.ne.s32.totalorder %s154, %s156
    %p163 = scmp.eq.s32.totalorder %s20, 1
    %p164 = por %p162, %p163
    %p165 = scmp.ne.s32.totalorder %s156, %s157
    %p166 = scmp.eq.s32.totalorder %s20, 0
    %p167 = por %p165, %p166
    %p168 = scmp.ne.s32.totalorder %s156, %s157
    %p169 = scmp.eq.s32.totalorder %s21, 1
    %p170 = por %p168, %p169
    %p172 = scmp.ne.s32.totalorder %s157, %s171
    %p173 = scmp.eq.s32.totalorder %s21, 0
    %p174 = por %p172, %p173
    %s176 = sadd.s32 %s175, 1
    %p179 = scmp.eq.s32.totalorder %s15, 1
    %p180 = scmp.ne.s32.totalorder %s175, %s177
    %p181 = scmp.eq.s32.totalorder %s15, 0
    %p182 = por %p180, %p181
    %p183 = scmp.ne.s32.totalorder %s175, %s177
    %p184 = scmp.eq.s32.totalorder %s20, 1
    %p185 = por %p183, %p184
    %p186 = scmp.ne.s32.totalorder %s177, %s178
    %p187 = scmp.eq.s32.totalorder %s20, 0
    %p188 = por %p186, %p187
    %p189 = scmp.ne.s32.totalorder %s177, %s178
    %p190 = scmp.eq.s32.totalorder %s21, 1
    %p191 = por %p189, %p190
    %p193 = scmp.ne.s32.totalorder %s178, %s192
    %p194 = scmp.eq.s32.totalorder %s21, 0
    %p195 = por %p193, %p194
    %s197 = sadd.s32 %s196, 1
    %p200 = scmp.eq.s32.totalorder %s15, 1
    %p201 = scmp.ne.s32.totalorder %s196, %s198
    %p202 = scmp.eq.s32.totalorder %s15, 0
    %p203 = por %p201, %p202
    %p204 = scmp.ne.s32.totalorder %s196, %s198
    %p205 = scmp.eq.s32.totalorder %s20, 1
    %p206 = por %p204, %p205
    %p207 = scmp.ne.s32.totalorder %s198, %s199
    %p208 = scmp.eq.s32.totalorder %s20, 0
    %p209 = por %p207, %p208
    %p210 = scmp.ne.s32.totalorder %s198, %s199
    %p211 = scmp.eq.s32.totalorder %s21, 1
    %p212 = por %p210, %p211
    %p214 = scmp.ne.s32.totalorder %s199, %s213
    %p215 = scmp.eq.s32.totalorder %s21, 0
    %p216 = por %p214, %p215
    %s217 = ssub.s32 %s15, %s22
    %p218 = scmp.eq.s32.totalorder %s217, 0
    %s220 = sadd.s32 %s219, 1
    %s221 = scalar_select %p218, %s219, %s220
    %p224 = pneg %p218
    %p225 = scmp.eq.s32.totalorder %s15, 1
    %p226 = por %p224, %p225
    %p227 = scmp.ne.s32.totalorder %s219, %s222
    %p228 = scmp.eq.s32.totalorder %s15, 0
    %p229 = por %p227, %p228
    %p230 = scmp.ne.s32.totalorder %s219, %s222
    %p231 = scmp.eq.s32.totalorder %s20, 1
    %p232 = por %p230, %p231
    %p233 = scmp.ne.s32.totalorder %s222, %s223
    %p234 = scmp.eq.s32.totalorder %s20, 0
    %p235 = por %p233, %p234
    %p236 = scmp.ne.s32.totalorder %s222, %s223
    %p237 = scmp.eq.s32.totalorder %s21, 1
    %p238 = por %p236, %p237
    %p240 = scmp.ne.s32.totalorder %s223, %s239
    %p241 = scmp.eq.s32.totalorder %s21, 0
    %p242 = por %p240, %p241
    %p243 = scmp.le.s32.totalorder 1, %s15
    %p244 = scmp.lt.s32.totalorder %s15, 3
    %p245 = pnand %p243, %p244
    %p246 = pneg %p245
    // Predicated region
    $region9: #{_lambda_.25} parent=5 // pred_check
      _
    $region10: #{_lambda_.25} parent=5 // pred_check_branch
      %248 = sbr.rel (%p245) target = $region12
    $region11: #{_lambda_.25} parent=5 // pred_region
      %s249 = ssub.s32 %s15, 1
      // Predicated region
      $region13: #{_lambda_.25} parent=11 // pred_check
        %p250 = pneg %p62
      $region14: #{_lambda_.25} parent=11 // pred_check_branch
        %252 = sbr.rel (%p250) target = $region16
      $region15: #{_lambda_.25} parent=11 // pred_region
        _
      $region16: #{_lambda_.25} parent=11 // pred_fallthru
        _
      // Predicated region
      $region17: #{_lambda_.25} parent=11 // pred_check
        %p253 = pneg %p83
      $region18: #{_lambda_.25} parent=11 // pred_check_branch
        %255 = sbr.rel (%p253) target = $region20
      $region19: #{_lambda_.25} parent=11 // pred_region
        _
      $region20: #{_lambda_.25} parent=11 // pred_fallthru
        _
      // Predicated region
      $region21: #{_lambda_.25} parent=11 // pred_check
        %p256 = pneg %p104
      $region22: #{_lambda_.25} parent=11 // pred_check_branch
        %258 = sbr.rel (%p256) target = $region24
      $region23: #{_lambda_.25} parent=11 // pred_region
        _
      $region24: #{_lambda_.25} parent=11 // pred_fallthru
        _
      // Predicated region
      $region25: #{_lambda_.25} parent=11 // pred_check
        %p259 = pneg %p125
      $region26: #{_lambda_.25} parent=11 // pred_check_branch
        %261 = sbr.rel (%p259) target = $region28
      $region27: #{_lambda_.25} parent=11 // pred_region
        _
      $region28: #{_lambda_.25} parent=11 // pred_fallthru
        _
      // Predicated region
      $region29: #{_lambda_.25} parent=11 // pred_check
        %p262 = pneg %p146
      $region30: #{_lambda_.25} parent=11 // pred_check_branch
        %264 = sbr.rel (%p262) target = $region32
      $region31: #{_lambda_.25} parent=11 // pred_region
        _
      $region32: #{_lambda_.25} parent=11 // pred_fallthru
        _
      // Predicated region
      $region33: #{_lambda_.25} parent=11 // pred_check
        %p265 = pneg %p167
      $region34: #{_lambda_.25} parent=11 // pred_check_branch
        %267 = sbr.rel (%p265) target = $region36
      $region35: #{_lambda_.25} parent=11 // pred_region
        _
      $region36: #{_lambda_.25} parent=11 // pred_fallthru
        _
      // Predicated region
      $region37: #{_lambda_.25} parent=11 // pred_check
        %p268 = pneg %p188
      $region38: #{_lambda_.25} parent=11 // pred_check_branch
        %270 = sbr.rel (%p268) target = $region40
      $region39: #{_lambda_.25} parent=11 // pred_region
        _
      $region40: #{_lambda_.25} parent=11 // pred_fallthru
        _
      // Predicated region
      $region41: #{_lambda_.25} parent=11 // pred_check
        %p271 = pneg %p209
      $region42: #{_lambda_.25} parent=11 // pred_check_branch
        %273 = sbr.rel (%p271) target = $region44
      $region43: #{_lambda_.25} parent=11 // pred_region
        _
      $region44: #{_lambda_.25} parent=11 // pred_fallthru
        _
    $region12: #{_lambda_.25} parent=5 // pred_fallthru
      _
    %p274 = scmp.lt.s32.totalorder %s15, 2
    // Predicated region
    $region45: #{_lambda_.25} parent=5 // pred_check
      %p275 = pneg %p274
    $region46: #{_lambda_.25} parent=5 // pred_check_branch
      %277 = sbr.rel (%p275) target = $region48
    $region47: #{_lambda_.25} parent=5 // pred_region
      // Predicated region
      $region49: #{_lambda_.25} parent=47 // pred_check
        %p278 = pneg %p35
      $region50: #{_lambda_.25} parent=47 // pred_check_branch
        %280 = sbr.rel (%p278) target = $region52
      $region51: #{_lambda_.25} parent=47 // pred_region
        %s281 = smul.u32 4, %s15
        %p282 = scmp.lt.s32.totalorder %s281, 7
        %s283 = scalar_select %p282, %s281, 7
        %s284 = smul.addr %s283, 4
        %s285 = scalar_lea.vmem %s0, %s284
        %s286 = smul.u32 4, %s15
      $region52: #{_lambda_.25} parent=47 // pred_fallthru
        _
    $region48: #{_lambda_.25} parent=5 // pred_fallthru
      _
    %p287 = scmp.le.s32.totalorder 1, %s15
    %p288 = scmp.lt.s32.totalorder %s15, 3
    %p289 = pnand %p287, %p288
    %p290 = pneg %p289
    // Predicated region
    $region53: #{_lambda_.25} parent=5 // pred_check
      _
    $region54: #{_lambda_.25} parent=5 // pred_check_branch
      %292 = sbr.rel (%p289) target = $region56
    $region55: #{_lambda_.25} parent=5 // pred_region
      %s293 = ssub.s32 %s15, 1
      %s294 = smul.u32 4, %s20
      %p295 = scmp.lt.s32.totalorder %s294, 7
      %s296 = scalar_select %p295, %s294, 7
      %s297 = smul.addr %s296, 4
      %s298 = scalar_lea.vmem %s0, %s297
      %p299 = pneg %p41
      %p300 = pneg %p38
      %p301 = pneg %p62
      %p302 = pneg %p59
      %p303 = pneg %p83
      %p304 = pneg %p80
      %p305 = pneg %p104
      %p306 = pneg %p101
      %p307 = pneg %p125
      %p308 = pneg %p122
      %p309 = pneg %p146
      %p310 = pneg %p143
      %p311 = pneg %p167
      %p312 = pneg %p164
      %p313 = pneg %p188
      %p314 = pneg %p185
      %p315 = pneg %p209
      %p316 = pneg %p206
      %p317 = pneg %p235
      %p318 = pneg %p232
      %s319 = smul.u32 4, %s20
      %p320 = scmp.lt.s32.totalorder %s319, 7
      %s321 = scalar_select %p320, %s319, 7
      %s322 = smul.addr %s321, 4
      %s323 = scalar_lea.vmem %s9, %s322
      %s324 = smul.u32 4, %s20
      %p325 = scmp.lt.s32.totalorder %s324, 7
      %s326 = scalar_select %p325, %s324, 7
      %s327 = smul.addr %s326, 4
      %s328 = scalar_lea.vmem %s0, %s327
      %s329 = smul.u32 4, %s20
      %s330 = smul.u32 4, %s20
      %p331 = scmp.lt.s32.totalorder %s330, 7
      %s332 = scalar_select %p331, %s330, 7
      %s333 = smul.addr %s332, 4
      %s334 = scalar_lea.vmem %s9, %s333
      %s335 = smul.u32 4, %s20
      %v337 = vld [vmem:[%s328] sm:$0xf]
      %v338 = vld [vmem:[%s328 + $0x4] sm:$0xf]
      %v339 = vld [vmem:[%s328 + $0x8] sm:$0xf]
      %v340 = vld [vmem:[%s328 + $0xc] sm:$0xf]
      %v341 = vld [vmem:[%s1] sm:$0x1]
      %v342 = vld [vmem:[%s2] sm:$0x1]
      %v347 = vcombine.low %v337, %v338
      %v348 = vcombine.low %v339, %v340
      %vm351 = vcmask 261120
      %v352 = vsel %vm351, %v347, 0.0
      %353 = vadd.xlane.f32.xlu0 %v352
      %v354 = vpop.xlane.xlu0 %353
      %v355 = vsel %vm351, %v348, 0.0
      %356 = vadd.xlane.f32.xlu0 %v355
      %v357 = vpop.xlane.xlu0 %356
      %v358 = vrcp.pop 32.0
      %v359 = vmul.f32 %v354, %v358
      %v360 = vmul.f32 %v357, %v358
      %v364 = vunpack.c.l.s4 839922192
      %v365 = vunpack.c.0.s8 %v364
      %v366 = vlaneseq
      %v367 = vshrl.u32 %v366, 7
      %v368 = vsub.s32 %v365, %v367
      %v369 = vrot.slane %v359, %v368
      %v371 = vunpack.c.l.s4 1985246804
      %v372 = vunpack.c.0.s8 %v371
      %v373 = vlaneseq
      %v374 = vshrl.u32 %v373, 7
      %v375 = vsub.s32 %v372, %v374
      %v376 = vrot.slane %v359, %v375
      %v378 = vunpack.c.l.s4 839922192
      %v379 = vunpack.c.0.s8 %v378
      %v380 = vlaneseq
      %v381 = vshrl.u32 %v380, 7
      %v382 = vsub.s32 %v379, %v381
      %v383 = vrot.slane %v360, %v382
      %v385 = vunpack.c.l.s4 1985246804
      %v386 = vunpack.c.0.s8 %v385
      %v387 = vlaneseq
      %v388 = vshrl.u32 %v387, 7
      %v389 = vsub.s32 %v386, %v388
      %v390 = vrot.slane %v360, %v389
      %v395 = vsub.f32 %v337, %v369
      %v396 = vsub.f32 %v338, %v376
      %v397 = vsub.f32 %v339, %v383
      %v398 = vsub.f32 %v340, %v390
      %v399 = vmul.f32 %v395, %v395
      %v400 = vmul.f32 %v396, %v396
      %v401 = vmul.f32 %v397, %v397
      %v402 = vmul.f32 %v398, %v398
      %v407 = vcombine.low %v399, %v400
      %v408 = vcombine.low %v401, %v402
      %v411 = vsel %vm351, %v407, 0.0
      %412 = vadd.xlane.f32.xlu0 %v411
      %v413 = vpop.xlane.xlu0 %412
      %v414 = vsel %vm351, %v408, 0.0
      %415 = vadd.xlane.f32.xlu0 %v414
      %v416 = vpop.xlane.xlu0 %415
      %v417 = vmul.f32 %v413, %v358
      %v418 = vmul.f32 %v416, %v358
      %v419 = vadd.f32 %v417, 1e-05
      %v420 = vadd.f32 %v418, 1e-05
      %v421 = vrsqrt.pop %v419
      %v422 = vrsqrt.pop %v420
      %v426 = vunpack.c.l.s4 839922192
      %v427 = vunpack.c.0.s8 %v426
      %v428 = vlaneseq
      %v429 = vshrl.u32 %v428, 7
      %v430 = vsub.s32 %v427, %v429
      %v431 = vrot.slane %v421, %v430
      %v433 = vunpack.c.l.s4 1985246804
      %v434 = vunpack.c.0.s8 %v433
      %v435 = vlaneseq
      %v436 = vshrl.u32 %v435, 7
      %v437 = vsub.s32 %v434, %v436
      %v438 = vrot.slane %v421, %v437
      %v440 = vunpack.c.l.s4 839922192
      %v441 = vunpack.c.0.s8 %v440
      %v442 = vlaneseq
      %v443 = vshrl.u32 %v442, 7
      %v444 = vsub.s32 %v441, %v443
      %v445 = vrot.slane %v422, %v444
      %v447 = vunpack.c.l.s4 1985246804
      %v448 = vunpack.c.0.s8 %v447
      %v449 = vlaneseq
      %v450 = vshrl.u32 %v449, 7
      %v451 = vsub.s32 %v448, %v450
      %v452 = vrot.slane %v422, %v451
      %v457 = vmul.f32 %v395, %v431
      %v458 = vmul.f32 %v396, %v438
      %v459 = vmul.f32 %v397, %v445
      %v460 = vmul.f32 %v398, %v452
      %v462 = vlaneseq
      %v463 = vshrl.u32 %v462, 7
      %v464 = vsub.s32 0, %v463
      %v465 = vrot.slane %v341, %v464
      %v467 = vcombine.high %v465, %v465
      %v469 = vmul.f32 %v457, %v465
      %v470 = vmul.f32 %v458, %v467
      %v471 = vmul.f32 %v459, %v465
      %v472 = vmul.f32 %v460, %v467
      %v474 = vlaneseq
      %v475 = vshrl.u32 %v474, 7
      %v476 = vsub.s32 0, %v475
      %v477 = vrot.slane %v342, %v476
      %v479 = vcombine.high %v477, %v477
      %v481 = vadd.f32 %v469, %v477
      %v482 = vadd.f32 %v470, %v479
      %v483 = vadd.f32 %v471, %v477
      %v484 = vadd.f32 %v472, %v479
      %v489 = vcombine.low %v481, %v482
      %v490 = vcombine.low %v483, %v484
      %v493 = vpack.c.bf16 %v490, %v489
      %v494 = vld [vmem:[%s3] sm:$0xf]
      %v495 = vld [vmem:[%s3 + $0x4] sm:$0xf]
      %v496 = vld [vmem:[%s3 + $0x8] sm:$0xf]
      %v497 = vld [vmem:[%s3 + $0xc] sm:$0xf]
      %v498 = vld [vmem:[%s4] sm:$0x1]
      %v500 = vlaneseq
      %v501 = vshrl.u32 %v500, 7
      %v502 = vsub.s32 0, %v501
      %v503 = vrot.slane %v498, %v502
      %v509 = vunpack.c.l.b16 %v494
      %v510 = vunpack.c.l.b16 %v495
      %v511 = vunpack.c.l.b16 %v496
      %v512 = vunpack.c.l.b16 %v497
      %v513 = vpack.c.b16 %v510, %v509
      %v514 = vpack.c.b16 %v512, %v511
      %v518 = vsel %vm351, %v493, 0
      %520 = vmatprep.subr.bf16.mxu0 0
      %521 = vmatpush1.bf16.msra.mxu0 0
      %522 = vmatprep.subr.bf16.mxu0 0
      %523 = vmatpush1.bf16.msra.mxu0 0
      %524 = vmatprep.subr.bf16.mxu0 0
      %525 = vmatpush1.bf16.msra.mxu0 0
      %526 = vmatprep.subr.bf16.mxu0 0
      %527 = vmatpush1.bf16.msra.mxu0 0
      %528 = vmatprep.subr.bf16.mxu0 0
      %529 = vmatpush1.bf16.msra.mxu0 0
      %530 = vmatprep.subr.bf16.mxu0 0
      %531 = vmatpush1.bf16.msra.mxu0 0
      %532 = vmatprep.subr.bf16.mxu0 0
      %533 = vmatpush1.bf16.msra.mxu0 %v514
      %534 = vmatprep.subr.bf16.mxu0 0
      %535 = vmatpush1.bf16.msra.mxu0 %v513
      %536 = vmatprep.subr.bf16.mxu0 0
      %537 = vmatpush2.bf16.msra.mxu0 0
      %538 = vmatprep.subr.bf16.mxu0 0
      %539 = vmatpush2.bf16.msra.mxu0 0
      %540 = vmatprep.subr.bf16.mxu0 0
      %541 = vmatpush2.bf16.msra.mxu0 0
      %542 = vmatprep.subr.bf16.mxu0 0
      %543 = vmatpush2.bf16.msra.mxu0 0
      %544 = vmatprep.subr.bf16.mxu0 0
      %545 = vmatpush2.bf16.msra.mxu0 0
      %546 = vmatprep.subr.bf16.mxu0 0
      %547 = vmatpush2.bf16.msra.mxu0 0
      %548 = vmatprep.subr.bf16.mxu0 0
      %549 = vmatpush2.bf16.msra.mxu0 0
      %550 = vmatprep.subr.bf16.mxu0 0
      %551 = vmatpush2.bf16.msra.mxu0 0
      %552 = vmatprep.mubr.bf16.mxu0 0
      %553 = vmatmul.mubr.bf16.gmra.mxu0 %v518
      %v554 = vpop.f32.mrf.mxu0
      %v555 = vadd.f32 %v503, %v554
      %v556 = vpop.f32.mrf.mxu0
      %v557 = vpop.f32.mrf.mxu0
      %v558 = vadd.f32 %v503, %v557
      %v559 = vpop.f32.mrf.mxu0
      %560 = vdwg.mxu0
      %v561 = vld [vmem:[%s8] sm:$0xf]
      %v562 = vld [vmem:[%s8 + $0x4] sm:$0xf]
      %v563 = vld [vmem:[%s8 + $0x8] sm:$0xf]
      %v564 = vld [vmem:[%s8 + $0xc] sm:$0xf]
      %v567 = vcombine.high %v555, %v555
      %v568 = vcombine.high %v558, %v558
      %v571 = vmul.f32 %v555, 0.25
      %v572 = vmul.f32 %v567, 0.25
      %v573 = vmul.f32 %v558, 0.25
      %v574 = vmul.f32 %v568, 0.25
      %v575 = vpack.c.bf16 %v571, %v571
      %v576 = vpack.c.bf16 %v572, %v572
      %v577 = vpack.c.bf16 %v573, %v573
      %v578 = vpack.c.bf16 %v574, %v574
      %v579 = vpack.c.bf16 %v555, %v555
      %v580 = vpack.c.bf16 %v567, %v567
      %v581 = vpack.c.bf16 %v558, %v558
      %v582 = vpack.c.bf16 %v568, %v568
      %v583 = vld [vmem:[%s7] sm:$0xf]
      %585 = vrot.lane.b32.xlu0 %v579, 96
      %v586 = vpop.permute.xlu0 %585
      %vm587 = vcmask 130048
      %v589 = vsel %vm587, %v575, 0
      %v592 = vsel %vm587, %v586, 0
      %594 = vmatprep.subr.bf16.mxu0 0
      %595 = vmatpush1.bf16.xpose.msra.mxu0 0
      %596 = vmatprep.subr.bf16.mxu0 0
      %597 = vmatpush1.bf16.xpose.msra.mxu0 0
      %598 = vmatprep.subr.bf16.mxu0 0
      %599 = vmatpush1.bf16.xpose.msra.mxu0 0
      %600 = vmatprep.subr.bf16.mxu0 0
      %601 = vmatpush1.bf16.xpose.msra.mxu0 0
      %602 = vmatprep.subr.bf16.mxu0 0
      %603 = vmatpush1.bf16.xpose.msra.mxu0 0
      %604 = vmatprep.subr.bf16.mxu0 0
      %605 = vmatpush1.bf16.xpose.msra.mxu0 0
      %606 = vmatprep.subr.bf16.mxu0 0
      %607 = vmatpush1.bf16.xpose.msra.mxu0 0
      %608 = vmatprep.subr.bf16.mxu0 0
      %609 = vmatpush1.bf16.xpose.msra.mxu0 %v592
      %610 = vmatprep.subr.bf16.mxu0 0
      %611 = vmatpush2.bf16.xpose.msra.mxu0 0
      %612 = vmatprep.subr.bf16.mxu0 0
      %613 = vmatpush2.bf16.xpose.msra.mxu0 0
      %614 = vmatprep.subr.bf16.mxu0 0
      %615 = vmatpush2.bf16.xpose.msra.mxu0 0
      %616 = vmatprep.subr.bf16.mxu0 0
      %617 = vmatpush2.bf16.xpose.msra.mxu0 0
      %618 = vmatprep.subr.bf16.mxu0 0
      %619 = vmatpush2.bf16.xpose.msra.mxu0 0
      %620 = vmatprep.subr.bf16.mxu0 0
      %621 = vmatpush2.bf16.xpose.msra.mxu0 0
      %622 = vmatprep.subr.bf16.mxu0 0
      %623 = vmatpush2.bf16.xpose.msra.mxu0 0
      %624 = vmatprep.subr.bf16.mxu0 0
      %625 = vmatpush2.bf16.xpose.msra.mxu0 0
      %626 = vmatprep.mubr.bf16.mxu0 0
      %627 = vmatmul.mubr.bf16.gmra.mxu0 %v589
      %v628 = vpop.f32.mrf.mxu0
      %v629 = vadd.f32 %v583, %v628
      %v630 = vpop.f32.mrf.mxu0
      %v631 = vpop.f32.mrf.mxu0
      %v632 = vpop.f32.mrf.mxu0
      %633 = vdwg.mxu0
      %635 = vrot.lane.b32.xlu0 %v580, 96
      %v636 = vpop.permute.xlu0 %635
      %v638 = vsel %vm587, %v576, 0
      %v641 = vsel %vm587, %v636, 0
      %643 = vmatprep.subr.bf16.mxu0 0
      %644 = vmatpush1.bf16.xpose.msra.mxu0 0
      %645 = vmatprep.subr.bf16.mxu0 0
      %646 = vmatpush1.bf16.xpose.msra.mxu0 0
      %647 = vmatprep.subr.bf16.mxu0 0
      %648 = vmatpush1.bf16.xpose.msra.mxu0 0
      %649 = vmatprep.subr.bf16.mxu0 0
      %650 = vmatpush1.bf16.xpose.msra.mxu0 0
      %651 = vmatprep.subr.bf16.mxu0 0
      %652 = vmatpush1.bf16.xpose.msra.mxu0 0
      %653 = vmatprep.subr.bf16.mxu0 0
      %654 = vmatpush1.bf16.xpose.msra.mxu0 0
      %655 = vmatprep.subr.bf16.mxu0 0
      %656 = vmatpush1.bf16.xpose.msra.mxu0 0
      %657 = vmatprep.subr.bf16.mxu0 0
      %658 = vmatpush1.bf16.xpose.msra.mxu0 %v641
      %659 = vmatprep.subr.bf16.mxu0 0
      %660 = vmatpush2.bf16.xpose.msra.mxu0 0
      %661 = vmatprep.subr.bf16.mxu0 0
      %662 = vmatpush2.bf16.xpose.msra.mxu0 0
      %663 = vmatprep.subr.bf16.mxu0 0
      %664 = vmatpush2.bf16.xpose.msra.mxu0 0
      %665 = vmatprep.subr.bf16.mxu0 0
      %666 = vmatpush2.bf16.xpose.msra.mxu0 0
      %667 = vmatprep.subr.bf16.mxu0 0
      %668 = vmatpush2.bf16.xpose.msra.mxu0 0
      %669 = vmatprep.subr.bf16.mxu0 0
      %670 = vmatpush2.bf16.xpose.msra.mxu0 0
      %671 = vmatprep.subr.bf16.mxu0 0
      %672 = vmatpush2.bf16.xpose.msra.mxu0 0
      %673 = vmatprep.subr.bf16.mxu0 0
      %674 = vmatpush2.bf16.xpose.msra.mxu0 0
      %675 = vmatprep.mubr.bf16.mxu0 0
      %676 = vmatmul.mubr.bf16.gmra.mxu0 %v638
      %v677 = vpop.f32.mrf.mxu0
      %v678 = vadd.f32 %v583, %v677
      %v679 = vpop.f32.mrf.mxu0
      %v680 = vpop.f32.mrf.mxu0
      %v681 = vpop.f32.mrf.mxu0
      %682 = vdwg.mxu0
      %684 = vrot.lane.b32.xlu0 %v581, 96
      %v685 = vpop.permute.xlu0 %684
      %v687 = vsel %vm587, %v577, 0
      %v690 = vsel %vm587, %v685, 0
      %692 = vmatprep.subr.bf16.mxu0 0
      %693 = vmatpush1.bf16.xpose.msra.mxu0 0
      %694 = vmatprep.subr.bf16.mxu0 0
      %695 = vmatpush1.bf16.xpose.msra.mxu0 0
      %696 = vmatprep.subr.bf16.mxu0 0
      %697 = vmatpush1.bf16.xpose.msra.mxu0 0
      %698 = vmatprep.subr.bf16.mxu0 0
      %699 = vmatpush1.bf16.xpose.msra.mxu0 0
      %700 = vmatprep.subr.bf16.mxu0 0
      %701 = vmatpush1.bf16.xpose.msra.mxu0 0
      %702 = vmatprep.subr.bf16.mxu0 0
      %703 = vmatpush1.bf16.xpose.msra.mxu0 0
      %704 = vmatprep.subr.bf16.mxu0 0
      %705 = vmatpush1.bf16.xpose.msra.mxu0 0
      %706 = vmatprep.subr.bf16.mxu0 0
      %707 = vmatpush1.bf16.xpose.msra.mxu0 %v690
      %708 = vmatprep.subr.bf16.mxu0 0
      %709 = vmatpush2.bf16.xpose.msra.mxu0 0
      %710 = vmatprep.subr.bf16.mxu0 0
      %711 = vmatpush2.bf16.xpose.msra.mxu0 0
      %712 = vmatprep.subr.bf16.mxu0 0
      %713 = vmatpush2.bf16.xpose.msra.mxu0 0
      %714 = vmatprep.subr.bf16.mxu0 0
      %715 = vmatpush2.bf16.xpose.msra.mxu0 0
      %716 = vmatprep.subr.bf16.mxu0 0
      %717 = vmatpush2.bf16.xpose.msra.mxu0 0
      %718 = vmatprep.subr.bf16.mxu0 0
      %719 = vmatpush2.bf16.xpose.msra.mxu0 0
      %720 = vmatprep.subr.bf16.mxu0 0
      %721 = vmatpush2.bf16.xpose.msra.mxu0 0
      %722 = vmatprep.subr.bf16.mxu0 0
      %723 = vmatpush2.bf16.xpose.msra.mxu0 0
      %724 = vmatprep.mubr.bf16.mxu0 0
      %725 = vmatmul.mubr.bf16.gmra.mxu0 %v687
      %v726 = vpop.f32.mrf.mxu0
      %v727 = vadd.f32 %v583, %v726
      %v728 = vpop.f32.mrf.mxu0
      %v729 = vpop.f32.mrf.mxu0
      %v730 = vpop.f32.mrf.mxu0
      %731 = vdwg.mxu0
      %733 = vrot.lane.b32.xlu0 %v582, 96
      %v734 = vpop.permute.xlu0 %733
      %v736 = vsel %vm587, %v578, 0
      %v739 = vsel %vm587, %v734, 0
      %741 = vmatprep.subr.bf16.mxu0 0
      %742 = vmatpush1.bf16.xpose.msra.mxu0 0
      %743 = vmatprep.subr.bf16.mxu0 0
      %744 = vmatpush1.bf16.xpose.msra.mxu0 0
      %745 = vmatprep.subr.bf16.mxu0 0
      %746 = vmatpush1.bf16.xpose.msra.mxu0 0
      %747 = vmatprep.subr.bf16.mxu0 0
      %748 = vmatpush1.bf16.xpose.msra.mxu0 0
      %749 = vmatprep.subr.bf16.mxu0 0
      %750 = vmatpush1.bf16.xpose.msra.mxu0 0
      %751 = vmatprep.subr.bf16.mxu0 0
      %752 = vmatpush1.bf16.xpose.msra.mxu0 0
      %753 = vmatprep.subr.bf16.mxu0 0
      %754 = vmatpush1.bf16.xpose.msra.mxu0 0
      %755 = vmatprep.subr.bf16.mxu0 0
      %756 = vmatpush1.bf16.xpose.msra.mxu0 %v739
      %757 = vmatprep.subr.bf16.mxu0 0
      %758 = vmatpush2.bf16.xpose.msra.mxu0 0
      %759 = vmatprep.subr.bf16.mxu0 0
      %760 = vmatpush2.bf16.xpose.msra.mxu0 0
      %761 = vmatprep.subr.bf16.mxu0 0
      %762 = vmatpush2.bf16.xpose.msra.mxu0 0
      %763 = vmatprep.subr.bf16.mxu0 0
      %764 = vmatpush2.bf16.xpose.msra.mxu0 0
      %765 = vmatprep.subr.bf16.mxu0 0
      %766 = vmatpush2.bf16.xpose.msra.mxu0 0
      %767 = vmatprep.subr.bf16.mxu0 0
      %768 = vmatpush2.bf16.xpose.msra.mxu0 0
      %769 = vmatprep.subr.bf16.mxu0 0
      %770 = vmatpush2.bf16.xpose.msra.mxu0 0
      %771 = vmatprep.subr.bf16.mxu0 0
      %772 = vmatpush2.bf16.xpose.msra.mxu0 0
      %773 = vmatprep.mubr.bf16.mxu0 0
      %774 = vmatmul.mubr.bf16.gmra.mxu0 %v736
      %v775 = vpop.f32.mrf.mxu0
      %v776 = vadd.f32 %v583, %v775
      %v777 = vpop.f32.mrf.mxu0
      %v778 = vpop.f32.mrf.mxu0
      %v779 = vpop.f32.mrf.mxu0
      %780 = vdwg.mxu0
      %v781 = vadd.f32 %v629, %v561
      %v782 = vadd.f32 %v678, %v562
      %v783 = vadd.f32 %v727, %v563
      %v784 = vadd.f32 %v776, %v564
      %vm785 = vcmask 27648
      %v786 = vsel %vm785, %v781, -inf
      %787 = vmax.xlane.f32.xlu0 %v786
      %v788 = vpop.xlane.xlu0 %787
      %v789 = vsel %vm785, %v782, -inf
      %790 = vmax.xlane.f32.xlu0 %v789
      %v791 = vpop.xlane.xlu0 %790
      %v792 = vsel %vm785, %v783, -inf
      %793 = vmax.xlane.f32.xlu0 %v792
      %v794 = vpop.xlane.xlu0 %793
      %v795 = vsel %vm785, %v784, -inf
      %796 = vmax.xlane.f32.xlu0 %v795
      %v797 = vpop.xlane.xlu0 %796
      %v798 = vsub.f32 %v781, %v788
      %v799 = vsub.f32 %v782, %v791
      %v800 = vsub.f32 %v783, %v794
      %v801 = vsub.f32 %v784, %v797
      %v802 = vmul.f32 %v798, 1.442695
      %v803 = vpow.pop %v802
      %v804 = vmul.f32 %v799, 1.442695
      %v805 = vpow.pop %v804
      %v806 = vmul.f32 %v800, 1.442695
      %v807 = vpow.pop %v806
      %v808 = vmul.f32 %v801, 1.442695
      %v809 = vpow.pop %v808
      %v810 = vsel %vm785, %v803, 0.0
      %811 = vadd.xlane.f32.xlu0 %v810
      %v812 = vpop.xlane.xlu0 %811
      %v813 = vsel %vm785, %v805, 0.0
      %814 = vadd.xlane.f32.xlu0 %v813
      %v815 = vpop.xlane.xlu0 %814
      %v816 = vsel %vm785, %v807, 0.0
      %817 = vadd.xlane.f32.xlu0 %v816
      %v818 = vpop.xlane.xlu0 %817
      %v819 = vsel %vm785, %v809, 0.0
      %820 = vadd.xlane.f32.xlu0 %v819
      %v821 = vpop.xlane.xlu0 %820
      %v822 = vrcp.pop %v812
      %v823 = vrcp.pop %v815
      %v824 = vrcp.pop %v818
      %v825 = vrcp.pop %v821
      %v826 = vmul.f32 %v803, %v822
      %v827 = vmul.f32 %v805, %v823
      %v828 = vmul.f32 %v807, %v824
      %v829 = vmul.f32 %v809, %v825
      %v830 = vpack.c.bf16 %v826, %v826
      %v831 = vpack.c.bf16 %v827, %v827
      %v832 = vpack.c.bf16 %v828, %v828
      %v833 = vpack.c.bf16 %v829, %v829
      %834 = vrot.lane.b32.xlu0 %v579, 64
      %v835 = vpop.permute.xlu0 %834
      %vm836 = vcmask 31744
      %v838 = vsel %vm836, %v830, 0
      %vm840 = vcmask 1041408
      %v842 = vsel %vm840, %v835, 0
      %844 = vmatprep.subr.bf16.mxu0 0
      %845 = vmatpush1.bf16.msra.mxu0 0
      %846 = vmatprep.subr.bf16.mxu0 0
      %847 = vmatpush1.bf16.msra.mxu0 0
      %848 = vmatprep.subr.bf16.mxu0 0
      %849 = vmatpush1.bf16.msra.mxu0 0
      %850 = vmatprep.subr.bf16.mxu0 0
      %851 = vmatpush1.bf16.msra.mxu0 0
      %852 = vmatprep.subr.bf16.mxu0 0
      %853 = vmatpush1.bf16.msra.mxu0 0
      %854 = vmatprep.subr.bf16.mxu0 0
      %855 = vmatpush1.bf16.msra.mxu0 0
      %856 = vmatprep.subr.bf16.mxu0 0
      %857 = vmatpush1.bf16.msra.mxu0 0
      %858 = vmatprep.subr.bf16.mxu0 0
      %859 = vmatpush1.bf16.msra.mxu0 %v842
      %860 = vmatprep.subr.bf16.mxu0 0
      %861 = vmatpush2.bf16.msra.mxu0 0
      %862 = vmatprep.subr.bf16.mxu0 0
      %863 = vmatpush2.bf16.msra.mxu0 0
      %864 = vmatprep.subr.bf16.mxu0 0
      %865 = vmatpush2.bf16.msra.mxu0 0
      %866 = vmatprep.subr.bf16.mxu0 0
      %867 = vmatpush2.bf16.msra.mxu0 0
      %868 = vmatprep.subr.bf16.mxu0 0
      %869 = vmatpush2.bf16.msra.mxu0 0
      %870 = vmatprep.subr.bf16.mxu0 0
      %871 = vmatpush2.bf16.msra.mxu0 0
      %872 = vmatprep.subr.bf16.mxu0 0
      %873 = vmatpush2.bf16.msra.mxu0 0
      %874 = vmatprep.subr.bf16.mxu0 0
      %875 = vmatpush2.bf16.msra.mxu0 0
      %876 = vmatprep.mubr.bf16.mxu0 0
      %877 = vmatmul.mubr.bf16.gmra.mxu0 %v838
      %v878 = vpop.f32.mrf.mxu0
      %v879 = vadd.f32 0.0, %v878
      %v880 = vpop.f32.mrf.mxu0
      %v881 = vpop.f32.mrf.mxu0
      %v882 = vpop.f32.mrf.mxu0
      %883 = vdwg.mxu0
      %884 = vrot.lane.b32.xlu0 %v580, 64
      %v885 = vpop.permute.xlu0 %884
      %v887 = vsel %vm836, %v831, 0
      %v890 = vsel %vm840, %v885, 0
      %892 = vmatprep.subr.bf16.mxu0 0
      %893 = vmatpush1.bf16.msra.mxu0 0
      %894 = vmatprep.subr.bf16.mxu0 0
      %895 = vmatpush1.bf16.msra.mxu0 0
      %896 = vmatprep.subr.bf16.mxu0 0
      %897 = vmatpush1.bf16.msra.mxu0 0
      %898 = vmatprep.subr.bf16.mxu0 0
      %899 = vmatpush1.bf16.msra.mxu0 0
      %900 = vmatprep.subr.bf16.mxu0 0
      %901 = vmatpush1.bf16.msra.mxu0 0
      %902 = vmatprep.subr.bf16.mxu0 0
      %903 = vmatpush1.bf16.msra.mxu0 0
      %904 = vmatprep.subr.bf16.mxu0 0
      %905 = vmatpush1.bf16.msra.mxu0 0
      %906 = vmatprep.subr.bf16.mxu0 0
      %907 = vmatpush1.bf16.msra.mxu0 %v890
      %908 = vmatprep.subr.bf16.mxu0 0
      %909 = vmatpush2.bf16.msra.mxu0 0
      %910 = vmatprep.subr.bf16.mxu0 0
      %911 = vmatpush2.bf16.msra.mxu0 0
      %912 = vmatprep.subr.bf16.mxu0 0
      %913 = vmatpush2.bf16.msra.mxu0 0
      %914 = vmatprep.subr.bf16.mxu0 0
      %915 = vmatpush2.bf16.msra.mxu0 0
      %916 = vmatprep.subr.bf16.mxu0 0
      %917 = vmatpush2.bf16.msra.mxu0 0
      %918 = vmatprep.subr.bf16.mxu0 0
      %919 = vmatpush2.bf16.msra.mxu0 0
      %920 = vmatprep.subr.bf16.mxu0 0
      %921 = vmatpush2.bf16.msra.mxu0 0
      %922 = vmatprep.subr.bf16.mxu0 0
      %923 = vmatpush2.bf16.msra.mxu0 0
      %924 = vmatprep.mubr.bf16.mxu0 0
      %925 = vmatmul.mubr.bf16.gmra.mxu0 %v887
      %v926 = vpop.f32.mrf.mxu0
      %v927 = vadd.f32 0.0, %v926
      %v928 = vpop.f32.mrf.mxu0
      %v929 = vpop.f32.mrf.mxu0
      %v930 = vpop.f32.mrf.mxu0
      %931 = vdwg.mxu0
      %932 = vrot.lane.b32.xlu0 %v581, 64
      %v933 = vpop.permute.xlu0 %932
      %v935 = vsel %vm836, %v832, 0
      %v938 = vsel %vm840, %v933, 0
      %940 = vmatprep.subr.bf16.mxu0 0
      %941 = vmatpush1.bf16.msra.mxu0 0
      %942 = vmatprep.subr.bf16.mxu0 0
      %943 = vmatpush1.bf16.msra.mxu0 0
      %944 = vmatprep.subr.bf16.mxu0 0
      %945 = vmatpush1.bf16.msra.mxu0 0
      %946 = vmatprep.subr.bf16.mxu0 0
      %947 = vmatpush1.bf16.msra.mxu0 0
      %948 = vmatprep.subr.bf16.mxu0 0
      %949 = vmatpush1.bf16.msra.mxu0 0
      %950 = vmatprep.subr.bf16.mxu0 0
      %951 = vmatpush1.bf16.msra.mxu0 0
      %952 = vmatprep.subr.bf16.mxu0 0
      %953 = vmatpush1.bf16.msra.mxu0 0
      %954 = vmatprep.subr.bf16.mxu0 0
      %955 = vmatpush1.bf16.msra.mxu0 %v938
      %956 = vmatprep.subr.bf16.mxu0 0
      %957 = vmatpush2.bf16.msra.mxu0 0
      %958 = vmatprep.subr.bf16.mxu0 0
      %959 = vmatpush2.bf16.msra.mxu0 0
      %960 = vmatprep.subr.bf16.mxu0 0
      %961 = vmatpush2.bf16.msra.mxu0 0
      %962 = vmatprep.subr.bf16.mxu0 0
      %963 = vmatpush2.bf16.msra.mxu0 0
      %964 = vmatprep.subr.bf16.mxu0 0
      %965 = vmatpush2.bf16.msra.mxu0 0
      %966 = vmatprep.subr.bf16.mxu0 0
      %967 = vmatpush2.bf16.msra.mxu0 0
      %968 = vmatprep.subr.bf16.mxu0 0
      %969 = vmatpush2.bf16.msra.mxu0 0
      %970 = vmatprep.subr.bf16.mxu0 0
      %971 = vmatpush2.bf16.msra.mxu0 0
      %972 = vmatprep.mubr.bf16.mxu0 0
      %973 = vmatmul.mubr.bf16.gmra.mxu0 %v935
      %v974 = vpop.f32.mrf.mxu0
      %v975 = vadd.f32 0.0, %v974
      %v976 = vpop.f32.mrf.mxu0
      %v977 = vpop.f32.mrf.mxu0
      %v978 = vpop.f32.mrf.mxu0
      %979 = vdwg.mxu0
      %980 = vrot.lane.b32.xlu0 %v582, 64
      %v981 = vpop.permute.xlu0 %980
      %v983 = vsel %vm836, %v833, 0
      %v986 = vsel %vm840, %v981, 0
      %988 = vmatprep.subr.bf16.mxu0 0
      %989 = vmatpush1.bf16.msra.mxu0 0
      %990 = vmatprep.subr.bf16.mxu0 0
      %991 = vmatpush1.bf16.msra.mxu0 0
      %992 = vmatprep.subr.bf16.mxu0 0
      %993 = vmatpush1.bf16.msra.mxu0 0
      %994 = vmatprep.subr.bf16.mxu0 0
      %995 = vmatpush1.bf16.msra.mxu0 0
      %996 = vmatprep.subr.bf16.mxu0 0
      %997 = vmatpush1.bf16.msra.mxu0 0
      %998 = vmatprep.subr.bf16.mxu0 0
      %999 = vmatpush1.bf16.msra.mxu0 0
      %1000 = vmatprep.subr.bf16.mxu0 0
      %1001 = vmatpush1.bf16.msra.mxu0 0
      %1002 = vmatprep.subr.bf16.mxu0 0
      %1003 = vmatpush1.bf16.msra.mxu0 %v986
      %1004 = vmatprep.subr.bf16.mxu0 0
      %1005 = vmatpush2.bf16.msra.mxu0 0
      %1006 = vmatprep.subr.bf16.mxu0 0
      %1007 = vmatpush2.bf16.msra.mxu0 0
      %1008 = vmatprep.subr.bf16.mxu0 0
      %1009 = vmatpush2.bf16.msra.mxu0 0
      %1010 = vmatprep.subr.bf16.mxu0 0
      %1011 = vmatpush2.bf16.msra.mxu0 0
      %1012 = vmatprep.subr.bf16.mxu0 0
      %1013 = vmatpush2.bf16.msra.mxu0 0
      %1014 = vmatprep.subr.bf16.mxu0 0
      %1015 = vmatpush2.bf16.msra.mxu0 0
      %1016 = vmatprep.subr.bf16.mxu0 0
      %1017 = vmatpush2.bf16.msra.mxu0 0
      %1018 = vmatprep.subr.bf16.mxu0 0
      %1019 = vmatpush2.bf16.msra.mxu0 0
      %1020 = vmatprep.mubr.bf16.mxu0 0
      %1021 = vmatmul.mubr.bf16.gmra.mxu0 %v983
      %v1022 = vpop.f32.mrf.mxu0
      %v1023 = vadd.f32 0.0, %v1022
      %v1024 = vpop.f32.mrf.mxu0
      %v1025 = vpop.f32.mrf.mxu0
      %v1026 = vpop.f32.mrf.mxu0
      %1027 = vdwg.mxu0
      %v1028 = vld [vmem:[%s5] sm:$0xf]
      %v1029 = vld [vmem:[%s5 + $0x4] sm:$0xf]
      %v1034 = vcombine.low %v879, %v927
      %v1035 = vcombine.low %v975, %v1023
      %v1038 = vpack.c.bf16 %v1035, %v1034
      %s1039 = scalar_lea.vmem %s7, 4
      %v1040 = vld [vmem:[%s1039] sm:$0xf]
      %1042 = vrot.lane.b32.xlu0 %v575, 112
      %v1043 = vpop.permute.xlu0 %1042
      %1044 = vrot.lane.b32.xlu0 %v579, 80
      %v1045 = vpop.permute.xlu0 %1044
      %v1047 = vsel %vm587, %v1043, 0
      %v1050 = vsel %vm587, %v1045, 0
      %1052 = vmatprep.subr.bf16.mxu0 0
      %1053 = vmatpush1.bf16.xpose.msra.mxu0 0
      %1054 = vmatprep.subr.bf16.mxu0 0
      %1055 = vmatpush1.bf16.xpose.msra.mxu0 0
      %1056 = vmatprep.subr.bf16.mxu0 0
      %1057 = vmatpush1.bf16.xpose.msra.mxu0 0
      %1058 = vmatprep.subr.bf16.mxu0 0
      %1059 = vmatpush1.bf16.xpose.msra.mxu0 0
      %1060 = vmatprep.subr.bf16.mxu0 0
      %1061 = vmatpush1.bf16.xpose.msra.mxu0 0
      %1062 = vmatprep.subr.bf16.mxu0 0
      %1063 = vmatpush1.bf16.xpose.msra.mxu0 0
      %1064 = vmatprep.subr.bf16.mxu0 0
      %1065 = vmatpush1.bf16.xpose.msra.mxu0 0
      %1066 = vmatprep.subr.bf16.mxu0 0
      %1067 = vmatpush1.bf16.xpose.msra.mxu0 %v1050
      %1068 = vmatprep.subr.bf16.mxu0 0
      %1069 = vmatpush2.bf16.xpose.msra.mxu0 0
      %1070 = vmatprep.subr.bf16.mxu0 0
      %1071 = vmatpush2.bf16.xpose.msra.mxu0 0
      %1072 = vmatprep.subr.bf16.mxu0 0
      %1073 = vmatpush2.bf16.xpose.msra.mxu0 0
      %1074 = vmatprep.subr.bf16.mxu0 0
      %1075 = vmatpush2.bf16.xpose.msra.mxu0 0
      %1076 = vmatprep.subr.bf16.mxu0 0
      %1077 = vmatpush2.bf16.xpose.msra.mxu0 0
      %1078 = vmatprep.subr.bf16.mxu0 0
      %1079 = vmatpush2.bf16.xpose.msra.mxu0 0
      %1080 = vmatprep.subr.bf16.mxu0 0
      %1081 = vmatpush2.bf16.xpose.msra.mxu0 0
      %1082 = vmatprep.subr.bf16.mxu0 0
      %1083 = vmatpush2.bf16.xpose.msra.mxu0 0
      %1084 = vmatprep.mubr.bf16.mxu0 0
      %1085 = vmatmul.mubr.bf16.gmra.mxu0 %v1047
      %v1086 = vpop.f32.mrf.mxu0
      %v1087 = vadd.f32 %v1040, %v1086
      %v1088 = vpop.f32.mrf.mxu0
      %v1089 = vpop.f32.mrf.mxu0
      %v1090 = vpop.f32.mrf.mxu0
      %1091 = vdwg.mxu0
      %1093 = vrot.lane.b32.xlu0 %v576, 112
      %v1094 = vpop.permute.xlu0 %1093
      %1095 = vrot.lane.b32.xlu0 %v580, 80
      %v1096 = vpop.permute.xlu0 %1095
      %v1098 = vsel %vm587, %v1094, 0
      %v1101 = vsel %vm587, %v1096, 0
      %1103 = vmatprep.subr.bf16.mxu0 0
      %1104 = vmatpush1.bf16.xpose.msra.mxu0 0
      %1105 = vmatprep.subr.bf16.mxu0 0
      %1106 = vmatpush1.bf16.xpose.msra.mxu0 0
      %1107 = vmatprep.subr.bf16.mxu0 0
      %1108 = vmatpush1.bf16.xpose.msra.mxu0 0
      %1109 = vmatprep.subr.bf16.mxu0 0
      %1110 = vmatpush1.bf16.xpose.msra.mxu0 0
      %1111 = vmatprep.subr.bf16.mxu0 0
      %1112 = vmatpush1.bf16.xpose.msra.mxu0 0
      %1113 = vmatprep.subr.bf16.mxu0 0
      %1114 = vmatpush1.bf16.xpose.msra.mxu0 0
      %1115 = vmatprep.subr.bf16.mxu0 0
      %1116 = vmatpush1.bf16.xpose.msra.mxu0 0
      %1117 = vmatprep.subr.bf16.mxu0 0
      %1118 = vmatpush1.bf16.xpose.msra.mxu0 %v1101
      %1119 = vmatprep.subr.bf16.mxu0 0
      %1120 = vmatpush2.bf16.xpose.msra.mxu0 0
      %1121 = vmatprep.subr.bf16.mxu0 0
      %1122 = vmatpush2.bf16.xpose.msra.mxu0 0
      %1123 = vmatprep.subr.bf16.mxu0 0
      %1124 = vmatpush2.bf16.xpose.msra.mxu0 0
      %1125 = vmatprep.subr.bf16.mxu0 0
      %1126 = vmatpush2.bf16.xpose.msra.mxu0 0
      %1127 = vmatprep.subr.bf16.mxu0 0
      %1128 = vmatpush2.bf16.xpose.msra.mxu0 0
      %1129 = vmatprep.subr.bf16.mxu0 0
      %1130 = vmatpush2.bf16.xpose.msra.mxu0 0
      %1131 = vmatprep.subr.bf16.mxu0 0
      %1132 = vmatpush2.bf16.xpose.msra.mxu0 0
      %1133 = vmatprep.subr.bf16.mxu0 0
      %1134 = vmatpush2.bf16.xpose.msra.mxu0 0
      %1135 = vmatprep.mubr.bf16.mxu0 0
      %1136 = vmatmul.mubr.bf16.gmra.mxu0 %v1098
      %v1137 = vpop.f32.mrf.mxu0
      %v1138 = vadd.f32 %v1040, %v1137
      %v1139 = vpop.f32.mrf.mxu0
      %v1140 = vpop.f32.mrf.mxu0
      %v1141 = vpop.f32.mrf.mxu0
      %1142 = vdwg.mxu0
      %1144 = vrot.lane.b32.xlu0 %v577, 112
      %v1145 = vpop.permute.xlu0 %1144
      %1146 = vrot.lane.b32.xlu0 %v581, 80
      %v1147 = vpop.permute.xlu0 %1146
      %v1149 = vsel %vm587, %v1145, 0
      %v1152 = vsel %vm587, %v1147, 0
      %1154 = vmatprep.subr.bf16.mxu0 0
      %1155 = vmatpush1.bf16.xpose.msra.mxu0 0
      %1156 = vmatprep.subr.bf16.mxu0 0
      %1157 = vmatpush1.bf16.xpose.msra.mxu0 0
      %1158 = vmatprep.subr.bf16.mxu0 0
      %1159 = vmatpush1.bf16.xpose.msra.mxu0 0
      %1160 = vmatprep.subr.bf16.mxu0 0
      %1161 = vmatpush1.bf16.xpose.msra.mxu0 0
      %1162 = vmatprep.subr.bf16.mxu0 0
      %1163 = vmatpush1.bf16.xpose.msra.mxu0 0
      %1164 = vmatprep.subr.bf16.mxu0 0
      %1165 = vmatpush1.bf16.xpose.msra.mxu0 0
      %1166 = vmatprep.subr.bf16.mxu0 0
      %1167 = vmatpush1.bf16.xpose.msra.mxu0 0
      %1168 = vmatprep.subr.bf16.mxu0 0
      %1169 = vmatpush1.bf16.xpose.msra.mxu0 %v1152
      %1170 = vmatprep.subr.bf16.mxu0 0
      %1171 = vmatpush2.bf16.xpose.msra.mxu0 0
      %1172 = vmatprep.subr.bf16.mxu0 0
      %1173 = vmatpush2.bf16.xpose.msra.mxu0 0
      %1174 = vmatprep.subr.bf16.mxu0 0
      %1175 = vmatpush2.bf16.xpose.msra.mxu0 0
      %1176 = vmatprep.subr.bf16.mxu0 0
      %1177 = vmatpush2.bf16.xpose.msra.mxu0 0
      %1178 = vmatprep.subr.bf16.mxu0 0
      %1179 = vmatpush2.bf16.xpose.msra.mxu0 0
      %1180 = vmatprep.subr.bf16.mxu0 0
      %1181 = vmatpush2.bf16.xpose.msra.mxu0 0
      %1182 = vmatprep.subr.bf16.mxu0 0
      %1183 = vmatpush2.bf16.xpose.msra.mxu0 0
      %1184 = vmatprep.subr.bf16.mxu0 0
      %1185 = vmatpush2.bf16.xpose.msra.mxu0 0
      %1186 = vmatprep.mubr.bf16.mxu0 0
      %1187 = vmatmul.mubr.bf16.gmra.mxu0 %v1149
      %v1188 = vpop.f32.mrf.mxu0
      %v1189 = vadd.f32 %v1040, %v1188
      %v1190 = vpop.f32.mrf.mxu0
      %v1191 = vpop.f32.mrf.mxu0
      %v1192 = vpop.f32.mrf.mxu0
      %1193 = vdwg.mxu0
      %1195 = vrot.lane.b32.xlu0 %v578, 112
      %v1196 = vpop.permute.xlu0 %1195
      %1197 = vrot.lane.b32.xlu0 %v582, 80
      %v1198 = vpop.permute.xlu0 %1197
      %v1200 = vsel %vm587, %v1196, 0
      %v1203 = vsel %vm587, %v1198, 0
      %1205 = vmatprep.subr.bf16.mxu0 0
      %1206 = vmatpush1.bf16.xpose.msra.mxu0 0
      %1207 = vmatprep.subr.bf16.mxu0 0
      %1208 = vmatpush1.bf16.xpose.msra.mxu0 0
      %1209 = vmatprep.subr.bf16.mxu0 0
      %1210 = vmatpush1.bf16.xpose.msra.mxu0 0
      %1211 = vmatprep.subr.bf16.mxu0 0
      %1212 = vmatpush1.bf16.xpose.msra.mxu0 0
      %1213 = vmatprep.subr.bf16.mxu0 0
      %1214 = vmatpush1.bf16.xpose.msra.mxu0 0
      %1215 = vmatprep.subr.bf16.mxu0 0
      %1216 = vmatpush1.bf16.xpose.msra.mxu0 0
      %1217 = vmatprep.subr.bf16.mxu0 0
      %1218 = vmatpush1.bf16.xpose.msra.mxu0 0
      %1219 = vmatprep.subr.bf16.mxu0 0
      %1220 = vmatpush1.bf16.xpose.msra.mxu0 %v1203
      %1221 = vmatprep.subr.bf16.mxu0 0
      %1222 = vmatpush2.bf16.xpose.msra.mxu0 0
      %1223 = vmatprep.subr.bf16.mxu0 0
      %1224 = vmatpush2.bf16.xpose.msra.mxu0 0
      %1225 = vmatprep.subr.bf16.mxu0 0
      %1226 = vmatpush2.bf16.xpose.msra.mxu0 0
      %1227 = vmatprep.subr.bf16.mxu0 0
      %1228 = vmatpush2.bf16.xpose.msra.mxu0 0
      %1229 = vmatprep.subr.bf16.mxu0 0
      %1230 = vmatpush2.bf16.xpose.msra.mxu0 0
      %1231 = vmatprep.subr.bf16.mxu0 0
      %1232 = vmatpush2.bf16.xpose.msra.mxu0 0
      %1233 = vmatprep.subr.bf16.mxu0 0
      %1234 = vmatpush2.bf16.xpose.msra.mxu0 0
      %1235 = vmatprep.subr.bf16.mxu0 0
      %1236 = vmatpush2.bf16.xpose.msra.mxu0 0
      %1237 = vmatprep.mubr.bf16.mxu0 0
      %1238 = vmatmul.mubr.bf16.gmra.mxu0 %v1200
      %v1239 = vpop.f32.mrf.mxu0
      %v1240 = vadd.f32 %v1040, %v1239
      %v1241 = vpop.f32.mrf.mxu0
      %v1242 = vpop.f32.mrf.mxu0
      %v1243 = vpop.f32.mrf.mxu0
      %1244 = vdwg.mxu0
      %v1245 = vadd.f32 %v1087, %v561
      %v1246 = vadd.f32 %v1138, %v562
      %v1247 = vadd.f32 %v1189, %v563
      %v1248 = vadd.f32 %v1240, %v564
      %v1249 = vsel %vm785, %v1245, -inf
      %1250 = vmax.xlane.f32.xlu0 %v1249
      %v1251 = vpop.xlane.xlu0 %1250
      %v1252 = vsel %vm785, %v1246, -inf
      %1253 = vmax.xlane.f32.xlu0 %v1252
      %v1254 = vpop.xlane.xlu0 %1253
      %v1255 = vsel %vm785, %v1247, -inf
      %1256 = vmax.xlane.f32.xlu0 %v1255
      %v1257 = vpop.xlane.xlu0 %1256
      %v1258 = vsel %vm785, %v1248, -inf
      %1259 = vmax.xlane.f32.xlu0 %v1258
      %v1260 = vpop.xlane.xlu0 %1259
      %v1261 = vsub.f32 %v1245, %v1251
      %v1262 = vsub.f32 %v1246, %v1254
      %v1263 = vsub.f32 %v1247, %v1257
      %v1264 = vsub.f32 %v1248, %v1260
      %v1265 = vmul.f32 %v1261, 1.442695
      %v1266 = vpow.pop %v1265
      %v1267 = vmul.f32 %v1262, 1.442695
      %v1268 = vpow.pop %v1267
      %v1269 = vmul.f32 %v1263, 1.442695
      %v1270 = vpow.pop %v1269
      %v1271 = vmul.f32 %v1264, 1.442695
      %v1272 = vpow.pop %v1271
      %v1273 = vsel %vm785, %v1266, 0.0
      %1274 = vadd.xlane.f32.xlu0 %v1273
      %v1275 = vpop.xlane.xlu0 %1274
      %v1276 = vsel %vm785, %v1268, 0.0
      %1277 = vadd.xlane.f32.xlu0 %v1276
      %v1278 = vpop.xlane.xlu0 %1277
      %v1279 = vsel %vm785, %v1270, 0.0
      %1280 = vadd.xlane.f32.xlu0 %v1279
      %v1281 = vpop.xlane.xlu0 %1280
      %v1282 = vsel %vm785, %v1272, 0.0
      %1283 = vadd.xlane.f32.xlu0 %v1282
      %v1284 = vpop.xlane.xlu0 %1283
      %v1285 = vrcp.pop %v1275
      %v1286 = vrcp.pop %v1278
      %v1287 = vrcp.pop %v1281
      %v1288 = vrcp.pop %v1284
      %v1289 = vmul.f32 %v1266, %v1285
      %v1290 = vmul.f32 %v1268, %v1286
      %v1291 = vmul.f32 %v1270, %v1287
      %v1292 = vmul.f32 %v1272, %v1288
      %v1293 = vpack.c.bf16 %v1289, %v1289
      %v1294 = vpack.c.bf16 %v1290, %v1290
      %v1295 = vpack.c.bf16 %v1291, %v1291
      %v1296 = vpack.c.bf16 %v1292, %v1292
      %1297 = vrot.lane.b32.xlu0 %v579, 48
      %v1298 = vpop.permute.xlu0 %1297
      %v1300 = vsel %vm836, %v1293, 0
      %v1303 = vsel %vm840, %v1298, 0
      %1305 = vmatprep.subr.bf16.mxu0 0
      %1306 = vmatpush1.bf16.msra.mxu0 0
      %1307 = vmatprep.subr.bf16.mxu0 0
      %1308 = vmatpush1.bf16.msra.mxu0 0
      %1309 = vmatprep.subr.bf16.mxu0 0
      %1310 = vmatpush1.bf16.msra.mxu0 0
      %1311 = vmatprep.subr.bf16.mxu0 0
      %1312 = vmatpush1.bf16.msra.mxu0 0
      %1313 = vmatprep.subr.bf16.mxu0 0
      %1314 = vmatpush1.bf16.msra.mxu0 0
      %1315 = vmatprep.subr.bf16.mxu0 0
      %1316 = vmatpush1.bf16.msra.mxu0 0
      %1317 = vmatprep.subr.bf16.mxu0 0
      %1318 = vmatpush1.bf16.msra.mxu0 0
      %1319 = vmatprep.subr.bf16.mxu0 0
      %1320 = vmatpush1.bf16.msra.mxu0 %v1303
      %1321 = vmatprep.subr.bf16.mxu0 0
      %1322 = vmatpush2.bf16.msra.mxu0 0
      %1323 = vmatprep.subr.bf16.mxu0 0
      %1324 = vmatpush2.bf16.msra.mxu0 0
      %1325 = vmatprep.subr.bf16.mxu0 0
      %1326 = vmatpush2.bf16.msra.mxu0 0
      %1327 = vmatprep.subr.bf16.mxu0 0
      %1328 = vmatpush2.bf16.msra.mxu0 0
      %1329 = vmatprep.subr.bf16.mxu0 0
      %1330 = vmatpush2.bf16.msra.mxu0 0
      %1331 = vmatprep.subr.bf16.mxu0 0
      %1332 = vmatpush2.bf16.msra.mxu0 0
      %1333 = vmatprep.subr.bf16.mxu0 0
      %1334 = vmatpush2.bf16.msra.mxu0 0
      %1335 = vmatprep.subr.bf16.mxu0 0
      %1336 = vmatpush2.bf16.msra.mxu0 0
      %1337 = vmatprep.mubr.bf16.mxu0 0
      %1338 = vmatmul.mubr.bf16.gmra.mxu0 %v1300
      %v1339 = vpop.f32.mrf.mxu0
      %v1340 = vadd.f32 0.0, %v1339
      %v1341 = vpop.f32.mrf.mxu0
      %v1342 = vpop.f32.mrf.mxu0
      %v1343 = vpop.f32.mrf.mxu0
      %1344 = vdwg.mxu0
      %1345 = vrot.lane.b32.xlu0 %v580, 48
      %v1346 = vpop.permute.xlu0 %1345
      %v1348 = vsel %vm836, %v1294, 0
      %v1351 = vsel %vm840, %v1346, 0
      %1353 = vmatprep.subr.bf16.mxu0 0
      %1354 = vmatpush1.bf16.msra.mxu0 0
      %1355 = vmatprep.subr.bf16.mxu0 0
      %1356 = vmatpush1.bf16.msra.mxu0 0
      %1357 = vmatprep.subr.bf16.mxu0 0
      %1358 = vmatpush1.bf16.msra.mxu0 0
      %1359 = vmatprep.subr.bf16.mxu0 0
      %1360 = vmatpush1.bf16.msra.mxu0 0
      %1361 = vmatprep.subr.bf16.mxu0 0
      %1362 = vmatpush1.bf16.msra.mxu0 0
      %1363 = vmatprep.subr.bf16.mxu0 0
      %1364 = vmatpush1.bf16.msra.mxu0 0
      %1365 = vmatprep.subr.bf16.mxu0 0
      %1366 = vmatpush1.bf16.msra.mxu0 0
      %1367 = vmatprep.subr.bf16.mxu0 0
      %1368 = vmatpush1.bf16.msra.mxu0 %v1351
      %1369 = vmatprep.subr.bf16.mxu0 0
      %1370 = vmatpush2.bf16.msra.mxu0 0
      %1371 = vmatprep.subr.bf16.mxu0 0
      %1372 = vmatpush2.bf16.msra.mxu0 0
      %1373 = vmatprep.subr.bf16.mxu0 0
      %1374 = vmatpush2.bf16.msra.mxu0 0
      %1375 = vmatprep.subr.bf16.mxu0 0
      %1376 = vmatpush2.bf16.msra.mxu0 0
      %1377 = vmatprep.subr.bf16.mxu0 0
      %1378 = vmatpush2.bf16.msra.mxu0 0
      %1379 = vmatprep.subr.bf16.mxu0 0
      %1380 = vmatpush2.bf16.msra.mxu0 0
      %1381 = vmatprep.subr.bf16.mxu0 0
      %1382 = vmatpush2.bf16.msra.mxu0 0
      %1383 = vmatprep.subr.bf16.mxu0 0
      %1384 = vmatpush2.bf16.msra.mxu0 0
      %1385 = vmatprep.mubr.bf16.mxu0 0
      %1386 = vmatmul.mubr.bf16.gmra.mxu0 %v1348
      %v1387 = vpop.f32.mrf.mxu0
      %v1388 = vadd.f32 0.0, %v1387
      %v1389 = vpop.f32.mrf.mxu0
      %v1390 = vpop.f32.mrf.mxu0
      %v1391 = vpop.f32.mrf.mxu0
      %1392 = vdwg.mxu0
      %1393 = vrot.lane.b32.xlu0 %v581, 48
      %v1394 = vpop.permute.xlu0 %1393
      %v1396 = vsel %vm836, %v1295, 0
      %v1399 = vsel %vm840, %v1394, 0
      %1401 = vmatprep.subr.bf16.mxu0 0
      %1402 = vmatpush1.bf16.msra.mxu0 0
      %1403 = vmatprep.subr.bf16.mxu0 0
      %1404 = vmatpush1.bf16.msra.mxu0 0
      %1405 = vmatprep.subr.bf16.mxu0 0
      %1406 = vmatpush1.bf16.msra.mxu0 0
      %1407 = vmatprep.subr.bf16.mxu0 0
      %1408 = vmatpush1.bf16.msra.mxu0 0
      %1409 = vmatprep.subr.bf16.mxu0 0
      %1410 = vmatpush1.bf16.msra.mxu0 0
      %1411 = vmatprep.subr.bf16.mxu0 0
      %1412 = vmatpush1.bf16.msra.mxu0 0
      %1413 = vmatprep.subr.bf16.mxu0 0
      %1414 = vmatpush1.bf16.msra.mxu0 0
      %1415 = vmatprep.subr.bf16.mxu0 0
      %1416 = vmatpush1.bf16.msra.mxu0 %v1399
      %1417 = vmatprep.subr.bf16.mxu0 0
      %1418 = vmatpush2.bf16.msra.mxu0 0
      %1419 = vmatprep.subr.bf16.mxu0 0
      %1420 = vmatpush2.bf16.msra.mxu0 0
      %1421 = vmatprep.subr.bf16.mxu0 0
      %1422 = vmatpush2.bf16.msra.mxu0 0
      %1423 = vmatprep.subr.bf16.mxu0 0
      %1424 = vmatpush2.bf16.msra.mxu0 0
      %1425 = vmatprep.subr.bf16.mxu0 0
      %1426 = vmatpush2.bf16.msra.mxu0 0
      %1427 = vmatprep.subr.bf16.mxu0 0
      %1428 = vmatpush2.bf16.msra.mxu0 0
      %1429 = vmatprep.subr.bf16.mxu0 0
      %1430 = vmatpush2.bf16.msra.mxu0 0
      %1431 = vmatprep.subr.bf16.mxu0 0
      %1432 = vmatpush2.bf16.msra.mxu0 0
      %1433 = vmatprep.mubr.bf16.mxu0 0
      %1434 = vmatmul.mubr.bf16.gmra.mxu0 %v1396
      %v1435 = vpop.f32.mrf.mxu0
      %v1436 = vadd.f32 0.0, %v1435
      %v1437 = vpop.f32.mrf.mxu0
      %v1438 = vpop.f32.mrf.mxu0
      %v1439 = vpop.f32.mrf.mxu0
      %1440 = vdwg.mxu0
      %1441 = vrot.lane.b32.xlu0 %v582, 48
      %v1442 = vpop.permute.xlu0 %1441
      %v1444 = vsel %vm836, %v1296, 0
      %v1447 = vsel %vm840, %v1442, 0
      %1449 = vmatprep.subr.bf16.mxu0 0
      %1450 = vmatpush1.bf16.msra.mxu0 0
      %1451 = vmatprep.subr.bf16.mxu0 0
      %1452 = vmatpush1.bf16.msra.mxu0 0
      %1453 = vmatprep.subr.bf16.mxu0 0
      %1454 = vmatpush1.bf16.msra.mxu0 0
      %1455 = vmatprep.subr.bf16.mxu0 0
      %1456 = vmatpush1.bf16.msra.mxu0 0
      %1457 = vmatprep.subr.bf16.mxu0 0
      %1458 = vmatpush1.bf16.msra.mxu0 0
      %1459 = vmatprep.subr.bf16.mxu0 0
      %1460 = vmatpush1.bf16.msra.mxu0 0
      %1461 = vmatprep.subr.bf16.mxu0 0
      %1462 = vmatpush1.bf16.msra.mxu0 0
      %1463 = vmatprep.subr.bf16.mxu0 0
      %1464 = vmatpush1.bf16.msra.mxu0 %v1447
      %1465 = vmatprep.subr.bf16.mxu0 0
      %1466 = vmatpush2.bf16.msra.mxu0 0
      %1467 = vmatprep.subr.bf16.mxu0 0
      %1468 = vmatpush2.bf16.msra.mxu0 0
      %1469 = vmatprep.subr.bf16.mxu0 0
      %1470 = vmatpush2.bf16.msra.mxu0 0
      %1471 = vmatprep.subr.bf16.mxu0 0
      %1472 = vmatpush2.bf16.msra.mxu0 0
      %1473 = vmatprep.subr.bf16.mxu0 0
      %1474 = vmatpush2.bf16.msra.mxu0 0
      %1475 = vmatprep.subr.bf16.mxu0 0
      %1476 = vmatpush2.bf16.msra.mxu0 0
      %1477 = vmatprep.subr.bf16.mxu0 0
      %1478 = vmatpush2.bf16.msra.mxu0 0
      %1479 = vmatprep.subr.bf16.mxu0 0
      %1480 = vmatpush2.bf16.msra.mxu0 0
      %1481 = vmatprep.mubr.bf16.mxu0 0
      %1482 = vmatmul.mubr.bf16.gmra.mxu0 %v1444
      %v1483 = vpop.f32.mrf.mxu0
      %v1484 = vadd.f32 0.0, %v1483
      %v1485 = vpop.f32.mrf.mxu0
      %v1486 = vpop.f32.mrf.mxu0
      %v1487 = vpop.f32.mrf.mxu0
      %1488 = vdwg.mxu0
      %v1489 = vld [vmem:[%s5 + $0x8] sm:$0xf]
      %v1490 = vld [vmem:[%s5 + $0xc] sm:$0xf]
      %v1495 = vcombine.low %v1340, %v1388
      %v1496 = vcombine.low %v1436, %v1484
      %v1499 = vpack.c.bf16 %v1496, %v1495
      %v1502 = vunpack.c.l.b16 %v1489
      %v1503 = vunpack.c.l.b16 %v1490
      %v1504 = vpack.c.b16 %v1503, %v1502
      %v1507 = vsel %vm587, %v1499, 0
      %1509 = vmatprep.subr.bf16.mxu0 0
      %1510 = vmatpush1.bf16.msra.mxu0 0
      %1511 = vmatprep.subr.bf16.mxu0 0
      %1512 = vmatpush1.bf16.msra.mxu0 0
      %1513 = vmatprep.subr.bf16.mxu0 0
      %1514 = vmatpush1.bf16.msra.mxu0 0
      %1515 = vmatprep.subr.bf16.mxu0 0
      %1516 = vmatpush1.bf16.msra.mxu0 0
      %1517 = vmatprep.subr.bf16.mxu0 0
      %1518 = vmatpush1.bf16.msra.mxu0 0
      %1519 = vmatprep.subr.bf16.mxu0 0
      %1520 = vmatpush1.bf16.msra.mxu0 0
      %1521 = vmatprep.subr.bf16.mxu0 0
      %1522 = vmatpush1.bf16.msra.mxu0 0
      %1523 = vmatprep.subr.bf16.mxu0 0
      %1524 = vmatpush1.bf16.msra.mxu0 %v1504
      %1525 = vmatprep.subr.bf16.mxu0 0
      %1526 = vmatpush2.bf16.msra.mxu0 0
      %1527 = vmatprep.subr.bf16.mxu0 0
      %1528 = vmatpush2.bf16.msra.mxu0 0
      %1529 = vmatprep.subr.bf16.mxu0 0
      %1530 = vmatpush2.bf16.msra.mxu0 0
      %1531 = vmatprep.subr.bf16.mxu0 0
      %1532 = vmatpush2.bf16.msra.mxu0 0
      %1533 = vmatprep.subr.bf16.mxu0 0
      %1534 = vmatpush2.bf16.msra.mxu0 0
      %1535 = vmatprep.subr.bf16.mxu0 0
      %1536 = vmatpush2.bf16.msra.mxu0 0
      %1537 = vmatprep.subr.bf16.mxu0 0
      %1538 = vmatpush2.bf16.msra.mxu0 0
      %1539 = vmatprep.subr.bf16.mxu0 0
      %1540 = vmatpush2.bf16.msra.mxu0 0
      %1541 = vmatprep.mubr.bf16.mxu0 0
      %1542 = vmatmul.mubr.bf16.gmra.mxu0 %v1507
      %v1543 = vpop.f32.mrf.mxu0
      %v1544 = vadd.f32 0.0, %v1543
      %v1545 = vpop.f32.mrf.mxu0
      %v1546 = vpop.f32.mrf.mxu0
      %v1547 = vadd.f32 0.0, %v1546
      %v1548 = vpop.f32.mrf.mxu0
      %1549 = vdwg.mxu0
      %v1552 = vunpack.c.l.b16 %v1028
      %v1553 = vunpack.c.l.b16 %v1029
      %v1554 = vpack.c.b16 %v1553, %v1552
      %v1557 = vsel %vm587, %v1038, 0
      %1559 = vmatprep.subr.bf16.mxu0 0
      %1560 = vmatpush1.bf16.msra.mxu0 0
      %1561 = vmatprep.subr.bf16.mxu0 0
      %1562 = vmatpush1.bf16.msra.mxu0 0
      %1563 = vmatprep.subr.bf16.mxu0 0
      %1564 = vmatpush1.bf16.msra.mxu0 0
      %1565 = vmatprep.subr.bf16.mxu0 0
      %1566 = vmatpush1.bf16.msra.mxu0 0
      %1567 = vmatprep.subr.bf16.mxu0 0
      %1568 = vmatpush1.bf16.msra.mxu0 0
      %1569 = vmatprep.subr.bf16.mxu0 0
      %1570 = vmatpush1.bf16.msra.mxu0 0
      %1571 = vmatprep.subr.bf16.mxu0 0
      %1572 = vmatpush1.bf16.msra.mxu0 0
      %1573 = vmatprep.subr.bf16.mxu0 0
      %1574 = vmatpush1.bf16.msra.mxu0 %v1554
      %1575 = vmatprep.subr.bf16.mxu0 0
      %1576 = vmatpush2.bf16.msra.mxu0 0
      %1577 = vmatprep.subr.bf16.mxu0 0
      %1578 = vmatpush2.bf16.msra.mxu0 0
      %1579 = vmatprep.subr.bf16.mxu0 0
      %1580 = vmatpush2.bf16.msra.mxu0 0
      %1581 = vmatprep.subr.bf16.mxu0 0
      %1582 = vmatpush2.bf16.msra.mxu0 0
      %1583 = vmatprep.subr.bf16.mxu0 0
      %1584 = vmatpush2.bf16.msra.mxu0 0
      %1585 = vmatprep.subr.bf16.mxu0 0
      %1586 = vmatpush2.bf16.msra.mxu0 0
      %1587 = vmatprep.subr.bf16.mxu0 0
      %1588 = vmatpush2.bf16.msra.mxu0 0
      %1589 = vmatprep.subr.bf16.mxu0 0
      %1590 = vmatpush2.bf16.msra.mxu0 0
      %1591 = vmatprep.mubr.bf16.mxu0 0
      %1592 = vmatmul.mubr.bf16.gmra.mxu0 %v1557
      %v1593 = vpop.f32.mrf.mxu0
      %v1594 = vadd.f32 %v1544, %v1593
      %v1595 = vpop.f32.mrf.mxu0
      %v1596 = vpop.f32.mrf.mxu0
      %v1597 = vadd.f32 %v1547, %v1596
      %v1598 = vpop.f32.mrf.mxu0
      %1599 = vdwg.mxu0
      %v1600 = vld [vmem:[%s6] sm:$0x1]
      %v1602 = vlaneseq
      %v1603 = vshrl.u32 %v1602, 7
      %v1604 = vsub.s32 0, %v1603
      %v1605 = vrot.slane %v1600, %v1604
      %v1607 = vadd.f32 %v1594, %v1605
      %v1608 = vadd.f32 %v1597, %v1605
      %v1611 = vcombine.high %v1607, %v1607
      %v1612 = vcombine.high %v1608, %v1608
      %v1615 = vadd.f32 %v337, %v1607
      %v1616 = vadd.f32 %v338, %v1611
      %v1617 = vadd.f32 %v339, %v1608
      %v1618 = vadd.f32 %v340, %v1612
      %vm1619 = vcmask 257024
      %1620 = vst.msk [vmem:[%s334] sm:$0xf] %vm1619, %v1615
      %1621 = vst.msk [vmem:[%s334 + $0x4] sm:$0xf] %vm1619, %v1616
      %1622 = vst.msk [vmem:[%s334 + $0x8] sm:$0xf] %vm1619, %v1617
      %1623 = vst.msk [vmem:[%s334 + $0xc] sm:$0xf] %vm1619, %v1618
      %s1624 = smul.u32 4, %s20
      %p1625 = scmp.lt.s32.totalorder %s1624, 7
      %s1626 = scalar_select %p1625, %s1624, 7
      %s1627 = smul.addr %s1626, 4
      %s1628 = scalar_lea.vmem %s9, %s1627
      // Predicated region
      $region57: #{_lambda_.25} parent=55 // pred_check
        %p1629 = pneg %p232
      $region58: #{_lambda_.25} parent=55 // pred_check_branch
        %1631 = sbr.rel (%p1629) target = $region60
      $region59: #{_lambda_.25} parent=55 // pred_region
        %s1632 = smul.u32 4, %s20
      $region60: #{_lambda_.25} parent=55 // pred_fallthru
        _
    $region56: #{_lambda_.25} parent=5 // pred_fallthru
      _
    %p1633 = scmp.le.s32.totalorder 2, %s15
    // Predicated region
    $region61: #{_lambda_.25} parent=5 // pred_check
      %p1634 = pneg %p1633
    $region62: #{_lambda_.25} parent=5 // pred_check_branch
      %1636 = sbr.rel (%p1634) target = $region64
    $region63: #{_lambda_.25} parent=5 // pred_region
      %s1637 = ssub.s32 %s15, 2
      // Predicated region
      $region65: #{_lambda_.25} parent=63 // pred_check
        %p1638 = pneg %p238
      $region66: #{_lambda_.25} parent=63 // pred_check_branch
        %1640 = sbr.rel (%p1638) target = $region68
      $region67: #{_lambda_.25} parent=63 // pred_region
        %s1641 = smul.u32 4, %s21
        %p1642 = scmp.lt.s32.totalorder %s1641, 7
        %s1643 = scalar_select %p1642, %s1641, 7
        %s1644 = smul.addr %s1643, 4
        %s1645 = scalar_lea.vmem %s9, %s1644
      $region68: #{_lambda_.25} parent=63 // pred_fallthru
        _
    $region64: #{_lambda_.25} parent=5 // pred_fallthru
      _
  $region6: #{_lambda_.25} parent=0 // loop_footer
    %s19 = sadd.s32 1, %s15
  $region7: #{_lambda_.25} parent=0 // loop_footer_branch
    %14 = sbr.rel target = $region3
  $region8: #{_lambda_.25} parent=0 // loop_exit
    _

// kernel: _lambda_.29
$region0: #{_lambda_.29}
  #allocation0 [shape = 'u32[]', space=smem, size = 0x4, offset = 0x4, fixed_abs, tag = 'smem constant byte address 0x4 - core index']
  #allocation1 [shape = 'u32[144,128]{1,0:T(1,128)}', space=vmem, size = 0x12000, scoped, tag = 'internal scratch']
  %s0 = inlined_call_operand.vmem [shape: f32[8,128], index: 0, kind: input, shape index: {}]
  %s1 = inlined_call_operand.vmem [shape: f32[1,128], index: 1, kind: input, shape index: {}]
  %s2 = inlined_call_operand.vmem [shape: f32[1,128], index: 2, kind: input, shape index: {}]
  %s3 = inlined_call_operand.vmem [shape: bf16[128,128], index: 3, kind: input, shape index: {}]
  %s4 = inlined_call_operand.vmem [shape: f32[1,128], index: 4, kind: input, shape index: {}]
  %s5 = inlined_call_operand.vmem [shape: f32[8,128], index: 5, kind: output, shape index: {}]
  %s6 = sld [smem:[#allocation0]]
  $region30: #{_lambda_.29} parent=0
    _
  %s8 = ssub.s32 1, %s6
  %s9 = scalar_select 0, %s8, %s6
  // Predicated region
  $region2: #{_lambda_.29} parent=0 // pred_check
    _
  $region3: #{_lambda_.29} parent=0 // pred_check_branch
    %11 = sbr.rel (0) target = $region5
  $region4: #{_lambda_.29} parent=0 // pred_region
    _
  $region5: #{_lambda_.29} parent=0 // pred_fallthru
    _
  // Predicated region
  $region6: #{_lambda_.29} parent=0 // pred_check
    _
  $region7: #{_lambda_.29} parent=0 // pred_check_branch
    %13 = sbr.rel (0) target = $region9
  $region8: #{_lambda_.29} parent=0 // pred_region
    _
  $region9: #{_lambda_.29} parent=0 // pred_fallthru
    _
  // Predicated region
  $region10: #{_lambda_.29} parent=0 // pred_check
    _
  $region11: #{_lambda_.29} parent=0 // pred_check_branch
    %15 = sbr.rel (0) target = $region13
  $region12: #{_lambda_.29} parent=0 // pred_region
    _
  $region13: #{_lambda_.29} parent=0 // pred_fallthru
    _
  // Predicated region
  $region14: #{_lambda_.29} parent=0 // pred_check
    _
  $region15: #{_lambda_.29} parent=0 // pred_check_branch
    %17 = sbr.rel (0) target = $region17
  $region16: #{_lambda_.29} parent=0 // pred_region
    _
  $region17: #{_lambda_.29} parent=0 // pred_fallthru
    _
  // Predicated region
  $region18: #{_lambda_.29} parent=0 // pred_check
    _
  $region19: #{_lambda_.29} parent=0 // pred_check_branch
    %19 = sbr.rel (0) target = $region21
  $region20: #{_lambda_.29} parent=0 // pred_region
    _
  $region21: #{_lambda_.29} parent=0 // pred_fallthru
    _
  %v21 = vld [vmem:[%s0] sm:$0xff]
  %v22 = vld [vmem:[%s1] sm:$0x1]
  %v23 = vld [vmem:[%s2] sm:$0x1]
  %24 = vadd.xlane.f32.xlu0 %v21
  %v25 = vpop.xlane.xlu0 %24
  %v26 = vrcp.pop 128.0
  %v27 = vmul.f32 %v25, %v26
  %v28 = vsub.f32 %v21, %v27
  %v29 = vmul.f32 %v28, %v28
  %30 = vadd.xlane.f32.xlu0 %v29
  %v31 = vpop.xlane.xlu0 %30
  %v32 = vmul.f32 %v31, %v26
  %v33 = vadd.f32 %v32, 1e-05
  %v34 = vrsqrt.pop %v33
  %v35 = vmul.f32 %v28, %v34
  %v37 = vlaneseq
  %v38 = vshrl.u32 %v37, 7
  %v39 = vsub.s32 0, %v38
  %v40 = vrot.slane %v22, %v39
  %v42 = vmul.f32 %v35, %v40
  %v44 = vlaneseq
  %v45 = vshrl.u32 %v44, 7
  %v46 = vsub.s32 0, %v45
  %v47 = vrot.slane %v23, %v46
  %v49 = vadd.f32 %v42, %v47
  %v50 = vpack.c.bf16 %v49, %v49
  %v51 = vld [vmem:[%s3] sm:$0xf]
  %v52 = vld [vmem:[%s3 + $0x4] sm:$0xf]
  %v53 = vld [vmem:[%s3 + $0x8] sm:$0xf]
  %v54 = vld [vmem:[%s3 + $0xc] sm:$0xf]
  %v55 = vld [vmem:[%s3 + $0x10] sm:$0xf]
  %v56 = vld [vmem:[%s3 + $0x14] sm:$0xf]
  %v57 = vld [vmem:[%s3 + $0x18] sm:$0xf]
  %v58 = vld [vmem:[%s3 + $0x1c] sm:$0xf]
  %v59 = vld [vmem:[%s3 + $0x20] sm:$0xf]
  %v60 = vld [vmem:[%s3 + $0x24] sm:$0xf]
  %v61 = vld [vmem:[%s3 + $0x28] sm:$0xf]
  %v62 = vld [vmem:[%s3 + $0x2c] sm:$0xf]
  %v63 = vld [vmem:[%s3 + $0x30] sm:$0xf]
  %v64 = vld [vmem:[%s3 + $0x34] sm:$0xf]
  %v65 = vld [vmem:[%s3 + $0x38] sm:$0xf]
  %v66 = vld [vmem:[%s3 + $0x3c] sm:$0xf]
  %v67 = vld [vmem:[%s4] sm:$0x1]
  %v69 = vlaneseq
  %v70 = vshrl.u32 %v69, 7
  %v71 = vsub.s32 0, %v70
  %v72 = vrot.slane %v67, %v71
  %v90 = vunpack.c.l.b16 %v51
  %v91 = vunpack.c.l.b16 %v52
  %v92 = vunpack.c.l.b16 %v53
  %v93 = vunpack.c.l.b16 %v54
  %v94 = vunpack.c.l.b16 %v55
  %v95 = vunpack.c.l.b16 %v56
  %v96 = vunpack.c.l.b16 %v57
  %v97 = vunpack.c.l.b16 %v58
  %v98 = vunpack.c.l.b16 %v59
  %v99 = vunpack.c.l.b16 %v60
  %v100 = vunpack.c.l.b16 %v61
  %v101 = vunpack.c.l.b16 %v62
  %v102 = vunpack.c.l.b16 %v63
  %v103 = vunpack.c.l.b16 %v64
  %v104 = vunpack.c.l.b16 %v65
  %v105 = vunpack.c.l.b16 %v66
  %v106 = vpack.c.b16 %v91, %v90
  %v107 = vpack.c.b16 %v93, %v92
  %v108 = vpack.c.b16 %v95, %v94
  %v109 = vpack.c.b16 %v97, %v96
  %v110 = vpack.c.b16 %v99, %v98
  %v111 = vpack.c.b16 %v101, %v100
  %v112 = vpack.c.b16 %v103, %v102
  %v113 = vpack.c.b16 %v105, %v104
  %122 = vmatprep.subr.bf16.mxu0 0
  %123 = vmatpush1.bf16.msra.mxu0 %v113
  %124 = vmatprep.subr.bf16.mxu0 0
  %125 = vmatpush1.bf16.msra.mxu0 %v112
  %126 = vmatprep.subr.bf16.mxu0 0
  %127 = vmatpush1.bf16.msra.mxu0 %v111
  %128 = vmatprep.subr.bf16.mxu0 0
  %129 = vmatpush1.bf16.msra.mxu0 %v110
  %130 = vmatprep.subr.bf16.mxu0 0
  %131 = vmatpush1.bf16.msra.mxu0 %v109
  %132 = vmatprep.subr.bf16.mxu0 0
  %133 = vmatpush1.bf16.msra.mxu0 %v108
  %134 = vmatprep.subr.bf16.mxu0 0
  %135 = vmatpush1.bf16.msra.mxu0 %v107
  %136 = vmatprep.subr.bf16.mxu0 0
  %137 = vmatpush1.bf16.msra.mxu0 %v106
  %138 = vmatprep.subr.bf16.mxu0 0
  %139 = vmatpush2.bf16.msra.mxu0 0
  %140 = vmatprep.subr.bf16.mxu0 0
  %141 = vmatpush2.bf16.msra.mxu0 0
  %142 = vmatprep.subr.bf16.mxu0 0
  %143 = vmatpush2.bf16.msra.mxu0 0
  %144 = vmatprep.subr.bf16.mxu0 0
  %145 = vmatpush2.bf16.msra.mxu0 0
  %146 = vmatprep.subr.bf16.mxu0 0
  %147 = vmatpush2.bf16.msra.mxu0 0
  %148 = vmatprep.subr.bf16.mxu0 0
  %149 = vmatpush2.bf16.msra.mxu0 0
  %150 = vmatprep.subr.bf16.mxu0 0
  %151 = vmatpush2.bf16.msra.mxu0 0
  %152 = vmatprep.subr.bf16.mxu0 0
  %153 = vmatpush2.bf16.msra.mxu0 0
  %154 = vmatprep.mubr.bf16.mxu0 0
  %155 = vmatmul.mubr.bf16.gmra.mxu0 %v50
  %v156 = vpop.f32.mrf.mxu0
  %v157 = vadd.f32 %v72, %v156
  %v158 = vpop.f32.mrf.mxu0
  %v159 = vpop.f32.mrf.mxu0
  %v160 = vpop.f32.mrf.mxu0
  %161 = vdwg.mxu0
  %162 = vst [vmem:[%s5] sm:$0xff] %v157
  // Predicated region
  $region22: #{_lambda_.29} parent=0 // pred_check
    _
  $region23: #{_lambda_.29} parent=0 // pred_check_branch
    %164 = sbr.rel (0) target = $region25
  $region24: #{_lambda_.29} parent=0 // pred_region
    _
  $region25: #{_lambda_.29} parent=0 // pred_fallthru
    _
  // Predicated region
  $region26: #{_lambda_.29} parent=0 // pred_check
    _
  $region27: #{_lambda_.29} parent=0 // pred_check_branch
    %166 = sbr.rel (0) target = $region29
  $region28: #{_lambda_.29} parent=0 // pred_region
    _
  $region29: #{_lambda_.29} parent=0 // pred_fallthru
    _

// kernel: _lambda_.31
$region0: #{_lambda_.31}
  #allocation0 [shape = 'u32[]', space=smem, size = 0x4, offset = 0x4, fixed_abs, tag = 'smem constant byte address 0x4 - core index']
  #allocation1 [shape = 'u32[144,128]{1,0:T(1,128)}', space=vmem, size = 0x12000, scoped, tag = 'internal scratch']
  %s0 = inlined_call_operand.vmem [shape: f32[8,64], index: 0, kind: input, shape index: {}]
  %s1 = inlined_call_operand.vmem [shape: f32[1,64], index: 1, kind: input, shape index: {}]
  %s2 = inlined_call_operand.vmem [shape: f32[1,64], index: 2, kind: input, shape index: {}]
  %s3 = inlined_call_operand.vmem [shape: bf16[64,256], index: 3, kind: input, shape index: {}]
  %s4 = inlined_call_operand.vmem [shape: f32[1,256], index: 4, kind: input, shape index: {}]
  %s5 = inlined_call_operand.vmem [shape: bf16[256,64], index: 5, kind: input, shape index: {}]
  %s6 = inlined_call_operand.vmem [shape: f32[1,64], index: 6, kind: input, shape index: {}]
  %s7 = inlined_call_operand.vmem [shape: f32[8,64], index: 7, kind: output, shape index: {}]
  %s8 = sld [smem:[#allocation0]]
  $region38: #{_lambda_.31} parent=0
    _
  %s10 = ssub.s32 1, %s8
  %s11 = scalar_select 0, %s10, %s8
  // Predicated region
  $region2: #{_lambda_.31} parent=0 // pred_check
    _
  $region3: #{_lambda_.31} parent=0 // pred_check_branch
    %13 = sbr.rel (0) target = $region5
  $region4: #{_lambda_.31} parent=0 // pred_region
    _
  $region5: #{_lambda_.31} parent=0 // pred_fallthru
    _
  // Predicated region
  $region6: #{_lambda_.31} parent=0 // pred_check
    _
  $region7: #{_lambda_.31} parent=0 // pred_check_branch
    %15 = sbr.rel (0) target = $region9
  $region8: #{_lambda_.31} parent=0 // pred_region
    _
  $region9: #{_lambda_.31} parent=0 // pred_fallthru
    _
  // Predicated region
  $region10: #{_lambda_.31} parent=0 // pred_check
    _
  $region11: #{_lambda_.31} parent=0 // pred_check_branch
    %17 = sbr.rel (0) target = $region13
  $region12: #{_lambda_.31} parent=0 // pred_region
    _
  $region13: #{_lambda_.31} parent=0 // pred_fallthru
    _
  // Predicated region
  $region14: #{_lambda_.31} parent=0 // pred_check
    _
  $region15: #{_lambda_.31} parent=0 // pred_check_branch
    %19 = sbr.rel (0) target = $region17
  $region16: #{_lambda_.31} parent=0 // pred_region
    _
  $region17: #{_lambda_.31} parent=0 // pred_fallthru
    _
  // Predicated region
  $region18: #{_lambda_.31} parent=0 // pred_check
    _
  $region19: #{_lambda_.31} parent=0 // pred_check_branch
    %21 = sbr.rel (0) target = $region21
  $region20: #{_lambda_.31} parent=0 // pred_region
    _
  $region21: #{_lambda_.31} parent=0 // pred_fallthru
    _
  // Predicated region
  $region22: #{_lambda_.31} parent=0 // pred_check
    _
  $region23: #{_lambda_.31} parent=0 // pred_check_branch
    %23 = sbr.rel (0) target = $region25
  $region24: #{_lambda_.31} parent=0 // pred_region
    _
  $region25: #{_lambda_.31} parent=0 // pred_fallthru
    _
  // Predicated region
  $region26: #{_lambda_.31} parent=0 // pred_check
    _
  $region27: #{_lambda_.31} parent=0 // pred_check_branch
    %25 = sbr.rel (0) target = $region29
  $region28: #{_lambda_.31} parent=0 // pred_region
    _
  $region29: #{_lambda_.31} parent=0 // pred_fallthru
    _
  %v27 = vld [vmem:[%s0] sm:$0xff]
  %v28 = vld [vmem:[%s1] sm:$0x1]
  %v29 = vld [vmem:[%s2] sm:$0x1]
  %vm30 = vcmask 523264
  %v31 = vsel %vm30, %v27, 0.0
  %32 = vadd.xlane.f32.xlu0 %v31
  %v33 = vpop.xlane.xlu0 %32
  %v34 = vrcp.pop 64.0
  %v35 = vmul.f32 %v33, %v34
  %v36 = vsub.f32 %v27, %v35
  %v37 = vmul.f32 %v36, %v36
  %v38 = vsel %vm30, %v37, 0.0
  %39 = vadd.xlane.f32.xlu0 %v38
  %v40 = vpop.xlane.xlu0 %39
  %v41 = vmul.f32 %v40, %v34
  %v42 = vadd.f32 %v41, 1e-05
  %v43 = vrsqrt.pop %v42
  %v44 = vmul.f32 %v36, %v43
  %v46 = vlaneseq
  %v47 = vshrl.u32 %v46, 7
  %v48 = vsub.s32 0, %v47
  %v49 = vrot.slane %v28, %v48
  %v51 = vmul.f32 %v44, %v49
  %v53 = vlaneseq
  %v54 = vshrl.u32 %v53, 7
  %v55 = vsub.s32 0, %v54
  %v56 = vrot.slane %v29, %v55
  %v58 = vadd.f32 %v51, %v56
  %v59 = vpack.c.bf16 %v58, %v58
  %v60 = vld [vmem:[%s3] sm:$0xff]
  %v61 = vld [vmem:[%s3 + $0x8] sm:$0xff]
  %v62 = vld [vmem:[%s3 + $0x10] sm:$0xff]
  %v63 = vld [vmem:[%s3 + $0x18] sm:$0xff]
  %v64 = vld [vmem:[%s3 + $0x20] sm:$0xff]
  %v65 = vld [vmem:[%s3 + $0x28] sm:$0xff]
  %v66 = vld [vmem:[%s3 + $0x30] sm:$0xff]
  %v67 = vld [vmem:[%s3 + $0x38] sm:$0xff]
  %v68 = vld [vmem:[%s4] sm:$0x3]
  %v70 = vlaneseq
  %v71 = vshrl.u32 %v70, 7
  %v72 = vsub.s32 0, %v71
  %v73 = vrot.slane %v68, %v72
  %v74 = vlaneseq
  %v75 = vshrl.u32 %v74, 7
  %v76 = vsub.s32 1, %v75
  %v77 = vrot.slane %v68, %v76
  %v88 = vunpack.c.l.b16 %v60
  %v89 = vunpack.c.h.b16 %v60
  %v90 = vunpack.c.l.b16 %v61
  %v91 = vunpack.c.h.b16 %v61
  %v92 = vunpack.c.l.b16 %v62
  %v93 = vunpack.c.h.b16 %v62
  %v94 = vunpack.c.l.b16 %v63
  %v95 = vunpack.c.h.b16 %v63
  %v96 = vunpack.c.l.b16 %v64
  %v97 = vunpack.c.h.b16 %v64
  %v98 = vunpack.c.l.b16 %v65
  %v99 = vunpack.c.h.b16 %v65
  %v100 = vunpack.c.l.b16 %v66
  %v101 = vunpack.c.h.b16 %v66
  %v102 = vunpack.c.l.b16 %v67
  %v103 = vunpack.c.h.b16 %v67
  %v104 = vpack.c.b16 %v90, %v88
  %v105 = vpack.c.b16 %v91, %v89
  %v106 = vpack.c.b16 %v94, %v92
  %v107 = vpack.c.b16 %v95, %v93
  %v108 = vpack.c.b16 %v98, %v96
  %v109 = vpack.c.b16 %v99, %v97
  %v110 = vpack.c.b16 %v102, %v100
  %v111 = vpack.c.b16 %v103, %v101
  %v121 = vsel %vm30, %v59, 0
  %123 = vmatprep.subr.bf16.mxu0 0
  %124 = vmatpush1.bf16.msra.mxu0 0
  %125 = vmatprep.subr.bf16.mxu0 0
  %126 = vmatpush1.bf16.msra.mxu0 0
  %127 = vmatprep.subr.bf16.mxu0 0
  %128 = vmatpush1.bf16.msra.mxu0 0
  %129 = vmatprep.subr.bf16.mxu0 0
  %130 = vmatpush1.bf16.msra.mxu0 0
  %131 = vmatprep.subr.bf16.mxu0 %v111
  %132 = vmatpush1.bf16.msra.mxu0 %v110
  %133 = vmatprep.subr.bf16.mxu0 %v109
  %134 = vmatpush1.bf16.msra.mxu0 %v108
  %135 = vmatprep.subr.bf16.mxu0 %v107
  %136 = vmatpush1.bf16.msra.mxu0 %v106
  %137 = vmatprep.subr.bf16.mxu0 %v105
  %138 = vmatpush1.bf16.msra.mxu0 %v104
  %139 = vmatprep.subr.bf16.mxu0 0
  %140 = vmatpush2.bf16.msra.mxu0 0
  %141 = vmatprep.subr.bf16.mxu0 0
  %142 = vmatpush2.bf16.msra.mxu0 0
  %143 = vmatprep.subr.bf16.mxu0 0
  %144 = vmatpush2.bf16.msra.mxu0 0
  %145 = vmatprep.subr.bf16.mxu0 0
  %146 = vmatpush2.bf16.msra.mxu0 0
  %147 = vmatprep.subr.bf16.mxu0 0
  %148 = vmatpush2.bf16.msra.mxu0 0
  %149 = vmatprep.subr.bf16.mxu0 0
  %150 = vmatpush2.bf16.msra.mxu0 0
  %151 = vmatprep.subr.bf16.mxu0 0
  %152 = vmatpush2.bf16.msra.mxu0 0
  %153 = vmatprep.subr.bf16.mxu0 0
  %154 = vmatpush2.bf16.msra.mxu0 0
  %155 = vmatprep.mubr.bf16.mxu0 0
  %156 = vmatmul.mubr.bf16.gmra.mxu0 %v121
  %v157 = vpop.f32.mrf.mxu0
  %v158 = vadd.f32 %v73, %v157
  %v159 = vpop.f32.mrf.mxu0
  %v160 = vadd.f32 %v77, %v159
  %v161 = vpop.f32.mrf.mxu0
  %v162 = vpop.f32.mrf.mxu0
  %163 = vdwg.mxu0
  %v164 = vmul.f32 %v158, 0.5
  %v165 = vmul.f32 %v160, 0.5
  %v166 = vmul.f32 %v158, 0.70710677
  %v167 = vmul.f32 %v160, 0.70710677
  %v168 = vand.u32 2147483647, %v166
  %v169 = vand.u32 2147483647, %v167
  %v170 = vmul.f32 %v168, 0.3275911
  %v171 = vmul.f32 %v169, 0.3275911
  %v172 = vadd.f32 %v170, 1.0
  %v173 = vadd.f32 %v171, 1.0
  %v174 = vrcp.pop %v172
  %v175 = vmul.f32 1.0, %v174
  %v176 = vrcp.pop %v173
  %v177 = vmul.f32 1.0, %v176
  %v178 = vmul.f32 %v175, 1.0614054
  %v179 = vmul.f32 %v177, 1.0614054
  %v180 = vadd.f32 %v178, -1.4531521
  %v181 = vadd.f32 %v179, -1.4531521
  %v182 = vmul.f32 %v180, %v175
  %v183 = vmul.f32 %v181, %v177
  %v184 = vadd.f32 %v182, 1.4214138
  %v185 = vadd.f32 %v183, 1.4214138
  %v186 = vmul.f32 %v184, %v175
  %v187 = vmul.f32 %v185, %v177
  %v188 = vadd.f32 %v186, -0.28449672
  %v189 = vadd.f32 %v187, -0.28449672
  %v190 = vmul.f32 %v188, %v175
  %v191 = vmul.f32 %v189, %v177
  %v192 = vadd.f32 %v190, 0.2548296
  %v193 = vadd.f32 %v191, 0.2548296
  %v194 = vmul.f32 %v192, %v175
  %v195 = vmul.f32 %v193, %v177
  %v196 = vsub.f32 0.0, %v168
  %v197 = vsub.f32 0.0, %v169
  %v198 = vmul.f32 %v196, %v168
  %v199 = vmul.f32 %v197, %v169
  %v200 = vmul.f32 %v198, 1.442695
  %v201 = vpow.pop %v200
  %v202 = vmul.f32 %v199, 1.442695
  %v203 = vpow.pop %v202
  %v204 = vmul.f32 %v194, %v201
  %v205 = vmul.f32 %v195, %v203
  %v206 = vsub.f32 1.0, %v204
  %v207 = vsub.f32 1.0, %v205
  %vm208 = vcmp.ge.f32.partialorder %v166, 0.0
  %vm209 = vcmp.ge.f32.partialorder %v167, 0.0
  %v210 = vsub.f32 0.0, %v206
  %v211 = vsub.f32 0.0, %v207
  %v212 = vsel %vm208, %v206, %v210
  %v213 = vsel %vm209, %v207, %v211
  %v214 = vadd.f32 %v212, 1.0
  %v215 = vadd.f32 %v213, 1.0
  %v216 = vmul.f32 %v164, %v214
  %v217 = vmul.f32 %v165, %v215
  %v218 = vpack.c.bf16 %v216, %v216
  %v219 = vpack.c.bf16 %v217, %v217
  %v220 = vld [vmem:[%s5] sm:$0xf]
  %v221 = vld [vmem:[%s5 + $0x4] sm:$0xf]
  %v222 = vld [vmem:[%s5 + $0x8] sm:$0xf]
  %v223 = vld [vmem:[%s5 + $0xc] sm:$0xf]
  %v224 = vld [vmem:[%s5 + $0x10] sm:$0xf]
  %v225 = vld [vmem:[%s5 + $0x14] sm:$0xf]
  %v226 = vld [vmem:[%s5 + $0x18] sm:$0xf]
  %v227 = vld [vmem:[%s5 + $0x1c] sm:$0xf]
  %v228 = vld [vmem:[%s5 + $0x20] sm:$0xf]
  %v229 = vld [vmem:[%s5 + $0x24] sm:$0xf]
  %v230 = vld [vmem:[%s5 + $0x28] sm:$0xf]
  %v231 = vld [vmem:[%s5 + $0x2c] sm:$0xf]
  %v232 = vld [vmem:[%s5 + $0x30] sm:$0xf]
  %v233 = vld [vmem:[%s5 + $0x34] sm:$0xf]
  %v234 = vld [vmem:[%s5 + $0x38] sm:$0xf]
  %v235 = vld [vmem:[%s5 + $0x3c] sm:$0xf]
  %v236 = vld [vmem:[%s5 + $0x40] sm:$0xf]
  %v237 = vld [vmem:[%s5 + $0x44] sm:$0xf]
  %v238 = vld [vmem:[%s5 + $0x48] sm:$0xf]
  %v239 = vld [vmem:[%s5 + $0x4c] sm:$0xf]
  %v240 = vld [vmem:[%s5 + $0x50] sm:$0xf]
  %v241 = vld [vmem:[%s5 + $0x54] sm:$0xf]
  %v242 = vld [vmem:[%s5 + $0x58] sm:$0xf]
  %v243 = vld [vmem:[%s5 + $0x5c] sm:$0xf]
  %v244 = vld [vmem:[%s5 + $0x60] sm:$0xf]
  %v245 = vld [vmem:[%s5 + $0x64] sm:$0xf]
  %v246 = vld [vmem:[%s5 + $0x68] sm:$0xf]
  %v247 = vld [vmem:[%s5 + $0x6c] sm:$0xf]
  %v248 = vld [vmem:[%s5 + $0x70] sm:$0xf]
  %v249 = vld [vmem:[%s5 + $0x74] sm:$0xf]
  %v250 = vld [vmem:[%s5 + $0x78] sm:$0xf]
  %v251 = vld [vmem:[%s5 + $0x7c] sm:$0xf]
  %v284 = vunpack.c.l.b16 %v220
  %v285 = vunpack.c.l.b16 %v221
  %v286 = vunpack.c.l.b16 %v222
  %v287 = vunpack.c.l.b16 %v223
  %v288 = vunpack.c.l.b16 %v224
  %v289 = vunpack.c.l.b16 %v225
  %v290 = vunpack.c.l.b16 %v226
  %v291 = vunpack.c.l.b16 %v227
  %v292 = vunpack.c.l.b16 %v228
  %v293 = vunpack.c.l.b16 %v229
  %v294 = vunpack.c.l.b16 %v230
  %v295 = vunpack.c.l.b16 %v231
  %v296 = vunpack.c.l.b16 %v232
  %v297 = vunpack.c.l.b16 %v233
  %v298 = vunpack.c.l.b16 %v234
  %v299 = vunpack.c.l.b16 %v235
  %v300 = vunpack.c.l.b16 %v236
  %v301 = vunpack.c.l.b16 %v237
  %v302 = vunpack.c.l.b16 %v238
  %v303 = vunpack.c.l.b16 %v239
  %v304 = vunpack.c.l.b16 %v240
  %v305 = vunpack.c.l.b16 %v241
  %v306 = vunpack.c.l.b16 %v242
  %v307 = vunpack.c.l.b16 %v243
  %v308 = vunpack.c.l.b16 %v244
  %v309 = vunpack.c.l.b16 %v245
  %v310 = vunpack.c.l.b16 %v246
  %v311 = vunpack.c.l.b16 %v247
  %v312 = vunpack.c.l.b16 %v248
  %v313 = vunpack.c.l.b16 %v249
  %v314 = vunpack.c.l.b16 %v250
  %v315 = vunpack.c.l.b16 %v251
  %v316 = vpack.c.b16 %v285, %v284
  %v317 = vpack.c.b16 %v287, %v286
  %v318 = vpack.c.b16 %v289, %v288
  %v319 = vpack.c.b16 %v291, %v290
  %v320 = vpack.c.b16 %v293, %v292
  %v321 = vpack.c.b16 %v295, %v294
  %v322 = vpack.c.b16 %v297, %v296
  %v323 = vpack.c.b16 %v299, %v298
  %v324 = vpack.c.b16 %v301, %v300
  %v325 = vpack.c.b16 %v303, %v302
  %v326 = vpack.c.b16 %v305, %v304
  %v327 = vpack.c.b16 %v307, %v306
  %v328 = vpack.c.b16 %v309, %v308
  %v329 = vpack.c.b16 %v311, %v310
  %v330 = vpack.c.b16 %v313, %v312
  %v331 = vpack.c.b16 %v315, %v314
  %348 = vmatprep.subr.bf16.mxu0 0
  %349 = vmatpush1.bf16.msra.mxu0 %v323
  %350 = vmatprep.subr.bf16.mxu0 0
  %351 = vmatpush1.bf16.msra.mxu0 %v322
  %352 = vmatprep.subr.bf16.mxu0 0
  %353 = vmatpush1.bf16.msra.mxu0 %v321
  %354 = vmatprep.subr.bf16.mxu0 0
  %355 = vmatpush1.bf16.msra.mxu0 %v320
  %356 = vmatprep.subr.bf16.mxu0 0
  %357 = vmatpush1.bf16.msra.mxu0 %v319
  %358 = vmatprep.subr.bf16.mxu0 0
  %359 = vmatpush1.bf16.msra.mxu0 %v318
  %360 = vmatprep.subr.bf16.mxu0 0
  %361 = vmatpush1.bf16.msra.mxu0 %v317
  %362 = vmatprep.subr.bf16.mxu0 0
  %363 = vmatpush1.bf16.msra.mxu0 %v316
  %364 = vmatprep.subr.bf16.mxu0 0
  %365 = vmatpush2.bf16.msra.mxu0 %v331
  %366 = vmatprep.subr.bf16.mxu0 0
  %367 = vmatpush2.bf16.msra.mxu0 %v330
  %368 = vmatprep.subr.bf16.mxu0 0
  %369 = vmatpush2.bf16.msra.mxu0 %v329
  %370 = vmatprep.subr.bf16.mxu0 0
  %371 = vmatpush2.bf16.msra.mxu0 %v328
  %372 = vmatprep.subr.bf16.mxu0 0
  %373 = vmatpush2.bf16.msra.mxu0 %v327
  %374 = vmatprep.subr.bf16.mxu0 0
  %375 = vmatpush2.bf16.msra.mxu0 %v326
  %376 = vmatprep.subr.bf16.mxu0 0
  %377 = vmatpush2.bf16.msra.mxu0 %v325
  %378 = vmatprep.subr.bf16.mxu0 0
  %379 = vmatpush2.bf16.msra.mxu0 %v324
  %380 = vmatprep.mubr.bf16.mxu0 %v219
  %381 = vmatmul.mubr.bf16.gmra.mxu0 %v218
  %v382 = vpop.f32.mrf.mxu0
  %v383 = vadd.f32 0.0, %v382
  %v384 = vpop.f32.mrf.mxu0
  %v385 = vpop.f32.mrf.mxu0
  %v386 = vpop.f32.mrf.mxu0
  %387 = vdwg.mxu0
  %v388 = vadd.f32 %v27, %v383
  %v389 = vld [vmem:[%s6] sm:$0x1]
  %v391 = vlaneseq
  %v392 = vshrl.u32 %v391, 7
  %v393 = vsub.s32 0, %v392
  %v394 = vrot.slane %v389, %v393
  %v396 = vadd.f32 %v388, %v394
  %397 = vst.msk [vmem:[%s7] sm:$0xff] %vm30, %v396
  // Predicated region
  $region30: #{_lambda_.31} parent=0 // pred_check
    _
  $region31: #{_lambda_.31} parent=0 // pred_check_branch
    %399 = sbr.rel (0) target = $region33
  $region32: #{_lambda_.31} parent=0 // pred_region
    _
  $region33: #{_lambda_.31} parent=0 // pred_fallthru
    _
  // Predicated region
  $region34: #{_lambda_.31} parent=0 // pred_check
    _
  $region35: #{_lambda_.31} parent=0 // pred_check_branch
    %401 = sbr.rel (0) target = $region37
  $region36: #{_lambda_.31} parent=0 // pred_region
    _
  $region37: #{_lambda_.31} parent=0 // pred_fallthru
    _

// kernel: _lambda_.34
$region0: #{_lambda_.34}
  #allocation0 [shape = 'u32[]', space=smem, size = 0x4, offset = 0x4, fixed_abs, tag = 'smem constant byte address 0x4 - core index']
  #allocation1 [shape = 'u32[144,128]{1,0:T(1,128)}', space=vmem, size = 0x12000, scoped, tag = 'internal scratch']
  %s0 = inlined_call_operand.vmem [shape: f32[8,64], index: 0, kind: input, shape index: {}]
  %s1 = inlined_call_operand.vmem [shape: f32[1,64], index: 1, kind: input, shape index: {}]
  %s2 = inlined_call_operand.vmem [shape: f32[1,64], index: 2, kind: input, shape index: {}]
  %s3 = inlined_call_operand.vmem [shape: bf16[64,128], index: 3, kind: input, shape index: {}]
  %s4 = inlined_call_operand.vmem [shape: f32[1,128], index: 4, kind: input, shape index: {}]
  %s5 = inlined_call_operand.vmem [shape: f32[8,128], index: 5, kind: output, shape index: {}]
  %s6 = sld [smem:[#allocation0]]
  $region30: #{_lambda_.34} parent=0
    _
  %s8 = ssub.s32 1, %s6
  %s9 = scalar_select 0, %s8, %s6
  // Predicated region
  $region2: #{_lambda_.34} parent=0 // pred_check
    _
  $region3: #{_lambda_.34} parent=0 // pred_check_branch
    %11 = sbr.rel (0) target = $region5
  $region4: #{_lambda_.34} parent=0 // pred_region
    _
  $region5: #{_lambda_.34} parent=0 // pred_fallthru
    _
  // Predicated region
  $region6: #{_lambda_.34} parent=0 // pred_check
    _
  $region7: #{_lambda_.34} parent=0 // pred_check_branch
    %13 = sbr.rel (0) target = $region9
  $region8: #{_lambda_.34} parent=0 // pred_region
    _
  $region9: #{_lambda_.34} parent=0 // pred_fallthru
    _
  // Predicated region
  $region10: #{_lambda_.34} parent=0 // pred_check
    _
  $region11: #{_lambda_.34} parent=0 // pred_check_branch
    %15 = sbr.rel (0) target = $region13
  $region12: #{_lambda_.34} parent=0 // pred_region
    _
  $region13: #{_lambda_.34} parent=0 // pred_fallthru
    _
  // Predicated region
  $region14: #{_lambda_.34} parent=0 // pred_check
    _
  $region15: #{_lambda_.34} parent=0 // pred_check_branch
    %17 = sbr.rel (0) target = $region17
  $region16: #{_lambda_.34} parent=0 // pred_region
    _
  $region17: #{_lambda_.34} parent=0 // pred_fallthru
    _
  // Predicated region
  $region18: #{_lambda_.34} parent=0 // pred_check
    _
  $region19: #{_lambda_.34} parent=0 // pred_check_branch
    %19 = sbr.rel (0) target = $region21
  $region20: #{_lambda_.34} parent=0 // pred_region
    _
  $region21: #{_lambda_.34} parent=0 // pred_fallthru
    _
  %v21 = vld [vmem:[%s0] sm:$0xff]
  %v22 = vld [vmem:[%s1] sm:$0x1]
  %v23 = vld [vmem:[%s2] sm:$0x1]
  %vm24 = vcmask 523264
  %v25 = vsel %vm24, %v21, 0.0
  %26 = vadd.xlane.f32.xlu0 %v25
  %v27 = vpop.xlane.xlu0 %26
  %v28 = vrcp.pop 64.0
  %v29 = vmul.f32 %v27, %v28
  %v30 = vsub.f32 %v21, %v29
  %v31 = vmul.f32 %v30, %v30
  %v32 = vsel %vm24, %v31, 0.0
  %33 = vadd.xlane.f32.xlu0 %v32
  %v34 = vpop.xlane.xlu0 %33
  %v35 = vmul.f32 %v34, %v28
  %v36 = vadd.f32 %v35, 1e-05
  %v37 = vrsqrt.pop %v36
  %v38 = vmul.f32 %v30, %v37
  %v40 = vlaneseq
  %v41 = vshrl.u32 %v40, 7
  %v42 = vsub.s32 0, %v41
  %v43 = vrot.slane %v22, %v42
  %v45 = vmul.f32 %v38, %v43
  %v47 = vlaneseq
  %v48 = vshrl.u32 %v47, 7
  %v49 = vsub.s32 0, %v48
  %v50 = vrot.slane %v23, %v49
  %v52 = vadd.f32 %v45, %v50
  %v53 = vpack.c.bf16 %v52, %v52
  %v54 = vld [vmem:[%s3] sm:$0xf]
  %v55 = vld [vmem:[%s3 + $0x4] sm:$0xf]
  %v56 = vld [vmem:[%s3 + $0x8] sm:$0xf]
  %v57 = vld [vmem:[%s3 + $0xc] sm:$0xf]
  %v58 = vld [vmem:[%s3 + $0x10] sm:$0xf]
  %v59 = vld [vmem:[%s3 + $0x14] sm:$0xf]
  %v60 = vld [vmem:[%s3 + $0x18] sm:$0xf]
  %v61 = vld [vmem:[%s3 + $0x1c] sm:$0xf]
  %v62 = vld [vmem:[%s4] sm:$0x1]
  %v64 = vlaneseq
  %v65 = vshrl.u32 %v64, 7
  %v66 = vsub.s32 0, %v65
  %v67 = vrot.slane %v62, %v66
  %v77 = vunpack.c.l.b16 %v54
  %v78 = vunpack.c.l.b16 %v55
  %v79 = vunpack.c.l.b16 %v56
  %v80 = vunpack.c.l.b16 %v57
  %v81 = vunpack.c.l.b16 %v58
  %v82 = vunpack.c.l.b16 %v59
  %v83 = vunpack.c.l.b16 %v60
  %v84 = vunpack.c.l.b16 %v61
  %v85 = vpack.c.b16 %v78, %v77
  %v86 = vpack.c.b16 %v80, %v79
  %v87 = vpack.c.b16 %v82, %v81
  %v88 = vpack.c.b16 %v84, %v83
  %v94 = vsel %vm24, %v53, 0
  %96 = vmatprep.subr.bf16.mxu0 0
  %97 = vmatpush1.bf16.msra.mxu0 0
  %98 = vmatprep.subr.bf16.mxu0 0
  %99 = vmatpush1.bf16.msra.mxu0 0
  %100 = vmatprep.subr.bf16.mxu0 0
  %101 = vmatpush1.bf16.msra.mxu0 0
  %102 = vmatprep.subr.bf16.mxu0 0
  %103 = vmatpush1.bf16.msra.mxu0 0
  %104 = vmatprep.subr.bf16.mxu0 0
  %105 = vmatpush1.bf16.msra.mxu0 %v88
  %106 = vmatprep.subr.bf16.mxu0 0
  %107 = vmatpush1.bf16.msra.mxu0 %v87
  %108 = vmatprep.subr.bf16.mxu0 0
  %109 = vmatpush1.bf16.msra.mxu0 %v86
  %110 = vmatprep.subr.bf16.mxu0 0
  %111 = vmatpush1.bf16.msra.mxu0 %v85
  %112 = vmatprep.subr.bf16.mxu0 0
  %113 = vmatpush2.bf16.msra.mxu0 0
  %114 = vmatprep.subr.bf16.mxu0 0
  %115 = vmatpush2.bf16.msra.mxu0 0
  %116 = vmatprep.subr.bf16.mxu0 0
  %117 = vmatpush2.bf16.msra.mxu0 0
  %118 = vmatprep.subr.bf16.mxu0 0
  %119 = vmatpush2.bf16.msra.mxu0 0
  %120 = vmatprep.subr.bf16.mxu0 0
  %121 = vmatpush2.bf16.msra.mxu0 0
  %122 = vmatprep.subr.bf16.mxu0 0
  %123 = vmatpush2.bf16.msra.mxu0 0
  %124 = vmatprep.subr.bf16.mxu0 0
  %125 = vmatpush2.bf16.msra.mxu0 0
  %126 = vmatprep.subr.bf16.mxu0 0
  %127 = vmatpush2.bf16.msra.mxu0 0
  %128 = vmatprep.mubr.bf16.mxu0 0
  %129 = vmatmul.mubr.bf16.gmra.mxu0 %v94
  %v130 = vpop.f32.mrf.mxu0
  %v131 = vadd.f32 %v67, %v130
  %v132 = vpop.f32.mrf.mxu0
  %v133 = vpop.f32.mrf.mxu0
  %v134 = vpop.f32.mrf.mxu0
  %135 = vdwg.mxu0
  %136 = vst [vmem:[%s5] sm:$0xff] %v131
  // Predicated region
  $region22: #{_lambda_.34} parent=0 // pred_check
    _
  $region23: #{_lambda_.34} parent=0 // pred_check_branch
    %138 = sbr.rel (0) target = $region25
  $region24: #{_lambda_.34} parent=0 // pred_region
    _
  $region25: #{_lambda_.34} parent=0 // pred_fallthru
    _
  // Predicated region
  $region26: #{_lambda_.34} parent=0 // pred_check
    _
  $region27: #{_lambda_.34} parent=0 // pred_check_branch
    %140 = sbr.rel (0) target = $region29
  $region28: #{_lambda_.34} parent=0 // pred_region
    _
  $region29: #{_lambda_.34} parent=0 // pred_fallthru
    _

// kernel: _lambda_.30
$region0: #{_lambda_.30}
  #allocation0 [shape = 'u32[]', space=smem, size = 0x4, offset = 0x4, fixed_abs, tag = 'smem constant byte address 0x4 - core index']
  #allocation1 [shape = 'u32[144,128]{1,0:T(1,128)}', space=vmem, size = 0x12000, scoped, tag = 'internal scratch']
  %s0 = inlined_call_operand.vmem [shape: f32[2,4,64], index: 0, kind: input, shape index: {}]
  %s1 = inlined_call_operand.vmem [shape: f32[1,64], index: 1, kind: input, shape index: {}]
  %s2 = inlined_call_operand.vmem [shape: f32[1,64], index: 2, kind: input, shape index: {}]
  %s3 = inlined_call_operand.vmem [shape: bf16[64,192], index: 3, kind: input, shape index: {}]
  %s4 = inlined_call_operand.vmem [shape: f32[1,192], index: 4, kind: input, shape index: {}]
  %s5 = inlined_call_operand.vmem [shape: bf16[64,64], index: 5, kind: input, shape index: {}]
  %s6 = inlined_call_operand.vmem [shape: f32[1,64], index: 6, kind: input, shape index: {}]
  %s7 = inlined_call_operand.vmem [shape: f32[4,4,4], index: 7, kind: input, shape index: {}]
  %s8 = inlined_call_operand.vmem [shape: f32[1,4,4], index: 8, kind: input, shape index: {}]
  %s9 = inlined_call_operand.vmem [shape: f32[2,4,64], index: 9, kind: output, shape index: {}]
  %s10 = sld [smem:[#allocation0]]
  $region69: #{_lambda_.30} parent=0
    _
  %s12 = ssub.s32 1, %s10
  %s13 = scalar_select 0, %s12, %s10
  loop: start=0, step=1, limit=4
  $region2: #{_lambda_.30} parent=0 // loop_pre_header
    _
  $region3: #{_lambda_.30} parent=0 // loop_header
    %s15 = sphi 0, %s19
    %p16 = scmp.ge.s32.totalorder %s15, 4
    %s25 = sphi 0, %s27
    %s28 = sphi 0, %s25
    %s29 = sphi 0, %s28
    %s45 = sphi 0, %s29
    %s49 = sphi 0, %s49
    %s51 = sphi 0, %s49
    %s52 = sphi 0, %s51
    %s66 = sphi 0, %s52
    %s70 = sphi 0, %s70
    %s72 = sphi 0, %s70
    %s73 = sphi 0, %s72
    %s87 = sphi 0, %s73
    %s91 = sphi 0, %s91
    %s93 = sphi 0, %s91
    %s94 = sphi 0, %s93
    %s108 = sphi 0, %s94
    %s112 = sphi 0, %s112
    %s114 = sphi 0, %s112
    %s115 = sphi 0, %s114
    %s129 = sphi 0, %s115
    %s133 = sphi 0, %s133
    %s135 = sphi 0, %s133
    %s136 = sphi 0, %s135
    %s150 = sphi 0, %s136
    %s154 = sphi 0, %s154
    %s156 = sphi 0, %s154
    %s157 = sphi 0, %s156
    %s171 = sphi 0, %s157
    %s175 = sphi 0, %s175
    %s177 = sphi 0, %s175
    %s178 = sphi 0, %s177
    %s192 = sphi 0, %s178
    %s196 = sphi 0, %s196
    %s198 = sphi 0, %s196
    %s199 = sphi 0, %s198
    %s213 = sphi 0, %s199
    %s219 = sphi 0, %s221
    %s222 = sphi 0, %s219
    %s223 = sphi 0, %s222
    %s239 = sphi 0, %s223
  $region4: #{_lambda_.30} parent=0 // loop_header_branch
    %18 = sbr.rel (%p16) target = $region8
  $region5: #{_lambda_.30} parent=0 // loop_body
    %s20 = ssub.s32 %s15, 1
    %s21 = ssub.s32 %s15, 2
    %s22 = sadd.s32 %s15, 1
    %s23 = ssub.s32 %s15, %s22
    %p24 = scmp.eq.s32.totalorder %s23, 0
    %s26 = sadd.s32 %s25, 1
    %s27 = scalar_select %p24, %s25, %s26
    %p30 = pneg %p24
    %p31 = scmp.eq.s32.totalorder %s15, 1
    %p32 = por %p30, %p31
    %p33 = scmp.ne.s32.totalorder %s25, %s28
    %p34 = scmp.eq.s32.totalorder %s15, 0
    %p35 = por %p33, %p34
    %p36 = scmp.ne.s32.totalorder %s25, %s28
    %p37 = scmp.eq.s32.totalorder %s20, 1
    %p38 = por %p36, %p37
    %p39 = scmp.ne.s32.totalorder %s28, %s29
    %p40 = scmp.eq.s32.totalorder %s20, 0
    %p41 = por %p39, %p40
    %p42 = scmp.ne.s32.totalorder %s28, %s29
    %p43 = scmp.eq.s32.totalorder %s21, 1
    %p44 = por %p42, %p43
    %p46 = scmp.ne.s32.totalorder %s29, %s45
    %p47 = scmp.eq.s32.totalorder %s21, 0
    %p48 = por %p46, %p47
    %s50 = sadd.s32 %s49, 1
    %p53 = scmp.eq.s32.totalorder %s15, 1
    %p54 = scmp.ne.s32.totalorder %s49, %s51
    %p55 = scmp.eq.s32.totalorder %s15, 0
    %p56 = por %p54, %p55
    %p57 = scmp.ne.s32.totalorder %s49, %s51
    %p58 = scmp.eq.s32.totalorder %s20, 1
    %p59 = por %p57, %p58
    %p60 = scmp.ne.s32.totalorder %s51, %s52
    %p61 = scmp.eq.s32.totalorder %s20, 0
    %p62 = por %p60, %p61
    %p63 = scmp.ne.s32.totalorder %s51, %s52
    %p64 = scmp.eq.s32.totalorder %s21, 1
    %p65 = por %p63, %p64
    %p67 = scmp.ne.s32.totalorder %s52, %s66
    %p68 = scmp.eq.s32.totalorder %s21, 0
    %p69 = por %p67, %p68
    %s71 = sadd.s32 %s70, 1
    %p74 = scmp.eq.s32.totalorder %s15, 1
    %p75 = scmp.ne.s32.totalorder %s70, %s72
    %p76 = scmp.eq.s32.totalorder %s15, 0
    %p77 = por %p75, %p76
    %p78 = scmp.ne.s32.totalorder %s70, %s72
    %p79 = scmp.eq.s32.totalorder %s20, 1
    %p80 = por %p78, %p79
    %p81 = scmp.ne.s32.totalorder %s72, %s73
    %p82 = scmp.eq.s32.totalorder %s20, 0
    %p83 = por %p81, %p82
    %p84 = scmp.ne.s32.totalorder %s72, %s73
    %p85 = scmp.eq.s32.totalorder %s21, 1
    %p86 = por %p84, %p85
    %p88 = scmp.ne.s32.totalorder %s73, %s87
    %p89 = scmp.eq.s32.totalorder %s21, 0
    %p90 = por %p88, %p89
    %s92 = sadd.s32 %s91, 1
    %p95 = scmp.eq.s32.totalorder %s15, 1
    %p96 = scmp.ne.s32.totalorder %s91, %s93
    %p97 = scmp.eq.s32.totalorder %s15, 0
    %p98 = por %p96, %p97
    %p99 = scmp.ne.s32.totalorder %s91, %s93
    %p100 = scmp.eq.s32.totalorder %s20, 1
    %p101 = por %p99, %p100
    %p102 = scmp.ne.s32.totalorder %s93, %s94
    %p103 = scmp.eq.s32.totalorder %s20, 0
    %p104 = por %p102, %p103
    %p105 = scmp.ne.s32.totalorder %s93, %s94
    %p106 = scmp.eq.s32.totalorder %s21, 1
    %p107 = por %p105, %p106
    %p109 = scmp.ne.s32.totalorder %s94, %s108
    %p110 = scmp.eq.s32.totalorder %s21, 0
    %p111 = por %p109, %p110
    %s113 = sadd.s32 %s112, 1
    %p116 = scmp.eq.s32.totalorder %s15, 1
    %p117 = scmp.ne.s32.totalorder %s112, %s114
    %p118 = scmp.eq.s32.totalorder %s15, 0
    %p119 = por %p117, %p118
    %p120 = scmp.ne.s32.totalorder %s112, %s114
    %p121 = scmp.eq.s32.totalorder %s20, 1
    %p122 = por %p120, %p121
    %p123 = scmp.ne.s32.totalorder %s114, %s115
    %p124 = scmp.eq.s32.totalorder %s20, 0
    %p125 = por %p123, %p124
    %p126 = scmp.ne.s32.totalorder %s114, %s115
    %p127 = scmp.eq.s32.totalorder %s21, 1
    %p128 = por %p126, %p127
    %p130 = scmp.ne.s32.totalorder %s115, %s129
    %p131 = scmp.eq.s32.totalorder %s21, 0
    %p132 = por %p130, %p131
    %s134 = sadd.s32 %s133, 1
    %p137 = scmp.eq.s32.totalorder %s15, 1
    %p138 = scmp.ne.s32.totalorder %s133, %s135
    %p139 = scmp.eq.s32.totalorder %s15, 0
    %p140 = por %p138, %p139
    %p141 = scmp.ne.s32.totalorder %s133, %s135
    %p142 = scmp.eq.s32.totalorder %s20, 1
    %p143 = por %p141, %p142
    %p144 = scmp.ne.s32.totalorder %s135, %s136
    %p145 = scmp.eq.s32.totalorder %s20, 0
    %p146 = por %p144, %p145
    %p147 = scmp.ne.s32.totalorder %s135, %s136
    %p148 = scmp.eq.s32.totalorder %s21, 1
    %p149 = por %p147, %p148
    %p151 = scmp.ne.s32.totalorder %s136, %s150
    %p152 = scmp.eq.s32.totalorder %s21, 0
    %p153 = por %p151, %p152
    %s155 = sadd.s32 %s154, 1
    %p158 = scmp.eq.s32.totalorder %s15, 1
    %p159 = scmp.ne.s32.totalorder %s154, %s156
    %p160 = scmp.eq.s32.totalorder %s15, 0
    %p161 = por %p159, %p160
    %p162 = scmp.ne.s32.totalorder %s154, %s156
    %p163 = scmp.eq.s32.totalorder %s20, 1
    %p164 = por %p162, %p163
    %p165 = scmp.ne.s32.totalorder %s156, %s157
    %p166 = scmp.eq.s32.totalorder %s20, 0
    %p167 = por %p165, %p166
    %p168 = scmp.ne.s32.totalorder %s156, %s157
    %p169 = scmp.eq.s32.totalorder %s21, 1
    %p170 = por %p168, %p169
    %p172 = scmp.ne.s32.totalorder %s157, %s171
    %p173 = scmp.eq.s32.totalorder %s21, 0
    %p174 = por %p172, %p173
    %s176 = sadd.s32 %s175, 1
    %p179 = scmp.eq.s32.totalorder %s15, 1
    %p180 = scmp.ne.s32.totalorder %s175, %s177
    %p181 = scmp.eq.s32.totalorder %s15, 0
    %p182 = por %p180, %p181
    %p183 = scmp.ne.s32.totalorder %s175, %s177
    %p184 = scmp.eq.s32.totalorder %s20, 1
    %p185 = por %p183, %p184
    %p186 = scmp.ne.s32.totalorder %s177, %s178
    %p187 = scmp.eq.s32.totalorder %s20, 0
    %p188 = por %p186, %p187
    %p189 = scmp.ne.s32.totalorder %s177, %s178
    %p190 = scmp.eq.s32.totalorder %s21, 1
    %p191 = por %p189, %p190
    %p193 = scmp.ne.s32.totalorder %s178, %s192
    %p194 = scmp.eq.s32.totalorder %s21, 0
    %p195 = por %p193, %p194
    %s197 = sadd.s32 %s196, 1
    %p200 = scmp.eq.s32.totalorder %s15, 1
    %p201 = scmp.ne.s32.totalorder %s196, %s198
    %p202 = scmp.eq.s32.totalorder %s15, 0
    %p203 = por %p201, %p202
    %p204 = scmp.ne.s32.totalorder %s196, %s198
    %p205 = scmp.eq.s32.totalorder %s20, 1
    %p206 = por %p204, %p205
    %p207 = scmp.ne.s32.totalorder %s198, %s199
    %p208 = scmp.eq.s32.totalorder %s20, 0
    %p209 = por %p207, %p208
    %p210 = scmp.ne.s32.totalorder %s198, %s199
    %p211 = scmp.eq.s32.totalorder %s21, 1
    %p212 = por %p210, %p211
    %p214 = scmp.ne.s32.totalorder %s199, %s213
    %p215 = scmp.eq.s32.totalorder %s21, 0
    %p216 = por %p214, %p215
    %s217 = ssub.s32 %s15, %s22
    %p218 = scmp.eq.s32.totalorder %s217, 0
    %s220 = sadd.s32 %s219, 1
    %s221 = scalar_select %p218, %s219, %s220
    %p224 = pneg %p218
    %p225 = scmp.eq.s32.totalorder %s15, 1
    %p226 = por %p224, %p225
    %p227 = scmp.ne.s32.totalorder %s219, %s222
    %p228 = scmp.eq.s32.totalorder %s15, 0
    %p229 = por %p227, %p228
    %p230 = scmp.ne.s32.totalorder %s219, %s222
    %p231 = scmp.eq.s32.totalorder %s20, 1
    %p232 = por %p230, %p231
    %p233 = scmp.ne.s32.totalorder %s222, %s223
    %p234 = scmp.eq.s32.totalorder %s20, 0
    %p235 = por %p233, %p234
    %p236 = scmp.ne.s32.totalorder %s222, %s223
    %p237 = scmp.eq.s32.totalorder %s21, 1
    %p238 = por %p236, %p237
    %p240 = scmp.ne.s32.totalorder %s223, %s239
    %p241 = scmp.eq.s32.totalorder %s21, 0
    %p242 = por %p240, %p241
    %p243 = scmp.le.s32.totalorder 1, %s15
    %p244 = scmp.lt.s32.totalorder %s15, 3
    %p245 = pnand %p243, %p244
    %p246 = pneg %p245
    // Predicated region
    $region9: #{_lambda_.30} parent=5 // pred_check
      _
    $region10: #{_lambda_.30} parent=5 // pred_check_branch
      %248 = sbr.rel (%p245) target = $region12
    $region11: #{_lambda_.30} parent=5 // pred_region
      %s249 = ssub.s32 %s15, 1
      // Predicated region
      $region13: #{_lambda_.30} parent=11 // pred_check
        %p250 = pneg %p62
      $region14: #{_lambda_.30} parent=11 // pred_check_branch
        %252 = sbr.rel (%p250) target = $region16
      $region15: #{_lambda_.30} parent=11 // pred_region
        _
      $region16: #{_lambda_.30} parent=11 // pred_fallthru
        _
      // Predicated region
      $region17: #{_lambda_.30} parent=11 // pred_check
        %p253 = pneg %p83
      $region18: #{_lambda_.30} parent=11 // pred_check_branch
        %255 = sbr.rel (%p253) target = $region20
      $region19: #{_lambda_.30} parent=11 // pred_region
        _
      $region20: #{_lambda_.30} parent=11 // pred_fallthru
        _
      // Predicated region
      $region21: #{_lambda_.30} parent=11 // pred_check
        %p256 = pneg %p104
      $region22: #{_lambda_.30} parent=11 // pred_check_branch
        %258 = sbr.rel (%p256) target = $region24
      $region23: #{_lambda_.30} parent=11 // pred_region
        _
      $region24: #{_lambda_.30} parent=11 // pred_fallthru
        _
      // Predicated region
      $region25: #{_lambda_.30} parent=11 // pred_check
        %p259 = pneg %p125
      $region26: #{_lambda_.30} parent=11 // pred_check_branch
        %261 = sbr.rel (%p259) target = $region28
      $region27: #{_lambda_.30} parent=11 // pred_region
        _
      $region28: #{_lambda_.30} parent=11 // pred_fallthru
        _
      // Predicated region
      $region29: #{_lambda_.30} parent=11 // pred_check
        %p262 = pneg %p146
      $region30: #{_lambda_.30} parent=11 // pred_check_branch
        %264 = sbr.rel (%p262) target = $region32
      $region31: #{_lambda_.30} parent=11 // pred_region
        _
      $region32: #{_lambda_.30} parent=11 // pred_fallthru
        _
      // Predicated region
      $region33: #{_lambda_.30} parent=11 // pred_check
        %p265 = pneg %p167
      $region34: #{_lambda_.30} parent=11 // pred_check_branch
        %267 = sbr.rel (%p265) target = $region36
      $region35: #{_lambda_.30} parent=11 // pred_region
        _
      $region36: #{_lambda_.30} parent=11 // pred_fallthru
        _
      // Predicated region
      $region37: #{_lambda_.30} parent=11 // pred_check
        %p268 = pneg %p188
      $region38: #{_lambda_.30} parent=11 // pred_check_branch
        %270 = sbr.rel (%p268) target = $region40
      $region39: #{_lambda_.30} parent=11 // pred_region
        _
      $region40: #{_lambda_.30} parent=11 // pred_fallthru
        _
      // Predicated region
      $region41: #{_lambda_.30} parent=11 // pred_check
        %p271 = pneg %p209
      $region42: #{_lambda_.30} parent=11 // pred_check_branch
        %273 = sbr.rel (%p271) target = $region44
      $region43: #{_lambda_.30} parent=11 // pred_region
        _
      $region44: #{_lambda_.30} parent=11 // pred_fallthru
        _
    $region12: #{_lambda_.30} parent=5 // pred_fallthru
      _
    %p274 = scmp.lt.s32.totalorder %s15, 2
    // Predicated region
    $region45: #{_lambda_.30} parent=5 // pred_check
      %p275 = pneg %p274
    $region46: #{_lambda_.30} parent=5 // pred_check_branch
      %277 = sbr.rel (%p275) target = $region48
    $region47: #{_lambda_.30} parent=5 // pred_region
      // Predicated region
      $region49: #{_lambda_.30} parent=47 // pred_check
        %p278 = pneg %p35
      $region50: #{_lambda_.30} parent=47 // pred_check_branch
        %280 = sbr.rel (%p278) target = $region52
      $region51: #{_lambda_.30} parent=47 // pred_region
        %p281 = scmp.lt.s32.totalorder %s15, 1
        %s282 = scalar_select %p281, %s15, 1
        %s283 = smul.addr %s282, 4
        %s284 = scalar_lea.vmem %s0, %s283
      $region52: #{_lambda_.30} parent=47 // pred_fallthru
        _
    $region48: #{_lambda_.30} parent=5 // pred_fallthru
      _
    %p285 = scmp.le.s32.totalorder 1, %s15
    %p286 = scmp.lt.s32.totalorder %s15, 3
    %p287 = pnand %p285, %p286
    %p288 = pneg %p287
    // Predicated region
    $region53: #{_lambda_.30} parent=5 // pred_check
      _
    $region54: #{_lambda_.30} parent=5 // pred_check_branch
      %290 = sbr.rel (%p287) target = $region56
    $region55: #{_lambda_.30} parent=5 // pred_region
      %s291 = ssub.s32 %s15, 1
      %p292 = scmp.lt.s32.totalorder %s20, 1
      %s293 = scalar_select %p292, %s20, 1
      %s294 = smul.addr %s293, 4
      %s295 = scalar_lea.vmem %s0, %s294
      %p296 = pneg %p41
      %p297 = pneg %p38
      %p298 = pneg %p62
      %p299 = pneg %p59
      %p300 = pneg %p83
      %p301 = pneg %p80
      %p302 = pneg %p104
      %p303 = pneg %p101
      %p304 = pneg %p125
      %p305 = pneg %p122
      %p306 = pneg %p146
      %p307 = pneg %p143
      %p308 = pneg %p167
      %p309 = pneg %p164
      %p310 = pneg %p188
      %p311 = pneg %p185
      %p312 = pneg %p209
      %p313 = pneg %p206
      %p314 = pneg %p235
      %p315 = pneg %p232
      %p316 = scmp.lt.s32.totalorder %s20, 1
      %s317 = scalar_select %p316, %s20, 1
      %s318 = smul.addr %s317, 4
      %s319 = scalar_lea.vmem %s9, %s318
      %p320 = scmp.lt.s32.totalorder %s20, 1
      %s321 = scalar_select %p320, %s20, 1
      %s322 = smul.addr %s321, 4
      %s323 = scalar_lea.vmem %s0, %s322
      %p324 = scmp.lt.s32.totalorder %s20, 1
      %s325 = scalar_select %p324, %s20, 1
      %s326 = smul.addr %s325, 4
      %s327 = scalar_lea.vmem %s9, %s326
      %v329 = vld [vmem:[%s323] sm:$0xf]
      %v330 = vld [vmem:[%s1] sm:$0x1]
      %v331 = vld [vmem:[%s2] sm:$0x1]
      %vm332 = vcmask 519168
      %v333 = vsel %vm332, %v329, 0.0
      %334 = vadd.xlane.f32.xlu0 %v333
      %v335 = vpop.xlane.xlu0 %334
      %v336 = vrcp.pop 64.0
      %v337 = vmul.f32 %v335, %v336
      %v338 = vsub.f32 %v329, %v337
      %v339 = vmul.f32 %v338, %v338
      %v340 = vsel %vm332, %v339, 0.0
      %341 = vadd.xlane.f32.xlu0 %v340
      %v342 = vpop.xlane.xlu0 %341
      %v343 = vmul.f32 %v342, %v336
      %v344 = vadd.f32 %v343, 1e-05
      %v345 = vrsqrt.pop %v344
      %v346 = vmul.f32 %v338, %v345
      %v348 = vlaneseq
      %v349 = vshrl.u32 %v348, 7
      %v350 = vsub.s32 0, %v349
      %v351 = vrot.slane %v330, %v350
      %v353 = vmul.f32 %v346, %v351
      %v355 = vlaneseq
      %v356 = vshrl.u32 %v355, 7
      %v357 = vsub.s32 0, %v356
      %v358 = vrot.slane %v331, %v357
      %v360 = vadd.f32 %v353, %v358
      %v361 = vpack.c.bf16 %v360, %v360
      %v362 = vld [vmem:[%s3] sm:$0xff]
      %v363 = vld [vmem:[%s3 + $0x8] sm:$0xff]
      %v364 = vld [vmem:[%s3 + $0x10] sm:$0xff]
      %v365 = vld [vmem:[%s3 + $0x18] sm:$0xff]
      %v366 = vld [vmem:[%s3 + $0x20] sm:$0xff]
      %v367 = vld [vmem:[%s3 + $0x28] sm:$0xff]
      %v368 = vld [vmem:[%s3 + $0x30] sm:$0xff]
      %v369 = vld [vmem:[%s3 + $0x38] sm:$0xff]
      %v370 = vld [vmem:[%s4] sm:$0x3]
      %v372 = vlaneseq
      %v373 = vshrl.u32 %v372, 7
      %v374 = vsub.s32 0, %v373
      %v375 = vrot.slane %v370, %v374
      %v376 = vlaneseq
      %v377 = vshrl.u32 %v376, 7
      %v378 = vsub.s32 1, %v377
      %v379 = vrot.slane %v370, %v378
      %v390 = vunpack.c.l.b16 %v362
      %v391 = vunpack.c.h.b16 %v362
      %v392 = vunpack.c.l.b16 %v363
      %v393 = vunpack.c.h.b16 %v363
      %v394 = vunpack.c.l.b16 %v364
      %v395 = vunpack.c.h.b16 %v364
      %v396 = vunpack.c.l.b16 %v365
      %v397 = vunpack.c.h.b16 %v365
      %v398 = vunpack.c.l.b16 %v366
      %v399 = vunpack.c.h.b16 %v366
      %v400 = vunpack.c.l.b16 %v367
      %v401 = vunpack.c.h.b16 %v367
      %v402 = vunpack.c.l.b16 %v368
      %v403 = vunpack.c.h.b16 %v368
      %v404 = vunpack.c.l.b16 %v369
      %v405 = vunpack.c.h.b16 %v369
      %v406 = vpack.c.b16 %v392, %v390
      %v407 = vpack.c.b16 %v393, %v391
      %v408 = vpack.c.b16 %v396, %v394
      %v409 = vpack.c.b16 %v397, %v395
      %v410 = vpack.c.b16 %v400, %v398
      %v411 = vpack.c.b16 %v401, %v399
      %v412 = vpack.c.b16 %v404, %v402
      %v413 = vpack.c.b16 %v405, %v403
      %vm422 = vcmask 523264
      %v424 = vsel %vm422, %v361, 0
      %426 = vmatprep.subr.bf16.mxu0 0
      %427 = vmatpush1.bf16.msra.mxu0 0
      %428 = vmatprep.subr.bf16.mxu0 0
      %429 = vmatpush1.bf16.msra.mxu0 0
      %430 = vmatprep.subr.bf16.mxu0 0
      %431 = vmatpush1.bf16.msra.mxu0 0
      %432 = vmatprep.subr.bf16.mxu0 0
      %433 = vmatpush1.bf16.msra.mxu0 0
      %434 = vmatprep.subr.bf16.mxu0 %v413
      %435 = vmatpush1.bf16.msra.mxu0 %v412
      %436 = vmatprep.subr.bf16.mxu0 %v411
      %437 = vmatpush1.bf16.msra.mxu0 %v410
      %438 = vmatprep.subr.bf16.mxu0 %v409
      %439 = vmatpush1.bf16.msra.mxu0 %v408
      %440 = vmatprep.subr.bf16.mxu0 %v407
      %441 = vmatpush1.bf16.msra.mxu0 %v406
      %442 = vmatprep.subr.bf16.mxu0 0
      %443 = vmatpush2.bf16.msra.mxu0 0
      %444 = vmatprep.subr.bf16.mxu0 0
      %445 = vmatpush2.bf16.msra.mxu0 0
      %446 = vmatprep.subr.bf16.mxu0 0
      %447 = vmatpush2.bf16.msra.mxu0 0
      %448 = vmatprep.subr.bf16.mxu0 0
      %449 = vmatpush2.bf16.msra.mxu0 0
      %450 = vmatprep.subr.bf16.mxu0 0
      %451 = vmatpush2.bf16.msra.mxu0 0
      %452 = vmatprep.subr.bf16.mxu0 0
      %453 = vmatpush2.bf16.msra.mxu0 0
      %454 = vmatprep.subr.bf16.mxu0 0
      %455 = vmatpush2.bf16.msra.mxu0 0
      %456 = vmatprep.subr.bf16.mxu0 0
      %457 = vmatpush2.bf16.msra.mxu0 0
      %458 = vmatprep.mubr.bf16.mxu0 0
      %459 = vmatmul.mubr.bf16.gmra.mxu0 %v424
      %v460 = vpop.f32.mrf.mxu0
      %v461 = vadd.f32 %v375, %v460
      %v462 = vpop.f32.mrf.mxu0
      %v463 = vadd.f32 %v379, %v462
      %v464 = vpop.f32.mrf.mxu0
      %v465 = vpop.f32.mrf.mxu0
      %466 = vdwg.mxu0
      %v467 = vld [vmem:[%s8] sm:$0xf]
      %v468 = vmul.f32 %v461, 0.25
      %v469 = vpack.c.bf16 %v468, %v468
      %v470 = vpack.c.bf16 %v461, %v461
      %v471 = vld [vmem:[%s7] sm:$0xf]
      %473 = vrot.lane.b32.xlu0 %v470, 64
      %v474 = vpop.permute.xlu0 %473
      %vm475 = vcmask 130048
      %v477 = vsel %vm475, %v469, 0
      %v480 = vsel %vm475, %v474, 0
      %482 = vmatprep.subr.bf16.mxu0 0
      %483 = vmatpush1.bf16.xpose.msra.mxu0 0
      %484 = vmatprep.subr.bf16.mxu0 0
      %485 = vmatpush1.bf16.xpose.msra.mxu0 0
      %486 = vmatprep.subr.bf16.mxu0 0
      %487 = vmatpush1.bf16.xpose.msra.mxu0 0
      %488 = vmatprep.subr.bf16.mxu0 0
      %489 = vmatpush1.bf16.xpose.msra.mxu0 0
      %490 = vmatprep.subr.bf16.mxu0 0
      %491 = vmatpush1.bf16.xpose.msra.mxu0 0
      %492 = vmatprep.subr.bf16.mxu0 0
      %493 = vmatpush1.bf16.xpose.msra.mxu0 0
      %494 = vmatprep.subr.bf16.mxu0 0
      %495 = vmatpush1.bf16.xpose.msra.mxu0 0
      %496 = vmatprep.subr.bf16.mxu0 0
      %497 = vmatpush1.bf16.xpose.msra.mxu0 %v480
      %498 = vmatprep.subr.bf16.mxu0 0
      %499 = vmatpush2.bf16.xpose.msra.mxu0 0
      %500 = vmatprep.subr.bf16.mxu0 0
      %501 = vmatpush2.bf16.xpose.msra.mxu0 0
      %502 = vmatprep.subr.bf16.mxu0 0
      %503 = vmatpush2.bf16.xpose.msra.mxu0 0
      %504 = vmatprep.subr.bf16.mxu0 0
      %505 = vmatpush2.bf16.xpose.msra.mxu0 0
      %506 = vmatprep.subr.bf16.mxu0 0
      %507 = vmatpush2.bf16.xpose.msra.mxu0 0
      %508 = vmatprep.subr.bf16.mxu0 0
      %509 = vmatpush2.bf16.xpose.msra.mxu0 0
      %510 = vmatprep.subr.bf16.mxu0 0
      %511 = vmatpush2.bf16.xpose.msra.mxu0 0
      %512 = vmatprep.subr.bf16.mxu0 0
      %513 = vmatpush2.bf16.xpose.msra.mxu0 0
      %514 = vmatprep.mubr.bf16.mxu0 0
      %515 = vmatmul.mubr.bf16.gmra.mxu0 %v477
      %v516 = vpop.f32.mrf.mxu0
      %v517 = vadd.f32 %v471, %v516
      %v518 = vpop.f32.mrf.mxu0
      %v519 = vpop.f32.mrf.mxu0
      %v520 = vpop.f32.mrf.mxu0
      %521 = vdwg.mxu0
      %v522 = vadd.f32 %v517, %v467
      %vm523 = vcmask 27648
      %v524 = vsel %vm523, %v522, -inf
      %525 = vmax.xlane.f32.xlu0 %v524
      %v526 = vpop.xlane.xlu0 %525
      %v527 = vsub.f32 %v522, %v526
      %v528 = vmul.f32 %v527, 1.442695
      %v529 = vpow.pop %v528
      %v530 = vsel %vm523, %v529, 0.0
      %531 = vadd.xlane.f32.xlu0 %v530
      %v532 = vpop.xlane.xlu0 %531
      %v533 = vrcp.pop %v532
      %v534 = vmul.f32 %v529, %v533
      %v535 = vpack.c.bf16 %v534, %v534
      %v536 = vpack.c.bf16 %v463, %v463
      %vm537 = vcmask 31744
      %v539 = vsel %vm537, %v535, 0
      %vm541 = vcmask 1041408
      %v543 = vsel %vm541, %v536, 0
      %545 = vmatprep.subr.bf16.mxu0 0
      %546 = vmatpush1.bf16.msra.mxu0 0
      %547 = vmatprep.subr.bf16.mxu0 0
      %548 = vmatpush1.bf16.msra.mxu0 0
      %549 = vmatprep.subr.bf16.mxu0 0
      %550 = vmatpush1.bf16.msra.mxu0 0
      %551 = vmatprep.subr.bf16.mxu0 0
      %552 = vmatpush1.bf16.msra.mxu0 0
      %553 = vmatprep.subr.bf16.mxu0 0
      %554 = vmatpush1.bf16.msra.mxu0 0
      %555 = vmatprep.subr.bf16.mxu0 0
      %556 = vmatpush1.bf16.msra.mxu0 0
      %557 = vmatprep.subr.bf16.mxu0 0
      %558 = vmatpush1.bf16.msra.mxu0 0
      %559 = vmatprep.subr.bf16.mxu0 0
      %560 = vmatpush1.bf16.msra.mxu0 %v543
      %561 = vmatprep.subr.bf16.mxu0 0
      %562 = vmatpush2.bf16.msra.mxu0 0
      %563 = vmatprep.subr.bf16.mxu0 0
      %564 = vmatpush2.bf16.msra.mxu0 0
      %565 = vmatprep.subr.bf16.mxu0 0
      %566 = vmatpush2.bf16.msra.mxu0 0
      %567 = vmatprep.subr.bf16.mxu0 0
      %568 = vmatpush2.bf16.msra.mxu0 0
      %569 = vmatprep.subr.bf16.mxu0 0
      %570 = vmatpush2.bf16.msra.mxu0 0
      %571 = vmatprep.subr.bf16.mxu0 0
      %572 = vmatpush2.bf16.msra.mxu0 0
      %573 = vmatprep.subr.bf16.mxu0 0
      %574 = vmatpush2.bf16.msra.mxu0 0
      %575 = vmatprep.subr.bf16.mxu0 0
      %576 = vmatpush2.bf16.msra.mxu0 0
      %577 = vmatprep.mubr.bf16.mxu0 0
      %578 = vmatmul.mubr.bf16.gmra.mxu0 %v539
      %v579 = vpop.f32.mrf.mxu0
      %v580 = vadd.f32 0.0, %v579
      %v581 = vpop.f32.mrf.mxu0
      %v582 = vpop.f32.mrf.mxu0
      %v583 = vpop.f32.mrf.mxu0
      %584 = vdwg.mxu0
      %v585 = vld [vmem:[%s5] sm:$0xf]
      %v586 = vld [vmem:[%s5 + $0x4] sm:$0xf]
      %v587 = vpack.c.bf16 %v580, %v580
      %s588 = scalar_lea.vmem %s7, 4
      %v589 = vld [vmem:[%s588] sm:$0xf]
      %591 = vrot.lane.b32.xlu0 %v469, 112
      %v592 = vpop.permute.xlu0 %591
      %593 = vrot.lane.b32.xlu0 %v470, 48
      %v594 = vpop.permute.xlu0 %593
      %v596 = vsel %vm475, %v592, 0
      %v599 = vsel %vm475, %v594, 0
      %601 = vmatprep.subr.bf16.mxu0 0
      %602 = vmatpush1.bf16.xpose.msra.mxu0 0
      %603 = vmatprep.subr.bf16.mxu0 0
      %604 = vmatpush1.bf16.xpose.msra.mxu0 0
      %605 = vmatprep.subr.bf16.mxu0 0
      %606 = vmatpush1.bf16.xpose.msra.mxu0 0
      %607 = vmatprep.subr.bf16.mxu0 0
      %608 = vmatpush1.bf16.xpose.msra.mxu0 0
      %609 = vmatprep.subr.bf16.mxu0 0
      %610 = vmatpush1.bf16.xpose.msra.mxu0 0
      %611 = vmatprep.subr.bf16.mxu0 0
      %612 = vmatpush1.bf16.xpose.msra.mxu0 0
      %613 = vmatprep.subr.bf16.mxu0 0
      %614 = vmatpush1.bf16.xpose.msra.mxu0 0
      %615 = vmatprep.subr.bf16.mxu0 0
      %616 = vmatpush1.bf16.xpose.msra.mxu0 %v599
      %617 = vmatprep.subr.bf16.mxu0 0
      %618 = vmatpush2.bf16.xpose.msra.mxu0 0
      %619 = vmatprep.subr.bf16.mxu0 0
      %620 = vmatpush2.bf16.xpose.msra.mxu0 0
      %621 = vmatprep.subr.bf16.mxu0 0
      %622 = vmatpush2.bf16.xpose.msra.mxu0 0
      %623 = vmatprep.subr.bf16.mxu0 0
      %624 = vmatpush2.bf16.xpose.msra.mxu0 0
      %625 = vmatprep.subr.bf16.mxu0 0
      %626 = vmatpush2.bf16.xpose.msra.mxu0 0
      %627 = vmatprep.subr.bf16.mxu0 0
      %628 = vmatpush2.bf16.xpose.msra.mxu0 0
      %629 = vmatprep.subr.bf16.mxu0 0
      %630 = vmatpush2.bf16.xpose.msra.mxu0 0
      %631 = vmatprep.subr.bf16.mxu0 0
      %632 = vmatpush2.bf16.xpose.msra.mxu0 0
      %633 = vmatprep.mubr.bf16.mxu0 0
      %634 = vmatmul.mubr.bf16.gmra.mxu0 %v596
      %v635 = vpop.f32.mrf.mxu0
      %v636 = vadd.f32 %v589, %v635
      %v637 = vpop.f32.mrf.mxu0
      %v638 = vpop.f32.mrf.mxu0
      %v639 = vpop.f32.mrf.mxu0
      %640 = vdwg.mxu0
      %v641 = vadd.f32 %v636, %v467
      %v642 = vsel %vm523, %v641, -inf
      %643 = vmax.xlane.f32.xlu0 %v642
      %v644 = vpop.xlane.xlu0 %643
      %v645 = vsub.f32 %v641, %v644
      %v646 = vmul.f32 %v645, 1.442695
      %v647 = vpow.pop %v646
      %v648 = vsel %vm523, %v647, 0.0
      %649 = vadd.xlane.f32.xlu0 %v648
      %v650 = vpop.xlane.xlu0 %649
      %v651 = vrcp.pop %v650
      %v652 = vmul.f32 %v647, %v651
      %v653 = vpack.c.bf16 %v652, %v652
      %655 = vrot.lane.b32.xlu0 %v536, 112
      %v656 = vpop.permute.xlu0 %655
      %v658 = vsel %vm537, %v653, 0
      %v661 = vsel %vm541, %v656, 0
      %663 = vmatprep.subr.bf16.mxu0 0
      %664 = vmatpush1.bf16.msra.mxu0 0
      %665 = vmatprep.subr.bf16.mxu0 0
      %666 = vmatpush1.bf16.msra.mxu0 0
      %667 = vmatprep.subr.bf16.mxu0 0
      %668 = vmatpush1.bf16.msra.mxu0 0
      %669 = vmatprep.subr.bf16.mxu0 0
      %670 = vmatpush1.bf16.msra.mxu0 0
      %671 = vmatprep.subr.bf16.mxu0 0
      %672 = vmatpush1.bf16.msra.mxu0 0
      %673 = vmatprep.subr.bf16.mxu0 0
      %674 = vmatpush1.bf16.msra.mxu0 0
      %675 = vmatprep.subr.bf16.mxu0 0
      %676 = vmatpush1.bf16.msra.mxu0 0
      %677 = vmatprep.subr.bf16.mxu0 0
      %678 = vmatpush1.bf16.msra.mxu0 %v661
      %679 = vmatprep.subr.bf16.mxu0 0
      %680 = vmatpush2.bf16.msra.mxu0 0
      %681 = vmatprep.subr.bf16.mxu0 0
      %682 = vmatpush2.bf16.msra.mxu0 0
      %683 = vmatprep.subr.bf16.mxu0 0
      %684 = vmatpush2.bf16.msra.mxu0 0
      %685 = vmatprep.subr.bf16.mxu0 0
      %686 = vmatpush2.bf16.msra.mxu0 0
      %687 = vmatprep.subr.bf16.mxu0 0
      %688 = vmatpush2.bf16.msra.mxu0 0
      %689 = vmatprep.subr.bf16.mxu0 0
      %690 = vmatpush2.bf16.msra.mxu0 0
      %691 = vmatprep.subr.bf16.mxu0 0
      %692 = vmatpush2.bf16.msra.mxu0 0
      %693 = vmatprep.subr.bf16.mxu0 0
      %694 = vmatpush2.bf16.msra.mxu0 0
      %695 = vmatprep.mubr.bf16.mxu0 0
      %696 = vmatmul.mubr.bf16.gmra.mxu0 %v658
      %v697 = vpop.f32.mrf.mxu0
      %v698 = vadd.f32 0.0, %v697
      %v699 = vpop.f32.mrf.mxu0
      %v700 = vpop.f32.mrf.mxu0
      %v701 = vpop.f32.mrf.mxu0
      %702 = vdwg.mxu0
      %v703 = vld [vmem:[%s5 + $0x8] sm:$0xf]
      %v704 = vld [vmem:[%s5 + $0xc] sm:$0xf]
      %v705 = vpack.c.bf16 %v698, %v698
      %v708 = vunpack.c.l.b16 %v703
      %v709 = vunpack.c.l.b16 %v704
      %v710 = vpack.c.b16 %v709, %v708
      %v713 = vsel %vm475, %v705, 0
      %715 = vmatprep.subr.bf16.mxu0 0
      %716 = vmatpush1.bf16.msra.mxu0 0
      %717 = vmatprep.subr.bf16.mxu0 0
      %718 = vmatpush1.bf16.msra.mxu0 0
      %719 = vmatprep.subr.bf16.mxu0 0
      %720 = vmatpush1.bf16.msra.mxu0 0
      %721 = vmatprep.subr.bf16.mxu0 0
      %722 = vmatpush1.bf16.msra.mxu0 0
      %723 = vmatprep.subr.bf16.mxu0 0
      %724 = vmatpush1.bf16.msra.mxu0 0
      %725 = vmatprep.subr.bf16.mxu0 0
      %726 = vmatpush1.bf16.msra.mxu0 0
      %727 = vmatprep.subr.bf16.mxu0 0
      %728 = vmatpush1.bf16.msra.mxu0 0
      %729 = vmatprep.subr.bf16.mxu0 0
      %730 = vmatpush1.bf16.msra.mxu0 %v710
      %731 = vmatprep.subr.bf16.mxu0 0
      %732 = vmatpush2.bf16.msra.mxu0 0
      %733 = vmatprep.subr.bf16.mxu0 0
      %734 = vmatpush2.bf16.msra.mxu0 0
      %735 = vmatprep.subr.bf16.mxu0 0
      %736 = vmatpush2.bf16.msra.mxu0 0
      %737 = vmatprep.subr.bf16.mxu0 0
      %738 = vmatpush2.bf16.msra.mxu0 0
      %739 = vmatprep.subr.bf16.mxu0 0
      %740 = vmatpush2.bf16.msra.mxu0 0
      %741 = vmatprep.subr.bf16.mxu0 0
      %742 = vmatpush2.bf16.msra.mxu0 0
      %743 = vmatprep.subr.bf16.mxu0 0
      %744 = vmatpush2.bf16.msra.mxu0 0
      %745 = vmatprep.subr.bf16.mxu0 0
      %746 = vmatpush2.bf16.msra.mxu0 0
      %747 = vmatprep.mubr.bf16.mxu0 0
      %748 = vmatmul.mubr.bf16.gmra.mxu0 %v713
      %v749 = vpop.f32.mrf.mxu0
      %v750 = vadd.f32 0.0, %v749
      %v751 = vpop.f32.mrf.mxu0
      %v752 = vpop.f32.mrf.mxu0
      %v753 = vpop.f32.mrf.mxu0
      %754 = vdwg.mxu0
      %v757 = vunpack.c.l.b16 %v585
      %v758 = vunpack.c.l.b16 %v586
      %v759 = vpack.c.b16 %v758, %v757
      %v762 = vsel %vm475, %v587, 0
      %764 = vmatprep.subr.bf16.mxu0 0
      %765 = vmatpush1.bf16.msra.mxu0 0
      %766 = vmatprep.subr.bf16.mxu0 0
      %767 = vmatpush1.bf16.msra.mxu0 0
      %768 = vmatprep.subr.bf16.mxu0 0
      %769 = vmatpush1.bf16.msra.mxu0 0
      %770 = vmatprep.subr.bf16.mxu0 0
      %771 = vmatpush1.bf16.msra.mxu0 0
      %772 = vmatprep.subr.bf16.mxu0 0
      %773 = vmatpush1.bf16.msra.mxu0 0
      %774 = vmatprep.subr.bf16.mxu0 0
      %775 = vmatpush1.bf16.msra.mxu0 0
      %776 = vmatprep.subr.bf16.mxu0 0
      %777 = vmatpush1.bf16.msra.mxu0 0
      %778 = vmatprep.subr.bf16.mxu0 0
      %779 = vmatpush1.bf16.msra.mxu0 %v759
      %780 = vmatprep.subr.bf16.mxu0 0
      %781 = vmatpush2.bf16.msra.mxu0 0
      %782 = vmatprep.subr.bf16.mxu0 0
      %783 = vmatpush2.bf16.msra.mxu0 0
      %784 = vmatprep.subr.bf16.mxu0 0
      %785 = vmatpush2.bf16.msra.mxu0 0
      %786 = vmatprep.subr.bf16.mxu0 0
      %787 = vmatpush2.bf16.msra.mxu0 0
      %788 = vmatprep.subr.bf16.mxu0 0
      %789 = vmatpush2.bf16.msra.mxu0 0
      %790 = vmatprep.subr.bf16.mxu0 0
      %791 = vmatpush2.bf16.msra.mxu0 0
      %792 = vmatprep.subr.bf16.mxu0 0
      %793 = vmatpush2.bf16.msra.mxu0 0
      %794 = vmatprep.subr.bf16.mxu0 0
      %795 = vmatpush2.bf16.msra.mxu0 0
      %796 = vmatprep.mubr.bf16.mxu0 0
      %797 = vmatmul.mubr.bf16.gmra.mxu0 %v762
      %v798 = vpop.f32.mrf.mxu0
      %v799 = vadd.f32 %v750, %v798
      %v800 = vpop.f32.mrf.mxu0
      %v801 = vpop.f32.mrf.mxu0
      %v802 = vpop.f32.mrf.mxu0
      %803 = vdwg.mxu0
      %s804 = scalar_lea.vmem %s7, 8
      %v805 = vld [vmem:[%s804] sm:$0xf]
      %806 = vrot.lane.b32.xlu0 %v469, 96
      %v807 = vpop.permute.xlu0 %806
      %808 = vrot.lane.b32.xlu0 %v470, 32
      %v809 = vpop.permute.xlu0 %808
      %v811 = vsel %vm475, %v807, 0
      %v814 = vsel %vm475, %v809, 0
      %816 = vmatprep.subr.bf16.mxu0 0
      %817 = vmatpush1.bf16.xpose.msra.mxu0 0
      %818 = vmatprep.subr.bf16.mxu0 0
      %819 = vmatpush1.bf16.xpose.msra.mxu0 0
      %820 = vmatprep.subr.bf16.mxu0 0
      %821 = vmatpush1.bf16.xpose.msra.mxu0 0
      %822 = vmatprep.subr.bf16.mxu0 0
      %823 = vmatpush1.bf16.xpose.msra.mxu0 0
      %824 = vmatprep.subr.bf16.mxu0 0
      %825 = vmatpush1.bf16.xpose.msra.mxu0 0
      %826 = vmatprep.subr.bf16.mxu0 0
      %827 = vmatpush1.bf16.xpose.msra.mxu0 0
      %828 = vmatprep.subr.bf16.mxu0 0
      %829 = vmatpush1.bf16.xpose.msra.mxu0 0
      %830 = vmatprep.subr.bf16.mxu0 0
      %831 = vmatpush1.bf16.xpose.msra.mxu0 %v814
      %832 = vmatprep.subr.bf16.mxu0 0
      %833 = vmatpush2.bf16.xpose.msra.mxu0 0
      %834 = vmatprep.subr.bf16.mxu0 0
      %835 = vmatpush2.bf16.xpose.msra.mxu0 0
      %836 = vmatprep.subr.bf16.mxu0 0
      %837 = vmatpush2.bf16.xpose.msra.mxu0 0
      %838 = vmatprep.subr.bf16.mxu0 0
      %839 = vmatpush2.bf16.xpose.msra.mxu0 0
      %840 = vmatprep.subr.bf16.mxu0 0
      %841 = vmatpush2.bf16.xpose.msra.mxu0 0
      %842 = vmatprep.subr.bf16.mxu0 0
      %843 = vmatpush2.bf16.xpose.msra.mxu0 0
      %844 = vmatprep.subr.bf16.mxu0 0
      %845 = vmatpush2.bf16.xpose.msra.mxu0 0
      %846 = vmatprep.subr.bf16.mxu0 0
      %847 = vmatpush2.bf16.xpose.msra.mxu0 0
      %848 = vmatprep.mubr.bf16.mxu0 0
      %849 = vmatmul.mubr.bf16.gmra.mxu0 %v811
      %v850 = vpop.f32.mrf.mxu0
      %v851 = vadd.f32 %v805, %v850
      %v852 = vpop.f32.mrf.mxu0
      %v853 = vpop.f32.mrf.mxu0
      %v854 = vpop.f32.mrf.mxu0
      %855 = vdwg.mxu0
      %v856 = vadd.f32 %v851, %v467
      %v857 = vsel %vm523, %v856, -inf
      %858 = vmax.xlane.f32.xlu0 %v857
      %v859 = vpop.xlane.xlu0 %858
      %v860 = vsub.f32 %v856, %v859
      %v861 = vmul.f32 %v860, 1.442695
      %v862 = vpow.pop %v861
      %v863 = vsel %vm523, %v862, 0.0
      %864 = vadd.xlane.f32.xlu0 %v863
      %v865 = vpop.xlane.xlu0 %864
      %v866 = vrcp.pop %v865
      %v867 = vmul.f32 %v862, %v866
      %v868 = vpack.c.bf16 %v867, %v867
      %869 = vrot.lane.b32.xlu0 %v536, 96
      %v870 = vpop.permute.xlu0 %869
      %v872 = vsel %vm537, %v868, 0
      %v875 = vsel %vm541, %v870, 0
      %877 = vmatprep.subr.bf16.mxu0 0
      %878 = vmatpush1.bf16.msra.mxu0 0
      %879 = vmatprep.subr.bf16.mxu0 0
      %880 = vmatpush1.bf16.msra.mxu0 0
      %881 = vmatprep.subr.bf16.mxu0 0
      %882 = vmatpush1.bf16.msra.mxu0 0
      %883 = vmatprep.subr.bf16.mxu0 0
      %884 = vmatpush1.bf16.msra.mxu0 0
      %885 = vmatprep.subr.bf16.mxu0 0
      %886 = vmatpush1.bf16.msra.mxu0 0
      %887 = vmatprep.subr.bf16.mxu0 0
      %888 = vmatpush1.bf16.msra.mxu0 0
      %889 = vmatprep.subr.bf16.mxu0 0
      %890 = vmatpush1.bf16.msra.mxu0 0
      %891 = vmatprep.subr.bf16.mxu0 0
      %892 = vmatpush1.bf16.msra.mxu0 %v875
      %893 = vmatprep.subr.bf16.mxu0 0
      %894 = vmatpush2.bf16.msra.mxu0 0
      %895 = vmatprep.subr.bf16.mxu0 0
      %896 = vmatpush2.bf16.msra.mxu0 0
      %897 = vmatprep.subr.bf16.mxu0 0
      %898 = vmatpush2.bf16.msra.mxu0 0
      %899 = vmatprep.subr.bf16.mxu0 0
      %900 = vmatpush2.bf16.msra.mxu0 0
      %901 = vmatprep.subr.bf16.mxu0 0
      %902 = vmatpush2.bf16.msra.mxu0 0
      %903 = vmatprep.subr.bf16.mxu0 0
      %904 = vmatpush2.bf16.msra.mxu0 0
      %905 = vmatprep.subr.bf16.mxu0 0
      %906 = vmatpush2.bf16.msra.mxu0 0
      %907 = vmatprep.subr.bf16.mxu0 0
      %908 = vmatpush2.bf16.msra.mxu0 0
      %909 = vmatprep.mubr.bf16.mxu0 0
      %910 = vmatmul.mubr.bf16.gmra.mxu0 %v872
      %v911 = vpop.f32.mrf.mxu0
      %v912 = vadd.f32 0.0, %v911
      %v913 = vpop.f32.mrf.mxu0
      %v914 = vpop.f32.mrf.mxu0
      %v915 = vpop.f32.mrf.mxu0
      %916 = vdwg.mxu0
      %v917 = vld [vmem:[%s5 + $0x10] sm:$0xf]
      %v918 = vld [vmem:[%s5 + $0x14] sm:$0xf]
      %v919 = vpack.c.bf16 %v912, %v912
      %v922 = vunpack.c.l.b16 %v917
      %v923 = vunpack.c.l.b16 %v918
      %v924 = vpack.c.b16 %v923, %v922
      %v927 = vsel %vm475, %v919, 0
      %929 = vmatprep.subr.bf16.mxu0 0
      %930 = vmatpush1.bf16.msra.mxu0 0
      %931 = vmatprep.subr.bf16.mxu0 0
      %932 = vmatpush1.bf16.msra.mxu0 0
      %933 = vmatprep.subr.bf16.mxu0 0
      %934 = vmatpush1.bf16.msra.mxu0 0
      %935 = vmatprep.subr.bf16.mxu0 0
      %936 = vmatpush1.bf16.msra.mxu0 0
      %937 = vmatprep.subr.bf16.mxu0 0
      %938 = vmatpush1.bf16.msra.mxu0 0
      %939 = vmatprep.subr.bf16.mxu0 0
      %940 = vmatpush1.bf16.msra.mxu0 0
      %941 = vmatprep.subr.bf16.mxu0 0
      %942 = vmatpush1.bf16.msra.mxu0 0
      %943 = vmatprep.subr.bf16.mxu0 0
      %944 = vmatpush1.bf16.msra.mxu0 %v924
      %945 = vmatprep.subr.bf16.mxu0 0
      %946 = vmatpush2.bf16.msra.mxu0 0
      %947 = vmatprep.subr.bf16.mxu0 0
      %948 = vmatpush2.bf16.msra.mxu0 0
      %949 = vmatprep.subr.bf16.mxu0 0
      %950 = vmatpush2.bf16.msra.mxu0 0
      %951 = vmatprep.subr.bf16.mxu0 0
      %952 = vmatpush2.bf16.msra.mxu0 0
      %953 = vmatprep.subr.bf16.mxu0 0
      %954 = vmatpush2.bf16.msra.mxu0 0
      %955 = vmatprep.subr.bf16.mxu0 0
      %956 = vmatpush2.bf16.msra.mxu0 0
      %957 = vmatprep.subr.bf16.mxu0 0
      %958 = vmatpush2.bf16.msra.mxu0 0
      %959 = vmatprep.subr.bf16.mxu0 0
      %960 = vmatpush2.bf16.msra.mxu0 0
      %961 = vmatprep.mubr.bf16.mxu0 0
      %962 = vmatmul.mubr.bf16.gmra.mxu0 %v927
      %v963 = vpop.f32.mrf.mxu0
      %v964 = vadd.f32 0.0, %v963
      %v965 = vpop.f32.mrf.mxu0
      %v966 = vpop.f32.mrf.mxu0
      %v967 = vpop.f32.mrf.mxu0
      %968 = vdwg.mxu0
      %v969 = vadd.f32 %v799, %v964
      %s970 = scalar_lea.vmem %s7, 12
      %v971 = vld [vmem:[%s970] sm:$0xf]
      %972 = vrot.lane.b32.xlu0 %v469, 80
      %v973 = vpop.permute.xlu0 %972
      %974 = vrot.lane.b32.xlu0 %v470, 16
      %v975 = vpop.permute.xlu0 %974
      %v977 = vsel %vm475, %v973, 0
      %v980 = vsel %vm475, %v975, 0
      %982 = vmatprep.subr.bf16.mxu0 0
      %983 = vmatpush1.bf16.xpose.msra.mxu0 0
      %984 = vmatprep.subr.bf16.mxu0 0
      %985 = vmatpush1.bf16.xpose.msra.mxu0 0
      %986 = vmatprep.subr.bf16.mxu0 0
      %987 = vmatpush1.bf16.xpose.msra.mxu0 0
      %988 = vmatprep.subr.bf16.mxu0 0
      %989 = vmatpush1.bf16.xpose.msra.mxu0 0
      %990 = vmatprep.subr.bf16.mxu0 0
      %991 = vmatpush1.bf16.xpose.msra.mxu0 0
      %992 = vmatprep.subr.bf16.mxu0 0
      %993 = vmatpush1.bf16.xpose.msra.mxu0 0
      %994 = vmatprep.subr.bf16.mxu0 0
      %995 = vmatpush1.bf16.xpose.msra.mxu0 0
      %996 = vmatprep.subr.bf16.mxu0 0
      %997 = vmatpush1.bf16.xpose.msra.mxu0 %v980
      %998 = vmatprep.subr.bf16.mxu0 0
      %999 = vmatpush2.bf16.xpose.msra.mxu0 0
      %1000 = vmatprep.subr.bf16.mxu0 0
      %1001 = vmatpush2.bf16.xpose.msra.mxu0 0
      %1002 = vmatprep.subr.bf16.mxu0 0
      %1003 = vmatpush2.bf16.xpose.msra.mxu0 0
      %1004 = vmatprep.subr.bf16.mxu0 0
      %1005 = vmatpush2.bf16.xpose.msra.mxu0 0
      %1006 = vmatprep.subr.bf16.mxu0 0
      %1007 = vmatpush2.bf16.xpose.msra.mxu0 0
      %1008 = vmatprep.subr.bf16.mxu0 0
      %1009 = vmatpush2.bf16.xpose.msra.mxu0 0
      %1010 = vmatprep.subr.bf16.mxu0 0
      %1011 = vmatpush2.bf16.xpose.msra.mxu0 0
      %1012 = vmatprep.subr.bf16.mxu0 0
      %1013 = vmatpush2.bf16.xpose.msra.mxu0 0
      %1014 = vmatprep.mubr.bf16.mxu0 0
      %1015 = vmatmul.mubr.bf16.gmra.mxu0 %v977
      %v1016 = vpop.f32.mrf.mxu0
      %v1017 = vadd.f32 %v971, %v1016
      %v1018 = vpop.f32.mrf.mxu0
      %v1019 = vpop.f32.mrf.mxu0
      %v1020 = vpop.f32.mrf.mxu0
      %1021 = vdwg.mxu0
      %v1022 = vadd.f32 %v1017, %v467
      %v1023 = vsel %vm523, %v1022, -inf
      %1024 = vmax.xlane.f32.xlu0 %v1023
      %v1025 = vpop.xlane.xlu0 %1024
      %v1026 = vsub.f32 %v1022, %v1025
      %v1027 = vmul.f32 %v1026, 1.442695
      %v1028 = vpow.pop %v1027
      %v1029 = vsel %vm523, %v1028, 0.0
      %1030 = vadd.xlane.f32.xlu0 %v1029
      %v1031 = vpop.xlane.xlu0 %1030
      %v1032 = vrcp.pop %v1031
      %v1033 = vmul.f32 %v1028, %v1032
      %v1034 = vpack.c.bf16 %v1033, %v1033
      %1035 = vrot.lane.b32.xlu0 %v536, 80
      %v1036 = vpop.permute.xlu0 %1035
      %v1038 = vsel %vm537, %v1034, 0
      %v1041 = vsel %vm541, %v1036, 0
      %1043 = vmatprep.subr.bf16.mxu0 0
      %1044 = vmatpush1.bf16.msra.mxu0 0
      %1045 = vmatprep.subr.bf16.mxu0 0
      %1046 = vmatpush1.bf16.msra.mxu0 0
      %1047 = vmatprep.subr.bf16.mxu0 0
      %1048 = vmatpush1.bf16.msra.mxu0 0
      %1049 = vmatprep.subr.bf16.mxu0 0
      %1050 = vmatpush1.bf16.msra.mxu0 0
      %1051 = vmatprep.subr.bf16.mxu0 0
      %1052 = vmatpush1.bf16.msra.mxu0 0
      %1053 = vmatprep.subr.bf16.mxu0 0
      %1054 = vmatpush1.bf16.msra.mxu0 0
      %1055 = vmatprep.subr.bf16.mxu0 0
      %1056 = vmatpush1.bf16.msra.mxu0 0
      %1057 = vmatprep.subr.bf16.mxu0 0
      %1058 = vmatpush1.bf16.msra.mxu0 %v1041
      %1059 = vmatprep.subr.bf16.mxu0 0
      %1060 = vmatpush2.bf16.msra.mxu0 0
      %1061 = vmatprep.subr.bf16.mxu0 0
      %1062 = vmatpush2.bf16.msra.mxu0 0
      %1063 = vmatprep.subr.bf16.mxu0 0
      %1064 = vmatpush2.bf16.msra.mxu0 0
      %1065 = vmatprep.subr.bf16.mxu0 0
      %1066 = vmatpush2.bf16.msra.mxu0 0
      %1067 = vmatprep.subr.bf16.mxu0 0
      %1068 = vmatpush2.bf16.msra.mxu0 0
      %1069 = vmatprep.subr.bf16.mxu0 0
      %1070 = vmatpush2.bf16.msra.mxu0 0
      %1071 = vmatprep.subr.bf16.mxu0 0
      %1072 = vmatpush2.bf16.msra.mxu0 0
      %1073 = vmatprep.subr.bf16.mxu0 0
      %1074 = vmatpush2.bf16.msra.mxu0 0
      %1075 = vmatprep.mubr.bf16.mxu0 0
      %1076 = vmatmul.mubr.bf16.gmra.mxu0 %v1038
      %v1077 = vpop.f32.mrf.mxu0
      %v1078 = vadd.f32 0.0, %v1077
      %v1079 = vpop.f32.mrf.mxu0
      %v1080 = vpop.f32.mrf.mxu0
      %v1081 = vpop.f32.mrf.mxu0
      %1082 = vdwg.mxu0
      %v1083 = vld [vmem:[%s5 + $0x18] sm:$0xf]
      %v1084 = vld [vmem:[%s5 + $0x1c] sm:$0xf]
      %v1085 = vpack.c.bf16 %v1078, %v1078
      %v1088 = vunpack.c.l.b16 %v1083
      %v1089 = vunpack.c.l.b16 %v1084
      %v1090 = vpack.c.b16 %v1089, %v1088
      %v1093 = vsel %vm475, %v1085, 0
      %1095 = vmatprep.subr.bf16.mxu0 0
      %1096 = vmatpush1.bf16.msra.mxu0 0
      %1097 = vmatprep.subr.bf16.mxu0 0
      %1098 = vmatpush1.bf16.msra.mxu0 0
      %1099 = vmatprep.subr.bf16.mxu0 0
      %1100 = vmatpush1.bf16.msra.mxu0 0
      %1101 = vmatprep.subr.bf16.mxu0 0
      %1102 = vmatpush1.bf16.msra.mxu0 0
      %1103 = vmatprep.subr.bf16.mxu0 0
      %1104 = vmatpush1.bf16.msra.mxu0 0
      %1105 = vmatprep.subr.bf16.mxu0 0
      %1106 = vmatpush1.bf16.msra.mxu0 0
      %1107 = vmatprep.subr.bf16.mxu0 0
      %1108 = vmatpush1.bf16.msra.mxu0 0
      %1109 = vmatprep.subr.bf16.mxu0 0
      %1110 = vmatpush1.bf16.msra.mxu0 %v1090
      %1111 = vmatprep.subr.bf16.mxu0 0
      %1112 = vmatpush2.bf16.msra.mxu0 0
      %1113 = vmatprep.subr.bf16.mxu0 0
      %1114 = vmatpush2.bf16.msra.mxu0 0
      %1115 = vmatprep.subr.bf16.mxu0 0
      %1116 = vmatpush2.bf16.msra.mxu0 0
      %1117 = vmatprep.subr.bf16.mxu0 0
      %1118 = vmatpush2.bf16.msra.mxu0 0
      %1119 = vmatprep.subr.bf16.mxu0 0
      %1120 = vmatpush2.bf16.msra.mxu0 0
      %1121 = vmatprep.subr.bf16.mxu0 0
      %1122 = vmatpush2.bf16.msra.mxu0 0
      %1123 = vmatprep.subr.bf16.mxu0 0
      %1124 = vmatpush2.bf16.msra.mxu0 0
      %1125 = vmatprep.subr.bf16.mxu0 0
      %1126 = vmatpush2.bf16.msra.mxu0 0
      %1127 = vmatprep.mubr.bf16.mxu0 0
      %1128 = vmatmul.mubr.bf16.gmra.mxu0 %v1093
      %v1129 = vpop.f32.mrf.mxu0
      %v1130 = vadd.f32 0.0, %v1129
      %v1131 = vpop.f32.mrf.mxu0
      %v1132 = vpop.f32.mrf.mxu0
      %v1133 = vpop.f32.mrf.mxu0
      %1134 = vdwg.mxu0
      %v1135 = vadd.f32 %v969, %v1130
      %v1136 = vld [vmem:[%s6] sm:$0x1]
      %v1138 = vlaneseq
      %v1139 = vshrl.u32 %v1138, 7
      %v1140 = vsub.s32 0, %v1139
      %v1141 = vrot.slane %v1136, %v1140
      %v1143 = vadd.f32 %v1135, %v1141
      %v1144 = vadd.f32 %v329, %v1143
      %1145 = vst.msk [vmem:[%s327] sm:$0xf] %vm332, %v1144
      %p1146 = scmp.lt.s32.totalorder %s20, 1
      %s1147 = scalar_select %p1146, %s20, 1
      %s1148 = smul.addr %s1147, 4
      %s1149 = scalar_lea.vmem %s9, %s1148
      // Predicated region
      $region57: #{_lambda_.30} parent=55 // pred_check
        %p1150 = pneg %p232
      $region58: #{_lambda_.30} parent=55 // pred_check_branch
        %1152 = sbr.rel (%p1150) target = $region60
      $region59: #{_lambda_.30} parent=55 // pred_region
        _
      $region60: #{_lambda_.30} parent=55 // pred_fallthru
        _
    $region56: #{_lambda_.30} parent=5 // pred_fallthru
      _
    %p1153 = scmp.le.s32.totalorder 2, %s15
    // Predicated region
    $region61: #{_lambda_.30} parent=5 // pred_check
      %p1154 = pneg %p1153
    $region62: #{_lambda_.30} parent=5 // pred_check_branch
      %1156 = sbr.rel (%p1154) target = $region64
    $region63: #{_lambda_.30} parent=5 // pred_region
      %s1157 = ssub.s32 %s15, 2
      // Predicated region
      $region65: #{_lambda_.30} parent=63 // pred_check
        %p1158 = pneg %p238
      $region66: #{_lambda_.30} parent=63 // pred_check_branch
        %1160 = sbr.rel (%p1158) target = $region68
      $region67: #{_lambda_.30} parent=63 // pred_region
        %p1161 = scmp.lt.s32.totalorder %s21, 1
        %s1162 = scalar_select %p1161, %s21, 1
        %s1163 = smul.addr %s1162, 4
        %s1164 = scalar_lea.vmem %s9, %s1163
      $region68: #{_lambda_.30} parent=63 // pred_fallthru
        _
    $region64: #{_lambda_.30} parent=5 // pred_fallthru
      _
  $region6: #{_lambda_.30} parent=0 // loop_footer
    %s19 = sadd.s32 1, %s15
  $region7: #{_lambda_.30} parent=0 // loop_footer_branch
    %14 = sbr.rel target = $region3
  $region8: #{_lambda_.30} parent=0 // loop_exit
    _

// kernel: _lambda_.41
$region0: #{_lambda_.41}
  #allocation0 [shape = 'u32[]', space=smem, size = 0x4, offset = 0x4, fixed_abs, tag = 'smem constant byte address 0x4 - core index']
  #allocation1 [shape = 'u32[144,128]{1,0:T(1,128)}', space=vmem, size = 0x12000, scoped, tag = 'internal scratch']
  %s0 = inlined_call_operand.vmem [shape: f32[32,32], index: 0, kind: input, shape index: {}]
  %s1 = inlined_call_operand.vmem [shape: f32[1,32], index: 1, kind: input, shape index: {}]
  %s2 = inlined_call_operand.vmem [shape: f32[1,32], index: 2, kind: input, shape index: {}]
  %s3 = inlined_call_operand.vmem [shape: bf16[32,512], index: 3, kind: input, shape index: {}]
  %s4 = inlined_call_operand.vmem [shape: f32[1,512], index: 4, kind: input, shape index: {}]
  %s5 = inlined_call_operand.vmem [shape: f32[32,512], index: 5, kind: output, shape index: {}]
  %s6 = sld [smem:[#allocation0]]
  $region110: #{_lambda_.41} parent=0
    _
  %s8 = ssub.s32 1, %s6
  %s9 = scalar_select 0, %s8, %s6
  $region1: #{_lambda_.41} parent=0
    #allocation2 [shape = 'u8[32768]{0}', space=vmem, size = 0x8000, scoped, tag = 'input window, operand 3']
    #allocation3 [shape = 'u8[65536]{0}', space=vmem, size = 0x10000, scoped, tag = 'output window, operand 0']
    loop: start=0, step=1, limit=4
    $region2: #{_lambda_.41} parent=1 // loop_pre_header
      _
    $region3: #{_lambda_.41} parent=1 // loop_header
      %s11 = sphi 0, %s15
      %p12 = scmp.ge.s32.totalorder %s11, 4
      %s18 = sphi 0, %s30
      %s19 = sphi 0, %s26
      %s20 = sphi 0, %s18
      %s21 = sphi 0, %s19
      %s22 = sphi 0, %s20
      %s23 = sphi 0, %s21
      %s33 = sphi 0, %s35
      %s36 = sphi 0, %s33
      %s37 = sphi 0, %s36
      %s53 = sphi 0, %s37
      %s57 = sphi 0, %s57
      %s59 = sphi 0, %s57
      %s60 = sphi 0, %s59
      %s74 = sphi 0, %s60
      %s78 = sphi 0, %s78
      %s80 = sphi 0, %s78
      %s81 = sphi 0, %s80
      %s95 = sphi 0, %s81
      %s101 = sphi 0, %s103
      %s104 = sphi 0, %s101
      %s105 = sphi 0, %s104
      %s121 = sphi 0, %s105
      %s127 = sphi 0, %s129
      %s130 = sphi 0, %s127
      %s131 = sphi 0, %s130
      %s147 = sphi 0, %s131
      %s155 = sphi 0, %s157
      %s158 = sphi 0, %s155
      %s159 = sphi 0, %s158
      %s175 = sphi 0, %s159
    $region4: #{_lambda_.41} parent=1 // loop_header_branch
      %14 = sbr.rel (%p12) target = $region8
    $region5: #{_lambda_.41} parent=1 // loop_body
      %s16 = ssub.s32 %s11, 1
      %s17 = ssub.s32 %s11, 2
      %s24 = sadd.s32 1, %s19
      %p25 = scmp.ge.s32.totalorder %s24, 2
      %s26 = scalar_select %p25, 0, %s24
      %s27 = sadd.s32 1, %s18
      %s28 = scalar_select %p25, %s27, %s18
      %p29 = scmp.ge.s32.totalorder %s28, 1
      %s30 = scalar_select %p29, 0, %s28
      %s31 = ssub.s32 %s18, %s30
      %p32 = scmp.eq.s32.totalorder %s31, 0
      %s34 = sadd.s32 %s33, 1
      %s35 = scalar_select %p32, %s33, %s34
      %p38 = pneg %p32
      %p39 = scmp.eq.s32.totalorder %s11, 1
      %p40 = por %p38, %p39
      %p41 = scmp.ne.s32.totalorder %s33, %s36
      %p42 = scmp.eq.s32.totalorder %s11, 0
      %p43 = por %p41, %p42
      %p44 = scmp.ne.s32.totalorder %s33, %s36
      %p45 = scmp.eq.s32.totalorder %s16, 1
      %p46 = por %p44, %p45
      %p47 = scmp.ne.s32.totalorder %s36, %s37
      %p48 = scmp.eq.s32.totalorder %s16, 0
      %p49 = por %p47, %p48
      %p50 = scmp.ne.s32.totalorder %s36, %s37
      %p51 = scmp.eq.s32.totalorder %s17, 1
      %p52 = por %p50, %p51
      %p54 = scmp.ne.s32.totalorder %s37, %s53
      %p55 = scmp.eq.s32.totalorder %s17, 0
      %p56 = por %p54, %p55
      %s58 = sadd.s32 %s57, 1
      %p61 = scmp.eq.s32.totalorder %s11, 1
      %p62 = scmp.ne.s32.totalorder %s57, %s59
      %p63 = scmp.eq.s32.totalorder %s11, 0
      %p64 = por %p62, %p63
      %p65 = scmp.ne.s32.totalorder %s57, %s59
      %p66 = scmp.eq.s32.totalorder %s16, 1
      %p67 = por %p65, %p66
      %p68 = scmp.ne.s32.totalorder %s59, %s60
      %p69 = scmp.eq.s32.totalorder %s16, 0
      %p70 = por %p68, %p69
      %p71 = scmp.ne.s32.totalorder %s59, %s60
      %p72 = scmp.eq.s32.totalorder %s17, 1
      %p73 = por %p71, %p72
      %p75 = scmp.ne.s32.totalorder %s60, %s74
      %p76 = scmp.eq.s32.totalorder %s17, 0
      %p77 = por %p75, %p76
      %s79 = sadd.s32 %s78, 1
      %p82 = scmp.eq.s32.totalorder %s11, 1
      %p83 = scmp.ne.s32.totalorder %s78, %s80
      %p84 = scmp.eq.s32.totalorder %s11, 0
      %p85 = por %p83, %p84
      %p86 = scmp.ne.s32.totalorder %s78, %s80
      %p87 = scmp.eq.s32.totalorder %s16, 1
      %p88 = por %p86, %p87
      %p89 = scmp.ne.s32.totalorder %s80, %s81
      %p90 = scmp.eq.s32.totalorder %s16, 0
      %p91 = por %p89, %p90
      %p92 = scmp.ne.s32.totalorder %s80, %s81
      %p93 = scmp.eq.s32.totalorder %s17, 1
      %p94 = por %p92, %p93
      %p96 = scmp.ne.s32.totalorder %s81, %s95
      %p97 = scmp.eq.s32.totalorder %s17, 0
      %p98 = por %p96, %p97
      %s99 = ssub.s32 %s19, %s26
      %p100 = scmp.eq.s32.totalorder %s99, 0
      %s102 = sadd.s32 %s101, 1
      %s103 = scalar_select %p100, %s101, %s102
      %p106 = pneg %p100
      %p107 = scmp.eq.s32.totalorder %s11, 1
      %p108 = por %p106, %p107
      %p109 = scmp.ne.s32.totalorder %s101, %s104
      %p110 = scmp.eq.s32.totalorder %s11, 0
      %p111 = por %p109, %p110
      %p112 = scmp.ne.s32.totalorder %s101, %s104
      %p113 = scmp.eq.s32.totalorder %s16, 1
      %p114 = por %p112, %p113
      %p115 = scmp.ne.s32.totalorder %s104, %s105
      %p116 = scmp.eq.s32.totalorder %s16, 0
      %p117 = por %p115, %p116
      %p118 = scmp.ne.s32.totalorder %s104, %s105
      %p119 = scmp.eq.s32.totalorder %s17, 1
      %p120 = por %p118, %p119
      %p122 = scmp.ne.s32.totalorder %s105, %s121
      %p123 = scmp.eq.s32.totalorder %s17, 0
      %p124 = por %p122, %p123
      %s125 = ssub.s32 %s19, %s26
      %p126 = scmp.eq.s32.totalorder %s125, 0
      %s128 = sadd.s32 %s127, 1
      %s129 = scalar_select %p126, %s127, %s128
      %p132 = pneg %p126
      %p133 = scmp.eq.s32.totalorder %s11, 1
      %p134 = por %p132, %p133
      %p135 = scmp.ne.s32.totalorder %s127, %s130
      %p136 = scmp.eq.s32.totalorder %s11, 0
      %p137 = por %p135, %p136
      %p138 = scmp.ne.s32.totalorder %s127, %s130
      %p139 = scmp.eq.s32.totalorder %s16, 1
      %p140 = por %p138, %p139
      %p141 = scmp.ne.s32.totalorder %s130, %s131
      %p142 = scmp.eq.s32.totalorder %s16, 0
      %p143 = por %p141, %p142
      %p144 = scmp.ne.s32.totalorder %s130, %s131
      %p145 = scmp.eq.s32.totalorder %s17, 1
      %p146 = por %p144, %p145
      %p148 = scmp.ne.s32.totalorder %s131, %s147
      %p149 = scmp.eq.s32.totalorder %s17, 0
      %p150 = por %p148, %p149
      %s151 = ssub.s32 %s18, %s30
      %s152 = ssub.s32 %s19, %s26
      %s153 = sor.u32 %s151, %s152
      %p154 = scmp.eq.s32.totalorder %s153, 0
      %s156 = sadd.s32 %s155, 1
      %s157 = scalar_select %p154, %s155, %s156
      %p160 = pneg %p154
      %p161 = scmp.eq.s32.totalorder %s11, 1
      %p162 = por %p160, %p161
      %p163 = scmp.ne.s32.totalorder %s155, %s158
      %p164 = scmp.eq.s32.totalorder %s11, 0
      %p165 = por %p163, %p164
      %p166 = scmp.ne.s32.totalorder %s155, %s158
      %p167 = scmp.eq.s32.totalorder %s16, 1
      %p168 = por %p166, %p167
      %p169 = scmp.ne.s32.totalorder %s158, %s159
      %p170 = scmp.eq.s32.totalorder %s16, 0
      %p171 = por %p169, %p170
      %p172 = scmp.ne.s32.totalorder %s158, %s159
      %p173 = scmp.eq.s32.totalorder %s17, 1
      %p174 = por %p172, %p173
      %p176 = scmp.ne.s32.totalorder %s159, %s175
      %p177 = scmp.eq.s32.totalorder %s17, 0
      %p178 = por %p176, %p177
      %p179 = scmp.le.s32.totalorder 1, %s11
      %p180 = scmp.lt.s32.totalorder %s11, 3
      %p181 = pnand %p179, %p180
      %p182 = pneg %p181
      // Predicated region
      $region9: #{_lambda_.41} parent=5 // pred_check
        _
      $region10: #{_lambda_.41} parent=5 // pred_check_branch
        %184 = sbr.rel (%p181) target = $region12
      $region11: #{_lambda_.41} parent=5 // pred_region
        %s185 = ssub.s32 %s11, 1
        // Predicated region
        $region13: #{_lambda_.41} parent=11 // pred_check
          %p186 = pneg %p49
        $region14: #{_lambda_.41} parent=11 // pred_check_branch
          %188 = sbr.rel (%p186) target = $region16
        $region15: #{_lambda_.41} parent=11 // pred_region
          %s189 = smul.u32 4, %s20
          %p190 = scmp.lt.s32.totalorder %s189, 3
          %s191 = scalar_select %p190, %s189, 3
          %s192 = smul.addr %s191, 8
          %s193 = scalar_lea.vmem %s0, %s192
          %s194 = smul.u32 4, %s20
        $region16: #{_lambda_.41} parent=11 // pred_fallthru
          _
        // Predicated region
        $region17: #{_lambda_.41} parent=11 // pred_check
          %p195 = pneg %p70
        $region18: #{_lambda_.41} parent=11 // pred_check_branch
          %197 = sbr.rel (%p195) target = $region20
        $region19: #{_lambda_.41} parent=11 // pred_region
          _
        $region20: #{_lambda_.41} parent=11 // pred_fallthru
          _
        // Predicated region
        $region21: #{_lambda_.41} parent=11 // pred_check
          %p198 = pneg %p91
        $region22: #{_lambda_.41} parent=11 // pred_check_branch
          %200 = sbr.rel (%p198) target = $region24
        $region23: #{_lambda_.41} parent=11 // pred_region
          _
        $region24: #{_lambda_.41} parent=11 // pred_fallthru
          _
      $region12: #{_lambda_.41} parent=5 // pred_fallthru
        _
      %p201 = scmp.lt.s32.totalorder %s11, 2
      // Predicated region
      $region25: #{_lambda_.41} parent=5 // pred_check
        %p202 = pneg %p201
      $region26: #{_lambda_.41} parent=5 // pred_check_branch
        %204 = sbr.rel (%p202) target = $region28
      $region27: #{_lambda_.41} parent=5 // pred_region
        // Predicated region
        $region29: #{_lambda_.41} parent=27 // pred_check
          %p205 = pneg %p111
        $region30: #{_lambda_.41} parent=27 // pred_check_branch
          %207 = sbr.rel (%p205) target = $region32
        $region31: #{_lambda_.41} parent=27 // pred_region
          %s208 = sand.u32 %s101, 1
          %s209 = sand.u32 %s101, 1
          %s210 = smul.addr %s209, 32
          %s211 = scalar_lea.vmem [#allocation2], %s210
          %s212 = smul.u32 2, %s19
          %s213 = smul.addr %s212, 4
          %s214 = scalar_lea.vmem %s3, %s213
          // Predicated region
          $region33: #{_lambda_.41} parent=31 // pred_check
            _
          $region34: #{_lambda_.41} parent=31 // pred_check_branch
            %216 = sbr.rel (0) target = $region36
          $region35: #{_lambda_.41} parent=31 // pred_region
            // Predicated region
            $region37: #{_lambda_.41} parent=35 // pred_check
              _
            $region38: #{_lambda_.41} parent=35 // pred_check_branch
              %218 = sbr.rel (0) target = $region40
            $region39: #{_lambda_.41} parent=35 // pred_region
              // Predicated region
              $region52: #{_lambda_.41} parent=39 // pred_check
                _
              $region53: #{_lambda_.41} parent=39 // pred_check_branch
                %240 = sbr.rel (0) target = $region55
              $region54: #{_lambda_.41} parent=39 // pred_region
                loop: start=0, step=1, limit=1
                $region56: #{_lambda_.41} parent=54 // loop_pre_header
                  _
                $region57: #{_lambda_.41} parent=54 // loop_header
                  %s242 = sphi 0, %s246
                  %p243 = scmp.ge.s32.totalorder %s242, 1
                  %s247 = sphi %s214, %s214
                  %s248 = sphi %s211, %s211
                $region58: #{_lambda_.41} parent=54 // loop_header_branch
                  %245 = sbr.rel (%p243) target = $region62
                $region59: #{_lambda_.41} parent=54 // loop_body
                  %v249 = vld [vmem:[%s247] sm:$0xff]
                  %250 = vst [vmem:[%s248] sm:$0xff] %v249
                  %v251 = vld [vmem:[%s247 + $0x10] sm:$0xff]
                  %252 = vst [vmem:[%s248 + $0x8] sm:$0xff] %v251
                  %v253 = vld [vmem:[%s247 + $0x20] sm:$0xff]
                  %254 = vst [vmem:[%s248 + $0x10] sm:$0xff] %v253
                  %v255 = vld [vmem:[%s247 + $0x30] sm:$0xff]
                  %256 = vst [vmem:[%s248 + $0x18] sm:$0xff] %v255
                $region60: #{_lambda_.41} parent=54 // loop_footer
                  %s246 = sadd.s32 1, %s242
                $region61: #{_lambda_.41} parent=54 // loop_footer_branch
                  %241 = sbr.rel target = $region57
                $region62: #{_lambda_.41} parent=54 // loop_exit
                  _
              $region55: #{_lambda_.41} parent=39 // pred_fallthru
                _
              // Predicated region
              $region63: #{_lambda_.41} parent=39 // pred_check
                _
              $region64: #{_lambda_.41} parent=39 // pred_check_branch
                %258 = sbr.rel target = $region66
              $region65: #{_lambda_.41} parent=39 // pred_region
                _
              $region66: #{_lambda_.41} parent=39 // pred_fallthru
                _
            $region40: #{_lambda_.41} parent=35 // pred_fallthru
              _
            // Predicated region
            $region41: #{_lambda_.41} parent=35 // pred_check
              _
            $region42: #{_lambda_.41} parent=35 // pred_check_branch
              %220 = sbr.rel target = $region44
            $region43: #{_lambda_.41} parent=35 // pred_region
              %s222 = ssub.s32 256, 1
              loop: start=0, step=1, limit=1
              $region45: #{_lambda_.41} parent=43 // loop_pre_header
                _
              $region46: #{_lambda_.41} parent=43 // loop_header
                %s224 = sphi 0, %s228
                %p225 = scmp.ge.s32.totalorder %s224, 1
                %s229 = sphi %s214, %s214
                %s230 = sphi %s211, %s211
              $region47: #{_lambda_.41} parent=43 // loop_header_branch
                %227 = sbr.rel (%p225) target = $region51
              $region48: #{_lambda_.41} parent=43 // loop_body
                %v231 = vld [vmem:[%s229] sm:%s222]
                %232 = vst [vmem:[%s230] sm:%s222] %v231
                %v233 = vld [vmem:[%s229 + $0x10] sm:%s222]
                %234 = vst [vmem:[%s230 + $0x8] sm:%s222] %v233
                %v235 = vld [vmem:[%s229 + $0x20] sm:%s222]
                %236 = vst [vmem:[%s230 + $0x10] sm:%s222] %v235
                %v237 = vld [vmem:[%s229 + $0x30] sm:%s222]
                %238 = vst [vmem:[%s230 + $0x18] sm:%s222] %v237
              $region49: #{_lambda_.41} parent=43 // loop_footer
                %s228 = sadd.s32 1, %s224
              $region50: #{_lambda_.41} parent=43 // loop_footer_branch
                %223 = sbr.rel target = $region46
              $region51: #{_lambda_.41} parent=43 // loop_exit
                _
            $region44: #{_lambda_.41} parent=35 // pred_fallthru
              _
          $region36: #{_lambda_.41} parent=31 // pred_fallthru
            _
          %259 = vnop
        $region32: #{_lambda_.41} parent=27 // pred_fallthru
          _
        // Predicated region
        $region67: #{_lambda_.41} parent=27 // pred_check
          %p260 = pneg %p137
        $region68: #{_lambda_.41} parent=27 // pred_check_branch
          %262 = sbr.rel (%p260) target = $region70
        $region69: #{_lambda_.41} parent=27 // pred_region
          %s263 = smul.u32 2, %s19
          %p264 = scmp.lt.s32.totalorder %s263, 3
          %s265 = scalar_select %p264, %s263, 3
          %s266 = scalar_lea.vmem %s4, %s265
          %s267 = smul.u32 2, %s19
        $region70: #{_lambda_.41} parent=27 // pred_fallthru
          _
      $region28: #{_lambda_.41} parent=5 // pred_fallthru
        _
      %p268 = scmp.le.s32.totalorder 1, %s11
      %p269 = scmp.lt.s32.totalorder %s11, 3
      %p270 = pnand %p268, %p269
      %p271 = pneg %p270
      // Predicated region
      $region71: #{_lambda_.41} parent=5 // pred_check
        _
      $region72: #{_lambda_.41} parent=5 // pred_check_branch
        %273 = sbr.rel (%p270) target = $region74
      $region73: #{_lambda_.41} parent=5 // pred_region
        %s274 = ssub.s32 %s11, 1
        %s275 = sand.u32 %s104, 1
        %s276 = sand.u32 %s104, 1
        %s277 = smul.addr %s276, 32
        %s278 = scalar_lea.vmem [#allocation2], %s277
        // Predicated region
        $region75: #{_lambda_.41} parent=73 // pred_check
          %p279 = pneg %p117
        $region76: #{_lambda_.41} parent=73 // pred_check_branch
          %281 = sbr.rel (%p279) target = $region78
        $region77: #{_lambda_.41} parent=73 // pred_region
          _
        $region78: #{_lambda_.41} parent=73 // pred_fallthru
          _
        %s282 = smul.u32 4, %s20
        %p283 = scmp.lt.s32.totalorder %s282, 3
        %s284 = scalar_select %p283, %s282, 3
        %s285 = smul.addr %s284, 8
        %s286 = scalar_lea.vmem %s0, %s285
        %p287 = pneg %p49
        %p288 = pneg %p46
        %p289 = pneg %p70
        %p290 = pneg %p67
        %p291 = pneg %p91
        %p292 = pneg %p88
        %s293 = sand.u32 %s104, 1
        %s294 = sand.u32 %s104, 1
        %s295 = smul.addr %s294, 32
        %s296 = scalar_lea.vmem [#allocation2], %s295
        %p297 = pneg %p117
        %p298 = pneg %p114
        %s299 = smul.u32 2, %s21
        %p300 = scmp.lt.s32.totalorder %s299, 3
        %s301 = scalar_select %p300, %s299, 3
        %s302 = scalar_lea.vmem %s4, %s301
        %p303 = pneg %p143
        %p304 = pneg %p140
        %p305 = pneg %p171
        %p306 = pneg %p168
        %s307 = sand.u32 %s158, 1
        %s308 = sand.u32 %s158, 1
        %s309 = smul.addr %s308, 64
        %s310 = scalar_lea.vmem [#allocation3], %s309
        %s311 = smul.u32 4, %s20
        %p312 = scmp.lt.s32.totalorder %s311, 3
        %s313 = scalar_select %p312, %s311, 3
        %s314 = smul.addr %s313, 8
        %s315 = scalar_lea.vmem %s0, %s314
        %s316 = smul.u32 4, %s20
        %s317 = smul.u32 2, %s21
        %s318 = smul.u32 2, %s21
        %p319 = scmp.lt.s32.totalorder %s318, 3
        %s320 = scalar_select %p319, %s318, 3
        %s321 = scalar_lea.vmem %s4, %s320
        %s322 = smul.u32 2, %s21
        %s323 = smul.u32 4, %s20
        %s324 = smul.u32 2, %s21
        %v326 = vld [vmem:[%s315] sm:$0xff]
        %v327 = vld [vmem:[%s315 + $0x8] sm:$0xff]
        %v328 = vld [vmem:[%s315 + $0x10] sm:$0xff]
        %v329 = vld [vmem:[%s315 + $0x18] sm:$0xff]
        %v330 = vld [vmem:[%s1] sm:$0x1]
        %v331 = vld [vmem:[%s2] sm:$0x1]
        %vm332 = vcmask 261120
        %v333 = vsel %vm332, %v326, 0.0
        %334 = vadd.xlane.f32.xlu0 %v333
        %v335 = vpop.xlane.xlu0 %334
        %v336 = vsel %vm332, %v327, 0.0
        %337 = vadd.xlane.f32.xlu0 %v336
        %v338 = vpop.xlane.xlu0 %337
        %v339 = vsel %vm332, %v328, 0.0
        %340 = vadd.xlane.f32.xlu0 %v339
        %v341 = vpop.xlane.xlu0 %340
        %v342 = vsel %vm332, %v329, 0.0
        %343 = vadd.xlane.f32.xlu0 %v342
        %v344 = vpop.xlane.xlu0 %343
        %v345 = vrcp.pop 32.0
        %v346 = vmul.f32 %v335, %v345
        %v347 = vmul.f32 %v338, %v345
        %v348 = vmul.f32 %v341, %v345
        %v349 = vmul.f32 %v344, %v345
        %v350 = vsub.f32 %v326, %v346
        %v351 = vsub.f32 %v327, %v347
        %v352 = vsub.f32 %v328, %v348
        %v353 = vsub.f32 %v329, %v349
        %v354 = vmul.f32 %v350, %v350
        %v355 = vmul.f32 %v351, %v351
        %v356 = vmul.f32 %v352, %v352
        %v357 = vmul.f32 %v353, %v353
        %v358 = vsel %vm332, %v354, 0.0
        %359 = vadd.xlane.f32.xlu0 %v358
        %v360 = vpop.xlane.xlu0 %359
        %v361 = vsel %vm332, %v355, 0.0
        %362 = vadd.xlane.f32.xlu0 %v361
        %v363 = vpop.xlane.xlu0 %362
        %v364 = vsel %vm332, %v356, 0.0
        %365 = vadd.xlane.f32.xlu0 %v364
        %v366 = vpop.xlane.xlu0 %365
        %v367 = vsel %vm332, %v357, 0.0
        %368 = vadd.xlane.f32.xlu0 %v367
        %v369 = vpop.xlane.xlu0 %368
        %v370 = vmul.f32 %v360, %v345
        %v371 = vmul.f32 %v363, %v345
        %v372 = vmul.f32 %v366, %v345
        %v373 = vmul.f32 %v369, %v345
        %v374 = vadd.f32 %v370, 1e-05
        %v375 = vadd.f32 %v371, 1e-05
        %v376 = vadd.f32 %v372, 1e-05
        %v377 = vadd.f32 %v373, 1e-05
        %v378 = vrsqrt.pop %v374
        %v379 = vrsqrt.pop %v375
        %v380 = vrsqrt.pop %v376
        %v381 = vrsqrt.pop %v377
        %v382 = vmul.f32 %v350, %v378
        %v383 = vmul.f32 %v351, %v379
        %v384 = vmul.f32 %v352, %v380
        %v385 = vmul.f32 %v353, %v381
        %v387 = vlaneseq
        %v388 = vshrl.u32 %v387, 7
        %v389 = vsub.s32 0, %v388
        %v390 = vrot.slane %v330, %v389
        %v392 = vmul.f32 %v382, %v390
        %v393 = vmul.f32 %v383, %v390
        %v394 = vmul.f32 %v384, %v390
        %v395 = vmul.f32 %v385, %v390
        %v397 = vlaneseq
        %v398 = vshrl.u32 %v397, 7
        %v399 = vsub.s32 0, %v398
        %v400 = vrot.slane %v331, %v399
        %v402 = vadd.f32 %v392, %v400
        %v403 = vadd.f32 %v393, %v400
        %v404 = vadd.f32 %v394, %v400
        %v405 = vadd.f32 %v395, %v400
        %v406 = vpack.c.bf16 %v403, %v402
        %v407 = vpack.c.bf16 %v405, %v404
        %v408 = vld [vmem:[%s278] sm:$0xff]
        %v409 = vld [vmem:[%s278 + $0x8] sm:$0xff]
        %v410 = vld [vmem:[%s278 + $0x10] sm:$0xff]
        %v411 = vld [vmem:[%s278 + $0x18] sm:$0xff]
        %v412 = vld [vmem:[%s321] sm:$0x3]
        %v414 = vlaneseq
        %v415 = vshrl.u32 %v414, 7
        %v416 = vsub.s32 0, %v415
        %v417 = vrot.slane %v412, %v416
        %v418 = vlaneseq
        %v419 = vshrl.u32 %v418, 7
        %v420 = vsub.s32 1, %v419
        %v421 = vrot.slane %v412, %v420
        %v428 = vunpack.c.l.b16 %v408
        %v429 = vunpack.c.h.b16 %v408
        %v430 = vunpack.c.l.b16 %v409
        %v431 = vunpack.c.h.b16 %v409
        %v432 = vunpack.c.l.b16 %v410
        %v433 = vunpack.c.h.b16 %v410
        %v434 = vunpack.c.l.b16 %v411
        %v435 = vunpack.c.h.b16 %v411
        %v436 = vpack.c.b16 %v430, %v428
        %v437 = vpack.c.b16 %v431, %v429
        %v438 = vpack.c.b16 %v434, %v432
        %v439 = vpack.c.b16 %v435, %v433
        %v445 = vsel %vm332, %v406, 0
        %v448 = vsel %vm332, %v407, 0
        %450 = vmatprep.subr.bf16.mxu0 0
        %451 = vmatpush1.bf16.msra.mxu0 0
        %452 = vmatprep.subr.bf16.mxu0 0
        %453 = vmatpush1.bf16.msra.mxu0 0
        %454 = vmatprep.subr.bf16.mxu0 0
        %455 = vmatpush1.bf16.msra.mxu0 0
        %456 = vmatprep.subr.bf16.mxu0 0
        %457 = vmatpush1.bf16.msra.mxu0 0
        %458 = vmatprep.subr.bf16.mxu0 0
        %459 = vmatpush1.bf16.msra.mxu0 0
        %460 = vmatprep.subr.bf16.mxu0 0
        %461 = vmatpush1.bf16.msra.mxu0 0
        %462 = vmatprep.subr.bf16.mxu0 %v439
        %463 = vmatpush1.bf16.msra.mxu0 %v438
        %464 = vmatprep.subr.bf16.mxu0 %v437
        %465 = vmatpush1.bf16.msra.mxu0 %v436
        %466 = vmatprep.subr.bf16.mxu0 0
        %467 = vmatpush2.bf16.msra.mxu0 0
        %468 = vmatprep.subr.bf16.mxu0 0
        %469 = vmatpush2.bf16.msra.mxu0 0
        %470 = vmatprep.subr.bf16.mxu0 0
        %471 = vmatpush2.bf16.msra.mxu0 0
        %472 = vmatprep.subr.bf16.mxu0 0
        %473 = vmatpush2.bf16.msra.mxu0 0
        %474 = vmatprep.subr.bf16.mxu0 0
        %475 = vmatpush2.bf16.msra.mxu0 0
        %476 = vmatprep.subr.bf16.mxu0 0
        %477 = vmatpush2.bf16.msra.mxu0 0
        %478 = vmatprep.subr.bf16.mxu0 0
        %479 = vmatpush2.bf16.msra.mxu0 0
        %480 = vmatprep.subr.bf16.mxu0 0
        %481 = vmatpush2.bf16.msra.mxu0 0
        %482 = vmatprep.mubr.bf16.mxu0 0
        %483 = vmatmul.mubr.bf16.gmra.mxu0 %v445
        %v484 = vpop.f32.mrf.mxu0
        %v485 = vadd.f32 %v417, %v484
        %v486 = vpop.f32.mrf.mxu0
        %v487 = vadd.f32 %v421, %v486
        %v488 = vpop.f32.mrf.mxu0
        %v489 = vadd.f32 %v417, %v488
        %v490 = vpop.f32.mrf.mxu0
        %v491 = vadd.f32 %v421, %v490
        %492 = vmatprep.mubr.bf16.mxu0 0
        %493 = vmatmul.mubr.bf16.gmra.mxu0 %v448
        %v494 = vpop.f32.mrf.mxu0
        %v495 = vadd.f32 %v417, %v494
        %v496 = vpop.f32.mrf.mxu0
        %v497 = vadd.f32 %v421, %v496
        %v498 = vpop.f32.mrf.mxu0
        %v499 = vadd.f32 %v417, %v498
        %v500 = vpop.f32.mrf.mxu0
        %v501 = vadd.f32 %v421, %v500
        %502 = vdwg.mxu0
        %503 = vst [vmem:[%s310] sm:$0xff] %v485
        %504 = vst [vmem:[%s310 + $0x8] sm:$0xff] %v487
        %505 = vst [vmem:[%s310 + $0x10] sm:$0xff] %v489
        %506 = vst [vmem:[%s310 + $0x18] sm:$0xff] %v491
        %507 = vst [vmem:[%s310 + $0x20] sm:$0xff] %v495
        %508 = vst [vmem:[%s310 + $0x28] sm:$0xff] %v497
        %509 = vst [vmem:[%s310 + $0x30] sm:$0xff] %v499
        %510 = vst [vmem:[%s310 + $0x38] sm:$0xff] %v501
        %s511 = sand.u32 %s158, 1
        %s512 = sand.u32 %s158, 1
        %s513 = smul.addr %s512, 64
        %s514 = scalar_lea.vmem [#allocation3], %s513
        // Predicated region
        $region79: #{_lambda_.41} parent=73 // pred_check
          %p515 = pneg %p168
        $region80: #{_lambda_.41} parent=73 // pred_check_branch
          %517 = sbr.rel (%p515) target = $region82
        $region81: #{_lambda_.41} parent=73 // pred_region
          %s518 = smul.u32 4, %s20
          %s519 = smul.u32 2, %s21
          %s520 = smul.addr %s518, 4
          %s521 = sadd.s32 %s519, %s520
          %s522 = smul.addr %s521, 8
          %s523 = scalar_lea.vmem %s5, %s522
          // Predicated region
          $region83: #{_lambda_.41} parent=81 // pred_check
            _
          $region84: #{_lambda_.41} parent=81 // pred_check_branch
            %525 = sbr.rel (0) target = $region86
          $region85: #{_lambda_.41} parent=81 // pred_region
            // Predicated region
            $region87: #{_lambda_.41} parent=85 // pred_check
              _
            $region88: #{_lambda_.41} parent=85 // pred_check_branch
              %527 = sbr.rel (0) target = $region90
            $region89: #{_lambda_.41} parent=85 // pred_region
              loop: start=0, step=1, limit=1
              $region91: #{_lambda_.41} parent=89 // loop_pre_header
                _
              $region92: #{_lambda_.41} parent=89 // loop_header
                %s529 = sphi 0, %s533
                %p530 = scmp.ge.s32.totalorder %s529, 1
                %s534 = sphi %s514, %s514
                %s535 = sphi %s523, %s523
              $region93: #{_lambda_.41} parent=89 // loop_header_branch
                %532 = sbr.rel (%p530) target = $region97
              $region94: #{_lambda_.41} parent=89 // loop_body
                %v536 = vld [vmem:[%s534] sm:$0xff]
                %537 = vst [vmem:[%s535] sm:$0xff] %v536
                %v538 = vld [vmem:[%s534 + $0x8] sm:$0xff]
                %539 = vst [vmem:[%s535 + $0x8] sm:$0xff] %v538
                %v540 = vld [vmem:[%s534 + $0x10] sm:$0xff]
                %541 = vst [vmem:[%s535 + $0x20] sm:$0xff] %v540
                %v542 = vld [vmem:[%s534 + $0x18] sm:$0xff]
                %543 = vst [vmem:[%s535 + $0x28] sm:$0xff] %v542
                %v544 = vld [vmem:[%s534 + $0x20] sm:$0xff]
                %545 = vst [vmem:[%s535 + $0x40] sm:$0xff] %v544
                %v546 = vld [vmem:[%s534 + $0x28] sm:$0xff]
                %547 = vst [vmem:[%s535 + $0x48] sm:$0xff] %v546
                %v548 = vld [vmem:[%s534 + $0x30] sm:$0xff]
                %549 = vst [vmem:[%s535 + $0x60] sm:$0xff] %v548
                %v550 = vld [vmem:[%s534 + $0x38] sm:$0xff]
                %551 = vst [vmem:[%s535 + $0x68] sm:$0xff] %v550
              $region95: #{_lambda_.41} parent=89 // loop_footer
                %s533 = sadd.s32 1, %s529
              $region96: #{_lambda_.41} parent=89 // loop_footer_branch
                %528 = sbr.rel target = $region92
              $region97: #{_lambda_.41} parent=89 // loop_exit
                _
            $region90: #{_lambda_.41} parent=85 // pred_fallthru
              _
            // Predicated region
            $region98: #{_lambda_.41} parent=85 // pred_check
              _
            $region99: #{_lambda_.41} parent=85 // pred_check_branch
              %553 = sbr.rel target = $region101
            $region100: #{_lambda_.41} parent=85 // pred_region
              _
            $region101: #{_lambda_.41} parent=85 // pred_fallthru
              _
          $region86: #{_lambda_.41} parent=81 // pred_fallthru
            _
          %554 = vnop
        $region82: #{_lambda_.41} parent=73 // pred_fallthru
          _
      $region74: #{_lambda_.41} parent=5 // pred_fallthru
        _
      %p555 = scmp.le.s32.totalorder 2, %s11
      // Predicated region
      $region102: #{_lambda_.41} parent=5 // pred_check
        %p556 = pneg %p555
      $region103: #{_lambda_.41} parent=5 // pred_check_branch
        %558 = sbr.rel (%p556) target = $region105
      $region104: #{_lambda_.41} parent=5 // pred_region
        %s559 = ssub.s32 %s11, 2
        // Predicated region
        $region106: #{_lambda_.41} parent=104 // pred_check
          %p560 = pneg %p174
        $region107: #{_lambda_.41} parent=104 // pred_check_branch
          %562 = sbr.rel (%p560) target = $region109
        $region108: #{_lambda_.41} parent=104 // pred_region
          %s563 = sand.u32 %s159, 1
          %s564 = sand.u32 %s159, 1
          %s565 = smul.addr %s564, 64
          %s566 = scalar_lea.vmem [#allocation3], %s565
        $region109: #{_lambda_.41} parent=104 // pred_fallthru
          _
      $region105: #{_lambda_.41} parent=5 // pred_fallthru
        _
    $region6: #{_lambda_.41} parent=1 // loop_footer
      %s15 = sadd.s32 1, %s11
    $region7: #{_lambda_.41} parent=1 // loop_footer_branch
      %10 = sbr.rel target = $region3
    $region8: #{_lambda_.41} parent=1 // loop_exit
      _

// kernel: _lambda_.42
$region0: #{_lambda_.42}
  #allocation0 [shape = 'u32[]', space=smem, size = 0x4, offset = 0x4, fixed_abs, tag = 'smem constant byte address 0x4 - core index']
  #allocation1 [shape = 'u32[144,128]{1,0:T(1,128)}', space=vmem, size = 0x12000, scoped, tag = 'internal scratch']
  %s0 = inlined_call_operand.vmem [shape: f32[512,32], index: 0, kind: input, shape index: {}]
  %s1 = inlined_call_operand.vmem [shape: f32[1,32], index: 1, kind: input, shape index: {}]
  %s2 = inlined_call_operand.vmem [shape: f32[1,32], index: 2, kind: input, shape index: {}]
  %s3 = inlined_call_operand.vmem [shape: f32[512,32], index: 3, kind: output, shape index: {}]
  %s4 = sld [smem:[#allocation0]]
  $region22: #{_lambda_.42} parent=0
    _
  %s6 = ssub.s32 1, %s4
  %s7 = scalar_select 0, %s6, %s4
  // Predicated region
  $region2: #{_lambda_.42} parent=0 // pred_check
    _
  $region3: #{_lambda_.42} parent=0 // pred_check_branch
    %9 = sbr.rel (0) target = $region5
  $region4: #{_lambda_.42} parent=0 // pred_region
    _
  $region5: #{_lambda_.42} parent=0 // pred_fallthru
    _
  // Predicated region
  $region6: #{_lambda_.42} parent=0 // pred_check
    _
  $region7: #{_lambda_.42} parent=0 // pred_check_branch
    %11 = sbr.rel (0) target = $region9
  $region8: #{_lambda_.42} parent=0 // pred_region
    _
  $region9: #{_lambda_.42} parent=0 // pred_fallthru
    _
  // Predicated region
  $region10: #{_lambda_.42} parent=0 // pred_check
    _
  $region11: #{_lambda_.42} parent=0 // pred_check_branch
    %13 = sbr.rel (0) target = $region13
  $region12: #{_lambda_.42} parent=0 // pred_region
    _
  $region13: #{_lambda_.42} parent=0 // pred_fallthru
    _
  %v14 = vld [vmem:[%s0] sm:$0xff]
  %v15 = vld [vmem:[%s0 + $0x8] sm:$0xff]
  %v16 = vld [vmem:[%s0 + $0x10] sm:$0xff]
  %v17 = vld [vmem:[%s0 + $0x18] sm:$0xff]
  %v18 = vld [vmem:[%s0 + $0x20] sm:$0xff]
  %v19 = vld [vmem:[%s0 + $0x28] sm:$0xff]
  %v20 = vld [vmem:[%s0 + $0x30] sm:$0xff]
  %v21 = vld [vmem:[%s0 + $0x38] sm:$0xff]
  %v22 = vld [vmem:[%s0 + $0x40] sm:$0xff]
  %v23 = vld [vmem:[%s0 + $0x48] sm:$0xff]
  %v24 = vld [vmem:[%s0 + $0x50] sm:$0xff]
  %v25 = vld [vmem:[%s0 + $0x58] sm:$0xff]
  %v26 = vld [vmem:[%s0 + $0x60] sm:$0xff]
  %v27 = vld [vmem:[%s0 + $0x68] sm:$0xff]
  %v28 = vld [vmem:[%s0 + $0x70] sm:$0xff]
  %v29 = vld [vmem:[%s0 + $0x78] sm:$0xff]
  %v30 = vld [vmem:[%s0 + $0x80] sm:$0xff]
  %v31 = vld [vmem:[%s0 + $0x88] sm:$0xff]
  %v32 = vld [vmem:[%s0 + $0x90] sm:$0xff]
  %v33 = vld [vmem:[%s0 + $0x98] sm:$0xff]
  %v34 = vld [vmem:[%s0 + $0xa0] sm:$0xff]
  %v35 = vld [vmem:[%s0 + $0xa8] sm:$0xff]
  %v36 = vld [vmem:[%s0 + $0xb0] sm:$0xff]
  %v37 = vld [vmem:[%s0 + $0xb8] sm:$0xff]
  %v38 = vld [vmem:[%s0 + $0xc0] sm:$0xff]
  %v39 = vld [vmem:[%s0 + $0xc8] sm:$0xff]
  %v40 = vld [vmem:[%s0 + $0xd0] sm:$0xff]
  %v41 = vld [vmem:[%s0 + $0xd8] sm:$0xff]
  %v42 = vld [vmem:[%s0 + $0xe0] sm:$0xff]
  %v43 = vld [vmem:[%s0 + $0xe8] sm:$0xff]
  %v44 = vld [vmem:[%s0 + $0xf0] sm:$0xff]
  %v45 = vld [vmem:[%s0 + $0xf8] sm:$0xff]
  %v46 = vld [vmem:[%s0 + $0x100] sm:$0xff]
  %v47 = vld [vmem:[%s0 + $0x108] sm:$0xff]
  %v48 = vld [vmem:[%s0 + $0x110] sm:$0xff]
  %v49 = vld [vmem:[%s0 + $0x118] sm:$0xff]
  %v50 = vld [vmem:[%s0 + $0x120] sm:$0xff]
  %v51 = vld [vmem:[%s0 + $0x128] sm:$0xff]
  %v52 = vld [vmem:[%s0 + $0x130] sm:$0xff]
  %v53 = vld [vmem:[%s0 + $0x138] sm:$0xff]
  %v54 = vld [vmem:[%s0 + $0x140] sm:$0xff]
  %v55 = vld [vmem:[%s0 + $0x148] sm:$0xff]
  %v56 = vld [vmem:[%s0 + $0x150] sm:$0xff]
  %v57 = vld [vmem:[%s0 + $0x158] sm:$0xff]
  %v58 = vld [vmem:[%s0 + $0x160] sm:$0xff]
  %v59 = vld [vmem:[%s0 + $0x168] sm:$0xff]
  %v60 = vld [vmem:[%s0 + $0x170] sm:$0xff]
  %v61 = vld [vmem:[%s0 + $0x178] sm:$0xff]
  %v62 = vld [vmem:[%s0 + $0x180] sm:$0xff]
  %v63 = vld [vmem:[%s0 + $0x188] sm:$0xff]
  %v64 = vld [vmem:[%s0 + $0x190] sm:$0xff]
  %v65 = vld [vmem:[%s0 + $0x198] sm:$0xff]
  %v66 = vld [vmem:[%s0 + $0x1a0] sm:$0xff]
  %v67 = vld [vmem:[%s0 + $0x1a8] sm:$0xff]
  %v68 = vld [vmem:[%s0 + $0x1b0] sm:$0xff]
  %v69 = vld [vmem:[%s0 + $0x1b8] sm:$0xff]
  %v70 = vld [vmem:[%s0 + $0x1c0] sm:$0xff]
  %v71 = vld [vmem:[%s0 + $0x1c8] sm:$0xff]
  %v72 = vld [vmem:[%s0 + $0x1d0] sm:$0xff]
  %v73 = vld [vmem:[%s0 + $0x1d8] sm:$0xff]
  %v74 = vld [vmem:[%s0 + $0x1e0] sm:$0xff]
  %v75 = vld [vmem:[%s0 + $0x1e8] sm:$0xff]
  %v76 = vld [vmem:[%s0 + $0x1f0] sm:$0xff]
  %v77 = vld [vmem:[%s0 + $0x1f8] sm:$0xff]
  %v78 = vld [vmem:[%s1] sm:$0x1]
  %v79 = vld [vmem:[%s2] sm:$0x1]
  %vm80 = vcmask 261120
  %v81 = vsel %vm80, %v14, 0.0
  %82 = vadd.xlane.f32.xlu0 %v81
  %v83 = vpop.xlane.xlu0 %82
  %v84 = vsel %vm80, %v15, 0.0
  %85 = vadd.xlane.f32.xlu0 %v84
  %v86 = vpop.xlane.xlu0 %85
  %v87 = vsel %vm80, %v16, 0.0
  %88 = vadd.xlane.f32.xlu0 %v87
  %v89 = vpop.xlane.xlu0 %88
  %v90 = vsel %vm80, %v17, 0.0
  %91 = vadd.xlane.f32.xlu0 %v90
  %v92 = vpop.xlane.xlu0 %91
  %v93 = vsel %vm80, %v18, 0.0
  %94 = vadd.xlane.f32.xlu0 %v93
  %v95 = vpop.xlane.xlu0 %94
  %v96 = vsel %vm80, %v19, 0.0
  %97 = vadd.xlane.f32.xlu0 %v96
  %v98 = vpop.xlane.xlu0 %97
  %v99 = vsel %vm80, %v20, 0.0
  %100 = vadd.xlane.f32.xlu0 %v99
  %v101 = vpop.xlane.xlu0 %100
  %v102 = vsel %vm80, %v21, 0.0
  %103 = vadd.xlane.f32.xlu0 %v102
  %v104 = vpop.xlane.xlu0 %103
  %v105 = vsel %vm80, %v22, 0.0
  %106 = vadd.xlane.f32.xlu0 %v105
  %v107 = vpop.xlane.xlu0 %106
  %v108 = vsel %vm80, %v23, 0.0
  %109 = vadd.xlane.f32.xlu0 %v108
  %v110 = vpop.xlane.xlu0 %109
  %v111 = vsel %vm80, %v24, 0.0
  %112 = vadd.xlane.f32.xlu0 %v111
  %v113 = vpop.xlane.xlu0 %112
  %v114 = vsel %vm80, %v25, 0.0
  %115 = vadd.xlane.f32.xlu0 %v114
  %v116 = vpop.xlane.xlu0 %115
  %v117 = vsel %vm80, %v26, 0.0
  %118 = vadd.xlane.f32.xlu0 %v117
  %v119 = vpop.xlane.xlu0 %118
  %v120 = vsel %vm80, %v27, 0.0
  %121 = vadd.xlane.f32.xlu0 %v120
  %v122 = vpop.xlane.xlu0 %121
  %v123 = vsel %vm80, %v28, 0.0
  %124 = vadd.xlane.f32.xlu0 %v123
  %v125 = vpop.xlane.xlu0 %124
  %v126 = vsel %vm80, %v29, 0.0
  %127 = vadd.xlane.f32.xlu0 %v126
  %v128 = vpop.xlane.xlu0 %127
  %v129 = vsel %vm80, %v30, 0.0
  %130 = vadd.xlane.f32.xlu0 %v129
  %v131 = vpop.xlane.xlu0 %130
  %v132 = vsel %vm80, %v31, 0.0
  %133 = vadd.xlane.f32.xlu0 %v132
  %v134 = vpop.xlane.xlu0 %133
  %v135 = vsel %vm80, %v32, 0.0
  %136 = vadd.xlane.f32.xlu0 %v135
  %v137 = vpop.xlane.xlu0 %136
  %v138 = vsel %vm80, %v33, 0.0
  %139 = vadd.xlane.f32.xlu0 %v138
  %v140 = vpop.xlane.xlu0 %139
  %v141 = vsel %vm80, %v34, 0.0
  %142 = vadd.xlane.f32.xlu0 %v141
  %v143 = vpop.xlane.xlu0 %142
  %v144 = vsel %vm80, %v35, 0.0
  %145 = vadd.xlane.f32.xlu0 %v144
  %v146 = vpop.xlane.xlu0 %145
  %v147 = vsel %vm80, %v36, 0.0
  %148 = vadd.xlane.f32.xlu0 %v147
  %v149 = vpop.xlane.xlu0 %148
  %v150 = vsel %vm80, %v37, 0.0
  %151 = vadd.xlane.f32.xlu0 %v150
  %v152 = vpop.xlane.xlu0 %151
  %v153 = vsel %vm80, %v38, 0.0
  %154 = vadd.xlane.f32.xlu0 %v153
  %v155 = vpop.xlane.xlu0 %154
  %v156 = vsel %vm80, %v39, 0.0
  %157 = vadd.xlane.f32.xlu0 %v156
  %v158 = vpop.xlane.xlu0 %157
  %v159 = vsel %vm80, %v40, 0.0
  %160 = vadd.xlane.f32.xlu0 %v159
  %v161 = vpop.xlane.xlu0 %160
  %v162 = vsel %vm80, %v41, 0.0
  %163 = vadd.xlane.f32.xlu0 %v162
  %v164 = vpop.xlane.xlu0 %163
  %v165 = vsel %vm80, %v42, 0.0
  %166 = vadd.xlane.f32.xlu0 %v165
  %v167 = vpop.xlane.xlu0 %166
  %v168 = vsel %vm80, %v43, 0.0
  %169 = vadd.xlane.f32.xlu0 %v168
  %v170 = vpop.xlane.xlu0 %169
  %v171 = vsel %vm80, %v44, 0.0
  %172 = vadd.xlane.f32.xlu0 %v171
  %v173 = vpop.xlane.xlu0 %172
  %v174 = vsel %vm80, %v45, 0.0
  %175 = vadd.xlane.f32.xlu0 %v174
  %v176 = vpop.xlane.xlu0 %175
  %v177 = vsel %vm80, %v46, 0.0
  %178 = vadd.xlane.f32.xlu0 %v177
  %v179 = vpop.xlane.xlu0 %178
  %v180 = vsel %vm80, %v47, 0.0
  %181 = vadd.xlane.f32.xlu0 %v180
  %v182 = vpop.xlane.xlu0 %181
  %v183 = vsel %vm80, %v48, 0.0
  %184 = vadd.xlane.f32.xlu0 %v183
  %v185 = vpop.xlane.xlu0 %184
  %v186 = vsel %vm80, %v49, 0.0
  %187 = vadd.xlane.f32.xlu0 %v186
  %v188 = vpop.xlane.xlu0 %187
  %v189 = vsel %vm80, %v50, 0.0
  %190 = vadd.xlane.f32.xlu0 %v189
  %v191 = vpop.xlane.xlu0 %190
  %v192 = vsel %vm80, %v51, 0.0
  %193 = vadd.xlane.f32.xlu0 %v192
  %v194 = vpop.xlane.xlu0 %193
  %v195 = vsel %vm80, %v52, 0.0
  %196 = vadd.xlane.f32.xlu0 %v195
  %v197 = vpop.xlane.xlu0 %196
  %v198 = vsel %vm80, %v53, 0.0
  %199 = vadd.xlane.f32.xlu0 %v198
  %v200 = vpop.xlane.xlu0 %199
  %v201 = vsel %vm80, %v54, 0.0
  %202 = vadd.xlane.f32.xlu0 %v201
  %v203 = vpop.xlane.xlu0 %202
  %v204 = vsel %vm80, %v55, 0.0
  %205 = vadd.xlane.f32.xlu0 %v204
  %v206 = vpop.xlane.xlu0 %205
  %v207 = vsel %vm80, %v56, 0.0
  %208 = vadd.xlane.f32.xlu0 %v207
  %v209 = vpop.xlane.xlu0 %208
  %v210 = vsel %vm80, %v57, 0.0
  %211 = vadd.xlane.f32.xlu0 %v210
  %v212 = vpop.xlane.xlu0 %211
  %v213 = vsel %vm80, %v58, 0.0
  %214 = vadd.xlane.f32.xlu0 %v213
  %v215 = vpop.xlane.xlu0 %214
  %v216 = vsel %vm80, %v59, 0.0
  %217 = vadd.xlane.f32.xlu0 %v216
  %v218 = vpop.xlane.xlu0 %217
  %v219 = vsel %vm80, %v60, 0.0
  %220 = vadd.xlane.f32.xlu0 %v219
  %v221 = vpop.xlane.xlu0 %220
  %v222 = vsel %vm80, %v61, 0.0
  %223 = vadd.xlane.f32.xlu0 %v222
  %v224 = vpop.xlane.xlu0 %223
  %v225 = vsel %vm80, %v62, 0.0
  %226 = vadd.xlane.f32.xlu0 %v225
  %v227 = vpop.xlane.xlu0 %226
  %v228 = vsel %vm80, %v63, 0.0
  %229 = vadd.xlane.f32.xlu0 %v228
  %v230 = vpop.xlane.xlu0 %229
  %v231 = vsel %vm80, %v64, 0.0
  %232 = vadd.xlane.f32.xlu0 %v231
  %v233 = vpop.xlane.xlu0 %232
  %v234 = vsel %vm80, %v65, 0.0
  %235 = vadd.xlane.f32.xlu0 %v234
  %v236 = vpop.xlane.xlu0 %235
  %v237 = vsel %vm80, %v66, 0.0
  %238 = vadd.xlane.f32.xlu0 %v237
  %v239 = vpop.xlane.xlu0 %238
  %v240 = vsel %vm80, %v67, 0.0
  %241 = vadd.xlane.f32.xlu0 %v240
  %v242 = vpop.xlane.xlu0 %241
  %v243 = vsel %vm80, %v68, 0.0
  %244 = vadd.xlane.f32.xlu0 %v243
  %v245 = vpop.xlane.xlu0 %244
  %v246 = vsel %vm80, %v69, 0.0
  %247 = vadd.xlane.f32.xlu0 %v246
  %v248 = vpop.xlane.xlu0 %247
  %v249 = vsel %vm80, %v70, 0.0
  %250 = vadd.xlane.f32.xlu0 %v249
  %v251 = vpop.xlane.xlu0 %250
  %v252 = vsel %vm80, %v71, 0.0
  %253 = vadd.xlane.f32.xlu0 %v252
  %v254 = vpop.xlane.xlu0 %253
  %v255 = vsel %vm80, %v72, 0.0
  %256 = vadd.xlane.f32.xlu0 %v255
  %v257 = vpop.xlane.xlu0 %256
  %v258 = vsel %vm80, %v73, 0.0
  %259 = vadd.xlane.f32.xlu0 %v258
  %v260 = vpop.xlane.xlu0 %259
  %v261 = vsel %vm80, %v74, 0.0
  %262 = vadd.xlane.f32.xlu0 %v261
  %v263 = vpop.xlane.xlu0 %262
  %v264 = vsel %vm80, %v75, 0.0
  %265 = vadd.xlane.f32.xlu0 %v264
  %v266 = vpop.xlane.xlu0 %265
  %v267 = vsel %vm80, %v76, 0.0
  %268 = vadd.xlane.f32.xlu0 %v267
  %v269 = vpop.xlane.xlu0 %268
  %v270 = vsel %vm80, %v77, 0.0
  %271 = vadd.xlane.f32.xlu0 %v270
  %v272 = vpop.xlane.xlu0 %271
  %v273 = vrcp.pop 32.0
  %v274 = vmul.f32 %v83, %v273
  %v275 = vmul.f32 %v86, %v273
  %v276 = vmul.f32 %v89, %v273
  %v277 = vmul.f32 %v92, %v273
  %v278 = vmul.f32 %v95, %v273
  %v279 = vmul.f32 %v98, %v273
  %v280 = vmul.f32 %v101, %v273
  %v281 = vmul.f32 %v104, %v273
  %v282 = vmul.f32 %v107, %v273
  %v283 = vmul.f32 %v110, %v273
  %v284 = vmul.f32 %v113, %v273
  %v285 = vmul.f32 %v116, %v273
  %v286 = vmul.f32 %v119, %v273
  %v287 = vmul.f32 %v122, %v273
  %v288 = vmul.f32 %v125, %v273
  %v289 = vmul.f32 %v128, %v273
  %v290 = vmul.f32 %v131, %v273
  %v291 = vmul.f32 %v134, %v273
  %v292 = vmul.f32 %v137, %v273
  %v293 = vmul.f32 %v140, %v273
  %v294 = vmul.f32 %v143, %v273
  %v295 = vmul.f32 %v146, %v273
  %v296 = vmul.f32 %v149, %v273
  %v297 = vmul.f32 %v152, %v273
  %v298 = vmul.f32 %v155, %v273
  %v299 = vmul.f32 %v158, %v273
  %v300 = vmul.f32 %v161, %v273
  %v301 = vmul.f32 %v164, %v273
  %v302 = vmul.f32 %v167, %v273
  %v303 = vmul.f32 %v170, %v273
  %v304 = vmul.f32 %v173, %v273
  %v305 = vmul.f32 %v176, %v273
  %v306 = vmul.f32 %v179, %v273
  %v307 = vmul.f32 %v182, %v273
  %v308 = vmul.f32 %v185, %v273
  %v309 = vmul.f32 %v188, %v273
  %v310 = vmul.f32 %v191, %v273
  %v311 = vmul.f32 %v194, %v273
  %v312 = vmul.f32 %v197, %v273
  %v313 = vmul.f32 %v200, %v273
  %v314 = vmul.f32 %v203, %v273
  %v315 = vmul.f32 %v206, %v273
  %v316 = vmul.f32 %v209, %v273
  %v317 = vmul.f32 %v212, %v273
  %v318 = vmul.f32 %v215, %v273
  %v319 = vmul.f32 %v218, %v273
  %v320 = vmul.f32 %v221, %v273
  %v321 = vmul.f32 %v224, %v273
  %v322 = vmul.f32 %v227, %v273
  %v323 = vmul.f32 %v230, %v273
  %v324 = vmul.f32 %v233, %v273
  %v325 = vmul.f32 %v236, %v273
  %v326 = vmul.f32 %v239, %v273
  %v327 = vmul.f32 %v242, %v273
  %v328 = vmul.f32 %v245, %v273
  %v329 = vmul.f32 %v248, %v273
  %v330 = vmul.f32 %v251, %v273
  %v331 = vmul.f32 %v254, %v273
  %v332 = vmul.f32 %v257, %v273
  %v333 = vmul.f32 %v260, %v273
  %v334 = vmul.f32 %v263, %v273
  %v335 = vmul.f32 %v266, %v273
  %v336 = vmul.f32 %v269, %v273
  %v337 = vmul.f32 %v272, %v273
  %v338 = vsub.f32 %v14, %v274
  %v339 = vsub.f32 %v15, %v275
  %v340 = vsub.f32 %v16, %v276
  %v341 = vsub.f32 %v17, %v277
  %v342 = vsub.f32 %v18, %v278
  %v343 = vsub.f32 %v19, %v279
  %v344 = vsub.f32 %v20, %v280
  %v345 = vsub.f32 %v21, %v281
  %v346 = vsub.f32 %v22, %v282
  %v347 = vsub.f32 %v23, %v283
  %v348 = vsub.f32 %v24, %v284
  %v349 = vsub.f32 %v25, %v285
  %v350 = vsub.f32 %v26, %v286
  %v351 = vsub.f32 %v27, %v287
  %v352 = vsub.f32 %v28, %v288
  %v353 = vsub.f32 %v29, %v289
  %v354 = vsub.f32 %v30, %v290
  %v355 = vsub.f32 %v31, %v291
  %v356 = vsub.f32 %v32, %v292
  %v357 = vsub.f32 %v33, %v293
  %v358 = vsub.f32 %v34, %v294
  %v359 = vsub.f32 %v35, %v295
  %v360 = vsub.f32 %v36, %v296
  %v361 = vsub.f32 %v37, %v297
  %v362 = vsub.f32 %v38, %v298
  %v363 = vsub.f32 %v39, %v299
  %v364 = vsub.f32 %v40, %v300
  %v365 = vsub.f32 %v41, %v301
  %v366 = vsub.f32 %v42, %v302
  %v367 = vsub.f32 %v43, %v303
  %v368 = vsub.f32 %v44, %v304
  %v369 = vsub.f32 %v45, %v305
  %v370 = vsub.f32 %v46, %v306
  %v371 = vsub.f32 %v47, %v307
  %v372 = vsub.f32 %v48, %v308
  %v373 = vsub.f32 %v49, %v309
  %v374 = vsub.f32 %v50, %v310
  %v375 = vsub.f32 %v51, %v311
  %v376 = vsub.f32 %v52, %v312
  %v377 = vsub.f32 %v53, %v313
  %v378 = vsub.f32 %v54, %v314
  %v379 = vsub.f32 %v55, %v315
  %v380 = vsub.f32 %v56, %v316
  %v381 = vsub.f32 %v57, %v317
  %v382 = vsub.f32 %v58, %v318
  %v383 = vsub.f32 %v59, %v319
  %v384 = vsub.f32 %v60, %v320
  %v385 = vsub.f32 %v61, %v321
  %v386 = vsub.f32 %v62, %v322
  %v387 = vsub.f32 %v63, %v323
  %v388 = vsub.f32 %v64, %v324
  %v389 = vsub.f32 %v65, %v325
  %v390 = vsub.f32 %v66, %v326
  %v391 = vsub.f32 %v67, %v327
  %v392 = vsub.f32 %v68, %v328
  %v393 = vsub.f32 %v69, %v329
  %v394 = vsub.f32 %v70, %v330
  %v395 = vsub.f32 %v71, %v331
  %v396 = vsub.f32 %v72, %v332
  %v397 = vsub.f32 %v73, %v333
  %v398 = vsub.f32 %v74, %v334
  %v399 = vsub.f32 %v75, %v335
  %v400 = vsub.f32 %v76, %v336
  %v401 = vsub.f32 %v77, %v337
  %v402 = vmul.f32 %v338, %v338
  %v403 = vmul.f32 %v339, %v339
  %v404 = vmul.f32 %v340, %v340
  %v405 = vmul.f32 %v341, %v341
  %v406 = vmul.f32 %v342, %v342
  %v407 = vmul.f32 %v343, %v343
  %v408 = vmul.f32 %v344, %v344
  %v409 = vmul.f32 %v345, %v345
  %v410 = vmul.f32 %v346, %v346
  %v411 = vmul.f32 %v347, %v347
  %v412 = vmul.f32 %v348, %v348
  %v413 = vmul.f32 %v349, %v349
  %v414 = vmul.f32 %v350, %v350
  %v415 = vmul.f32 %v351, %v351
  %v416 = vmul.f32 %v352, %v352
  %v417 = vmul.f32 %v353, %v353
  %v418 = vmul.f32 %v354, %v354
  %v419 = vmul.f32 %v355, %v355
  %v420 = vmul.f32 %v356, %v356
  %v421 = vmul.f32 %v357, %v357
  %v422 = vmul.f32 %v358, %v358
  %v423 = vmul.f32 %v359, %v359
  %v424 = vmul.f32 %v360, %v360
  %v425 = vmul.f32 %v361, %v361
  %v426 = vmul.f32 %v362, %v362
  %v427 = vmul.f32 %v363, %v363
  %v428 = vmul.f32 %v364, %v364
  %v429 = vmul.f32 %v365, %v365
  %v430 = vmul.f32 %v366, %v366
  %v431 = vmul.f32 %v367, %v367
  %v432 = vmul.f32 %v368, %v368
  %v433 = vmul.f32 %v369, %v369
  %v434 = vmul.f32 %v370, %v370
  %v435 = vmul.f32 %v371, %v371
  %v436 = vmul.f32 %v372, %v372
  %v437 = vmul.f32 %v373, %v373
  %v438 = vmul.f32 %v374, %v374
  %v439 = vmul.f32 %v375, %v375
  %v440 = vmul.f32 %v376, %v376
  %v441 = vmul.f32 %v377, %v377
  %v442 = vmul.f32 %v378, %v378
  %v443 = vmul.f32 %v379, %v379
  %v444 = vmul.f32 %v380, %v380
  %v445 = vmul.f32 %v381, %v381
  %v446 = vmul.f32 %v382, %v382
  %v447 = vmul.f32 %v383, %v383
  %v448 = vmul.f32 %v384, %v384
  %v449 = vmul.f32 %v385, %v385
  %v450 = vmul.f32 %v386, %v386
  %v451 = vmul.f32 %v387, %v387
  %v452 = vmul.f32 %v388, %v388
  %v453 = vmul.f32 %v389, %v389
  %v454 = vmul.f32 %v390, %v390
  %v455 = vmul.f32 %v391, %v391
  %v456 = vmul.f32 %v392, %v392
  %v457 = vmul.f32 %v393, %v393
  %v458 = vmul.f32 %v394, %v394
  %v459 = vmul.f32 %v395, %v395
  %v460 = vmul.f32 %v396, %v396
  %v461 = vmul.f32 %v397, %v397
  %v462 = vmul.f32 %v398, %v398
  %v463 = vmul.f32 %v399, %v399
  %v464 = vmul.f32 %v400, %v400
  %v465 = vmul.f32 %v401, %v401
  %v466 = vsel %vm80, %v402, 0.0
  %467 = vadd.xlane.f32.xlu0 %v466
  %v468 = vpop.xlane.xlu0 %467
  %v469 = vsel %vm80, %v403, 0.0
  %470 = vadd.xlane.f32.xlu0 %v469
  %v471 = vpop.xlane.xlu0 %470
  %v472 = vsel %vm80, %v404, 0.0
  %473 = vadd.xlane.f32.xlu0 %v472
  %v474 = vpop.xlane.xlu0 %473
  %v475 = vsel %vm80, %v405, 0.0
  %476 = vadd.xlane.f32.xlu0 %v475
  %v477 = vpop.xlane.xlu0 %476
  %v478 = vsel %vm80, %v406, 0.0
  %479 = vadd.xlane.f32.xlu0 %v478
  %v480 = vpop.xlane.xlu0 %479
  %v481 = vsel %vm80, %v407, 0.0
  %482 = vadd.xlane.f32.xlu0 %v481
  %v483 = vpop.xlane.xlu0 %482
  %v484 = vsel %vm80, %v408, 0.0
  %485 = vadd.xlane.f32.xlu0 %v484
  %v486 = vpop.xlane.xlu0 %485
  %v487 = vsel %vm80, %v409, 0.0
  %488 = vadd.xlane.f32.xlu0 %v487
  %v489 = vpop.xlane.xlu0 %488
  %v490 = vsel %vm80, %v410, 0.0
  %491 = vadd.xlane.f32.xlu0 %v490
  %v492 = vpop.xlane.xlu0 %491
  %v493 = vsel %vm80, %v411, 0.0
  %494 = vadd.xlane.f32.xlu0 %v493
  %v495 = vpop.xlane.xlu0 %494
  %v496 = vsel %vm80, %v412, 0.0
  %497 = vadd.xlane.f32.xlu0 %v496
  %v498 = vpop.xlane.xlu0 %497
  %v499 = vsel %vm80, %v413, 0.0
  %500 = vadd.xlane.f32.xlu0 %v499
  %v501 = vpop.xlane.xlu0 %500
  %v502 = vsel %vm80, %v414, 0.0
  %503 = vadd.xlane.f32.xlu0 %v502
  %v504 = vpop.xlane.xlu0 %503
  %v505 = vsel %vm80, %v415, 0.0
  %506 = vadd.xlane.f32.xlu0 %v505
  %v507 = vpop.xlane.xlu0 %506
  %v508 = vsel %vm80, %v416, 0.0
  %509 = vadd.xlane.f32.xlu0 %v508
  %v510 = vpop.xlane.xlu0 %509
  %v511 = vsel %vm80, %v417, 0.0
  %512 = vadd.xlane.f32.xlu0 %v511
  %v513 = vpop.xlane.xlu0 %512
  %v514 = vsel %vm80, %v418, 0.0
  %515 = vadd.xlane.f32.xlu0 %v514
  %v516 = vpop.xlane.xlu0 %515
  %v517 = vsel %vm80, %v419, 0.0
  %518 = vadd.xlane.f32.xlu0 %v517
  %v519 = vpop.xlane.xlu0 %518
  %v520 = vsel %vm80, %v420, 0.0
  %521 = vadd.xlane.f32.xlu0 %v520
  %v522 = vpop.xlane.xlu0 %521
  %v523 = vsel %vm80, %v421, 0.0
  %524 = vadd.xlane.f32.xlu0 %v523
  %v525 = vpop.xlane.xlu0 %524
  %v526 = vsel %vm80, %v422, 0.0
  %527 = vadd.xlane.f32.xlu0 %v526
  %v528 = vpop.xlane.xlu0 %527
  %v529 = vsel %vm80, %v423, 0.0
  %530 = vadd.xlane.f32.xlu0 %v529
  %v531 = vpop.xlane.xlu0 %530
  %v532 = vsel %vm80, %v424, 0.0
  %533 = vadd.xlane.f32.xlu0 %v532
  %v534 = vpop.xlane.xlu0 %533
  %v535 = vsel %vm80, %v425, 0.0
  %536 = vadd.xlane.f32.xlu0 %v535
  %v537 = vpop.xlane.xlu0 %536
  %v538 = vsel %vm80, %v426, 0.0
  %539 = vadd.xlane.f32.xlu0 %v538
  %v540 = vpop.xlane.xlu0 %539
  %v541 = vsel %vm80, %v427, 0.0
  %542 = vadd.xlane.f32.xlu0 %v541
  %v543 = vpop.xlane.xlu0 %542
  %v544 = vsel %vm80, %v428, 0.0
  %545 = vadd.xlane.f32.xlu0 %v544
  %v546 = vpop.xlane.xlu0 %545
  %v547 = vsel %vm80, %v429, 0.0
  %548 = vadd.xlane.f32.xlu0 %v547
  %v549 = vpop.xlane.xlu0 %548
  %v550 = vsel %vm80, %v430, 0.0
  %551 = vadd.xlane.f32.xlu0 %v550
  %v552 = vpop.xlane.xlu0 %551
  %v553 = vsel %vm80, %v431, 0.0
  %554 = vadd.xlane.f32.xlu0 %v553
  %v555 = vpop.xlane.xlu0 %554
  %v556 = vsel %vm80, %v432, 0.0
  %557 = vadd.xlane.f32.xlu0 %v556
  %v558 = vpop.xlane.xlu0 %557
  %v559 = vsel %vm80, %v433, 0.0
  %560 = vadd.xlane.f32.xlu0 %v559
  %v561 = vpop.xlane.xlu0 %560
  %v562 = vsel %vm80, %v434, 0.0
  %563 = vadd.xlane.f32.xlu0 %v562
  %v564 = vpop.xlane.xlu0 %563
  %v565 = vsel %vm80, %v435, 0.0
  %566 = vadd.xlane.f32.xlu0 %v565
  %v567 = vpop.xlane.xlu0 %566
  %v568 = vsel %vm80, %v436, 0.0
  %569 = vadd.xlane.f32.xlu0 %v568
  %v570 = vpop.xlane.xlu0 %569
  %v571 = vsel %vm80, %v437, 0.0
  %572 = vadd.xlane.f32.xlu0 %v571
  %v573 = vpop.xlane.xlu0 %572
  %v574 = vsel %vm80, %v438, 0.0
  %575 = vadd.xlane.f32.xlu0 %v574
  %v576 = vpop.xlane.xlu0 %575
  %v577 = vsel %vm80, %v439, 0.0
  %578 = vadd.xlane.f32.xlu0 %v577
  %v579 = vpop.xlane.xlu0 %578
  %v580 = vsel %vm80, %v440, 0.0
  %581 = vadd.xlane.f32.xlu0 %v580
  %v582 = vpop.xlane.xlu0 %581
  %v583 = vsel %vm80, %v441, 0.0
  %584 = vadd.xlane.f32.xlu0 %v583
  %v585 = vpop.xlane.xlu0 %584
  %v586 = vsel %vm80, %v442, 0.0
  %587 = vadd.xlane.f32.xlu0 %v586
  %v588 = vpop.xlane.xlu0 %587
  %v589 = vsel %vm80, %v443, 0.0
  %590 = vadd.xlane.f32.xlu0 %v589
  %v591 = vpop.xlane.xlu0 %590
  %v592 = vsel %vm80, %v444, 0.0
  %593 = vadd.xlane.f32.xlu0 %v592
  %v594 = vpop.xlane.xlu0 %593
  %v595 = vsel %vm80, %v445, 0.0
  %596 = vadd.xlane.f32.xlu0 %v595
  %v597 = vpop.xlane.xlu0 %596
  %v598 = vsel %vm80, %v446, 0.0
  %599 = vadd.xlane.f32.xlu0 %v598
  %v600 = vpop.xlane.xlu0 %599
  %v601 = vsel %vm80, %v447, 0.0
  %602 = vadd.xlane.f32.xlu0 %v601
  %v603 = vpop.xlane.xlu0 %602
  %v604 = vsel %vm80, %v448, 0.0
  %605 = vadd.xlane.f32.xlu0 %v604
  %v606 = vpop.xlane.xlu0 %605
  %v607 = vsel %vm80, %v449, 0.0
  %608 = vadd.xlane.f32.xlu0 %v607
  %v609 = vpop.xlane.xlu0 %608
  %v610 = vsel %vm80, %v450, 0.0
  %611 = vadd.xlane.f32.xlu0 %v610
  %v612 = vpop.xlane.xlu0 %611
  %v613 = vsel %vm80, %v451, 0.0
  %614 = vadd.xlane.f32.xlu0 %v613
  %v615 = vpop.xlane.xlu0 %614
  %v616 = vsel %vm80, %v452, 0.0
  %617 = vadd.xlane.f32.xlu0 %v616
  %v618 = vpop.xlane.xlu0 %617
  %v619 = vsel %vm80, %v453, 0.0
  %620 = vadd.xlane.f32.xlu0 %v619
  %v621 = vpop.xlane.xlu0 %620
  %v622 = vsel %vm80, %v454, 0.0
  %623 = vadd.xlane.f32.xlu0 %v622
  %v624 = vpop.xlane.xlu0 %623
  %v625 = vsel %vm80, %v455, 0.0
  %626 = vadd.xlane.f32.xlu0 %v625
  %v627 = vpop.xlane.xlu0 %626
  %v628 = vsel %vm80, %v456, 0.0
  %629 = vadd.xlane.f32.xlu0 %v628
  %v630 = vpop.xlane.xlu0 %629
  %v631 = vsel %vm80, %v457, 0.0
  %632 = vadd.xlane.f32.xlu0 %v631
  %v633 = vpop.xlane.xlu0 %632
  %v634 = vsel %vm80, %v458, 0.0
  %635 = vadd.xlane.f32.xlu0 %v634
  %v636 = vpop.xlane.xlu0 %635
  %v637 = vsel %vm80, %v459, 0.0
  %638 = vadd.xlane.f32.xlu0 %v637
  %v639 = vpop.xlane.xlu0 %638
  %v640 = vsel %vm80, %v460, 0.0
  %641 = vadd.xlane.f32.xlu0 %v640
  %v642 = vpop.xlane.xlu0 %641
  %v643 = vsel %vm80, %v461, 0.0
  %644 = vadd.xlane.f32.xlu0 %v643
  %v645 = vpop.xlane.xlu0 %644
  %v646 = vsel %vm80, %v462, 0.0
  %647 = vadd.xlane.f32.xlu0 %v646
  %v648 = vpop.xlane.xlu0 %647
  %v649 = vsel %vm80, %v463, 0.0
  %650 = vadd.xlane.f32.xlu0 %v649
  %v651 = vpop.xlane.xlu0 %650
  %v652 = vsel %vm80, %v464, 0.0
  %653 = vadd.xlane.f32.xlu0 %v652
  %v654 = vpop.xlane.xlu0 %653
  %v655 = vsel %vm80, %v465, 0.0
  %656 = vadd.xlane.f32.xlu0 %v655
  %v657 = vpop.xlane.xlu0 %656
  %v658 = vmul.f32 %v468, %v273
  %v659 = vmul.f32 %v471, %v273
  %v660 = vmul.f32 %v474, %v273
  %v661 = vmul.f32 %v477, %v273
  %v662 = vmul.f32 %v480, %v273
  %v663 = vmul.f32 %v483, %v273
  %v664 = vmul.f32 %v486, %v273
  %v665 = vmul.f32 %v489, %v273
  %v666 = vmul.f32 %v492, %v273
  %v667 = vmul.f32 %v495, %v273
  %v668 = vmul.f32 %v498, %v273
  %v669 = vmul.f32 %v501, %v273
  %v670 = vmul.f32 %v504, %v273
  %v671 = vmul.f32 %v507, %v273
  %v672 = vmul.f32 %v510, %v273
  %v673 = vmul.f32 %v513, %v273
  %v674 = vmul.f32 %v516, %v273
  %v675 = vmul.f32 %v519, %v273
  %v676 = vmul.f32 %v522, %v273
  %v677 = vmul.f32 %v525, %v273
  %v678 = vmul.f32 %v528, %v273
  %v679 = vmul.f32 %v531, %v273
  %v680 = vmul.f32 %v534, %v273
  %v681 = vmul.f32 %v537, %v273
  %v682 = vmul.f32 %v540, %v273
  %v683 = vmul.f32 %v543, %v273
  %v684 = vmul.f32 %v546, %v273
  %v685 = vmul.f32 %v549, %v273
  %v686 = vmul.f32 %v552, %v273
  %v687 = vmul.f32 %v555, %v273
  %v688 = vmul.f32 %v558, %v273
  %v689 = vmul.f32 %v561, %v273
  %v690 = vmul.f32 %v564, %v273
  %v691 = vmul.f32 %v567, %v273
  %v692 = vmul.f32 %v570, %v273
  %v693 = vmul.f32 %v573, %v273
  %v694 = vmul.f32 %v576, %v273
  %v695 = vmul.f32 %v579, %v273
  %v696 = vmul.f32 %v582, %v273
  %v697 = vmul.f32 %v585, %v273
  %v698 = vmul.f32 %v588, %v273
  %v699 = vmul.f32 %v591, %v273
  %v700 = vmul.f32 %v594, %v273
  %v701 = vmul.f32 %v597, %v273
  %v702 = vmul.f32 %v600, %v273
  %v703 = vmul.f32 %v603, %v273
  %v704 = vmul.f32 %v606, %v273
  %v705 = vmul.f32 %v609, %v273
  %v706 = vmul.f32 %v612, %v273
  %v707 = vmul.f32 %v615, %v273
  %v708 = vmul.f32 %v618, %v273
  %v709 = vmul.f32 %v621, %v273
  %v710 = vmul.f32 %v624, %v273
  %v711 = vmul.f32 %v627, %v273
  %v712 = vmul.f32 %v630, %v273
  %v713 = vmul.f32 %v633, %v273
  %v714 = vmul.f32 %v636, %v273
  %v715 = vmul.f32 %v639, %v273
  %v716 = vmul.f32 %v642, %v273
  %v717 = vmul.f32 %v645, %v273
  %v718 = vmul.f32 %v648, %v273
  %v719 = vmul.f32 %v651, %v273
  %v720 = vmul.f32 %v654, %v273
  %v721 = vmul.f32 %v657, %v273
  %v722 = vadd.f32 %v658, 1e-05
  %v723 = vadd.f32 %v659, 1e-05
  %v724 = vadd.f32 %v660, 1e-05
  %v725 = vadd.f32 %v661, 1e-05
  %v726 = vadd.f32 %v662, 1e-05
  %v727 = vadd.f32 %v663, 1e-05
  %v728 = vadd.f32 %v664, 1e-05
  %v729 = vadd.f32 %v665, 1e-05
  %v730 = vadd.f32 %v666, 1e-05
  %v731 = vadd.f32 %v667, 1e-05
  %v732 = vadd.f32 %v668, 1e-05
  %v733 = vadd.f32 %v669, 1e-05
  %v734 = vadd.f32 %v670, 1e-05
  %v735 = vadd.f32 %v671, 1e-05
  %v736 = vadd.f32 %v672, 1e-05
  %v737 = vadd.f32 %v673, 1e-05
  %v738 = vadd.f32 %v674, 1e-05
  %v739 = vadd.f32 %v675, 1e-05
  %v740 = vadd.f32 %v676, 1e-05
  %v741 = vadd.f32 %v677, 1e-05
  %v742 = vadd.f32 %v678, 1e-05
  %v743 = vadd.f32 %v679, 1e-05
  %v744 = vadd.f32 %v680, 1e-05
  %v745 = vadd.f32 %v681, 1e-05
  %v746 = vadd.f32 %v682, 1e-05
  %v747 = vadd.f32 %v683, 1e-05
  %v748 = vadd.f32 %v684, 1e-05
  %v749 = vadd.f32 %v685, 1e-05
  %v750 = vadd.f32 %v686, 1e-05
  %v751 = vadd.f32 %v687, 1e-05
  %v752 = vadd.f32 %v688, 1e-05
  %v753 = vadd.f32 %v689, 1e-05
  %v754 = vadd.f32 %v690, 1e-05
  %v755 = vadd.f32 %v691, 1e-05
  %v756 = vadd.f32 %v692, 1e-05
  %v757 = vadd.f32 %v693, 1e-05
  %v758 = vadd.f32 %v694, 1e-05
  %v759 = vadd.f32 %v695, 1e-05
  %v760 = vadd.f32 %v696, 1e-05
  %v761 = vadd.f32 %v697, 1e-05
  %v762 = vadd.f32 %v698, 1e-05
  %v763 = vadd.f32 %v699, 1e-05
  %v764 = vadd.f32 %v700, 1e-05
  %v765 = vadd.f32 %v701, 1e-05
  %v766 = vadd.f32 %v702, 1e-05
  %v767 = vadd.f32 %v703, 1e-05
  %v768 = vadd.f32 %v704, 1e-05
  %v769 = vadd.f32 %v705, 1e-05
  %v770 = vadd.f32 %v706, 1e-05
  %v771 = vadd.f32 %v707, 1e-05
  %v772 = vadd.f32 %v708, 1e-05
  %v773 = vadd.f32 %v709, 1e-05
  %v774 = vadd.f32 %v710, 1e-05
  %v775 = vadd.f32 %v711, 1e-05
  %v776 = vadd.f32 %v712, 1e-05
  %v777 = vadd.f32 %v713, 1e-05
  %v778 = vadd.f32 %v714, 1e-05
  %v779 = vadd.f32 %v715, 1e-05
  %v780 = vadd.f32 %v716, 1e-05
  %v781 = vadd.f32 %v717, 1e-05
  %v782 = vadd.f32 %v718, 1e-05
  %v783 = vadd.f32 %v719, 1e-05
  %v784 = vadd.f32 %v720, 1e-05
  %v785 = vadd.f32 %v721, 1e-05
  %v786 = vrsqrt.pop %v722
  %v787 = vrsqrt.pop %v723
  %v788 = vrsqrt.pop %v724
  %v789 = vrsqrt.pop %v725
  %v790 = vrsqrt.pop %v726
  %v791 = vrsqrt.pop %v727
  %v792 = vrsqrt.pop %v728
  %v793 = vrsqrt.pop %v729
  %v794 = vrsqrt.pop %v730
  %v795 = vrsqrt.pop %v731
  %v796 = vrsqrt.pop %v732
  %v797 = vrsqrt.pop %v733
  %v798 = vrsqrt.pop %v734
  %v799 = vrsqrt.pop %v735
  %v800 = vrsqrt.pop %v736
  %v801 = vrsqrt.pop %v737
  %v802 = vrsqrt.pop %v738
  %v803 = vrsqrt.pop %v739
  %v804 = vrsqrt.pop %v740
  %v805 = vrsqrt.pop %v741
  %v806 = vrsqrt.pop %v742
  %v807 = vrsqrt.pop %v743
  %v808 = vrsqrt.pop %v744
  %v809 = vrsqrt.pop %v745
  %v810 = vrsqrt.pop %v746
  %v811 = vrsqrt.pop %v747
  %v812 = vrsqrt.pop %v748
  %v813 = vrsqrt.pop %v749
  %v814 = vrsqrt.pop %v750
  %v815 = vrsqrt.pop %v751
  %v816 = vrsqrt.pop %v752
  %v817 = vrsqrt.pop %v753
  %v818 = vrsqrt.pop %v754
  %v819 = vrsqrt.pop %v755
  %v820 = vrsqrt.pop %v756
  %v821 = vrsqrt.pop %v757
  %v822 = vrsqrt.pop %v758
  %v823 = vrsqrt.pop %v759
  %v824 = vrsqrt.pop %v760
  %v825 = vrsqrt.pop %v761
  %v826 = vrsqrt.pop %v762
  %v827 = vrsqrt.pop %v763
  %v828 = vrsqrt.pop %v764
  %v829 = vrsqrt.pop %v765
  %v830 = vrsqrt.pop %v766
  %v831 = vrsqrt.pop %v767
  %v832 = vrsqrt.pop %v768
  %v833 = vrsqrt.pop %v769
  %v834 = vrsqrt.pop %v770
  %v835 = vrsqrt.pop %v771
  %v836 = vrsqrt.pop %v772
  %v837 = vrsqrt.pop %v773
  %v838 = vrsqrt.pop %v774
  %v839 = vrsqrt.pop %v775
  %v840 = vrsqrt.pop %v776
  %v841 = vrsqrt.pop %v777
  %v842 = vrsqrt.pop %v778
  %v843 = vrsqrt.pop %v779
  %v844 = vrsqrt.pop %v780
  %v845 = vrsqrt.pop %v781
  %v846 = vrsqrt.pop %v782
  %v847 = vrsqrt.pop %v783
  %v848 = vrsqrt.pop %v784
  %v849 = vrsqrt.pop %v785
  %v850 = vmul.f32 %v338, %v786
  %v851 = vmul.f32 %v339, %v787
  %v852 = vmul.f32 %v340, %v788
  %v853 = vmul.f32 %v341, %v789
  %v854 = vmul.f32 %v342, %v790
  %v855 = vmul.f32 %v343, %v791
  %v856 = vmul.f32 %v344, %v792
  %v857 = vmul.f32 %v345, %v793
  %v858 = vmul.f32 %v346, %v794
  %v859 = vmul.f32 %v347, %v795
  %v860 = vmul.f32 %v348, %v796
  %v861 = vmul.f32 %v349, %v797
  %v862 = vmul.f32 %v350, %v798
  %v863 = vmul.f32 %v351, %v799
  %v864 = vmul.f32 %v352, %v800
  %v865 = vmul.f32 %v353, %v801
  %v866 = vmul.f32 %v354, %v802
  %v867 = vmul.f32 %v355, %v803
  %v868 = vmul.f32 %v356, %v804
  %v869 = vmul.f32 %v357, %v805
  %v870 = vmul.f32 %v358, %v806
  %v871 = vmul.f32 %v359, %v807
  %v872 = vmul.f32 %v360, %v808
  %v873 = vmul.f32 %v361, %v809
  %v874 = vmul.f32 %v362, %v810
  %v875 = vmul.f32 %v363, %v811
  %v876 = vmul.f32 %v364, %v812
  %v877 = vmul.f32 %v365, %v813
  %v878 = vmul.f32 %v366, %v814
  %v879 = vmul.f32 %v367, %v815
  %v880 = vmul.f32 %v368, %v816
  %v881 = vmul.f32 %v369, %v817
  %v882 = vmul.f32 %v370, %v818
  %v883 = vmul.f32 %v371, %v819
  %v884 = vmul.f32 %v372, %v820
  %v885 = vmul.f32 %v373, %v821
  %v886 = vmul.f32 %v374, %v822
  %v887 = vmul.f32 %v375, %v823
  %v888 = vmul.f32 %v376, %v824
  %v889 = vmul.f32 %v377, %v825
  %v890 = vmul.f32 %v378, %v826
  %v891 = vmul.f32 %v379, %v827
  %v892 = vmul.f32 %v380, %v828
  %v893 = vmul.f32 %v381, %v829
  %v894 = vmul.f32 %v382, %v830
  %v895 = vmul.f32 %v383, %v831
  %v896 = vmul.f32 %v384, %v832
  %v897 = vmul.f32 %v385, %v833
  %v898 = vmul.f32 %v386, %v834
  %v899 = vmul.f32 %v387, %v835
  %v900 = vmul.f32 %v388, %v836
  %v901 = vmul.f32 %v389, %v837
  %v902 = vmul.f32 %v390, %v838
  %v903 = vmul.f32 %v391, %v839
  %v904 = vmul.f32 %v392, %v840
  %v905 = vmul.f32 %v393, %v841
  %v906 = vmul.f32 %v394, %v842
  %v907 = vmul.f32 %v395, %v843
  %v908 = vmul.f32 %v396, %v844
  %v909 = vmul.f32 %v397, %v845
  %v910 = vmul.f32 %v398, %v846
  %v911 = vmul.f32 %v399, %v847
  %v912 = vmul.f32 %v400, %v848
  %v913 = vmul.f32 %v401, %v849
  %v915 = vlaneseq
  %v916 = vshrl.u32 %v915, 7
  %v917 = vsub.s32 0, %v916
  %v918 = vrot.slane %v78, %v917
  %v920 = vmul.f32 %v850, %v918
  %v921 = vmul.f32 %v851, %v918
  %v922 = vmul.f32 %v852, %v918
  %v923 = vmul.f32 %v853, %v918
  %v924 = vmul.f32 %v854, %v918
  %v925 = vmul.f32 %v855, %v918
  %v926 = vmul.f32 %v856, %v918
  %v927 = vmul.f32 %v857, %v918
  %v928 = vmul.f32 %v858, %v918
  %v929 = vmul.f32 %v859, %v918
  %v930 = vmul.f32 %v860, %v918
  %v931 = vmul.f32 %v861, %v918
  %v932 = vmul.f32 %v862, %v918
  %v933 = vmul.f32 %v863, %v918
  %v934 = vmul.f32 %v864, %v918
  %v935 = vmul.f32 %v865, %v918
  %v936 = vmul.f32 %v866, %v918
  %v937 = vmul.f32 %v867, %v918
  %v938 = vmul.f32 %v868, %v918
  %v939 = vmul.f32 %v869, %v918
  %v940 = vmul.f32 %v870, %v918
  %v941 = vmul.f32 %v871, %v918
  %v942 = vmul.f32 %v872, %v918
  %v943 = vmul.f32 %v873, %v918
  %v944 = vmul.f32 %v874, %v918
  %v945 = vmul.f32 %v875, %v918
  %v946 = vmul.f32 %v876, %v918
  %v947 = vmul.f32 %v877, %v918
  %v948 = vmul.f32 %v878, %v918
  %v949 = vmul.f32 %v879, %v918
  %v950 = vmul.f32 %v880, %v918
  %v951 = vmul.f32 %v881, %v918
  %v952 = vmul.f32 %v882, %v918
  %v953 = vmul.f32 %v883, %v918
  %v954 = vmul.f32 %v884, %v918
  %v955 = vmul.f32 %v885, %v918
  %v956 = vmul.f32 %v886, %v918
  %v957 = vmul.f32 %v887, %v918
  %v958 = vmul.f32 %v888, %v918
  %v959 = vmul.f32 %v889, %v918
  %v960 = vmul.f32 %v890, %v918
  %v961 = vmul.f32 %v891, %v918
  %v962 = vmul.f32 %v892, %v918
  %v963 = vmul.f32 %v893, %v918
  %v964 = vmul.f32 %v894, %v918
  %v965 = vmul.f32 %v895, %v918
  %v966 = vmul.f32 %v896, %v918
  %v967 = vmul.f32 %v897, %v918
  %v968 = vmul.f32 %v898, %v918
  %v969 = vmul.f32 %v899, %v918
  %v970 = vmul.f32 %v900, %v918
  %v971 = vmul.f32 %v901, %v918
  %v972 = vmul.f32 %v902, %v918
  %v973 = vmul.f32 %v903, %v918
  %v974 = vmul.f32 %v904, %v918
  %v975 = vmul.f32 %v905, %v918
  %v976 = vmul.f32 %v906, %v918
  %v977 = vmul.f32 %v907, %v918
  %v978 = vmul.f32 %v908, %v918
  %v979 = vmul.f32 %v909, %v918
  %v980 = vmul.f32 %v910, %v918
  %v981 = vmul.f32 %v911, %v918
  %v982 = vmul.f32 %v912, %v918
  %v983 = vmul.f32 %v913, %v918
  %v985 = vlaneseq
  %v986 = vshrl.u32 %v985, 7
  %v987 = vsub.s32 0, %v986
  %v988 = vrot.slane %v79, %v987
  %v990 = vadd.f32 %v920, %v988
  %v991 = vadd.f32 %v921, %v988
  %v992 = vadd.f32 %v922, %v988
  %v993 = vadd.f32 %v923, %v988
  %v994 = vadd.f32 %v924, %v988
  %v995 = vadd.f32 %v925, %v988
  %v996 = vadd.f32 %v926, %v988
  %v997 = vadd.f32 %v927, %v988
  %v998 = vadd.f32 %v928, %v988
  %v999 = vadd.f32 %v929, %v988
  %v1000 = vadd.f32 %v930, %v988
  %v1001 = vadd.f32 %v931, %v988
  %v1002 = vadd.f32 %v932, %v988
  %v1003 = vadd.f32 %v933, %v988
  %v1004 = vadd.f32 %v934, %v988
  %v1005 = vadd.f32 %v935, %v988
  %v1006 = vadd.f32 %v936, %v988
  %v1007 = vadd.f32 %v937, %v988
  %v1008 = vadd.f32 %v938, %v988
  %v1009 = vadd.f32 %v939, %v988
  %v1010 = vadd.f32 %v940, %v988
  %v1011 = vadd.f32 %v941, %v988
  %v1012 = vadd.f32 %v942, %v988
  %v1013 = vadd.f32 %v943, %v988
  %v1014 = vadd.f32 %v944, %v988
  %v1015 = vadd.f32 %v945, %v988
  %v1016 = vadd.f32 %v946, %v988
  %v1017 = vadd.f32 %v947, %v988
  %v1018 = vadd.f32 %v948, %v988
  %v1019 = vadd.f32 %v949, %v988
  %v1020 = vadd.f32 %v950, %v988
  %v1021 = vadd.f32 %v951, %v988
  %v1022 = vadd.f32 %v952, %v988
  %v1023 = vadd.f32 %v953, %v988
  %v1024 = vadd.f32 %v954, %v988
  %v1025 = vadd.f32 %v955, %v988
  %v1026 = vadd.f32 %v956, %v988
  %v1027 = vadd.f32 %v957, %v988
  %v1028 = vadd.f32 %v958, %v988
  %v1029 = vadd.f32 %v959, %v988
  %v1030 = vadd.f32 %v960, %v988
  %v1031 = vadd.f32 %v961, %v988
  %v1032 = vadd.f32 %v962, %v988
  %v1033 = vadd.f32 %v963, %v988
  %v1034 = vadd.f32 %v964, %v988
  %v1035 = vadd.f32 %v965, %v988
  %v1036 = vadd.f32 %v966, %v988
  %v1037 = vadd.f32 %v967, %v988
  %v1038 = vadd.f32 %v968, %v988
  %v1039 = vadd.f32 %v969, %v988
  %v1040 = vadd.f32 %v970, %v988
  %v1041 = vadd.f32 %v971, %v988
  %v1042 = vadd.f32 %v972, %v988
  %v1043 = vadd.f32 %v973, %v988
  %v1044 = vadd.f32 %v974, %v988
  %v1045 = vadd.f32 %v975, %v988
  %v1046 = vadd.f32 %v976, %v988
  %v1047 = vadd.f32 %v977, %v988
  %v1048 = vadd.f32 %v978, %v988
  %v1049 = vadd.f32 %v979, %v988
  %v1050 = vadd.f32 %v980, %v988
  %v1051 = vadd.f32 %v981, %v988
  %v1052 = vadd.f32 %v982, %v988
  %v1053 = vadd.f32 %v983, %v988
  %1054 = vst.msk [vmem:[%s3] sm:$0xff] %vm80, %v990
  %1055 = vst.msk [vmem:[%s3 + $0x8] sm:$0xff] %vm80, %v991
  %1056 = vst.msk [vmem:[%s3 + $0x10] sm:$0xff] %vm80, %v992
  %1057 = vst.msk [vmem:[%s3 + $0x18] sm:$0xff] %vm80, %v993
  %1058 = vst.msk [vmem:[%s3 + $0x20] sm:$0xff] %vm80, %v994
  %1059 = vst.msk [vmem:[%s3 + $0x28] sm:$0xff] %vm80, %v995
  %1060 = vst.msk [vmem:[%s3 + $0x30] sm:$0xff] %vm80, %v996
  %1061 = vst.msk [vmem:[%s3 + $0x38] sm:$0xff] %vm80, %v997
  %1062 = vst.msk [vmem:[%s3 + $0x40] sm:$0xff] %vm80, %v998
  %1063 = vst.msk [vmem:[%s3 + $0x48] sm:$0xff] %vm80, %v999
  %1064 = vst.msk [vmem:[%s3 + $0x50] sm:$0xff] %vm80, %v1000
  %1065 = vst.msk [vmem:[%s3 + $0x58] sm:$0xff] %vm80, %v1001
  %1066 = vst.msk [vmem:[%s3 + $0x60] sm:$0xff] %vm80, %v1002
  %1067 = vst.msk [vmem:[%s3 + $0x68] sm:$0xff] %vm80, %v1003
  %1068 = vst.msk [vmem:[%s3 + $0x70] sm:$0xff] %vm80, %v1004
  %1069 = vst.msk [vmem:[%s3 + $0x78] sm:$0xff] %vm80, %v1005
  %1070 = vst.msk [vmem:[%s3 + $0x80] sm:$0xff] %vm80, %v1006
  %1071 = vst.msk [vmem:[%s3 + $0x88] sm:$0xff] %vm80, %v1007
  %1072 = vst.msk [vmem:[%s3 + $0x90] sm:$0xff] %vm80, %v1008
  %1073 = vst.msk [vmem:[%s3 + $0x98] sm:$0xff] %vm80, %v1009
  %1074 = vst.msk [vmem:[%s3 + $0xa0] sm:$0xff] %vm80, %v1010
  %1075 = vst.msk [vmem:[%s3 + $0xa8] sm:$0xff] %vm80, %v1011
  %1076 = vst.msk [vmem:[%s3 + $0xb0] sm:$0xff] %vm80, %v1012
  %1077 = vst.msk [vmem:[%s3 + $0xb8] sm:$0xff] %vm80, %v1013
  %1078 = vst.msk [vmem:[%s3 + $0xc0] sm:$0xff] %vm80, %v1014
  %1079 = vst.msk [vmem:[%s3 + $0xc8] sm:$0xff] %vm80, %v1015
  %1080 = vst.msk [vmem:[%s3 + $0xd0] sm:$0xff] %vm80, %v1016
  %1081 = vst.msk [vmem:[%s3 + $0xd8] sm:$0xff] %vm80, %v1017
  %1082 = vst.msk [vmem:[%s3 + $0xe0] sm:$0xff] %vm80, %v1018
  %1083 = vst.msk [vmem:[%s3 + $0xe8] sm:$0xff] %vm80, %v1019
  %1084 = vst.msk [vmem:[%s3 + $0xf0] sm:$0xff] %vm80, %v1020
  %1085 = vst.msk [vmem:[%s3 + $0xf8] sm:$0xff] %vm80, %v1021
  %1086 = vst.msk [vmem:[%s3 + $0x100] sm:$0xff] %vm80, %v1022
  %1087 = vst.msk [vmem:[%s3 + $0x108] sm:$0xff] %vm80, %v1023
  %1088 = vst.msk [vmem:[%s3 + $0x110] sm:$0xff] %vm80, %v1024
  %1089 = vst.msk [vmem:[%s3 + $0x118] sm:$0xff] %vm80, %v1025
  %1090 = vst.msk [vmem:[%s3 + $0x120] sm:$0xff] %vm80, %v1026
  %1091 = vst.msk [vmem:[%s3 + $0x128] sm:$0xff] %vm80, %v1027
  %1092 = vst.msk [vmem:[%s3 + $0x130] sm:$0xff] %vm80, %v1028
  %1093 = vst.msk [vmem:[%s3 + $0x138] sm:$0xff] %vm80, %v1029
  %1094 = vst.msk [vmem:[%s3 + $0x140] sm:$0xff] %vm80, %v1030
  %1095 = vst.msk [vmem:[%s3 + $0x148] sm:$0xff] %vm80, %v1031
  %1096 = vst.msk [vmem:[%s3 + $0x150] sm:$0xff] %vm80, %v1032
  %1097 = vst.msk [vmem:[%s3 + $0x158] sm:$0xff] %vm80, %v1033
  %1098 = vst.msk [vmem:[%s3 + $0x160] sm:$0xff] %vm80, %v1034
  %1099 = vst.msk [vmem:[%s3 + $0x168] sm:$0xff] %vm80, %v1035
  %1100 = vst.msk [vmem:[%s3 + $0x170] sm:$0xff] %vm80, %v1036
  %1101 = vst.msk [vmem:[%s3 + $0x178] sm:$0xff] %vm80, %v1037
  %1102 = vst.msk [vmem:[%s3 + $0x180] sm:$0xff] %vm80, %v1038
  %1103 = vst.msk [vmem:[%s3 + $0x188] sm:$0xff] %vm80, %v1039
  %1104 = vst.msk [vmem:[%s3 + $0x190] sm:$0xff] %vm80, %v1040
  %1105 = vst.msk [vmem:[%s3 + $0x198] sm:$0xff] %vm80, %v1041
  %1106 = vst.msk [vmem:[%s3 + $0x1a0] sm:$0xff] %vm80, %v1042
  %1107 = vst.msk [vmem:[%s3 + $0x1a8] sm:$0xff] %vm80, %v1043
  %1108 = vst.msk [vmem:[%s3 + $0x1b0] sm:$0xff] %vm80, %v1044
  %1109 = vst.msk [vmem:[%s3 + $0x1b8] sm:$0xff] %vm80, %v1045
  %1110 = vst.msk [vmem:[%s3 + $0x1c0] sm:$0xff] %vm80, %v1046
  %1111 = vst.msk [vmem:[%s3 + $0x1c8] sm:$0xff] %vm80, %v1047
  %1112 = vst.msk [vmem:[%s3 + $0x1d0] sm:$0xff] %vm80, %v1048
  %1113 = vst.msk [vmem:[%s3 + $0x1d8] sm:$0xff] %vm80, %v1049
  %1114 = vst.msk [vmem:[%s3 + $0x1e0] sm:$0xff] %vm80, %v1050
  %1115 = vst.msk [vmem:[%s3 + $0x1e8] sm:$0xff] %vm80, %v1051
  %1116 = vst.msk [vmem:[%s3 + $0x1f0] sm:$0xff] %vm80, %v1052
  %1117 = vst.msk [vmem:[%s3 + $0x1f8] sm:$0xff] %vm80, %v1053
  // Predicated region
  $region14: #{_lambda_.42} parent=0 // pred_check
    _
  $region15: #{_lambda_.42} parent=0 // pred_check_branch
    %1119 = sbr.rel (0) target = $region17
  $region16: #{_lambda_.42} parent=0 // pred_region
    _
  $region17: #{_lambda_.42} parent=0 // pred_fallthru
    _
  // Predicated region
  $region18: #{_lambda_.42} parent=0 // pred_check
    _
  $region19: #{_lambda_.42} parent=0 // pred_check_branch
    %1121 = sbr.rel (0) target = $region21
  $region20: #{_lambda_.42} parent=0 // pred_region
    _
  $region21: #{_lambda_.42} parent=0 // pred_fallthru
    _

</llo_original>
